<compile_context>
chip_gen: v5e
topology: v5e:2x2
jax: 0.10.0
libtpu: 0.0.40
codegen_flags: <defaults>
</compile_context>

<pallas_src>
import functools

import jax
import jax.numpy as jnp
from jax.experimental import pallas as pl
from jax.experimental.pallas import tpu as pltpu


# ----------------------------------------------------------------------------
# The single fused kernel
# ----------------------------------------------------------------------------

def _fused_forward_kernel(
        x_ref, wpool_ref,
        w1_ref, t1_ref, w2_ref, t2_ref, w3_ref, t3_ref,
        wm1_ref, tm1_ref, wm2_ref, tm2_ref,
        wbig_ref, tbig_ref, wb2_ref, tb2_ref,
        qwq_ref, qwk_ref, qwv_ref, qwo_ref,
        pred_ref, post_ref,
        feat_scr, qkv_scr,
        *, n_batch, n_support, n_query, n_points,
        base1_dim, att_dk, att_dout):
    """Whole ProtoNetAlignQGPASR forward for all (support + query) samples.

    x_ref    : (Cin_pad, B*L) bf16, batch collapsed into lanes (support then query)
    wpool_ref: (S*L, P) bf16   masked-avg-pool / prototype-average weights
    outputs  : pred (Nq, P, L) f32 cosine*10, post (Nq, P, feat_dim) f32
    feat_scr : (feat_dim, B*L) bf16 feature slab (concat-free layout)
    qkv_scr  : (2*dk+dout, B*L) bf16 per-point attention q/k/v
    """
    L = n_points
    SL = n_support * L
    bf16 = jnp.bfloat16

    def conv(w_ref, x_b16, t_ref, act):
        # Pointwise Conv1d + folded BN as one bf16 MXU matmul; activation in f32.
        y = jnp.dot(w_ref[...], x_b16, preferred_element_type=jnp.float32) + t_ref[...]
        if act == "relu":
            y = jnp.maximum(y, 0.0)
        elif act == "lrelu":
            y = jnp.where(y > 0.0, y, 0.2 * y)
        return y

    ec1 = w1_ref.shape[0]
    ec2 = w2_ref.shape[0]
    ec3 = w3_ref.shape[0]
    lvl1 = ec1 + ec2 + ec3
    fd3 = wb2_ref.shape[0]

    x = x_ref[...]                                        # bf16 (Cin_pad, B*L)

    # TODO(synk): original DGCNN uses k-NN EdgeConv graph features; definition not
    # provided, so each EdgeConv level is stood-in by a pointwise conv+BN+LeakyReLU.
    # Each level is written straight into the feature slab: concat-free, short lives.
    f1 = conv(w1_ref, x, t1_ref, "lrelu").astype(bf16)
    feat_scr[pl.ds(0, ec1), :] = f1
    f2 = conv(w2_ref, f1, t2_ref, "lrelu").astype(bf16)
    feat_scr[pl.ds(ec1, ec2), :] = f2
    f3 = conv(w3_ref, f2, t3_ref, "lrelu").astype(bf16)
    feat_scr[pl.ds(ec1 + ec2, ec3), :] = f3

    level1 = feat_scr[pl.ds(0, lvl1), :]                  # contiguous -> free "concat"
    m1 = conv(wm1_ref, level1, tm1_ref, "lrelu").astype(bf16)
    feat2 = conv(wm2_ref, m1, tm2_ref, "lrelu").astype(bf16)      # (mlp_w[1], B*L)

    # Stacked [BaseLearner conv1 ; att Q ; att K ; att V]: ONE 768-lane matmul.
    big = (jnp.dot(wbig_ref[...], feat2, preferred_element_type=jnp.float32)
           + tbig_ref[...])                               # (112, B*L) f32

    # BaseLearner: ReLU between layers, none after the last (conv+BN only).
    b1 = jnp.maximum(big[0:base1_dim, :], 0.0).astype(bf16)
    feat3 = conv(wb2_ref, b1, tb2_ref, "none").astype(bf16)
    feat_scr[pl.ds(lvl1 + att_dout, fd3), :] = feat3

    # Park attention q/k/v in a bf16 scratch so `big` dies here (bounded live range).
    qkv_scr[pl.ds(0, att_dk), :] = big[base1_dim:base1_dim + att_dk, :].astype(bf16)
    qkv_scr[pl.ds(att_dk, att_dk), :] = (
        big[base1_dim + att_dk:base1_dim + 2 * att_dk, :].astype(bf16))
    qkv_scr[pl.ds(2 * att_dk, att_dout), :] = (
        big[base1_dim + 2 * att_dk:base1_dim + 2 * att_dk + att_dout, :].astype(bf16))

    # TODO(synk): SelfAttention definition not provided; single-head attention
    # stand-in.  Softmax is per sample, so only logits/softmax/AV loop over batch.
    inv_sqrt_dk = 1.0 / float(att_dk) ** 0.5
    for b in range(n_batch):
        c0 = b * L
        qb = qkv_scr[pl.ds(0, att_dk), pl.ds(c0, L)]
        kb = qkv_scr[pl.ds(att_dk, att_dk), pl.ds(c0, L)]
        vb = qkv_scr[pl.ds(2 * att_dk, att_dout), pl.ds(c0, L)]
        logits = jax.lax.dot_general(qb, kb, (((0,), (0,)), ((), ())),
                                     preferred_element_type=jnp.float32) * inv_sqrt_dk
        mx = jnp.max(logits, axis=-1, keepdims=True)
        e = jnp.exp(logits - mx)
        attn = (e * pl.reciprocal(jnp.sum(e, axis=-1, keepdims=True),
                                  approx=True)).astype(bf16)
        out_b = jax.lax.dot_general(vb, attn, (((1,), (1,)), ((), ())),
                                    preferred_element_type=jnp.float32)
        feat_scr[pl.ds(lvl1, att_dout), pl.ds(c0, L)] = out_b.astype(bf16)

    # ---- prototypes (masked-avg-pool + per-way average as one MXU dot) ----------
    feat_sup = feat_scr[:, pl.ds(0, SL)]                  # bf16 (feat_dim, S*L)
    proto = jax.lax.dot_general(wpool_ref[...], feat_sup, (((0,), (1,)), ((), ())),
                                preferred_element_type=jnp.float32)   # (P, feat_dim)

    # Mean support feature (over all shots) used as QGPA context.
    ssum = feat_scr[:, pl.ds(0, L)].astype(jnp.float32)
    for s in range(1, n_support):
        ssum = ssum + feat_scr[:, pl.ds(s * L, L)].astype(jnp.float32)
    sfeat = (ssum * (1.0 / n_support)).astype(bf16)       # (feat_dim, L)

    # ---- QGPA x2 + 3-way prototype average + cosine similarity (per query) ------
    # TODO(synk): QGPA transformer definition not provided; cross-attention stand-in.
    d = qwq_ref.shape[1]
    inv_sqrt_d = 1.0 / float(d) ** 0.5
    wq = qwq_ref[...]
    wk = qwk_ref[...]
    wv = qwv_ref[...]
    wo = qwo_ref[...]
    # Support-side V is query independent -> hoisted, computed exactly once.
    v = jnp.dot(wv, sfeat, preferred_element_type=jnp.float32).astype(bf16)   # (d, L)

    for n in range(n_query):
        qf = feat_scr[:, pl.ds((n_support + n) * L, L)]   # bf16 (feat_dim, L)
        k = jnp.dot(wk, qf, preferred_element_type=jnp.float32).astype(bf16)  # (d, L)

        def qgpa_round(p, k=k):
            q = jnp.dot(p.astype(bf16), wq, preferred_element_type=jnp.float32)
            logits = jnp.dot(q.astype(bf16), k,
                             preferred_element_type=jnp.float32) * inv_sqrt_d
            mx = jnp.max(logits, axis=-1, keepdims=True)
            e = jnp.exp(logits - mx)
            attn = (e * pl.reciprocal(jnp.sum(e, axis=-1, keepdims=True),
                                      approx=True)).astype(bf16)
            ctx = jax.lax.dot_general(attn, v, (((1,), (1,)), ((), ())),
                                      preferred_element_type=jnp.float32)     # (P, d)
            return p + jnp.dot(ctx.astype(bf16), wo,
                               preferred_element_type=jnp.float32)

        p1 = qgpa_round(proto)
        p2 = qgpa_round(p1)
        pju = (proto + p1 + p2) * (1.0 / 3.0)

        # Cosine similarity (x10) of every query point against every avg prototype.
        qf32 = qf.astype(jnp.float32)
        dotpq = jnp.dot(pju.astype(bf16), qf, preferred_element_type=jnp.float32)
        fnorm = jnp.sqrt(jnp.sum(qf32 * qf32, axis=0, keepdims=True))         # (1, L)
        pnorm = jnp.sqrt(jnp.sum(pju * pju, axis=1, keepdims=True))           # (P, 1)
        denom = jnp.maximum(pnorm, 1e-8) * jnp.maximum(fnorm, 1e-8)
        pred_ref[n, :, :] = 10.0 * dotpq * pl.reciprocal(denom, approx=True)
        post_ref[n, :, :] = p1


def fused_forward(x_flat, w_pool, params, *, n_batch, n_support, n_query, n_points):
    feat_dim = params["feat_dim"]
    n_proto = w_pool.shape[1]
    L = n_points
    BL = n_batch * L
    att_dk = params["att_dk"]
    att_dout = params["att_dout"]
    base1_dim = params["base1_dim"]

    inputs = (x_flat, w_pool,
              *params["enc1"], *params["enc2"], *params["enc3"],
              *params["mlp1"], *params["mlp2"],
              params["wbig"], params["tbig"], *params["base2"],
              params["qgpa"]["wq"], params["qgpa"]["wk"],
              params["qgpa"]["wv"], params["qgpa"]["wo"])

    # Advisory cost estimate (helps XLA schedule around the custom call).
    mm_cols = sum(int(params[k][0].shape[0]) * int(params[k][0].shape[1])
                  for k in ("enc1", "enc2", "enc3", "mlp1", "mlp2", "base2"))
    mm_cols += int(params["wbig"].shape[0]) * int(params["wbig"].shape[1])
    d = int(params["qgpa"]["wq"].shape[1])
    flops = 2 * BL * mm_cols
    flops += 2 * n_batch * L * L * (att_dk + att_dout)
    flops += 2 * n_proto * feat_dim * n_support * L
    flops += 2 * (n_query + 1) * feat_dim * d * L
    flops += n_query * (8 * n_proto * feat_dim * d + 4 * n_proto * d * L
                        + 2 * n_proto * feat_dim * L)
    transcendentals = n_batch * L * L + n_query * 2 * n_proto * L
    bytes_accessed = (sum(int(a.size) * a.dtype.itemsize for a in inputs)
                      + n_query * n_proto * (L + feat_dim) * 4)

    vmem_spec = pl.BlockSpec(memory_space=pltpu.MemorySpace.VMEM)

    return pl.pallas_call(
        functools.partial(_fused_forward_kernel,
                          n_batch=n_batch, n_support=n_support, n_query=n_query,
                          n_points=L, base1_dim=base1_dim,
                          att_dk=att_dk, att_dout=att_dout),
        out_shape=(
            jax.ShapeDtypeStruct((n_query, n_proto, L), jnp.float32),
            jax.ShapeDtypeStruct((n_query, n_proto, feat_dim), jnp.float32),
        ),
        in_specs=[vmem_spec] * len(inputs),
        out_specs=(vmem_spec, vmem_spec),
        scratch_shapes=[
            pltpu.VMEM((feat_dim, BL), jnp.bfloat16),               # feature slab
            pltpu.VMEM((2 * att_dk + att_dout, BL), jnp.bfloat16),  # attention q/k/v
        ],
        cost_estimate=pl.CostEstimate(flops=int(flops),
                                      transcendentals=int(transcendentals),
                                      bytes_accessed=int(bytes_accessed)),
    )(*inputs)


# ----------------------------------------------------------------------------
# Parameters (deterministic; eval-mode BatchNorm folded into the conv weights)
# ----------------------------------------------------------------------------

def _fold_bn_pointwise(key, cin, cout, std=0.1):
    w = jax.random.normal(key, (cout, cin), jnp.float32) * std
    bias = jnp.zeros((cout,), jnp.float32)
    # BatchNorm1d eval-mode defaults: gamma=1, beta=0, running_mean=0, running_var=1
    gamma = jnp.ones((cout,), jnp.float32)
    beta = jnp.zeros((cout,), jnp.float32)
    mean = jnp.zeros((cout,), jnp.float32)
    var = jnp.ones((cout,), jnp.float32)
    scale = gamma / jnp.sqrt(var + 1e-5)
    w_eff = w * scale[:, None]                            # BN scale folded in
    t = ((bias - mean) * scale + beta)[:, None]           # remaining shift (cout, 1)
    return w_eff, t


def build_params(key, cfg):
    ks = jax.random.split(key, 16)
    ec, mlp_w, base_w, out_dim = (cfg["edgeconv_w"], cfg["mlp_w"],
                                  cfg["base_w"], cfg["output_dim"])
    cin_pad = 16                                          # pad Cin=9 -> 16
    bf16 = jnp.bfloat16

    def pconv(k, cin, cout, cin_pad_to=None):
        w, t = _fold_bn_pointwise(k, cin, cout)
        if cin_pad_to is not None and cin_pad_to > cin:
            w = jnp.pad(w, ((0, 0), (0, cin_pad_to - cin)))
        return (w.astype(bf16), t)

    p = {"cin_pad": cin_pad}
    p["enc1"] = pconv(ks[0], cfg["pc_in_dim"], ec[0], cin_pad)
    p["enc2"] = pconv(ks[1], ec[0], ec[1])
    p["enc3"] = pconv(ks[2], ec[1], ec[2])
    p["mlp1"] = pconv(ks[3], sum(ec), mlp_w[0])
    p["mlp2"] = pconv(ks[4], mlp_w[0], mlp_w[1])

    # BaseLearner conv1 (+BN folded) stacked with attention Q/K/V projections:
    # the kernel runs them as one matmul over all B*L lanes.
    wb1, tb1 = _fold_bn_pointwise(ks[5], mlp_w[1], base_w[0])
    dk = max(mlp_w[1] // 4, 8)
    awq = jax.random.normal(ks[7], (dk, mlp_w[1]), jnp.float32) * 0.1
    awk = jax.random.normal(ks[8], (dk, mlp_w[1]), jnp.float32) * 0.1
    awv = jax.random.normal(ks[9], (out_dim, mlp_w[1]), jnp.float32) * 0.1
    p["wbig"] = jnp.concatenate([wb1, awq, awk, awv], axis=0).astype(bf16)
    p["tbig"] = jnp.concatenate(
        [tb1, jnp.zeros((2 * dk + out_dim, 1), jnp.float32)], axis=0)
    p["base2"] = pconv(ks[6], base_w[0], base_w[1])

    feat_dim = sum(ec) + out_dim + base_w[1]
    d = 64
    p["qgpa"] = {
        "wq": (jax.random.normal(ks[10], (feat_dim, d), jnp.float32) * 0.05).astype(bf16),
        "wk": (jax.random.normal(ks[11], (d, feat_dim), jnp.float32) * 0.05).astype(bf16),
        "wv": (jax.random.normal(ks[12], (d, feat_dim), jnp.float32) * 0.05).astype(bf16),
        "wo": (jax.random.normal(ks[13], (d, feat_dim), jnp.float32) * 0.05).astype(bf16),
    }
    p["feat_dim"] = feat_dim
    p["base1_dim"] = base_w[0]
    p["att_dk"] = dk
    p["att_dout"] = out_dim
    return p


# ----------------------------------------------------------------------------
# Model forward (thin JAX glue around the single fused kernel)
# ----------------------------------------------------------------------------

def weighted_cross_entropy(logits, labels, weights):
    """logits: (N, P, L), labels: (N, L) int, weights: (P,). Matches F.cross_entropy."""
    logp = jax.nn.log_softmax(logits, axis=1)
    P = logits.shape[1]
    onehot = jax.nn.one_hot(labels, P, axis=1, dtype=logits.dtype)     # (N, P, L)
    nll = -jnp.sum(onehot * logp, axis=1)                              # (N, L)
    w = weights[labels]                                                # (N, L)
    return jnp.sum(w * nll) / jnp.sum(w)


def protonet_forward(params, support_x, support_y, query_x, query_y, n_way, k_shot):
    NW, KS, Cin, L = support_x.shape
    S = NW * KS
    Nq = query_x.shape[0]
    B = S + Nq
    P = n_way + 1
    cin_pad = params["cin_pad"]

    # Collapse batch into the lane dimension: (Cin_pad, B*L); support then query.
    x_all = jnp.concatenate([support_x.reshape(S, Cin, L), query_x], axis=0)
    x_flat = jnp.transpose(x_all, (1, 0, 2)).reshape(Cin, B * L)
    x_flat = jnp.pad(x_flat, ((0, cin_pad - Cin), (0, 0))).astype(jnp.bfloat16)

    # Masked-average-pool / prototype weights (one MXU dot inside the kernel).
    fg = support_y.reshape(S, L).astype(jnp.float32)
    bg = 1.0 - fg                                                      # logical_not
    fg_w = fg / (jnp.sum(fg, axis=1, keepdims=True) + 1e-5)
    bg_w = bg / (jnp.sum(bg, axis=1, keepdims=True) + 1e-5)
    way_idx = jnp.repeat(jnp.arange(n_way), k_shot)                    # (S,)
    cols = [(bg_w / float(S)).reshape(S * L, 1)]                       # bg prototype
    for w in range(n_way):
        sel = (way_idx == w).astype(jnp.float32)[:, None]
        cols.append(((fg_w * sel) / float(k_shot)).reshape(S * L, 1))  # fg prototypes
    w_pool = jnp.concatenate(cols, axis=1).astype(jnp.bfloat16)        # (S*L, P)

    # TODO(synk): FEM_15 enhance module definition not provided; identity pass-through.
    # TODO(synk): QGPA batches queries against per-way support features; exact pairing
    # rule lives in the unavailable QGPA code, so the support context is averaged over
    # all shots and broadcast to every query inside the fused kernel.
    query_pred, prototypes_all_post = fused_forward(
        x_flat, w_pool, params, n_batch=B, n_support=S, n_query=Nq, n_points=L)

    weights = jnp.ones(P, jnp.float32).at[0].set(1.5)
    loss = weighted_cross_entropy(query_pred, query_y, weights)

    align_loss = 0.0  # use_align=False in this configuration
    prototypes_all_post = jax.lax.stop_gradient(prototypes_all_post)   # clone().detach()
    return query_pred, loss + align_loss, prototypes_all_post


# ----------------------------------------------------------------------------
# Demo
# ----------------------------------------------------------------------------

if __name__ == "__main__":
    cfg = dict(
        n_way=2, k_shot=2, n_queries=2,
        pc_in_dim=9, pc_npts=128,
        edgeconv_w=[32, 32, 32],
        mlp_w=[64, 64],
        base_w=[48, 32],
        output_dim=32,
    )

    key = jax.random.PRNGKey(0)
    k1, k2, k3, k4 = jax.random.split(key, 4)
    support_x = jax.random.normal(
        k1, (cfg["n_way"], cfg["k_shot"], cfg["pc_in_dim"], cfg["pc_npts"]), jnp.float32)
    support_y = (jax.random.uniform(
        k2, (cfg["n_way"], cfg["k_shot"], cfg["pc_npts"])) > 0.5).astype(jnp.int32)
    query_x = jax.random.normal(
        k3, (cfg["n_queries"], cfg["pc_in_dim"], cfg["pc_npts"]), jnp.float32)
    query_y = jax.random.randint(
        k4, (cfg["n_queries"], cfg["pc_npts"]), 0, cfg["n_way"] + 1, jnp.int32)

    params = build_params(jax.random.PRNGKey(42), cfg)

    query_pred, loss, protos_post = protonet_forward(
        params, support_x, support_y, query_x, query_y, cfg["n_way"], cfg["k_shot"])
    jax.block_until_ready((query_pred, loss, protos_post))

    assert query_pred.shape == (cfg["n_queries"], cfg["n_way"] + 1, cfg["pc_npts"])
    assert protos_post.shape == (cfg["n_queries"], cfg["n_way"] + 1, params["feat_dim"])
    assert jnp.isfinite(loss)
    print("KERNEL_OK")
</pallas_src>

<mosaic_0001>
module attributes {stable_mosaic.version = 11 : i64} {
  func.func @_fused_forward_kernel(%arg0: memref<16x768xbf16, #tpu.memory_space<vmem>>, %arg1: memref<512x3xbf16, #tpu.memory_space<vmem>>, %arg2: memref<32x16xbf16, #tpu.memory_space<vmem>>, %arg3: memref<32x1xf32, #tpu.memory_space<vmem>>, %arg4: memref<32x32xbf16, #tpu.memory_space<vmem>>, %arg5: memref<32x1xf32, #tpu.memory_space<vmem>>, %arg6: memref<32x32xbf16, #tpu.memory_space<vmem>>, %arg7: memref<32x1xf32, #tpu.memory_space<vmem>>, %arg8: memref<64x96xbf16, #tpu.memory_space<vmem>>, %arg9: memref<64x1xf32, #tpu.memory_space<vmem>>, %arg10: memref<64x64xbf16, #tpu.memory_space<vmem>>, %arg11: memref<64x1xf32, #tpu.memory_space<vmem>>, %arg12: memref<112x64xbf16, #tpu.memory_space<vmem>>, %arg13: memref<112x1xf32, #tpu.memory_space<vmem>>, %arg14: memref<32x48xbf16, #tpu.memory_space<vmem>>, %arg15: memref<32x1xf32, #tpu.memory_space<vmem>>, %arg16: memref<160x64xbf16, #tpu.memory_space<vmem>>, %arg17: memref<64x160xbf16, #tpu.memory_space<vmem>>, %arg18: memref<64x160xbf16, #tpu.memory_space<vmem>>, %arg19: memref<64x160xbf16, #tpu.memory_space<vmem>>, %arg20: memref<2x3x128xf32, #tpu.memory_space<vmem>>, %arg21: memref<2x3x160xf32, #tpu.memory_space<vmem>>, %arg22: memref<160x768xbf16, #tpu.memory_space<vmem>>, %arg23: memref<64x768xbf16, #tpu.memory_space<vmem>>) attributes {dimension_semantics = [], scalar_prefetch = 0 : i64, scratch_operands = 2 : i64, tpu.core_type = #tpu.core_type<tc>} {
    %c0 = arith.constant 0 : index
    %c0_0 = arith.constant 0 : index
    %0 = vector.load %arg0[%c0, %c0_0] : memref<16x768xbf16, #tpu.memory_space<vmem>>, vector<16x768xbf16>
    %c0_1 = arith.constant 0 : index
    %c0_2 = arith.constant 0 : index
    %1 = vector.load %arg2[%c0_1, %c0_2] : memref<32x16xbf16, #tpu.memory_space<vmem>>, vector<32x16xbf16>
    %cst = arith.constant dense<0.000000e+00> : vector<32x768xf32>
    %2 = tpu.matmul %1, %0, %cst {dimension_numbers = #tpu.dot_dimension_numbers<[1], [0], [0], [1], [0, 0, 1, 1], [], []>} : vector<32x16xbf16>, vector<16x768xbf16>, vector<32x768xf32> -> vector<32x768xf32>
    %c0_3 = arith.constant 0 : index
    %c0_4 = arith.constant 0 : index
    %3 = vector.load %arg3[%c0_3, %c0_4] : memref<32x1xf32, #tpu.memory_space<vmem>>, vector<32x1xf32>
    %4 = vector.broadcast %3 : vector<32x1xf32> to vector<32x768xf32>
    %5 = arith.addf %2, %4 : vector<32x768xf32>
    %cst_5 = arith.constant 0.000000e+00 : f32
    %6 = vector.broadcast %cst_5 : f32 to vector<32x768xf32>
    %7 = arith.cmpf ogt, %5, %6 : vector<32x768xf32>
    %cst_6 = arith.constant 2.000000e-01 : f32
    %8 = vector.broadcast %cst_6 : f32 to vector<32x768xf32>
    %9 = arith.mulf %8, %5 : vector<32x768xf32>
    %10 = arith.select %7, %5, %9 : vector<32x768xi1>, vector<32x768xf32>
    %11 = arith.truncf %10 : vector<32x768xf32> to vector<32x768xbf16>
    %c0_7 = arith.constant 0 : index
    %c0_8 = arith.constant 0 : index
    %12 = vector.load %arg22[%c0_7, %c0_8] : memref<160x768xbf16, #tpu.memory_space<vmem>>, vector<32x768xbf16>
    tpu.vector_store %arg22[%c0_7, %c0_8], %11 {strides = array<i32>} : memref<160x768xbf16, #tpu.memory_space<vmem>>, vector<32x768xbf16>,
    %c0_9 = arith.constant 0 : index
    %c0_10 = arith.constant 0 : index
    %13 = vector.load %arg4[%c0_9, %c0_10] : memref<32x32xbf16, #tpu.memory_space<vmem>>, vector<32x32xbf16>
    %cst_11 = arith.constant dense<0.000000e+00> : vector<32x768xf32>
    %14 = tpu.matmul %13, %11, %cst_11 {dimension_numbers = #tpu.dot_dimension_numbers<[1], [0], [0], [1], [0, 0, 1, 1], [], []>} : vector<32x32xbf16>, vector<32x768xbf16>, vector<32x768xf32> -> vector<32x768xf32>
    %c0_12 = arith.constant 0 : index
    %c0_13 = arith.constant 0 : index
    %15 = vector.load %arg5[%c0_12, %c0_13] : memref<32x1xf32, #tpu.memory_space<vmem>>, vector<32x1xf32>
    %16 = vector.broadcast %15 : vector<32x1xf32> to vector<32x768xf32>
    %17 = arith.addf %14, %16 : vector<32x768xf32>
    %cst_14 = arith.constant 0.000000e+00 : f32
    %18 = vector.broadcast %cst_14 : f32 to vector<32x768xf32>
    %19 = arith.cmpf ogt, %17, %18 : vector<32x768xf32>
    %cst_15 = arith.constant 2.000000e-01 : f32
    %20 = vector.broadcast %cst_15 : f32 to vector<32x768xf32>
    %21 = arith.mulf %20, %17 : vector<32x768xf32>
    %22 = arith.select %19, %17, %21 : vector<32x768xi1>, vector<32x768xf32>
    %23 = arith.truncf %22 : vector<32x768xf32> to vector<32x768xbf16>
    %c32 = arith.constant 32 : index
    %c0_16 = arith.constant 0 : index
    %24 = vector.load %arg22[%c32, %c0_16] : memref<160x768xbf16, #tpu.memory_space<vmem>>, vector<32x768xbf16>
    tpu.vector_store %arg22[%c32, %c0_16], %23 {strides = array<i32>} : memref<160x768xbf16, #tpu.memory_space<vmem>>, vector<32x768xbf16>,
    %c0_17 = arith.constant 0 : index
    %c0_18 = arith.constant 0 : index
    %25 = vector.load %arg6[%c0_17, %c0_18] : memref<32x32xbf16, #tpu.memory_space<vmem>>, vector<32x32xbf16>
    %cst_19 = arith.constant dense<0.000000e+00> : vector<32x768xf32>
    %26 = tpu.matmul %25, %23, %cst_19 {dimension_numbers = #tpu.dot_dimension_numbers<[1], [0], [0], [1], [0, 0, 1, 1], [], []>} : vector<32x32xbf16>, vector<32x768xbf16>, vector<32x768xf32> -> vector<32x768xf32>
    %c0_20 = arith.constant 0 : index
    %c0_21 = arith.constant 0 : index
    %27 = vector.load %arg7[%c0_20, %c0_21] : memref<32x1xf32, #tpu.memory_space<vmem>>, vector<32x1xf32>
    %28 = vector.broadcast %27 : vector<32x1xf32> to vector<32x768xf32>
    %29 = arith.addf %26, %28 : vector<32x768xf32>
    %cst_22 = arith.constant 0.000000e+00 : f32
    %30 = vector.broadcast %cst_22 : f32 to vector<32x768xf32>
    %31 = arith.cmpf ogt, %29, %30 : vector<32x768xf32>
    %cst_23 = arith.constant 2.000000e-01 : f32
    %32 = vector.broadcast %cst_23 : f32 to vector<32x768xf32>
    %33 = arith.mulf %32, %29 : vector<32x768xf32>
    %34 = arith.select %31, %29, %33 : vector<32x768xi1>, vector<32x768xf32>
    %35 = arith.truncf %34 : vector<32x768xf32> to vector<32x768xbf16>
    %c64 = arith.constant 64 : index
    %c0_24 = arith.constant 0 : index
    %36 = vector.load %arg22[%c64, %c0_24] : memref<160x768xbf16, #tpu.memory_space<vmem>>, vector<32x768xbf16>
    tpu.vector_store %arg22[%c64, %c0_24], %35 {strides = array<i32>} : memref<160x768xbf16, #tpu.memory_space<vmem>>, vector<32x768xbf16>,
    %c0_25 = arith.constant 0 : index
    %c0_26 = arith.constant 0 : index
    %37 = vector.load %arg22[%c0_25, %c0_26] : memref<160x768xbf16, #tpu.memory_space<vmem>>, vector<96x768xbf16>
    %c0_27 = arith.constant 0 : index
    %c0_28 = arith.constant 0 : index
    %38 = vector.load %arg8[%c0_27, %c0_28] : memref<64x96xbf16, #tpu.memory_space<vmem>>, vector<64x96xbf16>
    %cst_29 = arith.constant dense<0.000000e+00> : vector<64x768xf32>
    %39 = tpu.matmul %38, %37, %cst_29 {dimension_numbers = #tpu.dot_dimension_numbers<[1], [0], [0], [1], [0, 0, 1, 1], [], []>} : vector<64x96xbf16>, vector<96x768xbf16>, vector<64x768xf32> -> vector<64x768xf32>
    %c0_30 = arith.constant 0 : index
    %c0_31 = arith.constant 0 : index
    %40 = vector.load %arg9[%c0_30, %c0_31] : memref<64x1xf32, #tpu.memory_space<vmem>>, vector<64x1xf32>
    %41 = vector.broadcast %40 : vector<64x1xf32> to vector<64x768xf32>
    %42 = arith.addf %39, %41 : vector<64x768xf32>
    %cst_32 = arith.constant 0.000000e+00 : f32
    %43 = vector.broadcast %cst_32 : f32 to vector<64x768xf32>
    %44 = arith.cmpf ogt, %42, %43 : vector<64x768xf32>
    %cst_33 = arith.constant 2.000000e-01 : f32
    %45 = vector.broadcast %cst_33 : f32 to vector<64x768xf32>
    %46 = arith.mulf %45, %42 : vector<64x768xf32>
    %47 = arith.select %44, %42, %46 : vector<64x768xi1>, vector<64x768xf32>
    %48 = arith.truncf %47 : vector<64x768xf32> to vector<64x768xbf16>
    %c0_34 = arith.constant 0 : index
    %c0_35 = arith.constant 0 : index
    %49 = vector.load %arg10[%c0_34, %c0_35] : memref<64x64xbf16, #tpu.memory_space<vmem>>, vector<64x64xbf16>
    %cst_36 = arith.constant dense<0.000000e+00> : vector<64x768xf32>
    %50 = tpu.matmul %49, %48, %cst_36 {dimension_numbers = #tpu.dot_dimension_numbers<[1], [0], [0], [1], [0, 0, 1, 1], [], []>} : vector<64x64xbf16>, vector<64x768xbf16>, vector<64x768xf32> -> vector<64x768xf32>
    %c0_37 = arith.constant 0 : index
    %c0_38 = arith.constant 0 : index
    %51 = vector.load %arg11[%c0_37, %c0_38] : memref<64x1xf32, #tpu.memory_space<vmem>>, vector<64x1xf32>
    %52 = vector.broadcast %51 : vector<64x1xf32> to vector<64x768xf32>
    %53 = arith.addf %50, %52 : vector<64x768xf32>
    %cst_39 = arith.constant 0.000000e+00 : f32
    %54 = vector.broadcast %cst_39 : f32 to vector<64x768xf32>
    %55 = arith.cmpf ogt, %53, %54 : vector<64x768xf32>
    %cst_40 = arith.constant 2.000000e-01 : f32
    %56 = vector.broadcast %cst_40 : f32 to vector<64x768xf32>
    %57 = arith.mulf %56, %53 : vector<64x768xf32>
    %58 = arith.select %55, %53, %57 : vector<64x768xi1>, vector<64x768xf32>
    %59 = arith.truncf %58 : vector<64x768xf32> to vector<64x768xbf16>
    %c0_41 = arith.constant 0 : index
    %c0_42 = arith.constant 0 : index
    %60 = vector.load %arg12[%c0_41, %c0_42] : memref<112x64xbf16, #tpu.memory_space<vmem>>, vector<112x64xbf16>
    %cst_43 = arith.constant dense<0.000000e+00> : vector<112x768xf32>
    %61 = tpu.matmul %60, %59, %cst_43 {dimension_numbers = #tpu.dot_dimension_numbers<[1], [0], [0], [1], [0, 0, 1, 1], [], []>} : vector<112x64xbf16>, vector<64x768xbf16>, vector<112x768xf32> -> vector<112x768xf32>
    %c0_44 = arith.constant 0 : index
    %c0_45 = arith.constant 0 : index
    %62 = vector.load %arg13[%c0_44, %c0_45] : memref<112x1xf32, #tpu.memory_space<vmem>>, vector<112x1xf32>
    %63 = vector.broadcast %62 : vector<112x1xf32> to vector<112x768xf32>
    %64 = arith.addf %61, %63 : vector<112x768xf32>
    %65 = vector.extract_strided_slice %64 {offsets = [0, 0], sizes = [48, 768], strides = [1, 1]} : vector<112x768xf32> to vector<48x768xf32>
    %cst_46 = arith.constant 0.000000e+00 : f32
    %66 = vector.broadcast %cst_46 : f32 to vector<48x768xf32>
    %67 = arith.maximumf %65, %66 : vector<48x768xf32>
    %68 = arith.truncf %67 : vector<48x768xf32> to vector<48x768xbf16>
    %c0_47 = arith.constant 0 : index
    %c0_48 = arith.constant 0 : index
    %69 = vector.load %arg14[%c0_47, %c0_48] : memref<32x48xbf16, #tpu.memory_space<vmem>>, vector<32x48xbf16>
    %cst_49 = arith.constant dense<0.000000e+00> : vector<32x768xf32>
    %70 = tpu.matmul %69, %68, %cst_49 {dimension_numbers = #tpu.dot_dimension_numbers<[1], [0], [0], [1], [0, 0, 1, 1], [], []>} : vector<32x48xbf16>, vector<48x768xbf16>, vector<32x768xf32> -> vector<32x768xf32>
    %c0_50 = arith.constant 0 : index
    %c0_51 = arith.constant 0 : index
    %71 = vector.load %arg15[%c0_50, %c0_51] : memref<32x1xf32, #tpu.memory_space<vmem>>, vector<32x1xf32>
    %72 = vector.broadcast %71 : vector<32x1xf32> to vector<32x768xf32>
    %73 = arith.addf %70, %72 : vector<32x768xf32>
    %74 = arith.truncf %73 : vector<32x768xf32> to vector<32x768xbf16>
    %c128 = arith.constant 128 : index
    %c0_52 = arith.constant 0 : index
    %75 = vector.load %arg22[%c128, %c0_52] : memref<160x768xbf16, #tpu.memory_space<vmem>>, vector<32x768xbf16>
    tpu.vector_store %arg22[%c128, %c0_52], %74 {strides = array<i32>} : memref<160x768xbf16, #tpu.memory_space<vmem>>, vector<32x768xbf16>,
    %76 = vector.extract_strided_slice %64 {offsets = [48, 0], sizes = [16, 768], strides = [1, 1]} : vector<112x768xf32> to vector<16x768xf32>
    %77 = arith.truncf %76 : vector<16x768xf32> to vector<16x768xbf16>
    %c0_53 = arith.constant 0 : index
    %c0_54 = arith.constant 0 : index
    %78 = vector.load %arg23[%c0_53, %c0_54] : memref<64x768xbf16, #tpu.memory_space<vmem>>, vector<16x768xbf16>
    tpu.vector_store %arg23[%c0_53, %c0_54], %77 {strides = array<i32>} : memref<64x768xbf16, #tpu.memory_space<vmem>>, vector<16x768xbf16>,
    %79 = vector.extract_strided_slice %64 {offsets = [64, 0], sizes = [16, 768], strides = [1, 1]} : vector<112x768xf32> to vector<16x768xf32>
    %80 = arith.truncf %79 : vector<16x768xf32> to vector<16x768xbf16>
    %c16 = arith.constant 16 : index
    %c0_55 = arith.constant 0 : index
    %81 = vector.load %arg23[%c16, %c0_55] : memref<64x768xbf16, #tpu.memory_space<vmem>>, vector<16x768xbf16>
    tpu.vector_store %arg23[%c16, %c0_55], %80 {strides = array<i32>} : memref<64x768xbf16, #tpu.memory_space<vmem>>, vector<16x768xbf16>,
    %82 = vector.extract_strided_slice %64 {offsets = [80, 0], sizes = [32, 768], strides = [1, 1]} : vector<112x768xf32> to vector<32x768xf32>
    %83 = arith.truncf %82 : vector<32x768xf32> to vector<32x768xbf16>
    %c32_56 = arith.constant 32 : index
    %c0_57 = arith.constant 0 : index
    %84 = vector.load %arg23[%c32_56, %c0_57] : memref<64x768xbf16, #tpu.memory_space<vmem>>, vector<32x768xbf16>
    tpu.vector_store %arg23[%c32_56, %c0_57], %83 {strides = array<i32>} : memref<64x768xbf16, #tpu.memory_space<vmem>>, vector<32x768xbf16>,
    %c0_58 = arith.constant 0 : index
    %c0_59 = arith.constant 0 : index
    %85 = vector.load %arg23[%c0_58, %c0_59] : memref<64x768xbf16, #tpu.memory_space<vmem>>, vector<16x128xbf16>
    %c16_60 = arith.constant 16 : index
    %c0_61 = arith.constant 0 : index
    %86 = vector.load %arg23[%c16_60, %c0_61] : memref<64x768xbf16, #tpu.memory_space<vmem>>, vector<16x128xbf16>
    %c32_62 = arith.constant 32 : index
    %c0_63 = arith.constant 0 : index
    %87 = vector.load %arg23[%c32_62, %c0_63] : memref<64x768xbf16, #tpu.memory_space<vmem>>, vector<32x128xbf16>
    %cst_64 = arith.constant dense<0.000000e+00> : vector<128x128xf32>
    %88 = tpu.matmul %85, %86, %cst_64 {dimension_numbers = #tpu.dot_dimension_numbers<[0], [0], [1], [1], [0, 1, 1, 1], [], []>} : vector<16x128xbf16>, vector<16x128xbf16>, vector<128x128xf32> -> vector<128x128xf32>
    %cst_65 = arith.constant 2.500000e-01 : f32
    %89 = vector.broadcast %cst_65 : f32 to vector<128x128xf32>
    %90 = arith.mulf %88, %89 : vector<128x128xf32>
    %cst_66 = arith.constant dense<0xFF800000> : vector<128xf32>
    %91 = vector.multi_reduction <maximumf>, %90, %cst_66 [1] : vector<128x128xf32> to vector<128xf32>
    %92 = vector.shape_cast %91 : vector<128xf32> to vector<128x1xf32>
    %93 = vector.broadcast %92 : vector<128x1xf32> to vector<128x128xf32>
    %94 = arith.subf %90, %93 : vector<128x128xf32>
    %95 = math.exp %94 : vector<128x128xf32>
    %cst_67 = arith.constant dense<0.000000e+00> : vector<128xf32>
    %96 = vector.multi_reduction <add>, %95, %cst_67 [1] : vector<128x128xf32> to vector<128xf32>
    %97 = vector.shape_cast %96 : vector<128xf32> to vector<128x1xf32>
    %98 = tpu.reciprocal %97 {approx = true} : vector<128x1xf32> -> vector<128x1xf32>
    %99 = vector.broadcast %98 : vector<128x1xf32> to vector<128x128xf32>
    %100 = arith.mulf %95, %99 : vector<128x128xf32>
    %101 = arith.truncf %100 : vector<128x128xf32> to vector<128x128xbf16>
    %cst_68 = arith.constant dense<0.000000e+00> : vector<32x128xf32>
    %102 = tpu.matmul %87, %101, %cst_68 {dimension_numbers = #tpu.dot_dimension_numbers<[1], [1], [0], [0], [0, 0, 1, 0], [], []>} : vector<32x128xbf16>, vector<128x128xbf16>, vector<32x128xf32> -> vector<32x128xf32>
    %103 = arith.truncf %102 : vector<32x128xf32> to vector<32x128xbf16>
    %c96 = arith.constant 96 : index
    %c0_69 = arith.constant 0 : index
    %104 = vector.load %arg22[%c96, %c0_69] : memref<160x768xbf16, #tpu.memory_space<vmem>>, vector<32x128xbf16>
    tpu.vector_store %arg22[%c96, %c0_69], %103 {strides = array<i32>} : memref<160x768xbf16, #tpu.memory_space<vmem>>, vector<32x128xbf16>,
    %c0_70 = arith.constant 0 : index
    %c128_71 = arith.constant 128 : index
    %105 = vector.load %arg23[%c0_70, %c128_71] : memref<64x768xbf16, #tpu.memory_space<vmem>>, vector<16x128xbf16>
    %c16_72 = arith.constant 16 : index
    %c128_73 = arith.constant 128 : index
    %106 = vector.load %arg23[%c16_72, %c128_73] : memref<64x768xbf16, #tpu.memory_space<vmem>>, vector<16x128xbf16>
    %c32_74 = arith.constant 32 : index
    %c128_75 = arith.constant 128 : index
    %107 = vector.load %arg23[%c32_74, %c128_75] : memref<64x768xbf16, #tpu.memory_space<vmem>>, vector<32x128xbf16>
    %cst_76 = arith.constant dense<0.000000e+00> : vector<128x128xf32>
    %108 = tpu.matmul %105, %106, %cst_76 {dimension_numbers = #tpu.dot_dimension_numbers<[0], [0], [1], [1], [0, 1, 1, 1], [], []>} : vector<16x128xbf16>, vector<16x128xbf16>, vector<128x128xf32> -> vector<128x128xf32>
    %cst_77 = arith.constant 2.500000e-01 : f32
    %109 = vector.broadcast %cst_77 : f32 to vector<128x128xf32>
    %110 = arith.mulf %108, %109 : vector<128x128xf32>
    %cst_78 = arith.constant dense<0xFF800000> : vector<128xf32>
    %111 = vector.multi_reduction <maximumf>, %110, %cst_78 [1] : vector<128x128xf32> to vector<128xf32>
    %112 = vector.shape_cast %111 : vector<128xf32> to vector<128x1xf32>
    %113 = vector.broadcast %112 : vector<128x1xf32> to vector<128x128xf32>
    %114 = arith.subf %110, %113 : vector<128x128xf32>
    %115 = math.exp %114 : vector<128x128xf32>
    %cst_79 = arith.constant dense<0.000000e+00> : vector<128xf32>
    %116 = vector.multi_reduction <add>, %115, %cst_79 [1] : vector<128x128xf32> to vector<128xf32>
    %117 = vector.shape_cast %116 : vector<128xf32> to vector<128x1xf32>
    %118 = tpu.reciprocal %117 {approx = true} : vector<128x1xf32> -> vector<128x1xf32>
    %119 = vector.broadcast %118 : vector<128x1xf32> to vector<128x128xf32>
    %120 = arith.mulf %115, %119 : vector<128x128xf32>
    %121 = arith.truncf %120 : vector<128x128xf32> to vector<128x128xbf16>
    %cst_80 = arith.constant dense<0.000000e+00> : vector<32x128xf32>
    %122 = tpu.matmul %107, %121, %cst_80 {dimension_numbers = #tpu.dot_dimension_numbers<[1], [1], [0], [0], [0, 0, 1, 0], [], []>} : vector<32x128xbf16>, vector<128x128xbf16>, vector<32x128xf32> -> vector<32x128xf32>
    %123 = arith.truncf %122 : vector<32x128xf32> to vector<32x128xbf16>
    %c96_81 = arith.constant 96 : index
    %c128_82 = arith.constant 128 : index
    %124 = vector.load %arg22[%c96_81, %c128_82] : memref<160x768xbf16, #tpu.memory_space<vmem>>, vector<32x128xbf16>
    tpu.vector_store %arg22[%c96_81, %c128_82], %123 {strides = array<i32>} : memref<160x768xbf16, #tpu.memory_space<vmem>>, vector<32x128xbf16>,
    %c0_83 = arith.constant 0 : index
    %c256 = arith.constant 256 : index
    %125 = vector.load %arg23[%c0_83, %c256] : memref<64x768xbf16, #tpu.memory_space<vmem>>, vector<16x128xbf16>
    %c16_84 = arith.constant 16 : index
    %c256_85 = arith.constant 256 : index
    %126 = vector.load %arg23[%c16_84, %c256_85] : memref<64x768xbf16, #tpu.memory_space<vmem>>, vector<16x128xbf16>
    %c32_86 = arith.constant 32 : index
    %c256_87 = arith.constant 256 : index
    %127 = vector.load %arg23[%c32_86, %c256_87] : memref<64x768xbf16, #tpu.memory_space<vmem>>, vector<32x128xbf16>
    %cst_88 = arith.constant dense<0.000000e+00> : vector<128x128xf32>
    %128 = tpu.matmul %125, %126, %cst_88 {dimension_numbers = #tpu.dot_dimension_numbers<[0], [0], [1], [1], [0, 1, 1, 1], [], []>} : vector<16x128xbf16>, vector<16x128xbf16>, vector<128x128xf32> -> vector<128x128xf32>
    %cst_89 = arith.constant 2.500000e-01 : f32
    %129 = vector.broadcast %cst_89 : f32 to vector<128x128xf32>
    %130 = arith.mulf %128, %129 : vector<128x128xf32>
    %cst_90 = arith.constant dense<0xFF800000> : vector<128xf32>
    %131 = vector.multi_reduction <maximumf>, %130, %cst_90 [1] : vector<128x128xf32> to vector<128xf32>
    %132 = vector.shape_cast %131 : vector<128xf32> to vector<128x1xf32>
    %133 = vector.broadcast %132 : vector<128x1xf32> to vector<128x128xf32>
    %134 = arith.subf %130, %133 : vector<128x128xf32>
    %135 = math.exp %134 : vector<128x128xf32>
    %cst_91 = arith.constant dense<0.000000e+00> : vector<128xf32>
    %136 = vector.multi_reduction <add>, %135, %cst_91 [1] : vector<128x128xf32> to vector<128xf32>
    %137 = vector.shape_cast %136 : vector<128xf32> to vector<128x1xf32>
    %138 = tpu.reciprocal %137 {approx = true} : vector<128x1xf32> -> vector<128x1xf32>
    %139 = vector.broadcast %138 : vector<128x1xf32> to vector<128x128xf32>
    %140 = arith.mulf %135, %139 : vector<128x128xf32>
    %141 = arith.truncf %140 : vector<128x128xf32> to vector<128x128xbf16>
    %cst_92 = arith.constant dense<0.000000e+00> : vector<32x128xf32>
    %142 = tpu.matmul %127, %141, %cst_92 {dimension_numbers = #tpu.dot_dimension_numbers<[1], [1], [0], [0], [0, 0, 1, 0], [], []>} : vector<32x128xbf16>, vector<128x128xbf16>, vector<32x128xf32> -> vector<32x128xf32>
    %143 = arith.truncf %142 : vector<32x128xf32> to vector<32x128xbf16>
    %c96_93 = arith.constant 96 : index
    %c256_94 = arith.constant 256 : index
    %144 = vector.load %arg22[%c96_93, %c256_94] : memref<160x768xbf16, #tpu.memory_space<vmem>>, vector<32x128xbf16>
    tpu.vector_store %arg22[%c96_93, %c256_94], %143 {strides = array<i32>} : memref<160x768xbf16, #tpu.memory_space<vmem>>, vector<32x128xbf16>,
    %c0_95 = arith.constant 0 : index
    %c384 = arith.constant 384 : index
    %145 = vector.load %arg23[%c0_95, %c384] : memref<64x768xbf16, #tpu.memory_space<vmem>>, vector<16x128xbf16>
    %c16_96 = arith.constant 16 : index
    %c384_97 = arith.constant 384 : index
    %146 = vector.load %arg23[%c16_96, %c384_97] : memref<64x768xbf16, #tpu.memory_space<vmem>>, vector<16x128xbf16>
    %c32_98 = arith.constant 32 : index
    %c384_99 = arith.constant 384 : index
    %147 = vector.load %arg23[%c32_98, %c384_99] : memref<64x768xbf16, #tpu.memory_space<vmem>>, vector<32x128xbf16>
    %cst_100 = arith.constant dense<0.000000e+00> : vector<128x128xf32>
    %148 = tpu.matmul %145, %146, %cst_100 {dimension_numbers = #tpu.dot_dimension_numbers<[0], [0], [1], [1], [0, 1, 1, 1], [], []>} : vector<16x128xbf16>, vector<16x128xbf16>, vector<128x128xf32> -> vector<128x128xf32>
    %cst_101 = arith.constant 2.500000e-01 : f32
    %149 = vector.broadcast %cst_101 : f32 to vector<128x128xf32>
    %150 = arith.mulf %148, %149 : vector<128x128xf32>
    %cst_102 = arith.constant dense<0xFF800000> : vector<128xf32>
    %151 = vector.multi_reduction <maximumf>, %150, %cst_102 [1] : vector<128x128xf32> to vector<128xf32>
    %152 = vector.shape_cast %151 : vector<128xf32> to vector<128x1xf32>
    %153 = vector.broadcast %152 : vector<128x1xf32> to vector<128x128xf32>
    %154 = arith.subf %150, %153 : vector<128x128xf32>
    %155 = math.exp %154 : vector<128x128xf32>
    %cst_103 = arith.constant dense<0.000000e+00> : vector<128xf32>
    %156 = vector.multi_reduction <add>, %155, %cst_103 [1] : vector<128x128xf32> to vector<128xf32>
    %157 = vector.shape_cast %156 : vector<128xf32> to vector<128x1xf32>
    %158 = tpu.reciprocal %157 {approx = true} : vector<128x1xf32> -> vector<128x1xf32>
    %159 = vector.broadcast %158 : vector<128x1xf32> to vector<128x128xf32>
    %160 = arith.mulf %155, %159 : vector<128x128xf32>
    %161 = arith.truncf %160 : vector<128x128xf32> to vector<128x128xbf16>
    %cst_104 = arith.constant dense<0.000000e+00> : vector<32x128xf32>
    %162 = tpu.matmul %147, %161, %cst_104 {dimension_numbers = #tpu.dot_dimension_numbers<[1], [1], [0], [0], [0, 0, 1, 0], [], []>} : vector<32x128xbf16>, vector<128x128xbf16>, vector<32x128xf32> -> vector<32x128xf32>
    %163 = arith.truncf %162 : vector<32x128xf32> to vector<32x128xbf16>
    %c96_105 = arith.constant 96 : index
    %c384_106 = arith.constant 384 : index
    %164 = vector.load %arg22[%c96_105, %c384_106] : memref<160x768xbf16, #tpu.memory_space<vmem>>, vector<32x128xbf16>
    tpu.vector_store %arg22[%c96_105, %c384_106], %163 {strides = array<i32>} : memref<160x768xbf16, #tpu.memory_space<vmem>>, vector<32x128xbf16>,
    %c0_107 = arith.constant 0 : index
    %c512 = arith.constant 512 : index
    %165 = vector.load %arg23[%c0_107, %c512] : memref<64x768xbf16, #tpu.memory_space<vmem>>, vector<16x128xbf16>
    %c16_108 = arith.constant 16 : index
    %c512_109 = arith.constant 512 : index
    %166 = vector.load %arg23[%c16_108, %c512_109] : memref<64x768xbf16, #tpu.memory_space<vmem>>, vector<16x128xbf16>
    %c32_110 = arith.constant 32 : index
    %c512_111 = arith.constant 512 : index
    %167 = vector.load %arg23[%c32_110, %c512_111] : memref<64x768xbf16, #tpu.memory_space<vmem>>, vector<32x128xbf16>
    %cst_112 = arith.constant dense<0.000000e+00> : vector<128x128xf32>
    %168 = tpu.matmul %165, %166, %cst_112 {dimension_numbers = #tpu.dot_dimension_numbers<[0], [0], [1], [1], [0, 1, 1, 1], [], []>} : vector<16x128xbf16>, vector<16x128xbf16>, vector<128x128xf32> -> vector<128x128xf32>
    %cst_113 = arith.constant 2.500000e-01 : f32
    %169 = vector.broadcast %cst_113 : f32 to vector<128x128xf32>
    %170 = arith.mulf %168, %169 : vector<128x128xf32>
    %cst_114 = arith.constant dense<0xFF800000> : vector<128xf32>
    %171 = vector.multi_reduction <maximumf>, %170, %cst_114 [1] : vector<128x128xf32> to vector<128xf32>
    %172 = vector.shape_cast %171 : vector<128xf32> to vector<128x1xf32>
    %173 = vector.broadcast %172 : vector<128x1xf32> to vector<128x128xf32>
    %174 = arith.subf %170, %173 : vector<128x128xf32>
    %175 = math.exp %174 : vector<128x128xf32>
    %cst_115 = arith.constant dense<0.000000e+00> : vector<128xf32>
    %176 = vector.multi_reduction <add>, %175, %cst_115 [1] : vector<128x128xf32> to vector<128xf32>
    %177 = vector.shape_cast %176 : vector<128xf32> to vector<128x1xf32>
    %178 = tpu.reciprocal %177 {approx = true} : vector<128x1xf32> -> vector<128x1xf32>
    %179 = vector.broadcast %178 : vector<128x1xf32> to vector<128x128xf32>
    %180 = arith.mulf %175, %179 : vector<128x128xf32>
    %181 = arith.truncf %180 : vector<128x128xf32> to vector<128x128xbf16>
    %cst_116 = arith.constant dense<0.000000e+00> : vector<32x128xf32>
    %182 = tpu.matmul %167, %181, %cst_116 {dimension_numbers = #tpu.dot_dimension_numbers<[1], [1], [0], [0], [0, 0, 1, 0], [], []>} : vector<32x128xbf16>, vector<128x128xbf16>, vector<32x128xf32> -> vector<32x128xf32>
    %183 = arith.truncf %182 : vector<32x128xf32> to vector<32x128xbf16>
    %c96_117 = arith.constant 96 : index
    %c512_118 = arith.constant 512 : index
    %184 = vector.load %arg22[%c96_117, %c512_118] : memref<160x768xbf16, #tpu.memory_space<vmem>>, vector<32x128xbf16>
    tpu.vector_store %arg22[%c96_117, %c512_118], %183 {strides = array<i32>} : memref<160x768xbf16, #tpu.memory_space<vmem>>, vector<32x128xbf16>,
    %c0_119 = arith.constant 0 : index
    %c640 = arith.constant 640 : index
    %185 = vector.load %arg23[%c0_119, %c640] : memref<64x768xbf16, #tpu.memory_space<vmem>>, vector<16x128xbf16>
    %c16_120 = arith.constant 16 : index
    %c640_121 = arith.constant 640 : index
    %186 = vector.load %arg23[%c16_120, %c640_121] : memref<64x768xbf16, #tpu.memory_space<vmem>>, vector<16x128xbf16>
    %c32_122 = arith.constant 32 : index
    %c640_123 = arith.constant 640 : index
    %187 = vector.load %arg23[%c32_122, %c640_123] : memref<64x768xbf16, #tpu.memory_space<vmem>>, vector<32x128xbf16>
    %cst_124 = arith.constant dense<0.000000e+00> : vector<128x128xf32>
    %188 = tpu.matmul %185, %186, %cst_124 {dimension_numbers = #tpu.dot_dimension_numbers<[0], [0], [1], [1], [0, 1, 1, 1], [], []>} : vector<16x128xbf16>, vector<16x128xbf16>, vector<128x128xf32> -> vector<128x128xf32>
    %cst_125 = arith.constant 2.500000e-01 : f32
    %189 = vector.broadcast %cst_125 : f32 to vector<128x128xf32>
    %190 = arith.mulf %188, %189 : vector<128x128xf32>
    %cst_126 = arith.constant dense<0xFF800000> : vector<128xf32>
    %191 = vector.multi_reduction <maximumf>, %190, %cst_126 [1] : vector<128x128xf32> to vector<128xf32>
    %192 = vector.shape_cast %191 : vector<128xf32> to vector<128x1xf32>
    %193 = vector.broadcast %192 : vector<128x1xf32> to vector<128x128xf32>
    %194 = arith.subf %190, %193 : vector<128x128xf32>
    %195 = math.exp %194 : vector<128x128xf32>
    %cst_127 = arith.constant dense<0.000000e+00> : vector<128xf32>
    %196 = vector.multi_reduction <add>, %195, %cst_127 [1] : vector<128x128xf32> to vector<128xf32>
    %197 = vector.shape_cast %196 : vector<128xf32> to vector<128x1xf32>
    %198 = tpu.reciprocal %197 {approx = true} : vector<128x1xf32> -> vector<128x1xf32>
    %199 = vector.broadcast %198 : vector<128x1xf32> to vector<128x128xf32>
    %200 = arith.mulf %195, %199 : vector<128x128xf32>
    %201 = arith.truncf %200 : vector<128x128xf32> to vector<128x128xbf16>
    %cst_128 = arith.constant dense<0.000000e+00> : vector<32x128xf32>
    %202 = tpu.matmul %187, %201, %cst_128 {dimension_numbers = #tpu.dot_dimension_numbers<[1], [1], [0], [0], [0, 0, 1, 0], [], []>} : vector<32x128xbf16>, vector<128x128xbf16>, vector<32x128xf32> -> vector<32x128xf32>
    %203 = arith.truncf %202 : vector<32x128xf32> to vector<32x128xbf16>
    %c96_129 = arith.constant 96 : index
    %c640_130 = arith.constant 640 : index
    %204 = vector.load %arg22[%c96_129, %c640_130] : memref<160x768xbf16, #tpu.memory_space<vmem>>, vector<32x128xbf16>
    tpu.vector_store %arg22[%c96_129, %c640_130], %203 {strides = array<i32>} : memref<160x768xbf16, #tpu.memory_space<vmem>>, vector<32x128xbf16>,
    %c0_131 = arith.constant 0 : index
    %c0_132 = arith.constant 0 : index
    %205 = vector.load %arg22[%c0_131, %c0_132] : memref<160x768xbf16, #tpu.memory_space<vmem>>, vector<160x512xbf16>
    %c0_133 = arith.constant 0 : index
    %c0_134 = arith.constant 0 : index
    %206 = vector.load %arg1[%c0_133, %c0_134] : memref<512x3xbf16, #tpu.memory_space<vmem>>, vector<512x3xbf16>
    %cst_135 = arith.constant dense<0.000000e+00> : vector<3x160xf32>
    %207 = tpu.matmul %206, %205, %cst_135 {dimension_numbers = #tpu.dot_dimension_numbers<[0], [1], [1], [0], [0, 1, 1, 0], [], []>} : vector<512x3xbf16>, vector<160x512xbf16>, vector<3x160xf32> -> vector<3x160xf32>
    %c0_136 = arith.constant 0 : index
    %c0_137 = arith.constant 0 : index
    %208 = vector.load %arg22[%c0_136, %c0_137] : memref<160x768xbf16, #tpu.memory_space<vmem>>, vector<160x128xbf16>
    %209 = arith.extf %208 : vector<160x128xbf16> to vector<160x128xf32>
    %c0_138 = arith.constant 0 : index
    %c128_139 = arith.constant 128 : index
    %210 = vector.load %arg22[%c0_138, %c128_139] : memref<160x768xbf16, #tpu.memory_space<vmem>>, vector<160x128xbf16>
    %211 = arith.extf %210 : vector<160x128xbf16> to vector<160x128xf32>
    %212 = arith.addf %209, %211 : vector<160x128xf32>
    %c0_140 = arith.constant 0 : index
    %c256_141 = arith.constant 256 : index
    %213 = vector.load %arg22[%c0_140, %c256_141] : memref<160x768xbf16, #tpu.memory_space<vmem>>, vector<160x128xbf16>
    %214 = arith.extf %213 : vector<160x128xbf16> to vector<160x128xf32>
    %215 = arith.addf %212, %214 : vector<160x128xf32>
    %c0_142 = arith.constant 0 : index
    %c384_143 = arith.constant 384 : index
    %216 = vector.load %arg22[%c0_142, %c384_143] : memref<160x768xbf16, #tpu.memory_space<vmem>>, vector<160x128xbf16>
    %217 = arith.extf %216 : vector<160x128xbf16> to vector<160x128xf32>
    %218 = arith.addf %215, %217 : vector<160x128xf32>
    %cst_144 = arith.constant 2.500000e-01 : f32
    %219 = vector.broadcast %cst_144 : f32 to vector<160x128xf32>
    %220 = arith.mulf %218, %219 : vector<160x128xf32>
    %221 = arith.truncf %220 : vector<160x128xf32> to vector<160x128xbf16>
    %c0_145 = arith.constant 0 : index
    %c0_146 = arith.constant 0 : index
    %222 = vector.load %arg16[%c0_145, %c0_146] : memref<160x64xbf16, #tpu.memory_space<vmem>>, vector<160x64xbf16>
    %c0_147 = arith.constant 0 : index
    %c0_148 = arith.constant 0 : index
    %223 = vector.load %arg17[%c0_147, %c0_148] : memref<64x160xbf16, #tpu.memory_space<vmem>>, vector<64x160xbf16>
    %c0_149 = arith.constant 0 : index
    %c0_150 = arith.constant 0 : index
    %224 = vector.load %arg18[%c0_149, %c0_150] : memref<64x160xbf16, #tpu.memory_space<vmem>>, vector<64x160xbf16>
    %c0_151 = arith.constant 0 : index
    %c0_152 = arith.constant 0 : index
    %225 = vector.load %arg19[%c0_151, %c0_152] : memref<64x160xbf16, #tpu.memory_space<vmem>>, vector<64x160xbf16>
    %cst_153 = arith.constant dense<0.000000e+00> : vector<64x128xf32>
    %226 = tpu.matmul %224, %221, %cst_153 {dimension_numbers = #tpu.dot_dimension_numbers<[1], [0], [0], [1], [0, 0, 1, 1], [], []>} : vector<64x160xbf16>, vector<160x128xbf16>, vector<64x128xf32> -> vector<64x128xf32>
    %227 = arith.truncf %226 : vector<64x128xf32> to vector<64x128xbf16>
    %c0_154 = arith.constant 0 : index
    %c512_155 = arith.constant 512 : index
    %228 = vector.load %arg22[%c0_154, %c512_155] : memref<160x768xbf16, #tpu.memory_space<vmem>>, vector<160x128xbf16>
    %cst_156 = arith.constant dense<0.000000e+00> : vector<64x128xf32>
    %229 = tpu.matmul %223, %228, %cst_156 {dimension_numbers = #tpu.dot_dimension_numbers<[1], [0], [0], [1], [0, 0, 1, 1], [], []>} : vector<64x160xbf16>, vector<160x128xbf16>, vector<64x128xf32> -> vector<64x128xf32>
    %230 = arith.truncf %229 : vector<64x128xf32> to vector<64x128xbf16>
    %231 = arith.truncf %207 : vector<3x160xf32> to vector<3x160xbf16>
    %cst_157 = arith.constant dense<0.000000e+00> : vector<3x64xf32>
    %232 = tpu.matmul %231, %222, %cst_157 {dimension_numbers = #tpu.dot_dimension_numbers<[1], [0], [0], [1], [0, 0, 1, 1], [], []>} : vector<3x160xbf16>, vector<160x64xbf16>, vector<3x64xf32> -> vector<3x64xf32>
    %233 = arith.truncf %232 : vector<3x64xf32> to vector<3x64xbf16>
    %cst_158 = arith.constant dense<0.000000e+00> : vector<3x128xf32>
    %234 = tpu.matmul %233, %230, %cst_158 {dimension_numbers = #tpu.dot_dimension_numbers<[1], [0], [0], [1], [0, 0, 1, 1], [], []>} : vector<3x64xbf16>, vector<64x128xbf16>, vector<3x128xf32> -> vector<3x128xf32>
    %cst_159 = arith.constant 1.250000e-01 : f32
    %235 = vector.broadcast %cst_159 : f32 to vector<3x128xf32>
    %236 = arith.mulf %234, %235 : vector<3x128xf32>
    %cst_160 = arith.constant dense<0xFF800000> : vector<3xf32>
    %237 = vector.multi_reduction <maximumf>, %236, %cst_160 [1] : vector<3x128xf32> to vector<3xf32>
    %238 = vector.shape_cast %237 : vector<3xf32> to vector<3x1xf32>
    %239 = vector.broadcast %238 : vector<3x1xf32> to vector<3x128xf32>
    %240 = arith.subf %236, %239 : vector<3x128xf32>
    %241 = math.exp %240 : vector<3x128xf32>
    %cst_161 = arith.constant dense<0.000000e+00> : vector<3xf32>
    %242 = vector.multi_reduction <add>, %241, %cst_161 [1] : vector<3x128xf32> to vector<3xf32>
    %243 = vector.shape_cast %242 : vector<3xf32> to vector<3x1xf32>
    %244 = tpu.reciprocal %243 {approx = true} : vector<3x1xf32> -> vector<3x1xf32>
    %245 = vector.broadcast %244 : vector<3x1xf32> to vector<3x128xf32>
    %246 = arith.mulf %241, %245 : vector<3x128xf32>
    %247 = arith.truncf %246 : vector<3x128xf32> to vector<3x128xbf16>
    %cst_162 = arith.constant dense<0.000000e+00> : vector<3x64xf32>
    %248 = tpu.matmul %247, %227, %cst_162 {dimension_numbers = #tpu.dot_dimension_numbers<[1], [1], [0], [0], [0, 0, 1, 0], [], []>} : vector<3x128xbf16>, vector<64x128xbf16>, vector<3x64xf32> -> vector<3x64xf32>
    %249 = arith.truncf %248 : vector<3x64xf32> to vector<3x64xbf16>
    %cst_163 = arith.constant dense<0.000000e+00> : vector<3x160xf32>
    %250 = tpu.matmul %249, %225, %cst_163 {dimension_numbers = #tpu.dot_dimension_numbers<[1], [0], [0], [1], [0, 0, 1, 1], [], []>} : vector<3x64xbf16>, vector<64x160xbf16>, vector<3x160xf32> -> vector<3x160xf32>
    %251 = arith.addf %207, %250 : vector<3x160xf32>
    %252 = arith.truncf %251 : vector<3x160xf32> to vector<3x160xbf16>
    %cst_164 = arith.constant dense<0.000000e+00> : vector<3x64xf32>
    %253 = tpu.matmul %252, %222, %cst_164 {dimension_numbers = #tpu.dot_dimension_numbers<[1], [0], [0], [1], [0, 0, 1, 1], [], []>} : vector<3x160xbf16>, vector<160x64xbf16>, vector<3x64xf32> -> vector<3x64xf32>
    %254 = arith.truncf %253 : vector<3x64xf32> to vector<3x64xbf16>
    %cst_165 = arith.constant dense<0.000000e+00> : vector<3x128xf32>
    %255 = tpu.matmul %254, %230, %cst_165 {dimension_numbers = #tpu.dot_dimension_numbers<[1], [0], [0], [1], [0, 0, 1, 1], [], []>} : vector<3x64xbf16>, vector<64x128xbf16>, vector<3x128xf32> -> vector<3x128xf32>
    %cst_166 = arith.constant 1.250000e-01 : f32
    %256 = vector.broadcast %cst_166 : f32 to vector<3x128xf32>
    %257 = arith.mulf %255, %256 : vector<3x128xf32>
    %cst_167 = arith.constant dense<0xFF800000> : vector<3xf32>
    %258 = vector.multi_reduction <maximumf>, %257, %cst_167 [1] : vector<3x128xf32> to vector<3xf32>
    %259 = vector.shape_cast %258 : vector<3xf32> to vector<3x1xf32>
    %260 = vector.broadcast %259 : vector<3x1xf32> to vector<3x128xf32>
    %261 = arith.subf %257, %260 : vector<3x128xf32>
    %262 = math.exp %261 : vector<3x128xf32>
    %cst_168 = arith.constant dense<0.000000e+00> : vector<3xf32>
    %263 = vector.multi_reduction <add>, %262, %cst_168 [1] : vector<3x128xf32> to vector<3xf32>
    %264 = vector.shape_cast %263 : vector<3xf32> to vector<3x1xf32>
    %265 = tpu.reciprocal %264 {approx = true} : vector<3x1xf32> -> vector<3x1xf32>
    %266 = vector.broadcast %265 : vector<3x1xf32> to vector<3x128xf32>
    %267 = arith.mulf %262, %266 : vector<3x128xf32>
    %268 = arith.truncf %267 : vector<3x128xf32> to vector<3x128xbf16>
    %cst_169 = arith.constant dense<0.000000e+00> : vector<3x64xf32>
    %269 = tpu.matmul %268, %227, %cst_169 {dimension_numbers = #tpu.dot_dimension_numbers<[1], [1], [0], [0], [0, 0, 1, 0], [], []>} : vector<3x128xbf16>, vector<64x128xbf16>, vector<3x64xf32> -> vector<3x64xf32>
    %270 = arith.truncf %269 : vector<3x64xf32> to vector<3x64xbf16>
    %cst_170 = arith.constant dense<0.000000e+00> : vector<3x160xf32>
    %271 = tpu.matmul %270, %225, %cst_170 {dimension_numbers = #tpu.dot_dimension_numbers<[1], [0], [0], [1], [0, 0, 1, 1], [], []>} : vector<3x64xbf16>, vector<64x160xbf16>, vector<3x160xf32> -> vector<3x160xf32>
    %272 = arith.addf %251, %271 : vector<3x160xf32>
    %273 = arith.addf %207, %251 : vector<3x160xf32>
    %274 = arith.addf %273, %272 : vector<3x160xf32>
    %cst_171 = arith.constant 0.333333343 : f32
    %275 = vector.broadcast %cst_171 : f32 to vector<3x160xf32>
    %276 = arith.mulf %274, %275 : vector<3x160xf32>
    %277 = arith.extf %228 : vector<160x128xbf16> to vector<160x128xf32>
    %278 = arith.truncf %276 : vector<3x160xf32> to vector<3x160xbf16>
    %cst_172 = arith.constant dense<0.000000e+00> : vector<3x128xf32>
    %279 = tpu.matmul %278, %228, %cst_172 {dimension_numbers = #tpu.dot_dimension_numbers<[1], [0], [0], [1], [0, 0, 1, 1], [], []>} : vector<3x160xbf16>, vector<160x128xbf16>, vector<3x128xf32> -> vector<3x128xf32>
    %280 = arith.mulf %277, %277 : vector<160x128xf32>
    %cst_173 = arith.constant dense<0.000000e+00> : vector<128xf32>
    %281 = vector.multi_reduction <add>, %280, %cst_173 [0] : vector<160x128xf32> to vector<128xf32>
    %282 = vector.shape_cast %281 : vector<128xf32> to vector<1x128xf32>
    %283 = math.sqrt %282 : vector<1x128xf32>
    %284 = arith.mulf %276, %276 : vector<3x160xf32>
    %cst_174 = arith.constant dense<0.000000e+00> : vector<3xf32>
    %285 = vector.multi_reduction <add>, %284, %cst_174 [1] : vector<3x160xf32> to vector<3xf32>
    %286 = vector.shape_cast %285 : vector<3xf32> to vector<3x1xf32>
    %287 = math.sqrt %286 : vector<3x1xf32>
    %cst_175 = arith.constant 9.99999993E-9 : f32
    %288 = vector.broadcast %cst_175 : f32 to vector<3x1xf32>
    %289 = arith.maximumf %287, %288 : vector<3x1xf32>
    %cst_176 = arith.constant 9.99999993E-9 : f32
    %290 = vector.broadcast %cst_176 : f32 to vector<1x128xf32>
    %291 = arith.maximumf %283, %290 : vector<1x128xf32>
    %292 = vector.broadcast %289 : vector<3x1xf32> to vector<3x128xf32>
    %293 = vector.broadcast %291 : vector<1x128xf32> to vector<3x128xf32>
    %294 = arith.mulf %292, %293 : vector<3x128xf32>
    %cst_177 = arith.constant 1.000000e+01 : f32
    %295 = vector.broadcast %cst_177 : f32 to vector<3x128xf32>
    %296 = arith.mulf %295, %279 : vector<3x128xf32>
    %297 = tpu.reciprocal %294 {approx = true} : vector<3x128xf32> -> vector<3x128xf32>
    %298 = arith.mulf %296, %297 : vector<3x128xf32>
    %c0_178 = arith.constant 0 : index
    %c0_179 = arith.constant 0 : index
    %c0_180 = arith.constant 0 : index
    %299 = vector.load %arg20[%c0_178, %c0_179, %c0_180] : memref<2x3x128xf32, #tpu.memory_space<vmem>>, vector<1x3x128xf32>
    %300 = vector.shape_cast %299 : vector<1x3x128xf32> to vector<3x128xf32>
    %301 = vector.shape_cast %298 : vector<3x128xf32> to vector<1x3x128xf32>
    tpu.vector_store %arg20[%c0_178, %c0_179, %c0_180], %301 {strides = array<i32>} : memref<2x3x128xf32, #tpu.memory_space<vmem>>, vector<1x3x128xf32>,
    %c0_181 = arith.constant 0 : index
    %c0_182 = arith.constant 0 : index
    %c0_183 = arith.constant 0 : index
    %302 = vector.load %arg21[%c0_181, %c0_182, %c0_183] : memref<2x3x160xf32, #tpu.memory_space<vmem>>, vector<1x3x160xf32>
    %303 = vector.shape_cast %302 : vector<1x3x160xf32> to vector<3x160xf32>
    %304 = vector.shape_cast %251 : vector<3x160xf32> to vector<1x3x160xf32>
    tpu.vector_store %arg21[%c0_181, %c0_182, %c0_183], %304 {strides = array<i32>} : memref<2x3x160xf32, #tpu.memory_space<vmem>>, vector<1x3x160xf32>,
    %c0_184 = arith.constant 0 : index
    %c640_185 = arith.constant 640 : index
    %305 = vector.load %arg22[%c0_184, %c640_185] : memref<160x768xbf16, #tpu.memory_space<vmem>>, vector<160x128xbf16>
    %cst_186 = arith.constant dense<0.000000e+00> : vector<64x128xf32>
    %306 = tpu.matmul %223, %305, %cst_186 {dimension_numbers = #tpu.dot_dimension_numbers<[1], [0], [0], [1], [0, 0, 1, 1], [], []>} : vector<64x160xbf16>, vector<160x128xbf16>, vector<64x128xf32> -> vector<64x128xf32>
    %307 = arith.truncf %306 : vector<64x128xf32> to vector<64x128xbf16>
    %308 = arith.truncf %207 : vector<3x160xf32> to vector<3x160xbf16>
    %cst_187 = arith.constant dense<0.000000e+00> : vector<3x64xf32>
    %309 = tpu.matmul %308, %222, %cst_187 {dimension_numbers = #tpu.dot_dimension_numbers<[1], [0], [0], [1], [0, 0, 1, 1], [], []>} : vector<3x160xbf16>, vector<160x64xbf16>, vector<3x64xf32> -> vector<3x64xf32>
    %310 = arith.truncf %309 : vector<3x64xf32> to vector<3x64xbf16>
    %cst_188 = arith.constant dense<0.000000e+00> : vector<3x128xf32>
    %311 = tpu.matmul %310, %307, %cst_188 {dimension_numbers = #tpu.dot_dimension_numbers<[1], [0], [0], [1], [0, 0, 1, 1], [], []>} : vector<3x64xbf16>, vector<64x128xbf16>, vector<3x128xf32> -> vector<3x128xf32>
    %cst_189 = arith.constant 1.250000e-01 : f32
    %312 = vector.broadcast %cst_189 : f32 to vector<3x128xf32>
    %313 = arith.mulf %311, %312 : vector<3x128xf32>
    %cst_190 = arith.constant dense<0xFF800000> : vector<3xf32>
    %314 = vector.multi_reduction <maximumf>, %313, %cst_190 [1] : vector<3x128xf32> to vector<3xf32>
    %315 = vector.shape_cast %314 : vector<3xf32> to vector<3x1xf32>
    %316 = vector.broadcast %315 : vector<3x1xf32> to vector<3x128xf32>
    %317 = arith.subf %313, %316 : vector<3x128xf32>
    %318 = math.exp %317 : vector<3x128xf32>
    %cst_191 = arith.constant dense<0.000000e+00> : vector<3xf32>
    %319 = vector.multi_reduction <add>, %318, %cst_191 [1] : vector<3x128xf32> to vector<3xf32>
    %320 = vector.shape_cast %319 : vector<3xf32> to vector<3x1xf32>
    %321 = tpu.reciprocal %320 {approx = true} : vector<3x1xf32> -> vector<3x1xf32>
    %322 = vector.broadcast %321 : vector<3x1xf32> to vector<3x128xf32>
    %323 = arith.mulf %318, %322 : vector<3x128xf32>
    %324 = arith.truncf %323 : vector<3x128xf32> to vector<3x128xbf16>
    %cst_192 = arith.constant dense<0.000000e+00> : vector<3x64xf32>
    %325 = tpu.matmul %324, %227, %cst_192 {dimension_numbers = #tpu.dot_dimension_numbers<[1], [1], [0], [0], [0, 0, 1, 0], [], []>} : vector<3x128xbf16>, vector<64x128xbf16>, vector<3x64xf32> -> vector<3x64xf32>
    %326 = arith.truncf %325 : vector<3x64xf32> to vector<3x64xbf16>
    %cst_193 = arith.constant dense<0.000000e+00> : vector<3x160xf32>
    %327 = tpu.matmul %326, %225, %cst_193 {dimension_numbers = #tpu.dot_dimension_numbers<[1], [0], [0], [1], [0, 0, 1, 1], [], []>} : vector<3x64xbf16>, vector<64x160xbf16>, vector<3x160xf32> -> vector<3x160xf32>
    %328 = arith.addf %207, %327 : vector<3x160xf32>
    %329 = arith.truncf %328 : vector<3x160xf32> to vector<3x160xbf16>
    %cst_194 = arith.constant dense<0.000000e+00> : vector<3x64xf32>
    %330 = tpu.matmul %329, %222, %cst_194 {dimension_numbers = #tpu.dot_dimension_numbers<[1], [0], [0], [1], [0, 0, 1, 1], [], []>} : vector<3x160xbf16>, vector<160x64xbf16>, vector<3x64xf32> -> vector<3x64xf32>
    %331 = arith.truncf %330 : vector<3x64xf32> to vector<3x64xbf16>
    %cst_195 = arith.constant dense<0.000000e+00> : vector<3x128xf32>
    %332 = tpu.matmul %331, %307, %cst_195 {dimension_numbers = #tpu.dot_dimension_numbers<[1], [0], [0], [1], [0, 0, 1, 1], [], []>} : vector<3x64xbf16>, vector<64x128xbf16>, vector<3x128xf32> -> vector<3x128xf32>
    %cst_196 = arith.constant 1.250000e-01 : f32
    %333 = vector.broadcast %cst_196 : f32 to vector<3x128xf32>
    %334 = arith.mulf %332, %333 : vector<3x128xf32>
    %cst_197 = arith.constant dense<0xFF800000> : vector<3xf32>
    %335 = vector.multi_reduction <maximumf>, %334, %cst_197 [1] : vector<3x128xf32> to vector<3xf32>
    %336 = vector.shape_cast %335 : vector<3xf32> to vector<3x1xf32>
    %337 = vector.broadcast %336 : vector<3x1xf32> to vector<3x128xf32>
    %338 = arith.subf %334, %337 : vector<3x128xf32>
    %339 = math.exp %338 : vector<3x128xf32>
    %cst_198 = arith.constant dense<0.000000e+00> : vector<3xf32>
    %340 = vector.multi_reduction <add>, %339, %cst_198 [1] : vector<3x128xf32> to vector<3xf32>
    %341 = vector.shape_cast %340 : vector<3xf32> to vector<3x1xf32>
    %342 = tpu.reciprocal %341 {approx = true} : vector<3x1xf32> -> vector<3x1xf32>
    %343 = vector.broadcast %342 : vector<3x1xf32> to vector<3x128xf32>
    %344 = arith.mulf %339, %343 : vector<3x128xf32>
    %345 = arith.truncf %344 : vector<3x128xf32> to vector<3x128xbf16>
    %cst_199 = arith.constant dense<0.000000e+00> : vector<3x64xf32>
    %346 = tpu.matmul %345, %227, %cst_199 {dimension_numbers = #tpu.dot_dimension_numbers<[1], [1], [0], [0], [0, 0, 1, 0], [], []>} : vector<3x128xbf16>, vector<64x128xbf16>, vector<3x64xf32> -> vector<3x64xf32>
    %347 = arith.truncf %346 : vector<3x64xf32> to vector<3x64xbf16>
    %cst_200 = arith.constant dense<0.000000e+00> : vector<3x160xf32>
    %348 = tpu.matmul %347, %225, %cst_200 {dimension_numbers = #tpu.dot_dimension_numbers<[1], [0], [0], [1], [0, 0, 1, 1], [], []>} : vector<3x64xbf16>, vector<64x160xbf16>, vector<3x160xf32> -> vector<3x160xf32>
    %349 = arith.addf %328, %348 : vector<3x160xf32>
    %350 = arith.addf %207, %328 : vector<3x160xf32>
    %351 = arith.addf %350, %349 : vector<3x160xf32>
    %cst_201 = arith.constant 0.333333343 : f32
    %352 = vector.broadcast %cst_201 : f32 to vector<3x160xf32>
    %353 = arith.mulf %351, %352 : vector<3x160xf32>
    %354 = arith.extf %305 : vector<160x128xbf16> to vector<160x128xf32>
    %355 = arith.truncf %353 : vector<3x160xf32> to vector<3x160xbf16>
    %cst_202 = arith.constant dense<0.000000e+00> : vector<3x128xf32>
    %356 = tpu.matmul %355, %305, %cst_202 {dimension_numbers = #tpu.dot_dimension_numbers<[1], [0], [0], [1], [0, 0, 1, 1], [], []>} : vector<3x160xbf16>, vector<160x128xbf16>, vector<3x128xf32> -> vector<3x128xf32>
    %357 = arith.mulf %354, %354 : vector<160x128xf32>
    %cst_203 = arith.constant dense<0.000000e+00> : vector<128xf32>
    %358 = vector.multi_reduction <add>, %357, %cst_203 [0] : vector<160x128xf32> to vector<128xf32>
    %359 = vector.shape_cast %358 : vector<128xf32> to vector<1x128xf32>
    %360 = math.sqrt %359 : vector<1x128xf32>
    %361 = arith.mulf %353, %353 : vector<3x160xf32>
    %cst_204 = arith.constant dense<0.000000e+00> : vector<3xf32>
    %362 = vector.multi_reduction <add>, %361, %cst_204 [1] : vector<3x160xf32> to vector<3xf32>
    %363 = vector.shape_cast %362 : vector<3xf32> to vector<3x1xf32>
    %364 = math.sqrt %363 : vector<3x1xf32>
    %cst_205 = arith.constant 9.99999993E-9 : f32
    %365 = vector.broadcast %cst_205 : f32 to vector<3x1xf32>
    %366 = arith.maximumf %364, %365 : vector<3x1xf32>
    %cst_206 = arith.constant 9.99999993E-9 : f32
    %367 = vector.broadcast %cst_206 : f32 to vector<1x128xf32>
    %368 = arith.maximumf %360, %367 : vector<1x128xf32>
    %369 = vector.broadcast %366 : vector<3x1xf32> to vector<3x128xf32>
    %370 = vector.broadcast %368 : vector<1x128xf32> to vector<3x128xf32>
    %371 = arith.mulf %369, %370 : vector<3x128xf32>
    %cst_207 = arith.constant 1.000000e+01 : f32
    %372 = vector.broadcast %cst_207 : f32 to vector<3x128xf32>
    %373 = arith.mulf %372, %356 : vector<3x128xf32>
    %374 = tpu.reciprocal %371 {approx = true} : vector<3x128xf32> -> vector<3x128xf32>
    %375 = arith.mulf %373, %374 : vector<3x128xf32>
    %c1 = arith.constant 1 : index
    %c0_208 = arith.constant 0 : index
    %c0_209 = arith.constant 0 : index
    %376 = vector.load %arg20[%c1, %c0_208, %c0_209] : memref<2x3x128xf32, #tpu.memory_space<vmem>>, vector<1x3x128xf32>
    %377 = vector.shape_cast %376 : vector<1x3x128xf32> to vector<3x128xf32>
    %378 = vector.shape_cast %375 : vector<3x128xf32> to vector<1x3x128xf32>
    tpu.vector_store %arg20[%c1, %c0_208, %c0_209], %378 {strides = array<i32>} : memref<2x3x128xf32, #tpu.memory_space<vmem>>, vector<1x3x128xf32>,
    %c1_210 = arith.constant 1 : index
    %c0_211 = arith.constant 0 : index
    %c0_212 = arith.constant 0 : index
    %379 = vector.load %arg21[%c1_210, %c0_211, %c0_212] : memref<2x3x160xf32, #tpu.memory_space<vmem>>, vector<1x3x160xf32>
    %380 = vector.shape_cast %379 : vector<1x3x160xf32> to vector<3x160xf32>
    %381 = vector.shape_cast %328 : vector<3x160xf32> to vector<1x3x160xf32>
    tpu.vector_store %arg21[%c1_210, %c0_211, %c0_212], %381 {strides = array<i32>} : memref<2x3x160xf32, #tpu.memory_space<vmem>>, vector<1x3x160xf32>,
    return
  }
}

</mosaic_0001>

<llo_original>
// kernel: tpu_custom_call.1
$region0: #{tpu_custom_call.1}
  #allocation0 [shape = 'u32[]', space=smem, size = 0x4, offset = 0x4, fixed_abs, tag = 'smem constant byte address 0x4 - core index']
  #allocation1 [shape = 'u32[72,128]{1,0:T(1,128)}', space=vmem, size = 0x9000, scoped, tag = 'internal scratch']
  #allocation2 [shape = 'bf16[160,768]{1,0:T(8,128)(2,1)}', space=vmem, size = 0x3c000, scoped, tag = 'scratch operand']
  #allocation3 [shape = 'bf16[64,768]{1,0:T(8,128)(2,1)}', space=vmem, size = 0x18000, scoped, tag = 'scratch operand']
  %s0 = inlined_call_operand.vmem [shape: bf16[16,768], index: 0, kind: input, shape index: {}]
  %s1 = inlined_call_operand.vmem [shape: bf16[512,3], index: 1, kind: input, shape index: {}]
  %s2 = inlined_call_operand.vmem [shape: bf16[32,16], index: 2, kind: input, shape index: {}]
  %s3 = inlined_call_operand.vmem [shape: f32[32,1], index: 3, kind: input, shape index: {}]
  %s4 = inlined_call_operand.vmem [shape: bf16[32,32], index: 4, kind: input, shape index: {}]
  %s5 = inlined_call_operand.vmem [shape: f32[32,1], index: 5, kind: input, shape index: {}]
  %s6 = inlined_call_operand.vmem [shape: bf16[32,32], index: 6, kind: input, shape index: {}]
  %s7 = inlined_call_operand.vmem [shape: f32[32,1], index: 7, kind: input, shape index: {}]
  %s8 = inlined_call_operand.vmem [shape: bf16[64,96], index: 8, kind: input, shape index: {}]
  %s9 = inlined_call_operand.vmem [shape: f32[64,1], index: 9, kind: input, shape index: {}]
  %s10 = inlined_call_operand.vmem [shape: bf16[64,64], index: 10, kind: input, shape index: {}]
  %s11 = inlined_call_operand.vmem [shape: f32[64,1], index: 11, kind: input, shape index: {}]
  %s12 = inlined_call_operand.vmem [shape: bf16[112,64], index: 12, kind: input, shape index: {}]
  %s13 = inlined_call_operand.vmem [shape: f32[112,1], index: 13, kind: input, shape index: {}]
  %s14 = inlined_call_operand.vmem [shape: bf16[32,48], index: 14, kind: input, shape index: {}]
  %s15 = inlined_call_operand.vmem [shape: f32[32,1], index: 15, kind: input, shape index: {}]
  %s16 = inlined_call_operand.vmem [shape: bf16[160,64], index: 16, kind: input, shape index: {}]
  %s17 = inlined_call_operand.vmem [shape: bf16[64,160], index: 17, kind: input, shape index: {}]
  %s18 = inlined_call_operand.vmem [shape: bf16[64,160], index: 18, kind: input, shape index: {}]
  %s19 = inlined_call_operand.vmem [shape: bf16[64,160], index: 19, kind: input, shape index: {}]
  %s20 = inlined_call_operand.vmem [shape: f32[2,3,128], index: 20, kind: output, shape index: {0}]
  %s21 = inlined_call_operand.vmem [shape: f32[2,3,160], index: 21, kind: output, shape index: {1}]
  %22 = xla_tuple %s20, %s21
  %s23 = sld [smem:[#allocation0]]
  $region98: #{tpu_custom_call.1} parent=0
    _
  %s25 = ssub.s32 1, %s23
  %s26 = scalar_select 0, %s25, %s23
  // Predicated region
  $region2: #{tpu_custom_call.1} parent=0 // pred_check
    _
  $region3: #{tpu_custom_call.1} parent=0 // pred_check_branch
    %28 = sbr.rel (0) target = $region5
  $region4: #{tpu_custom_call.1} parent=0 // pred_region
    _
  $region5: #{tpu_custom_call.1} parent=0 // pred_fallthru
    _
  // Predicated region
  $region6: #{tpu_custom_call.1} parent=0 // pred_check
    _
  $region7: #{tpu_custom_call.1} parent=0 // pred_check_branch
    %30 = sbr.rel (0) target = $region9
  $region8: #{tpu_custom_call.1} parent=0 // pred_region
    _
  $region9: #{tpu_custom_call.1} parent=0 // pred_fallthru
    _
  // Predicated region
  $region10: #{tpu_custom_call.1} parent=0 // pred_check
    _
  $region11: #{tpu_custom_call.1} parent=0 // pred_check_branch
    %32 = sbr.rel (0) target = $region13
  $region12: #{tpu_custom_call.1} parent=0 // pred_region
    _
  $region13: #{tpu_custom_call.1} parent=0 // pred_fallthru
    _
  // Predicated region
  $region14: #{tpu_custom_call.1} parent=0 // pred_check
    _
  $region15: #{tpu_custom_call.1} parent=0 // pred_check_branch
    %34 = sbr.rel (0) target = $region17
  $region16: #{tpu_custom_call.1} parent=0 // pred_region
    _
  $region17: #{tpu_custom_call.1} parent=0 // pred_fallthru
    _
  // Predicated region
  $region18: #{tpu_custom_call.1} parent=0 // pred_check
    _
  $region19: #{tpu_custom_call.1} parent=0 // pred_check_branch
    %36 = sbr.rel (0) target = $region21
  $region20: #{tpu_custom_call.1} parent=0 // pred_region
    _
  $region21: #{tpu_custom_call.1} parent=0 // pred_fallthru
    _
  // Predicated region
  $region22: #{tpu_custom_call.1} parent=0 // pred_check
    _
  $region23: #{tpu_custom_call.1} parent=0 // pred_check_branch
    %38 = sbr.rel (0) target = $region25
  $region24: #{tpu_custom_call.1} parent=0 // pred_region
    _
  $region25: #{tpu_custom_call.1} parent=0 // pred_fallthru
    _
  // Predicated region
  $region26: #{tpu_custom_call.1} parent=0 // pred_check
    _
  $region27: #{tpu_custom_call.1} parent=0 // pred_check_branch
    %40 = sbr.rel (0) target = $region29
  $region28: #{tpu_custom_call.1} parent=0 // pred_region
    _
  $region29: #{tpu_custom_call.1} parent=0 // pred_fallthru
    _
  // Predicated region
  $region30: #{tpu_custom_call.1} parent=0 // pred_check
    _
  $region31: #{tpu_custom_call.1} parent=0 // pred_check_branch
    %42 = sbr.rel (0) target = $region33
  $region32: #{tpu_custom_call.1} parent=0 // pred_region
    _
  $region33: #{tpu_custom_call.1} parent=0 // pred_fallthru
    _
  // Predicated region
  $region34: #{tpu_custom_call.1} parent=0 // pred_check
    _
  $region35: #{tpu_custom_call.1} parent=0 // pred_check_branch
    %44 = sbr.rel (0) target = $region37
  $region36: #{tpu_custom_call.1} parent=0 // pred_region
    _
  $region37: #{tpu_custom_call.1} parent=0 // pred_fallthru
    _
  // Predicated region
  $region38: #{tpu_custom_call.1} parent=0 // pred_check
    _
  $region39: #{tpu_custom_call.1} parent=0 // pred_check_branch
    %46 = sbr.rel (0) target = $region41
  $region40: #{tpu_custom_call.1} parent=0 // pred_region
    _
  $region41: #{tpu_custom_call.1} parent=0 // pred_fallthru
    _
  // Predicated region
  $region42: #{tpu_custom_call.1} parent=0 // pred_check
    _
  $region43: #{tpu_custom_call.1} parent=0 // pred_check_branch
    %48 = sbr.rel (0) target = $region45
  $region44: #{tpu_custom_call.1} parent=0 // pred_region
    _
  $region45: #{tpu_custom_call.1} parent=0 // pred_fallthru
    _
  // Predicated region
  $region46: #{tpu_custom_call.1} parent=0 // pred_check
    _
  $region47: #{tpu_custom_call.1} parent=0 // pred_check_branch
    %50 = sbr.rel (0) target = $region49
  $region48: #{tpu_custom_call.1} parent=0 // pred_region
    _
  $region49: #{tpu_custom_call.1} parent=0 // pred_fallthru
    _
  // Predicated region
  $region50: #{tpu_custom_call.1} parent=0 // pred_check
    _
  $region51: #{tpu_custom_call.1} parent=0 // pred_check_branch
    %52 = sbr.rel (0) target = $region53
  $region52: #{tpu_custom_call.1} parent=0 // pred_region
    _
  $region53: #{tpu_custom_call.1} parent=0 // pred_fallthru
    _
  // Predicated region
  $region54: #{tpu_custom_call.1} parent=0 // pred_check
    _
  $region55: #{tpu_custom_call.1} parent=0 // pred_check_branch
    %54 = sbr.rel (0) target = $region57
  $region56: #{tpu_custom_call.1} parent=0 // pred_region
    _
  $region57: #{tpu_custom_call.1} parent=0 // pred_fallthru
    _
  // Predicated region
  $region58: #{tpu_custom_call.1} parent=0 // pred_check
    _
  $region59: #{tpu_custom_call.1} parent=0 // pred_check_branch
    %56 = sbr.rel (0) target = $region61
  $region60: #{tpu_custom_call.1} parent=0 // pred_region
    _
  $region61: #{tpu_custom_call.1} parent=0 // pred_fallthru
    _
  // Predicated region
  $region62: #{tpu_custom_call.1} parent=0 // pred_check
    _
  $region63: #{tpu_custom_call.1} parent=0 // pred_check_branch
    %58 = sbr.rel (0) target = $region65
  $region64: #{tpu_custom_call.1} parent=0 // pred_region
    _
  $region65: #{tpu_custom_call.1} parent=0 // pred_fallthru
    _
  // Predicated region
  $region66: #{tpu_custom_call.1} parent=0 // pred_check
    _
  $region67: #{tpu_custom_call.1} parent=0 // pred_check_branch
    %60 = sbr.rel (0) target = $region69
  $region68: #{tpu_custom_call.1} parent=0 // pred_region
    _
  $region69: #{tpu_custom_call.1} parent=0 // pred_fallthru
    _
  // Predicated region
  $region70: #{tpu_custom_call.1} parent=0 // pred_check
    _
  $region71: #{tpu_custom_call.1} parent=0 // pred_check_branch
    %62 = sbr.rel (0) target = $region73
  $region72: #{tpu_custom_call.1} parent=0 // pred_region
    _
  $region73: #{tpu_custom_call.1} parent=0 // pred_fallthru
    _
  // Predicated region
  $region74: #{tpu_custom_call.1} parent=0 // pred_check
    _
  $region75: #{tpu_custom_call.1} parent=0 // pred_check_branch
    %64 = sbr.rel (0) target = $region77
  $region76: #{tpu_custom_call.1} parent=0 // pred_region
    _
  $region77: #{tpu_custom_call.1} parent=0 // pred_fallthru
    _
  // Predicated region
  $region78: #{tpu_custom_call.1} parent=0 // pred_check
    _
  $region79: #{tpu_custom_call.1} parent=0 // pred_check_branch
    %66 = sbr.rel (0) target = $region81
  $region80: #{tpu_custom_call.1} parent=0 // pred_region
    _
  $region81: #{tpu_custom_call.1} parent=0 // pred_fallthru
    _
  %v68 = vld [vmem:[%s0] sm:$0xff]
  %v69 = vld [vmem:[%s0 + $0x8] sm:$0xff]
  %v70 = vld [vmem:[%s0 + $0x10] sm:$0xff]
  %v71 = vld [vmem:[%s0 + $0x18] sm:$0xff]
  %v72 = vld [vmem:[%s0 + $0x20] sm:$0xff]
  %v73 = vld [vmem:[%s0 + $0x28] sm:$0xff]
  %v74 = vld [vmem:[%s2] sm:$0xf]
  %v75 = vld [vmem:[%s2 + $0x4] sm:$0xf]
  %v76 = vld [vmem:[%s2 + $0x8] sm:$0xf]
  %v77 = vld [vmem:[%s2 + $0xc] sm:$0xf]
  %v78 = vld [vmem:[%s3] sm:$0xff]
  %v79 = vld [vmem:[%s3 + $0x8] sm:$0xff]
  %v80 = vld [vmem:[%s3 + $0x10] sm:$0xff]
  %v81 = vld [vmem:[%s3 + $0x18] sm:$0xff]
  %83 = vset.pattern.permute.xlu0 0
  %84 = vperm.xlu0 %83, %v78
  %v85 = vpop.permute.xlu0 %84
  %88 = vset.pattern.permute.xlu0 0
  %89 = vperm.xlu0 %88, %v79
  %v90 = vpop.permute.xlu0 %89
  %93 = vset.pattern.permute.xlu0 0
  %94 = vperm.xlu0 %93, %v80
  %v95 = vpop.permute.xlu0 %94
  %98 = vset.pattern.permute.xlu0 0
  %99 = vperm.xlu0 %98, %v81
  %v100 = vpop.permute.xlu0 %99
  %v106 = vunpack.c.l.b16 %v74
  %v107 = vunpack.c.l.b16 %v75
  %v108 = vunpack.c.l.b16 %v76
  %v109 = vunpack.c.l.b16 %v77
  %v110 = vpack.c.b16 %v107, %v106
  %v111 = vpack.c.b16 %v109, %v108
  %v118 = vunpack.c.l.b16 %v68
  %v119 = vunpack.c.h.b16 %v68
  %v120 = vunpack.c.l.b16 %v69
  %v121 = vunpack.c.h.b16 %v69
  %v122 = vunpack.c.l.b16 %v70
  %v123 = vunpack.c.h.b16 %v70
  %v124 = vunpack.c.l.b16 %v71
  %v125 = vunpack.c.h.b16 %v71
  %v126 = vunpack.c.l.b16 %v72
  %v127 = vunpack.c.h.b16 %v72
  %v128 = vunpack.c.l.b16 %v73
  %v129 = vunpack.c.h.b16 %v73
  %v130 = vpack.c.b16 %v124, %v118
  %v131 = vpack.c.b16 %v125, %v119
  %v132 = vpack.c.b16 %v126, %v120
  %v133 = vpack.c.b16 %v127, %v121
  %v134 = vpack.c.b16 %v128, %v122
  %v135 = vpack.c.b16 %v129, %v123
  %vm142 = vcmask 130048
  %v144 = vsel %vm142, %v110, 0
  %v147 = vsel %vm142, %v111, 0
  %149 = vmatpush.bf16.msra.mxu0 0
  %150 = vmatpush.bf16.msra.mxu0 0
  %151 = vmatpush.bf16.msra.mxu0 0
  %152 = vmatpush.bf16.msra.mxu0 0
  %153 = vmatpush.bf16.msra.mxu0 0
  %154 = vmatpush.bf16.msra.mxu0 0
  %155 = vmatpush.bf16.msra.mxu0 0
  %156 = vmatpush.bf16.msra.mxu0 %v130
  %157 = vmatmul.bf16.gmra.mxu0 %v144
  %v158 = vpop.f32.mrf.mxu0
  %v159 = vadd.f32 %v85, %v158
  %v160 = vpop.f32.mrf.mxu0
  %v161 = vadd.f32 %v90, %v160
  %162 = vmatmul.bf16.gmra.mxu0 %v147
  %v163 = vpop.f32.mrf.mxu0
  %v164 = vadd.f32 %v95, %v163
  %v165 = vpop.f32.mrf.mxu0
  %v166 = vadd.f32 %v100, %v165
  %167 = vdwg.mxu0
  %168 = vmatpush.bf16.msra.mxu0 0
  %169 = vmatpush.bf16.msra.mxu0 0
  %170 = vmatpush.bf16.msra.mxu0 0
  %171 = vmatpush.bf16.msra.mxu0 0
  %172 = vmatpush.bf16.msra.mxu0 0
  %173 = vmatpush.bf16.msra.mxu0 0
  %174 = vmatpush.bf16.msra.mxu0 0
  %175 = vmatpush.bf16.msra.mxu0 %v131
  %176 = vmatmul.bf16.gmra.mxu0 %v144
  %v177 = vpop.f32.mrf.mxu0
  %v178 = vadd.f32 %v85, %v177
  %v179 = vpop.f32.mrf.mxu0
  %v180 = vadd.f32 %v90, %v179
  %181 = vmatmul.bf16.gmra.mxu0 %v147
  %v182 = vpop.f32.mrf.mxu0
  %v183 = vadd.f32 %v95, %v182
  %v184 = vpop.f32.mrf.mxu0
  %v185 = vadd.f32 %v100, %v184
  %186 = vdwg.mxu0
  %187 = vmatpush.bf16.msra.mxu0 0
  %188 = vmatpush.bf16.msra.mxu0 0
  %189 = vmatpush.bf16.msra.mxu0 0
  %190 = vmatpush.bf16.msra.mxu0 0
  %191 = vmatpush.bf16.msra.mxu0 0
  %192 = vmatpush.bf16.msra.mxu0 0
  %193 = vmatpush.bf16.msra.mxu0 0
  %194 = vmatpush.bf16.msra.mxu0 %v132
  %195 = vmatmul.bf16.gmra.mxu0 %v144
  %v196 = vpop.f32.mrf.mxu0
  %v197 = vadd.f32 %v85, %v196
  %v198 = vpop.f32.mrf.mxu0
  %v199 = vadd.f32 %v90, %v198
  %200 = vmatmul.bf16.gmra.mxu0 %v147
  %v201 = vpop.f32.mrf.mxu0
  %v202 = vadd.f32 %v95, %v201
  %v203 = vpop.f32.mrf.mxu0
  %v204 = vadd.f32 %v100, %v203
  %205 = vdwg.mxu0
  %206 = vmatpush.bf16.msra.mxu0 0
  %207 = vmatpush.bf16.msra.mxu0 0
  %208 = vmatpush.bf16.msra.mxu0 0
  %209 = vmatpush.bf16.msra.mxu0 0
  %210 = vmatpush.bf16.msra.mxu0 0
  %211 = vmatpush.bf16.msra.mxu0 0
  %212 = vmatpush.bf16.msra.mxu0 0
  %213 = vmatpush.bf16.msra.mxu0 %v133
  %214 = vmatmul.bf16.gmra.mxu0 %v144
  %v215 = vpop.f32.mrf.mxu0
  %v216 = vadd.f32 %v85, %v215
  %v217 = vpop.f32.mrf.mxu0
  %v218 = vadd.f32 %v90, %v217
  %219 = vmatmul.bf16.gmra.mxu0 %v147
  %v220 = vpop.f32.mrf.mxu0
  %v221 = vadd.f32 %v95, %v220
  %v222 = vpop.f32.mrf.mxu0
  %v223 = vadd.f32 %v100, %v222
  %224 = vdwg.mxu0
  %225 = vmatpush.bf16.msra.mxu0 0
  %226 = vmatpush.bf16.msra.mxu0 0
  %227 = vmatpush.bf16.msra.mxu0 0
  %228 = vmatpush.bf16.msra.mxu0 0
  %229 = vmatpush.bf16.msra.mxu0 0
  %230 = vmatpush.bf16.msra.mxu0 0
  %231 = vmatpush.bf16.msra.mxu0 0
  %232 = vmatpush.bf16.msra.mxu0 %v134
  %233 = vmatmul.bf16.gmra.mxu0 %v144
  %v234 = vpop.f32.mrf.mxu0
  %v235 = vadd.f32 %v85, %v234
  %v236 = vpop.f32.mrf.mxu0
  %v237 = vadd.f32 %v90, %v236
  %238 = vmatmul.bf16.gmra.mxu0 %v147
  %v239 = vpop.f32.mrf.mxu0
  %v240 = vadd.f32 %v95, %v239
  %v241 = vpop.f32.mrf.mxu0
  %v242 = vadd.f32 %v100, %v241
  %243 = vdwg.mxu0
  %244 = vmatpush.bf16.msra.mxu0 0
  %245 = vmatpush.bf16.msra.mxu0 0
  %246 = vmatpush.bf16.msra.mxu0 0
  %247 = vmatpush.bf16.msra.mxu0 0
  %248 = vmatpush.bf16.msra.mxu0 0
  %249 = vmatpush.bf16.msra.mxu0 0
  %250 = vmatpush.bf16.msra.mxu0 0
  %251 = vmatpush.bf16.msra.mxu0 %v135
  %252 = vmatmul.bf16.gmra.mxu0 %v144
  %v253 = vpop.f32.mrf.mxu0
  %v254 = vadd.f32 %v85, %v253
  %v255 = vpop.f32.mrf.mxu0
  %v256 = vadd.f32 %v90, %v255
  %257 = vmatmul.bf16.gmra.mxu0 %v147
  %v258 = vpop.f32.mrf.mxu0
  %v259 = vadd.f32 %v95, %v258
  %v260 = vpop.f32.mrf.mxu0
  %v261 = vadd.f32 %v100, %v260
  %262 = vdwg.mxu0
  %vm263 = vcmp.gt.f32.partialorder %v159, 0.0
  %vm264 = vcmp.gt.f32.partialorder %v178, 0.0
  %vm265 = vcmp.gt.f32.partialorder %v197, 0.0
  %vm266 = vcmp.gt.f32.partialorder %v216, 0.0
  %vm267 = vcmp.gt.f32.partialorder %v235, 0.0
  %vm268 = vcmp.gt.f32.partialorder %v254, 0.0
  %vm269 = vcmp.gt.f32.partialorder %v161, 0.0
  %vm270 = vcmp.gt.f32.partialorder %v180, 0.0
  %vm271 = vcmp.gt.f32.partialorder %v199, 0.0
  %vm272 = vcmp.gt.f32.partialorder %v218, 0.0
  %vm273 = vcmp.gt.f32.partialorder %v237, 0.0
  %vm274 = vcmp.gt.f32.partialorder %v256, 0.0
  %vm275 = vcmp.gt.f32.partialorder %v164, 0.0
  %vm276 = vcmp.gt.f32.partialorder %v183, 0.0
  %vm277 = vcmp.gt.f32.partialorder %v202, 0.0
  %vm278 = vcmp.gt.f32.partialorder %v221, 0.0
  %vm279 = vcmp.gt.f32.partialorder %v240, 0.0
  %vm280 = vcmp.gt.f32.partialorder %v259, 0.0
  %vm281 = vcmp.gt.f32.partialorder %v166, 0.0
  %vm282 = vcmp.gt.f32.partialorder %v185, 0.0
  %vm283 = vcmp.gt.f32.partialorder %v204, 0.0
  %vm284 = vcmp.gt.f32.partialorder %v223, 0.0
  %vm285 = vcmp.gt.f32.partialorder %v242, 0.0
  %vm286 = vcmp.gt.f32.partialorder %v261, 0.0
  %v287 = vmul.f32 %v159, 0.2
  %v288 = vmul.f32 %v178, 0.2
  %v289 = vmul.f32 %v197, 0.2
  %v290 = vmul.f32 %v216, 0.2
  %v291 = vmul.f32 %v235, 0.2
  %v292 = vmul.f32 %v254, 0.2
  %v293 = vmul.f32 %v161, 0.2
  %v294 = vmul.f32 %v180, 0.2
  %v295 = vmul.f32 %v199, 0.2
  %v296 = vmul.f32 %v218, 0.2
  %v297 = vmul.f32 %v237, 0.2
  %v298 = vmul.f32 %v256, 0.2
  %v299 = vmul.f32 %v164, 0.2
  %v300 = vmul.f32 %v183, 0.2
  %v301 = vmul.f32 %v202, 0.2
  %v302 = vmul.f32 %v221, 0.2
  %v303 = vmul.f32 %v240, 0.2
  %v304 = vmul.f32 %v259, 0.2
  %v305 = vmul.f32 %v166, 0.2
  %v306 = vmul.f32 %v185, 0.2
  %v307 = vmul.f32 %v204, 0.2
  %v308 = vmul.f32 %v223, 0.2
  %v309 = vmul.f32 %v242, 0.2
  %v310 = vmul.f32 %v261, 0.2
  %v311 = vsel %vm263, %v159, %v287
  %v312 = vsel %vm264, %v178, %v288
  %v313 = vsel %vm265, %v197, %v289
  %v314 = vsel %vm266, %v216, %v290
  %v315 = vsel %vm267, %v235, %v291
  %v316 = vsel %vm268, %v254, %v292
  %v317 = vsel %vm269, %v161, %v293
  %v318 = vsel %vm270, %v180, %v294
  %v319 = vsel %vm271, %v199, %v295
  %v320 = vsel %vm272, %v218, %v296
  %v321 = vsel %vm273, %v237, %v297
  %v322 = vsel %vm274, %v256, %v298
  %v323 = vsel %vm275, %v164, %v299
  %v324 = vsel %vm276, %v183, %v300
  %v325 = vsel %vm277, %v202, %v301
  %v326 = vsel %vm278, %v221, %v302
  %v327 = vsel %vm279, %v240, %v303
  %v328 = vsel %vm280, %v259, %v304
  %v329 = vsel %vm281, %v166, %v305
  %v330 = vsel %vm282, %v185, %v306
  %v331 = vsel %vm283, %v204, %v307
  %v332 = vsel %vm284, %v223, %v308
  %v333 = vsel %vm285, %v242, %v309
  %v334 = vsel %vm286, %v261, %v310
  %v335 = vpack.c.bf16 %v312, %v311
  %v336 = vpack.c.bf16 %v314, %v313
  %v337 = vpack.c.bf16 %v316, %v315
  %v338 = vpack.c.bf16 %v318, %v317
  %v339 = vpack.c.bf16 %v320, %v319
  %v340 = vpack.c.bf16 %v322, %v321
  %v341 = vpack.c.bf16 %v324, %v323
  %v342 = vpack.c.bf16 %v326, %v325
  %v343 = vpack.c.bf16 %v328, %v327
  %v344 = vpack.c.bf16 %v330, %v329
  %v345 = vpack.c.bf16 %v332, %v331
  %v346 = vpack.c.bf16 %v334, %v333
  %347 = vst [vmem:[#allocation2] sm:$0xff] %v335
  %348 = vst [vmem:[#allocation2 + $0x8] sm:$0xff] %v336
  %349 = vst [vmem:[#allocation2 + $0x10] sm:$0xff] %v337
  %350 = vst [vmem:[#allocation2 + $0x18] sm:$0xff] %v338
  %351 = vst [vmem:[#allocation2 + $0x20] sm:$0xff] %v339
  %352 = vst [vmem:[#allocation2 + $0x28] sm:$0xff] %v340
  %353 = vst [vmem:[#allocation2 + $0x30] sm:$0xff] %v341
  %354 = vst [vmem:[#allocation2 + $0x38] sm:$0xff] %v342
  %355 = vst [vmem:[#allocation2 + $0x40] sm:$0xff] %v343
  %356 = vst [vmem:[#allocation2 + $0x48] sm:$0xff] %v344
  %357 = vst [vmem:[#allocation2 + $0x50] sm:$0xff] %v345
  %358 = vst [vmem:[#allocation2 + $0x58] sm:$0xff] %v346
  %v359 = vld [vmem:[%s4] sm:$0xf]
  %v360 = vld [vmem:[%s4 + $0x4] sm:$0xf]
  %v361 = vld [vmem:[%s4 + $0x8] sm:$0xf]
  %v362 = vld [vmem:[%s4 + $0xc] sm:$0xf]
  %v363 = vld [vmem:[%s5] sm:$0xff]
  %v364 = vld [vmem:[%s5 + $0x8] sm:$0xff]
  %v365 = vld [vmem:[%s5 + $0x10] sm:$0xff]
  %v366 = vld [vmem:[%s5 + $0x18] sm:$0xff]
  %368 = vset.pattern.permute.xlu0 0
  %369 = vperm.xlu0 %368, %v363
  %v370 = vpop.permute.xlu0 %369
  %373 = vset.pattern.permute.xlu0 0
  %374 = vperm.xlu0 %373, %v364
  %v375 = vpop.permute.xlu0 %374
  %378 = vset.pattern.permute.xlu0 0
  %379 = vperm.xlu0 %378, %v365
  %v380 = vpop.permute.xlu0 %379
  %383 = vset.pattern.permute.xlu0 0
  %384 = vperm.xlu0 %383, %v366
  %v385 = vpop.permute.xlu0 %384
  %v391 = vunpack.c.l.b16 %v359
  %v392 = vunpack.c.l.b16 %v360
  %v393 = vunpack.c.l.b16 %v361
  %v394 = vunpack.c.l.b16 %v362
  %v395 = vpack.c.b16 %v392, %v391
  %v396 = vpack.c.b16 %v394, %v393
  %v409 = vunpack.c.l.b16 %v335
  %v410 = vunpack.c.h.b16 %v335
  %v411 = vunpack.c.l.b16 %v336
  %v412 = vunpack.c.h.b16 %v336
  %v413 = vunpack.c.l.b16 %v337
  %v414 = vunpack.c.h.b16 %v337
  %v415 = vunpack.c.l.b16 %v338
  %v416 = vunpack.c.h.b16 %v338
  %v417 = vunpack.c.l.b16 %v339
  %v418 = vunpack.c.h.b16 %v339
  %v419 = vunpack.c.l.b16 %v340
  %v420 = vunpack.c.h.b16 %v340
  %v421 = vunpack.c.l.b16 %v341
  %v422 = vunpack.c.h.b16 %v341
  %v423 = vunpack.c.l.b16 %v342
  %v424 = vunpack.c.h.b16 %v342
  %v425 = vunpack.c.l.b16 %v343
  %v426 = vunpack.c.h.b16 %v343
  %v427 = vunpack.c.l.b16 %v344
  %v428 = vunpack.c.h.b16 %v344
  %v429 = vunpack.c.l.b16 %v345
  %v430 = vunpack.c.h.b16 %v345
  %v431 = vunpack.c.l.b16 %v346
  %v432 = vunpack.c.h.b16 %v346
  %v433 = vpack.c.b16 %v415, %v409
  %v434 = vpack.c.b16 %v416, %v410
  %v435 = vpack.c.b16 %v417, %v411
  %v436 = vpack.c.b16 %v418, %v412
  %v437 = vpack.c.b16 %v419, %v413
  %v438 = vpack.c.b16 %v420, %v414
  %v439 = vpack.c.b16 %v427, %v421
  %v440 = vpack.c.b16 %v428, %v422
  %v441 = vpack.c.b16 %v429, %v423
  %v442 = vpack.c.b16 %v430, %v424
  %v443 = vpack.c.b16 %v431, %v425
  %v444 = vpack.c.b16 %v432, %v426
  %vm457 = vcmask 261120
  %v459 = vsel %vm457, %v395, 0
  %v462 = vsel %vm457, %v396, 0
  %464 = vmatpush.bf16.msra.mxu0 0
  %465 = vmatpush.bf16.msra.mxu0 0
  %466 = vmatpush.bf16.msra.mxu0 0
  %467 = vmatpush.bf16.msra.mxu0 0
  %468 = vmatpush.bf16.msra.mxu0 0
  %469 = vmatpush.bf16.msra.mxu0 0
  %470 = vmatpush.bf16.msra.mxu0 %v439
  %471 = vmatpush.bf16.msra.mxu0 %v433
  %472 = vmatmul.bf16.gmra.mxu0 %v459
  %v473 = vpop.f32.mrf.mxu0
  %v474 = vadd.f32 %v370, %v473
  %v475 = vpop.f32.mrf.mxu0
  %v476 = vadd.f32 %v375, %v475
  %477 = vmatmul.bf16.gmra.mxu0 %v462
  %v478 = vpop.f32.mrf.mxu0
  %v479 = vadd.f32 %v380, %v478
  %v480 = vpop.f32.mrf.mxu0
  %v481 = vadd.f32 %v385, %v480
  %482 = vdwg.mxu0
  %483 = vmatpush.bf16.msra.mxu0 0
  %484 = vmatpush.bf16.msra.mxu0 0
  %485 = vmatpush.bf16.msra.mxu0 0
  %486 = vmatpush.bf16.msra.mxu0 0
  %487 = vmatpush.bf16.msra.mxu0 0
  %488 = vmatpush.bf16.msra.mxu0 0
  %489 = vmatpush.bf16.msra.mxu0 %v440
  %490 = vmatpush.bf16.msra.mxu0 %v434
  %491 = vmatmul.bf16.gmra.mxu0 %v459
  %v492 = vpop.f32.mrf.mxu0
  %v493 = vadd.f32 %v370, %v492
  %v494 = vpop.f32.mrf.mxu0
  %v495 = vadd.f32 %v375, %v494
  %496 = vmatmul.bf16.gmra.mxu0 %v462
  %v497 = vpop.f32.mrf.mxu0
  %v498 = vadd.f32 %v380, %v497
  %v499 = vpop.f32.mrf.mxu0
  %v500 = vadd.f32 %v385, %v499
  %501 = vdwg.mxu0
  %502 = vmatpush.bf16.msra.mxu0 0
  %503 = vmatpush.bf16.msra.mxu0 0
  %504 = vmatpush.bf16.msra.mxu0 0
  %505 = vmatpush.bf16.msra.mxu0 0
  %506 = vmatpush.bf16.msra.mxu0 0
  %507 = vmatpush.bf16.msra.mxu0 0
  %508 = vmatpush.bf16.msra.mxu0 %v441
  %509 = vmatpush.bf16.msra.mxu0 %v435
  %510 = vmatmul.bf16.gmra.mxu0 %v459
  %v511 = vpop.f32.mrf.mxu0
  %v512 = vadd.f32 %v370, %v511
  %v513 = vpop.f32.mrf.mxu0
  %v514 = vadd.f32 %v375, %v513
  %515 = vmatmul.bf16.gmra.mxu0 %v462
  %v516 = vpop.f32.mrf.mxu0
  %v517 = vadd.f32 %v380, %v516
  %v518 = vpop.f32.mrf.mxu0
  %v519 = vadd.f32 %v385, %v518
  %520 = vdwg.mxu0
  %521 = vmatpush.bf16.msra.mxu0 0
  %522 = vmatpush.bf16.msra.mxu0 0
  %523 = vmatpush.bf16.msra.mxu0 0
  %524 = vmatpush.bf16.msra.mxu0 0
  %525 = vmatpush.bf16.msra.mxu0 0
  %526 = vmatpush.bf16.msra.mxu0 0
  %527 = vmatpush.bf16.msra.mxu0 %v442
  %528 = vmatpush.bf16.msra.mxu0 %v436
  %529 = vmatmul.bf16.gmra.mxu0 %v459
  %v530 = vpop.f32.mrf.mxu0
  %v531 = vadd.f32 %v370, %v530
  %v532 = vpop.f32.mrf.mxu0
  %v533 = vadd.f32 %v375, %v532
  %534 = vmatmul.bf16.gmra.mxu0 %v462
  %v535 = vpop.f32.mrf.mxu0
  %v536 = vadd.f32 %v380, %v535
  %v537 = vpop.f32.mrf.mxu0
  %v538 = vadd.f32 %v385, %v537
  %539 = vdwg.mxu0
  %540 = vmatpush.bf16.msra.mxu0 0
  %541 = vmatpush.bf16.msra.mxu0 0
  %542 = vmatpush.bf16.msra.mxu0 0
  %543 = vmatpush.bf16.msra.mxu0 0
  %544 = vmatpush.bf16.msra.mxu0 0
  %545 = vmatpush.bf16.msra.mxu0 0
  %546 = vmatpush.bf16.msra.mxu0 %v443
  %547 = vmatpush.bf16.msra.mxu0 %v437
  %548 = vmatmul.bf16.gmra.mxu0 %v459
  %v549 = vpop.f32.mrf.mxu0
  %v550 = vadd.f32 %v370, %v549
  %v551 = vpop.f32.mrf.mxu0
  %v552 = vadd.f32 %v375, %v551
  %553 = vmatmul.bf16.gmra.mxu0 %v462
  %v554 = vpop.f32.mrf.mxu0
  %v555 = vadd.f32 %v380, %v554
  %v556 = vpop.f32.mrf.mxu0
  %v557 = vadd.f32 %v385, %v556
  %558 = vdwg.mxu0
  %559 = vmatpush.bf16.msra.mxu0 0
  %560 = vmatpush.bf16.msra.mxu0 0
  %561 = vmatpush.bf16.msra.mxu0 0
  %562 = vmatpush.bf16.msra.mxu0 0
  %563 = vmatpush.bf16.msra.mxu0 0
  %564 = vmatpush.bf16.msra.mxu0 0
  %565 = vmatpush.bf16.msra.mxu0 %v444
  %566 = vmatpush.bf16.msra.mxu0 %v438
  %567 = vmatmul.bf16.gmra.mxu0 %v459
  %v568 = vpop.f32.mrf.mxu0
  %v569 = vadd.f32 %v370, %v568
  %v570 = vpop.f32.mrf.mxu0
  %v571 = vadd.f32 %v375, %v570
  %572 = vmatmul.bf16.gmra.mxu0 %v462
  %v573 = vpop.f32.mrf.mxu0
  %v574 = vadd.f32 %v380, %v573
  %v575 = vpop.f32.mrf.mxu0
  %v576 = vadd.f32 %v385, %v575
  %577 = vdwg.mxu0
  %vm578 = vcmp.gt.f32.partialorder %v474, 0.0
  %vm579 = vcmp.gt.f32.partialorder %v493, 0.0
  %vm580 = vcmp.gt.f32.partialorder %v512, 0.0
  %vm581 = vcmp.gt.f32.partialorder %v531, 0.0
  %vm582 = vcmp.gt.f32.partialorder %v550, 0.0
  %vm583 = vcmp.gt.f32.partialorder %v569, 0.0
  %vm584 = vcmp.gt.f32.partialorder %v476, 0.0
  %vm585 = vcmp.gt.f32.partialorder %v495, 0.0
  %vm586 = vcmp.gt.f32.partialorder %v514, 0.0
  %vm587 = vcmp.gt.f32.partialorder %v533, 0.0
  %vm588 = vcmp.gt.f32.partialorder %v552, 0.0
  %vm589 = vcmp.gt.f32.partialorder %v571, 0.0
  %vm590 = vcmp.gt.f32.partialorder %v479, 0.0
  %vm591 = vcmp.gt.f32.partialorder %v498, 0.0
  %vm592 = vcmp.gt.f32.partialorder %v517, 0.0
  %vm593 = vcmp.gt.f32.partialorder %v536, 0.0
  %vm594 = vcmp.gt.f32.partialorder %v555, 0.0
  %vm595 = vcmp.gt.f32.partialorder %v574, 0.0
  %vm596 = vcmp.gt.f32.partialorder %v481, 0.0
  %vm597 = vcmp.gt.f32.partialorder %v500, 0.0
  %vm598 = vcmp.gt.f32.partialorder %v519, 0.0
  %vm599 = vcmp.gt.f32.partialorder %v538, 0.0
  %vm600 = vcmp.gt.f32.partialorder %v557, 0.0
  %vm601 = vcmp.gt.f32.partialorder %v576, 0.0
  %v602 = vmul.f32 %v474, 0.2
  %v603 = vmul.f32 %v493, 0.2
  %v604 = vmul.f32 %v512, 0.2
  %v605 = vmul.f32 %v531, 0.2
  %v606 = vmul.f32 %v550, 0.2
  %v607 = vmul.f32 %v569, 0.2
  %v608 = vmul.f32 %v476, 0.2
  %v609 = vmul.f32 %v495, 0.2
  %v610 = vmul.f32 %v514, 0.2
  %v611 = vmul.f32 %v533, 0.2
  %v612 = vmul.f32 %v552, 0.2
  %v613 = vmul.f32 %v571, 0.2
  %v614 = vmul.f32 %v479, 0.2
  %v615 = vmul.f32 %v498, 0.2
  %v616 = vmul.f32 %v517, 0.2
  %v617 = vmul.f32 %v536, 0.2
  %v618 = vmul.f32 %v555, 0.2
  %v619 = vmul.f32 %v574, 0.2
  %v620 = vmul.f32 %v481, 0.2
  %v621 = vmul.f32 %v500, 0.2
  %v622 = vmul.f32 %v519, 0.2
  %v623 = vmul.f32 %v538, 0.2
  %v624 = vmul.f32 %v557, 0.2
  %v625 = vmul.f32 %v576, 0.2
  %v626 = vsel %vm578, %v474, %v602
  %v627 = vsel %vm579, %v493, %v603
  %v628 = vsel %vm580, %v512, %v604
  %v629 = vsel %vm581, %v531, %v605
  %v630 = vsel %vm582, %v550, %v606
  %v631 = vsel %vm583, %v569, %v607
  %v632 = vsel %vm584, %v476, %v608
  %v633 = vsel %vm585, %v495, %v609
  %v634 = vsel %vm586, %v514, %v610
  %v635 = vsel %vm587, %v533, %v611
  %v636 = vsel %vm588, %v552, %v612
  %v637 = vsel %vm589, %v571, %v613
  %v638 = vsel %vm590, %v479, %v614
  %v639 = vsel %vm591, %v498, %v615
  %v640 = vsel %vm592, %v517, %v616
  %v641 = vsel %vm593, %v536, %v617
  %v642 = vsel %vm594, %v555, %v618
  %v643 = vsel %vm595, %v574, %v619
  %v644 = vsel %vm596, %v481, %v620
  %v645 = vsel %vm597, %v500, %v621
  %v646 = vsel %vm598, %v519, %v622
  %v647 = vsel %vm599, %v538, %v623
  %v648 = vsel %vm600, %v557, %v624
  %v649 = vsel %vm601, %v576, %v625
  %v650 = vpack.c.bf16 %v627, %v626
  %v651 = vpack.c.bf16 %v629, %v628
  %v652 = vpack.c.bf16 %v631, %v630
  %v653 = vpack.c.bf16 %v633, %v632
  %v654 = vpack.c.bf16 %v635, %v634
  %v655 = vpack.c.bf16 %v637, %v636
  %v656 = vpack.c.bf16 %v639, %v638
  %v657 = vpack.c.bf16 %v641, %v640
  %v658 = vpack.c.bf16 %v643, %v642
  %v659 = vpack.c.bf16 %v645, %v644
  %v660 = vpack.c.bf16 %v647, %v646
  %v661 = vpack.c.bf16 %v649, %v648
  %662 = vst [vmem:[#allocation2 + $0x60] sm:$0xff] %v650
  %663 = vst [vmem:[#allocation2 + $0x68] sm:$0xff] %v651
  %664 = vst [vmem:[#allocation2 + $0x70] sm:$0xff] %v652
  %665 = vst [vmem:[#allocation2 + $0x78] sm:$0xff] %v653
  %666 = vst [vmem:[#allocation2 + $0x80] sm:$0xff] %v654
  %667 = vst [vmem:[#allocation2 + $0x88] sm:$0xff] %v655
  %668 = vst [vmem:[#allocation2 + $0x90] sm:$0xff] %v656
  %669 = vst [vmem:[#allocation2 + $0x98] sm:$0xff] %v657
  %670 = vst [vmem:[#allocation2 + $0xa0] sm:$0xff] %v658
  %671 = vst [vmem:[#allocation2 + $0xa8] sm:$0xff] %v659
  %672 = vst [vmem:[#allocation2 + $0xb0] sm:$0xff] %v660
  %673 = vst [vmem:[#allocation2 + $0xb8] sm:$0xff] %v661
  %v674 = vld [vmem:[%s6] sm:$0xf]
  %v675 = vld [vmem:[%s6 + $0x4] sm:$0xf]
  %v676 = vld [vmem:[%s6 + $0x8] sm:$0xf]
  %v677 = vld [vmem:[%s6 + $0xc] sm:$0xf]
  %v678 = vld [vmem:[%s7] sm:$0xff]
  %v679 = vld [vmem:[%s7 + $0x8] sm:$0xff]
  %v680 = vld [vmem:[%s7 + $0x10] sm:$0xff]
  %v681 = vld [vmem:[%s7 + $0x18] sm:$0xff]
  %683 = vset.pattern.permute.xlu0 0
  %684 = vperm.xlu0 %683, %v678
  %v685 = vpop.permute.xlu0 %684
  %688 = vset.pattern.permute.xlu0 0
  %689 = vperm.xlu0 %688, %v679
  %v690 = vpop.permute.xlu0 %689
  %693 = vset.pattern.permute.xlu0 0
  %694 = vperm.xlu0 %693, %v680
  %v695 = vpop.permute.xlu0 %694
  %698 = vset.pattern.permute.xlu0 0
  %699 = vperm.xlu0 %698, %v681
  %v700 = vpop.permute.xlu0 %699
  %v706 = vunpack.c.l.b16 %v674
  %v707 = vunpack.c.l.b16 %v675
  %v708 = vunpack.c.l.b16 %v676
  %v709 = vunpack.c.l.b16 %v677
  %v710 = vpack.c.b16 %v707, %v706
  %v711 = vpack.c.b16 %v709, %v708
  %v724 = vunpack.c.l.b16 %v650
  %v725 = vunpack.c.h.b16 %v650
  %v726 = vunpack.c.l.b16 %v651
  %v727 = vunpack.c.h.b16 %v651
  %v728 = vunpack.c.l.b16 %v652
  %v729 = vunpack.c.h.b16 %v652
  %v730 = vunpack.c.l.b16 %v653
  %v731 = vunpack.c.h.b16 %v653
  %v732 = vunpack.c.l.b16 %v654
  %v733 = vunpack.c.h.b16 %v654
  %v734 = vunpack.c.l.b16 %v655
  %v735 = vunpack.c.h.b16 %v655
  %v736 = vunpack.c.l.b16 %v656
  %v737 = vunpack.c.h.b16 %v656
  %v738 = vunpack.c.l.b16 %v657
  %v739 = vunpack.c.h.b16 %v657
  %v740 = vunpack.c.l.b16 %v658
  %v741 = vunpack.c.h.b16 %v658
  %v742 = vunpack.c.l.b16 %v659
  %v743 = vunpack.c.h.b16 %v659
  %v744 = vunpack.c.l.b16 %v660
  %v745 = vunpack.c.h.b16 %v660
  %v746 = vunpack.c.l.b16 %v661
  %v747 = vunpack.c.h.b16 %v661
  %v748 = vpack.c.b16 %v730, %v724
  %v749 = vpack.c.b16 %v731, %v725
  %v750 = vpack.c.b16 %v732, %v726
  %v751 = vpack.c.b16 %v733, %v727
  %v752 = vpack.c.b16 %v734, %v728
  %v753 = vpack.c.b16 %v735, %v729
  %v754 = vpack.c.b16 %v742, %v736
  %v755 = vpack.c.b16 %v743, %v737
  %v756 = vpack.c.b16 %v744, %v738
  %v757 = vpack.c.b16 %v745, %v739
  %v758 = vpack.c.b16 %v746, %v740
  %v759 = vpack.c.b16 %v747, %v741
  %v773 = vsel %vm457, %v710, 0
  %v776 = vsel %vm457, %v711, 0
  %778 = vmatpush.bf16.msra.mxu0 0
  %779 = vmatpush.bf16.msra.mxu0 0
  %780 = vmatpush.bf16.msra.mxu0 0
  %781 = vmatpush.bf16.msra.mxu0 0
  %782 = vmatpush.bf16.msra.mxu0 0
  %783 = vmatpush.bf16.msra.mxu0 0
  %784 = vmatpush.bf16.msra.mxu0 %v754
  %785 = vmatpush.bf16.msra.mxu0 %v748
  %786 = vmatmul.bf16.gmra.mxu0 %v773
  %v787 = vpop.f32.mrf.mxu0
  %v788 = vadd.f32 %v685, %v787
  %v789 = vpop.f32.mrf.mxu0
  %v790 = vadd.f32 %v690, %v789
  %791 = vmatmul.bf16.gmra.mxu0 %v776
  %v792 = vpop.f32.mrf.mxu0
  %v793 = vadd.f32 %v695, %v792
  %v794 = vpop.f32.mrf.mxu0
  %v795 = vadd.f32 %v700, %v794
  %796 = vdwg.mxu0
  %797 = vmatpush.bf16.msra.mxu0 0
  %798 = vmatpush.bf16.msra.mxu0 0
  %799 = vmatpush.bf16.msra.mxu0 0
  %800 = vmatpush.bf16.msra.mxu0 0
  %801 = vmatpush.bf16.msra.mxu0 0
  %802 = vmatpush.bf16.msra.mxu0 0
  %803 = vmatpush.bf16.msra.mxu0 %v755
  %804 = vmatpush.bf16.msra.mxu0 %v749
  %805 = vmatmul.bf16.gmra.mxu0 %v773
  %v806 = vpop.f32.mrf.mxu0
  %v807 = vadd.f32 %v685, %v806
  %v808 = vpop.f32.mrf.mxu0
  %v809 = vadd.f32 %v690, %v808
  %810 = vmatmul.bf16.gmra.mxu0 %v776
  %v811 = vpop.f32.mrf.mxu0
  %v812 = vadd.f32 %v695, %v811
  %v813 = vpop.f32.mrf.mxu0
  %v814 = vadd.f32 %v700, %v813
  %815 = vdwg.mxu0
  %816 = vmatpush.bf16.msra.mxu0 0
  %817 = vmatpush.bf16.msra.mxu0 0
  %818 = vmatpush.bf16.msra.mxu0 0
  %819 = vmatpush.bf16.msra.mxu0 0
  %820 = vmatpush.bf16.msra.mxu0 0
  %821 = vmatpush.bf16.msra.mxu0 0
  %822 = vmatpush.bf16.msra.mxu0 %v756
  %823 = vmatpush.bf16.msra.mxu0 %v750
  %824 = vmatmul.bf16.gmra.mxu0 %v773
  %v825 = vpop.f32.mrf.mxu0
  %v826 = vadd.f32 %v685, %v825
  %v827 = vpop.f32.mrf.mxu0
  %v828 = vadd.f32 %v690, %v827
  %829 = vmatmul.bf16.gmra.mxu0 %v776
  %v830 = vpop.f32.mrf.mxu0
  %v831 = vadd.f32 %v695, %v830
  %v832 = vpop.f32.mrf.mxu0
  %v833 = vadd.f32 %v700, %v832
  %834 = vdwg.mxu0
  %835 = vmatpush.bf16.msra.mxu0 0
  %836 = vmatpush.bf16.msra.mxu0 0
  %837 = vmatpush.bf16.msra.mxu0 0
  %838 = vmatpush.bf16.msra.mxu0 0
  %839 = vmatpush.bf16.msra.mxu0 0
  %840 = vmatpush.bf16.msra.mxu0 0
  %841 = vmatpush.bf16.msra.mxu0 %v757
  %842 = vmatpush.bf16.msra.mxu0 %v751
  %843 = vmatmul.bf16.gmra.mxu0 %v773
  %v844 = vpop.f32.mrf.mxu0
  %v845 = vadd.f32 %v685, %v844
  %v846 = vpop.f32.mrf.mxu0
  %v847 = vadd.f32 %v690, %v846
  %848 = vmatmul.bf16.gmra.mxu0 %v776
  %v849 = vpop.f32.mrf.mxu0
  %v850 = vadd.f32 %v695, %v849
  %v851 = vpop.f32.mrf.mxu0
  %v852 = vadd.f32 %v700, %v851
  %853 = vdwg.mxu0
  %854 = vmatpush.bf16.msra.mxu0 0
  %855 = vmatpush.bf16.msra.mxu0 0
  %856 = vmatpush.bf16.msra.mxu0 0
  %857 = vmatpush.bf16.msra.mxu0 0
  %858 = vmatpush.bf16.msra.mxu0 0
  %859 = vmatpush.bf16.msra.mxu0 0
  %860 = vmatpush.bf16.msra.mxu0 %v758
  %861 = vmatpush.bf16.msra.mxu0 %v752
  %862 = vmatmul.bf16.gmra.mxu0 %v773
  %v863 = vpop.f32.mrf.mxu0
  %v864 = vadd.f32 %v685, %v863
  %v865 = vpop.f32.mrf.mxu0
  %v866 = vadd.f32 %v690, %v865
  %867 = vmatmul.bf16.gmra.mxu0 %v776
  %v868 = vpop.f32.mrf.mxu0
  %v869 = vadd.f32 %v695, %v868
  %v870 = vpop.f32.mrf.mxu0
  %v871 = vadd.f32 %v700, %v870
  %872 = vdwg.mxu0
  %873 = vmatpush.bf16.msra.mxu0 0
  %874 = vmatpush.bf16.msra.mxu0 0
  %875 = vmatpush.bf16.msra.mxu0 0
  %876 = vmatpush.bf16.msra.mxu0 0
  %877 = vmatpush.bf16.msra.mxu0 0
  %878 = vmatpush.bf16.msra.mxu0 0
  %879 = vmatpush.bf16.msra.mxu0 %v759
  %880 = vmatpush.bf16.msra.mxu0 %v753
  %881 = vmatmul.bf16.gmra.mxu0 %v773
  %v882 = vpop.f32.mrf.mxu0
  %v883 = vadd.f32 %v685, %v882
  %v884 = vpop.f32.mrf.mxu0
  %v885 = vadd.f32 %v690, %v884
  %886 = vmatmul.bf16.gmra.mxu0 %v776
  %v887 = vpop.f32.mrf.mxu0
  %v888 = vadd.f32 %v695, %v887
  %v889 = vpop.f32.mrf.mxu0
  %v890 = vadd.f32 %v700, %v889
  %891 = vdwg.mxu0
  %vm892 = vcmp.gt.f32.partialorder %v788, 0.0
  %vm893 = vcmp.gt.f32.partialorder %v807, 0.0
  %vm894 = vcmp.gt.f32.partialorder %v826, 0.0
  %vm895 = vcmp.gt.f32.partialorder %v845, 0.0
  %vm896 = vcmp.gt.f32.partialorder %v864, 0.0
  %vm897 = vcmp.gt.f32.partialorder %v883, 0.0
  %vm898 = vcmp.gt.f32.partialorder %v790, 0.0
  %vm899 = vcmp.gt.f32.partialorder %v809, 0.0
  %vm900 = vcmp.gt.f32.partialorder %v828, 0.0
  %vm901 = vcmp.gt.f32.partialorder %v847, 0.0
  %vm902 = vcmp.gt.f32.partialorder %v866, 0.0
  %vm903 = vcmp.gt.f32.partialorder %v885, 0.0
  %vm904 = vcmp.gt.f32.partialorder %v793, 0.0
  %vm905 = vcmp.gt.f32.partialorder %v812, 0.0
  %vm906 = vcmp.gt.f32.partialorder %v831, 0.0
  %vm907 = vcmp.gt.f32.partialorder %v850, 0.0
  %vm908 = vcmp.gt.f32.partialorder %v869, 0.0
  %vm909 = vcmp.gt.f32.partialorder %v888, 0.0
  %vm910 = vcmp.gt.f32.partialorder %v795, 0.0
  %vm911 = vcmp.gt.f32.partialorder %v814, 0.0
  %vm912 = vcmp.gt.f32.partialorder %v833, 0.0
  %vm913 = vcmp.gt.f32.partialorder %v852, 0.0
  %vm914 = vcmp.gt.f32.partialorder %v871, 0.0
  %vm915 = vcmp.gt.f32.partialorder %v890, 0.0
  %v916 = vmul.f32 %v788, 0.2
  %v917 = vmul.f32 %v807, 0.2
  %v918 = vmul.f32 %v826, 0.2
  %v919 = vmul.f32 %v845, 0.2
  %v920 = vmul.f32 %v864, 0.2
  %v921 = vmul.f32 %v883, 0.2
  %v922 = vmul.f32 %v790, 0.2
  %v923 = vmul.f32 %v809, 0.2
  %v924 = vmul.f32 %v828, 0.2
  %v925 = vmul.f32 %v847, 0.2
  %v926 = vmul.f32 %v866, 0.2
  %v927 = vmul.f32 %v885, 0.2
  %v928 = vmul.f32 %v793, 0.2
  %v929 = vmul.f32 %v812, 0.2
  %v930 = vmul.f32 %v831, 0.2
  %v931 = vmul.f32 %v850, 0.2
  %v932 = vmul.f32 %v869, 0.2
  %v933 = vmul.f32 %v888, 0.2
  %v934 = vmul.f32 %v795, 0.2
  %v935 = vmul.f32 %v814, 0.2
  %v936 = vmul.f32 %v833, 0.2
  %v937 = vmul.f32 %v852, 0.2
  %v938 = vmul.f32 %v871, 0.2
  %v939 = vmul.f32 %v890, 0.2
  %v940 = vsel %vm892, %v788, %v916
  %v941 = vsel %vm893, %v807, %v917
  %v942 = vsel %vm894, %v826, %v918
  %v943 = vsel %vm895, %v845, %v919
  %v944 = vsel %vm896, %v864, %v920
  %v945 = vsel %vm897, %v883, %v921
  %v946 = vsel %vm898, %v790, %v922
  %v947 = vsel %vm899, %v809, %v923
  %v948 = vsel %vm900, %v828, %v924
  %v949 = vsel %vm901, %v847, %v925
  %v950 = vsel %vm902, %v866, %v926
  %v951 = vsel %vm903, %v885, %v927
  %v952 = vsel %vm904, %v793, %v928
  %v953 = vsel %vm905, %v812, %v929
  %v954 = vsel %vm906, %v831, %v930
  %v955 = vsel %vm907, %v850, %v931
  %v956 = vsel %vm908, %v869, %v932
  %v957 = vsel %vm909, %v888, %v933
  %v958 = vsel %vm910, %v795, %v934
  %v959 = vsel %vm911, %v814, %v935
  %v960 = vsel %vm912, %v833, %v936
  %v961 = vsel %vm913, %v852, %v937
  %v962 = vsel %vm914, %v871, %v938
  %v963 = vsel %vm915, %v890, %v939
  %v964 = vpack.c.bf16 %v941, %v940
  %v965 = vpack.c.bf16 %v943, %v942
  %v966 = vpack.c.bf16 %v945, %v944
  %v967 = vpack.c.bf16 %v947, %v946
  %v968 = vpack.c.bf16 %v949, %v948
  %v969 = vpack.c.bf16 %v951, %v950
  %v970 = vpack.c.bf16 %v953, %v952
  %v971 = vpack.c.bf16 %v955, %v954
  %v972 = vpack.c.bf16 %v957, %v956
  %v973 = vpack.c.bf16 %v959, %v958
  %v974 = vpack.c.bf16 %v961, %v960
  %v975 = vpack.c.bf16 %v963, %v962
  %976 = vst [vmem:[#allocation2 + $0xc0] sm:$0xff] %v964
  %977 = vst [vmem:[#allocation2 + $0xc8] sm:$0xff] %v965
  %978 = vst [vmem:[#allocation2 + $0xd0] sm:$0xff] %v966
  %979 = vst [vmem:[#allocation2 + $0xd8] sm:$0xff] %v967
  %980 = vst [vmem:[#allocation2 + $0xe0] sm:$0xff] %v968
  %981 = vst [vmem:[#allocation2 + $0xe8] sm:$0xff] %v969
  %982 = vst [vmem:[#allocation2 + $0xf0] sm:$0xff] %v970
  %983 = vst [vmem:[#allocation2 + $0xf8] sm:$0xff] %v971
  %984 = vst [vmem:[#allocation2 + $0x100] sm:$0xff] %v972
  %985 = vst [vmem:[#allocation2 + $0x108] sm:$0xff] %v973
  %986 = vst [vmem:[#allocation2 + $0x110] sm:$0xff] %v974
  %987 = vst [vmem:[#allocation2 + $0x118] sm:$0xff] %v975
  %v988 = vld [vmem:[#allocation2] sm:$0xff]
  %v989 = vld [vmem:[#allocation2 + $0x8] sm:$0xff]
  %v990 = vld [vmem:[#allocation2 + $0x10] sm:$0xff]
  %v991 = vld [vmem:[#allocation2 + $0x18] sm:$0xff]
  %v992 = vld [vmem:[#allocation2 + $0x20] sm:$0xff]
  %v993 = vld [vmem:[#allocation2 + $0x28] sm:$0xff]
  %v994 = vld [vmem:[#allocation2 + $0x30] sm:$0xff]
  %v995 = vld [vmem:[#allocation2 + $0x38] sm:$0xff]
  %v996 = vld [vmem:[#allocation2 + $0x40] sm:$0xff]
  %v997 = vld [vmem:[#allocation2 + $0x48] sm:$0xff]
  %v998 = vld [vmem:[#allocation2 + $0x50] sm:$0xff]
  %v999 = vld [vmem:[#allocation2 + $0x58] sm:$0xff]
  %v1000 = vld [vmem:[#allocation2 + $0x60] sm:$0xff]
  %v1001 = vld [vmem:[#allocation2 + $0x68] sm:$0xff]
  %v1002 = vld [vmem:[#allocation2 + $0x70] sm:$0xff]
  %v1003 = vld [vmem:[#allocation2 + $0x78] sm:$0xff]
  %v1004 = vld [vmem:[#allocation2 + $0x80] sm:$0xff]
  %v1005 = vld [vmem:[#allocation2 + $0x88] sm:$0xff]
  %v1006 = vld [vmem:[#allocation2 + $0x90] sm:$0xff]
  %v1007 = vld [vmem:[#allocation2 + $0x98] sm:$0xff]
  %v1008 = vld [vmem:[#allocation2 + $0xa0] sm:$0xff]
  %v1009 = vld [vmem:[#allocation2 + $0xa8] sm:$0xff]
  %v1010 = vld [vmem:[#allocation2 + $0xb0] sm:$0xff]
  %v1011 = vld [vmem:[#allocation2 + $0xb8] sm:$0xff]
  %v1012 = vld [vmem:[#allocation2 + $0xc0] sm:$0xff]
  %v1013 = vld [vmem:[#allocation2 + $0xc8] sm:$0xff]
  %v1014 = vld [vmem:[#allocation2 + $0xd0] sm:$0xff]
  %v1015 = vld [vmem:[#allocation2 + $0xd8] sm:$0xff]
  %v1016 = vld [vmem:[#allocation2 + $0xe0] sm:$0xff]
  %v1017 = vld [vmem:[#allocation2 + $0xe8] sm:$0xff]
  %v1018 = vld [vmem:[#allocation2 + $0xf0] sm:$0xff]
  %v1019 = vld [vmem:[#allocation2 + $0xf8] sm:$0xff]
  %v1020 = vld [vmem:[#allocation2 + $0x100] sm:$0xff]
  %v1021 = vld [vmem:[#allocation2 + $0x108] sm:$0xff]
  %v1022 = vld [vmem:[#allocation2 + $0x110] sm:$0xff]
  %v1023 = vld [vmem:[#allocation2 + $0x118] sm:$0xff]
  %v1024 = vld [vmem:[%s8] sm:$0xf]
  %v1025 = vld [vmem:[%s8 + $0x4] sm:$0xf]
  %v1026 = vld [vmem:[%s8 + $0x8] sm:$0xf]
  %v1027 = vld [vmem:[%s8 + $0xc] sm:$0xf]
  %v1028 = vld [vmem:[%s8 + $0x10] sm:$0xf]
  %v1029 = vld [vmem:[%s8 + $0x14] sm:$0xf]
  %v1030 = vld [vmem:[%s8 + $0x18] sm:$0xf]
  %v1031 = vld [vmem:[%s8 + $0x1c] sm:$0xf]
  %v1032 = vld [vmem:[%s9] sm:$0xff]
  %v1033 = vld [vmem:[%s9 + $0x8] sm:$0xff]
  %v1034 = vld [vmem:[%s9 + $0x10] sm:$0xff]
  %v1035 = vld [vmem:[%s9 + $0x18] sm:$0xff]
  %v1036 = vld [vmem:[%s9 + $0x20] sm:$0xff]
  %v1037 = vld [vmem:[%s9 + $0x28] sm:$0xff]
  %v1038 = vld [vmem:[%s9 + $0x30] sm:$0xff]
  %v1039 = vld [vmem:[%s9 + $0x38] sm:$0xff]
  %1041 = vset.pattern.permute.xlu0 0
  %1042 = vperm.xlu0 %1041, %v1032
  %v1043 = vpop.permute.xlu0 %1042
  %1046 = vset.pattern.permute.xlu0 0
  %1047 = vperm.xlu0 %1046, %v1033
  %v1048 = vpop.permute.xlu0 %1047
  %1051 = vset.pattern.permute.xlu0 0
  %1052 = vperm.xlu0 %1051, %v1034
  %v1053 = vpop.permute.xlu0 %1052
  %1056 = vset.pattern.permute.xlu0 0
  %1057 = vperm.xlu0 %1056, %v1035
  %v1058 = vpop.permute.xlu0 %1057
  %1061 = vset.pattern.permute.xlu0 0
  %1062 = vperm.xlu0 %1061, %v1036
  %v1063 = vpop.permute.xlu0 %1062
  %1066 = vset.pattern.permute.xlu0 0
  %1067 = vperm.xlu0 %1066, %v1037
  %v1068 = vpop.permute.xlu0 %1067
  %1071 = vset.pattern.permute.xlu0 0
  %1072 = vperm.xlu0 %1071, %v1038
  %v1073 = vpop.permute.xlu0 %1072
  %1076 = vset.pattern.permute.xlu0 0
  %1077 = vperm.xlu0 %1076, %v1039
  %v1078 = vpop.permute.xlu0 %1077
  %v1088 = vunpack.c.l.b16 %v1024
  %v1089 = vunpack.c.l.b16 %v1025
  %v1090 = vunpack.c.l.b16 %v1026
  %v1091 = vunpack.c.l.b16 %v1027
  %v1092 = vunpack.c.l.b16 %v1028
  %v1093 = vunpack.c.l.b16 %v1029
  %v1094 = vunpack.c.l.b16 %v1030
  %v1095 = vunpack.c.l.b16 %v1031
  %v1096 = vpack.c.b16 %v1089, %v1088
  %v1097 = vpack.c.b16 %v1091, %v1090
  %v1098 = vpack.c.b16 %v1093, %v1092
  %v1099 = vpack.c.b16 %v1095, %v1094
  %v1136 = vunpack.c.l.b16 %v988
  %v1137 = vunpack.c.h.b16 %v988
  %v1138 = vunpack.c.l.b16 %v989
  %v1139 = vunpack.c.h.b16 %v989
  %v1140 = vunpack.c.l.b16 %v990
  %v1141 = vunpack.c.h.b16 %v990
  %v1142 = vunpack.c.l.b16 %v991
  %v1143 = vunpack.c.h.b16 %v991
  %v1144 = vunpack.c.l.b16 %v992
  %v1145 = vunpack.c.h.b16 %v992
  %v1146 = vunpack.c.l.b16 %v993
  %v1147 = vunpack.c.h.b16 %v993
  %v1148 = vunpack.c.l.b16 %v994
  %v1149 = vunpack.c.h.b16 %v994
  %v1150 = vunpack.c.l.b16 %v995
  %v1151 = vunpack.c.h.b16 %v995
  %v1152 = vunpack.c.l.b16 %v996
  %v1153 = vunpack.c.h.b16 %v996
  %v1154 = vunpack.c.l.b16 %v997
  %v1155 = vunpack.c.h.b16 %v997
  %v1156 = vunpack.c.l.b16 %v998
  %v1157 = vunpack.c.h.b16 %v998
  %v1158 = vunpack.c.l.b16 %v999
  %v1159 = vunpack.c.h.b16 %v999
  %v1160 = vunpack.c.l.b16 %v1000
  %v1161 = vunpack.c.h.b16 %v1000
  %v1162 = vunpack.c.l.b16 %v1001
  %v1163 = vunpack.c.h.b16 %v1001
  %v1164 = vunpack.c.l.b16 %v1002
  %v1165 = vunpack.c.h.b16 %v1002
  %v1166 = vunpack.c.l.b16 %v1003
  %v1167 = vunpack.c.h.b16 %v1003
  %v1168 = vunpack.c.l.b16 %v1004
  %v1169 = vunpack.c.h.b16 %v1004
  %v1170 = vunpack.c.l.b16 %v1005
  %v1171 = vunpack.c.h.b16 %v1005
  %v1172 = vunpack.c.l.b16 %v1006
  %v1173 = vunpack.c.h.b16 %v1006
  %v1174 = vunpack.c.l.b16 %v1007
  %v1175 = vunpack.c.h.b16 %v1007
  %v1176 = vunpack.c.l.b16 %v1008
  %v1177 = vunpack.c.h.b16 %v1008
  %v1178 = vunpack.c.l.b16 %v1009
  %v1179 = vunpack.c.h.b16 %v1009
  %v1180 = vunpack.c.l.b16 %v1010
  %v1181 = vunpack.c.h.b16 %v1010
  %v1182 = vunpack.c.l.b16 %v1011
  %v1183 = vunpack.c.h.b16 %v1011
  %v1184 = vunpack.c.l.b16 %v1012
  %v1185 = vunpack.c.h.b16 %v1012
  %v1186 = vunpack.c.l.b16 %v1013
  %v1187 = vunpack.c.h.b16 %v1013
  %v1188 = vunpack.c.l.b16 %v1014
  %v1189 = vunpack.c.h.b16 %v1014
  %v1190 = vunpack.c.l.b16 %v1015
  %v1191 = vunpack.c.h.b16 %v1015
  %v1192 = vunpack.c.l.b16 %v1016
  %v1193 = vunpack.c.h.b16 %v1016
  %v1194 = vunpack.c.l.b16 %v1017
  %v1195 = vunpack.c.h.b16 %v1017
  %v1196 = vunpack.c.l.b16 %v1018
  %v1197 = vunpack.c.h.b16 %v1018
  %v1198 = vunpack.c.l.b16 %v1019
  %v1199 = vunpack.c.h.b16 %v1019
  %v1200 = vunpack.c.l.b16 %v1020
  %v1201 = vunpack.c.h.b16 %v1020
  %v1202 = vunpack.c.l.b16 %v1021
  %v1203 = vunpack.c.h.b16 %v1021
  %v1204 = vunpack.c.l.b16 %v1022
  %v1205 = vunpack.c.h.b16 %v1022
  %v1206 = vunpack.c.l.b16 %v1023
  %v1207 = vunpack.c.h.b16 %v1023
  %v1208 = vpack.c.b16 %v1142, %v1136
  %v1209 = vpack.c.b16 %v1143, %v1137
  %v1210 = vpack.c.b16 %v1144, %v1138
  %v1211 = vpack.c.b16 %v1145, %v1139
  %v1212 = vpack.c.b16 %v1146, %v1140
  %v1213 = vpack.c.b16 %v1147, %v1141
  %v1214 = vpack.c.b16 %v1154, %v1148
  %v1215 = vpack.c.b16 %v1155, %v1149
  %v1216 = vpack.c.b16 %v1156, %v1150
  %v1217 = vpack.c.b16 %v1157, %v1151
  %v1218 = vpack.c.b16 %v1158, %v1152
  %v1219 = vpack.c.b16 %v1159, %v1153
  %v1220 = vpack.c.b16 %v1166, %v1160
  %v1221 = vpack.c.b16 %v1167, %v1161
  %v1222 = vpack.c.b16 %v1168, %v1162
  %v1223 = vpack.c.b16 %v1169, %v1163
  %v1224 = vpack.c.b16 %v1170, %v1164
  %v1225 = vpack.c.b16 %v1171, %v1165
  %v1226 = vpack.c.b16 %v1178, %v1172
  %v1227 = vpack.c.b16 %v1179, %v1173
  %v1228 = vpack.c.b16 %v1180, %v1174
  %v1229 = vpack.c.b16 %v1181, %v1175
  %v1230 = vpack.c.b16 %v1182, %v1176
  %v1231 = vpack.c.b16 %v1183, %v1177
  %v1232 = vpack.c.b16 %v1190, %v1184
  %v1233 = vpack.c.b16 %v1191, %v1185
  %v1234 = vpack.c.b16 %v1192, %v1186
  %v1235 = vpack.c.b16 %v1193, %v1187
  %v1236 = vpack.c.b16 %v1194, %v1188
  %v1237 = vpack.c.b16 %v1195, %v1189
  %v1238 = vpack.c.b16 %v1202, %v1196
  %v1239 = vpack.c.b16 %v1203, %v1197
  %v1240 = vpack.c.b16 %v1204, %v1198
  %v1241 = vpack.c.b16 %v1205, %v1199
  %v1242 = vpack.c.b16 %v1206, %v1200
  %v1243 = vpack.c.b16 %v1207, %v1201
  %vm1280 = vcmask 785408
  %v1282 = vsel %vm1280, %v1096, 0
  %v1285 = vsel %vm1280, %v1097, 0
  %v1288 = vsel %vm1280, %v1098, 0
  %v1291 = vsel %vm1280, %v1099, 0
  %1293 = vmatpush.bf16.msra.mxu0 0
  %1294 = vmatpush.bf16.msra.mxu0 0
  %1295 = vmatpush.bf16.msra.mxu0 %v1238
  %1296 = vmatpush.bf16.msra.mxu0 %v1232
  %1297 = vmatpush.bf16.msra.mxu0 %v1226
  %1298 = vmatpush.bf16.msra.mxu0 %v1220
  %1299 = vmatpush.bf16.msra.mxu0 %v1214
  %1300 = vmatpush.bf16.msra.mxu0 %v1208
  %1301 = vmatmul.bf16.gmra.mxu0 %v1282
  %v1302 = vpop.f32.mrf.mxu0
  %v1303 = vadd.f32 %v1043, %v1302
  %v1304 = vpop.f32.mrf.mxu0
  %v1305 = vadd.f32 %v1048, %v1304
  %1306 = vmatmul.bf16.gmra.mxu0 %v1285
  %v1307 = vpop.f32.mrf.mxu0
  %v1308 = vadd.f32 %v1053, %v1307
  %v1309 = vpop.f32.mrf.mxu0
  %v1310 = vadd.f32 %v1058, %v1309
  %1311 = vmatmul.bf16.gmra.mxu0 %v1288
  %v1312 = vpop.f32.mrf.mxu0
  %v1313 = vadd.f32 %v1063, %v1312
  %v1314 = vpop.f32.mrf.mxu0
  %v1315 = vadd.f32 %v1068, %v1314
  %1316 = vmatmul.bf16.gmra.mxu0 %v1291
  %v1317 = vpop.f32.mrf.mxu0
  %v1318 = vadd.f32 %v1073, %v1317
  %v1319 = vpop.f32.mrf.mxu0
  %v1320 = vadd.f32 %v1078, %v1319
  %1321 = vdwg.mxu0
  %1322 = vmatpush.bf16.msra.mxu0 0
  %1323 = vmatpush.bf16.msra.mxu0 0
  %1324 = vmatpush.bf16.msra.mxu0 %v1239
  %1325 = vmatpush.bf16.msra.mxu0 %v1233
  %1326 = vmatpush.bf16.msra.mxu0 %v1227
  %1327 = vmatpush.bf16.msra.mxu0 %v1221
  %1328 = vmatpush.bf16.msra.mxu0 %v1215
  %1329 = vmatpush.bf16.msra.mxu0 %v1209
  %1330 = vmatmul.bf16.gmra.mxu0 %v1282
  %v1331 = vpop.f32.mrf.mxu0
  %v1332 = vadd.f32 %v1043, %v1331
  %v1333 = vpop.f32.mrf.mxu0
  %v1334 = vadd.f32 %v1048, %v1333
  %1335 = vmatmul.bf16.gmra.mxu0 %v1285
  %v1336 = vpop.f32.mrf.mxu0
  %v1337 = vadd.f32 %v1053, %v1336
  %v1338 = vpop.f32.mrf.mxu0
  %v1339 = vadd.f32 %v1058, %v1338
  %1340 = vmatmul.bf16.gmra.mxu0 %v1288
  %v1341 = vpop.f32.mrf.mxu0
  %v1342 = vadd.f32 %v1063, %v1341
  %v1343 = vpop.f32.mrf.mxu0
  %v1344 = vadd.f32 %v1068, %v1343
  %1345 = vmatmul.bf16.gmra.mxu0 %v1291
  %v1346 = vpop.f32.mrf.mxu0
  %v1347 = vadd.f32 %v1073, %v1346
  %v1348 = vpop.f32.mrf.mxu0
  %v1349 = vadd.f32 %v1078, %v1348
  %1350 = vdwg.mxu0
  %1351 = vmatpush.bf16.msra.mxu0 0
  %1352 = vmatpush.bf16.msra.mxu0 0
  %1353 = vmatpush.bf16.msra.mxu0 %v1240
  %1354 = vmatpush.bf16.msra.mxu0 %v1234
  %1355 = vmatpush.bf16.msra.mxu0 %v1228
  %1356 = vmatpush.bf16.msra.mxu0 %v1222
  %1357 = vmatpush.bf16.msra.mxu0 %v1216
  %1358 = vmatpush.bf16.msra.mxu0 %v1210
  %1359 = vmatmul.bf16.gmra.mxu0 %v1282
  %v1360 = vpop.f32.mrf.mxu0
  %v1361 = vadd.f32 %v1043, %v1360
  %v1362 = vpop.f32.mrf.mxu0
  %v1363 = vadd.f32 %v1048, %v1362
  %1364 = vmatmul.bf16.gmra.mxu0 %v1285
  %v1365 = vpop.f32.mrf.mxu0
  %v1366 = vadd.f32 %v1053, %v1365
  %v1367 = vpop.f32.mrf.mxu0
  %v1368 = vadd.f32 %v1058, %v1367
  %1369 = vmatmul.bf16.gmra.mxu0 %v1288
  %v1370 = vpop.f32.mrf.mxu0
  %v1371 = vadd.f32 %v1063, %v1370
  %v1372 = vpop.f32.mrf.mxu0
  %v1373 = vadd.f32 %v1068, %v1372
  %1374 = vmatmul.bf16.gmra.mxu0 %v1291
  %v1375 = vpop.f32.mrf.mxu0
  %v1376 = vadd.f32 %v1073, %v1375
  %v1377 = vpop.f32.mrf.mxu0
  %v1378 = vadd.f32 %v1078, %v1377
  %1379 = vdwg.mxu0
  %1380 = vmatpush.bf16.msra.mxu0 0
  %1381 = vmatpush.bf16.msra.mxu0 0
  %1382 = vmatpush.bf16.msra.mxu0 %v1241
  %1383 = vmatpush.bf16.msra.mxu0 %v1235
  %1384 = vmatpush.bf16.msra.mxu0 %v1229
  %1385 = vmatpush.bf16.msra.mxu0 %v1223
  %1386 = vmatpush.bf16.msra.mxu0 %v1217
  %1387 = vmatpush.bf16.msra.mxu0 %v1211
  %1388 = vmatmul.bf16.gmra.mxu0 %v1282
  %v1389 = vpop.f32.mrf.mxu0
  %v1390 = vadd.f32 %v1043, %v1389
  %v1391 = vpop.f32.mrf.mxu0
  %v1392 = vadd.f32 %v1048, %v1391
  %1393 = vmatmul.bf16.gmra.mxu0 %v1285
  %v1394 = vpop.f32.mrf.mxu0
  %v1395 = vadd.f32 %v1053, %v1394
  %v1396 = vpop.f32.mrf.mxu0
  %v1397 = vadd.f32 %v1058, %v1396
  %1398 = vmatmul.bf16.gmra.mxu0 %v1288
  %v1399 = vpop.f32.mrf.mxu0
  %v1400 = vadd.f32 %v1063, %v1399
  %v1401 = vpop.f32.mrf.mxu0
  %v1402 = vadd.f32 %v1068, %v1401
  %1403 = vmatmul.bf16.gmra.mxu0 %v1291
  %v1404 = vpop.f32.mrf.mxu0
  %v1405 = vadd.f32 %v1073, %v1404
  %v1406 = vpop.f32.mrf.mxu0
  %v1407 = vadd.f32 %v1078, %v1406
  %1408 = vdwg.mxu0
  %1409 = vmatpush.bf16.msra.mxu0 0
  %1410 = vmatpush.bf16.msra.mxu0 0
  %1411 = vmatpush.bf16.msra.mxu0 %v1242
  %1412 = vmatpush.bf16.msra.mxu0 %v1236
  %1413 = vmatpush.bf16.msra.mxu0 %v1230
  %1414 = vmatpush.bf16.msra.mxu0 %v1224
  %1415 = vmatpush.bf16.msra.mxu0 %v1218
  %1416 = vmatpush.bf16.msra.mxu0 %v1212
  %1417 = vmatmul.bf16.gmra.mxu0 %v1282
  %v1418 = vpop.f32.mrf.mxu0
  %v1419 = vadd.f32 %v1043, %v1418
  %v1420 = vpop.f32.mrf.mxu0
  %v1421 = vadd.f32 %v1048, %v1420
  %1422 = vmatmul.bf16.gmra.mxu0 %v1285
  %v1423 = vpop.f32.mrf.mxu0
  %v1424 = vadd.f32 %v1053, %v1423
  %v1425 = vpop.f32.mrf.mxu0
  %v1426 = vadd.f32 %v1058, %v1425
  %1427 = vmatmul.bf16.gmra.mxu0 %v1288
  %v1428 = vpop.f32.mrf.mxu0
  %v1429 = vadd.f32 %v1063, %v1428
  %v1430 = vpop.f32.mrf.mxu0
  %v1431 = vadd.f32 %v1068, %v1430
  %1432 = vmatmul.bf16.gmra.mxu0 %v1291
  %v1433 = vpop.f32.mrf.mxu0
  %v1434 = vadd.f32 %v1073, %v1433
  %v1435 = vpop.f32.mrf.mxu0
  %v1436 = vadd.f32 %v1078, %v1435
  %1437 = vdwg.mxu0
  %1438 = vmatpush.bf16.msra.mxu0 0
  %1439 = vmatpush.bf16.msra.mxu0 0
  %1440 = vmatpush.bf16.msra.mxu0 %v1243
  %1441 = vmatpush.bf16.msra.mxu0 %v1237
  %1442 = vmatpush.bf16.msra.mxu0 %v1231
  %1443 = vmatpush.bf16.msra.mxu0 %v1225
  %1444 = vmatpush.bf16.msra.mxu0 %v1219
  %1445 = vmatpush.bf16.msra.mxu0 %v1213
  %1446 = vmatmul.bf16.gmra.mxu0 %v1282
  %v1447 = vpop.f32.mrf.mxu0
  %v1448 = vadd.f32 %v1043, %v1447
  %v1449 = vpop.f32.mrf.mxu0
  %v1450 = vadd.f32 %v1048, %v1449
  %1451 = vmatmul.bf16.gmra.mxu0 %v1285
  %v1452 = vpop.f32.mrf.mxu0
  %v1453 = vadd.f32 %v1053, %v1452
  %v1454 = vpop.f32.mrf.mxu0
  %v1455 = vadd.f32 %v1058, %v1454
  %1456 = vmatmul.bf16.gmra.mxu0 %v1288
  %v1457 = vpop.f32.mrf.mxu0
  %v1458 = vadd.f32 %v1063, %v1457
  %v1459 = vpop.f32.mrf.mxu0
  %v1460 = vadd.f32 %v1068, %v1459
  %1461 = vmatmul.bf16.gmra.mxu0 %v1291
  %v1462 = vpop.f32.mrf.mxu0
  %v1463 = vadd.f32 %v1073, %v1462
  %v1464 = vpop.f32.mrf.mxu0
  %v1465 = vadd.f32 %v1078, %v1464
  %1466 = vdwg.mxu0
  %vm1467 = vcmp.gt.f32.partialorder %v1303, 0.0
  %vm1468 = vcmp.gt.f32.partialorder %v1332, 0.0
  %vm1469 = vcmp.gt.f32.partialorder %v1361, 0.0
  %vm1470 = vcmp.gt.f32.partialorder %v1390, 0.0
  %vm1471 = vcmp.gt.f32.partialorder %v1419, 0.0
  %vm1472 = vcmp.gt.f32.partialorder %v1448, 0.0
  %vm1473 = vcmp.gt.f32.partialorder %v1305, 0.0
  %vm1474 = vcmp.gt.f32.partialorder %v1334, 0.0
  %vm1475 = vcmp.gt.f32.partialorder %v1363, 0.0
  %vm1476 = vcmp.gt.f32.partialorder %v1392, 0.0
  %vm1477 = vcmp.gt.f32.partialorder %v1421, 0.0
  %vm1478 = vcmp.gt.f32.partialorder %v1450, 0.0
  %vm1479 = vcmp.gt.f32.partialorder %v1308, 0.0
  %vm1480 = vcmp.gt.f32.partialorder %v1337, 0.0
  %vm1481 = vcmp.gt.f32.partialorder %v1366, 0.0
  %vm1482 = vcmp.gt.f32.partialorder %v1395, 0.0
  %vm1483 = vcmp.gt.f32.partialorder %v1424, 0.0
  %vm1484 = vcmp.gt.f32.partialorder %v1453, 0.0
  %vm1485 = vcmp.gt.f32.partialorder %v1310, 0.0
  %vm1486 = vcmp.gt.f32.partialorder %v1339, 0.0
  %vm1487 = vcmp.gt.f32.partialorder %v1368, 0.0
  %vm1488 = vcmp.gt.f32.partialorder %v1397, 0.0
  %vm1489 = vcmp.gt.f32.partialorder %v1426, 0.0
  %vm1490 = vcmp.gt.f32.partialorder %v1455, 0.0
  %vm1491 = vcmp.gt.f32.partialorder %v1313, 0.0
  %vm1492 = vcmp.gt.f32.partialorder %v1342, 0.0
  %vm1493 = vcmp.gt.f32.partialorder %v1371, 0.0
  %vm1494 = vcmp.gt.f32.partialorder %v1400, 0.0
  %vm1495 = vcmp.gt.f32.partialorder %v1429, 0.0
  %vm1496 = vcmp.gt.f32.partialorder %v1458, 0.0
  %vm1497 = vcmp.gt.f32.partialorder %v1315, 0.0
  %vm1498 = vcmp.gt.f32.partialorder %v1344, 0.0
  %vm1499 = vcmp.gt.f32.partialorder %v1373, 0.0
  %vm1500 = vcmp.gt.f32.partialorder %v1402, 0.0
  %vm1501 = vcmp.gt.f32.partialorder %v1431, 0.0
  %vm1502 = vcmp.gt.f32.partialorder %v1460, 0.0
  %vm1503 = vcmp.gt.f32.partialorder %v1318, 0.0
  %vm1504 = vcmp.gt.f32.partialorder %v1347, 0.0
  %vm1505 = vcmp.gt.f32.partialorder %v1376, 0.0
  %vm1506 = vcmp.gt.f32.partialorder %v1405, 0.0
  %vm1507 = vcmp.gt.f32.partialorder %v1434, 0.0
  %vm1508 = vcmp.gt.f32.partialorder %v1463, 0.0
  %vm1509 = vcmp.gt.f32.partialorder %v1320, 0.0
  %vm1510 = vcmp.gt.f32.partialorder %v1349, 0.0
  %vm1511 = vcmp.gt.f32.partialorder %v1378, 0.0
  %vm1512 = vcmp.gt.f32.partialorder %v1407, 0.0
  %vm1513 = vcmp.gt.f32.partialorder %v1436, 0.0
  %vm1514 = vcmp.gt.f32.partialorder %v1465, 0.0
  %v1515 = vmul.f32 %v1303, 0.2
  %v1516 = vmul.f32 %v1332, 0.2
  %v1517 = vmul.f32 %v1361, 0.2
  %v1518 = vmul.f32 %v1390, 0.2
  %v1519 = vmul.f32 %v1419, 0.2
  %v1520 = vmul.f32 %v1448, 0.2
  %v1521 = vmul.f32 %v1305, 0.2
  %v1522 = vmul.f32 %v1334, 0.2
  %v1523 = vmul.f32 %v1363, 0.2
  %v1524 = vmul.f32 %v1392, 0.2
  %v1525 = vmul.f32 %v1421, 0.2
  %v1526 = vmul.f32 %v1450, 0.2
  %v1527 = vmul.f32 %v1308, 0.2
  %v1528 = vmul.f32 %v1337, 0.2
  %v1529 = vmul.f32 %v1366, 0.2
  %v1530 = vmul.f32 %v1395, 0.2
  %v1531 = vmul.f32 %v1424, 0.2
  %v1532 = vmul.f32 %v1453, 0.2
  %v1533 = vmul.f32 %v1310, 0.2
  %v1534 = vmul.f32 %v1339, 0.2
  %v1535 = vmul.f32 %v1368, 0.2
  %v1536 = vmul.f32 %v1397, 0.2
  %v1537 = vmul.f32 %v1426, 0.2
  %v1538 = vmul.f32 %v1455, 0.2
  %v1539 = vmul.f32 %v1313, 0.2
  %v1540 = vmul.f32 %v1342, 0.2
  %v1541 = vmul.f32 %v1371, 0.2
  %v1542 = vmul.f32 %v1400, 0.2
  %v1543 = vmul.f32 %v1429, 0.2
  %v1544 = vmul.f32 %v1458, 0.2
  %v1545 = vmul.f32 %v1315, 0.2
  %v1546 = vmul.f32 %v1344, 0.2
  %v1547 = vmul.f32 %v1373, 0.2
  %v1548 = vmul.f32 %v1402, 0.2
  %v1549 = vmul.f32 %v1431, 0.2
  %v1550 = vmul.f32 %v1460, 0.2
  %v1551 = vmul.f32 %v1318, 0.2
  %v1552 = vmul.f32 %v1347, 0.2
  %v1553 = vmul.f32 %v1376, 0.2
  %v1554 = vmul.f32 %v1405, 0.2
  %v1555 = vmul.f32 %v1434, 0.2
  %v1556 = vmul.f32 %v1463, 0.2
  %v1557 = vmul.f32 %v1320, 0.2
  %v1558 = vmul.f32 %v1349, 0.2
  %v1559 = vmul.f32 %v1378, 0.2
  %v1560 = vmul.f32 %v1407, 0.2
  %v1561 = vmul.f32 %v1436, 0.2
  %v1562 = vmul.f32 %v1465, 0.2
  %v1563 = vsel %vm1467, %v1303, %v1515
  %v1564 = vsel %vm1468, %v1332, %v1516
  %v1565 = vsel %vm1469, %v1361, %v1517
  %v1566 = vsel %vm1470, %v1390, %v1518
  %v1567 = vsel %vm1471, %v1419, %v1519
  %v1568 = vsel %vm1472, %v1448, %v1520
  %v1569 = vsel %vm1473, %v1305, %v1521
  %v1570 = vsel %vm1474, %v1334, %v1522
  %v1571 = vsel %vm1475, %v1363, %v1523
  %v1572 = vsel %vm1476, %v1392, %v1524
  %v1573 = vsel %vm1477, %v1421, %v1525
  %v1574 = vsel %vm1478, %v1450, %v1526
  %v1575 = vsel %vm1479, %v1308, %v1527
  %v1576 = vsel %vm1480, %v1337, %v1528
  %v1577 = vsel %vm1481, %v1366, %v1529
  %v1578 = vsel %vm1482, %v1395, %v1530
  %v1579 = vsel %vm1483, %v1424, %v1531
  %v1580 = vsel %vm1484, %v1453, %v1532
  %v1581 = vsel %vm1485, %v1310, %v1533
  %v1582 = vsel %vm1486, %v1339, %v1534
  %v1583 = vsel %vm1487, %v1368, %v1535
  %v1584 = vsel %vm1488, %v1397, %v1536
  %v1585 = vsel %vm1489, %v1426, %v1537
  %v1586 = vsel %vm1490, %v1455, %v1538
  %v1587 = vsel %vm1491, %v1313, %v1539
  %v1588 = vsel %vm1492, %v1342, %v1540
  %v1589 = vsel %vm1493, %v1371, %v1541
  %v1590 = vsel %vm1494, %v1400, %v1542
  %v1591 = vsel %vm1495, %v1429, %v1543
  %v1592 = vsel %vm1496, %v1458, %v1544
  %v1593 = vsel %vm1497, %v1315, %v1545
  %v1594 = vsel %vm1498, %v1344, %v1546
  %v1595 = vsel %vm1499, %v1373, %v1547
  %v1596 = vsel %vm1500, %v1402, %v1548
  %v1597 = vsel %vm1501, %v1431, %v1549
  %v1598 = vsel %vm1502, %v1460, %v1550
  %v1599 = vsel %vm1503, %v1318, %v1551
  %v1600 = vsel %vm1504, %v1347, %v1552
  %v1601 = vsel %vm1505, %v1376, %v1553
  %v1602 = vsel %vm1506, %v1405, %v1554
  %v1603 = vsel %vm1507, %v1434, %v1555
  %v1604 = vsel %vm1508, %v1463, %v1556
  %v1605 = vsel %vm1509, %v1320, %v1557
  %v1606 = vsel %vm1510, %v1349, %v1558
  %v1607 = vsel %vm1511, %v1378, %v1559
  %v1608 = vsel %vm1512, %v1407, %v1560
  %v1609 = vsel %vm1513, %v1436, %v1561
  %v1610 = vsel %vm1514, %v1465, %v1562
  %v1611 = vpack.c.bf16 %v1569, %v1563
  %v1612 = vpack.c.bf16 %v1570, %v1564
  %v1613 = vpack.c.bf16 %v1571, %v1565
  %v1614 = vpack.c.bf16 %v1572, %v1566
  %v1615 = vpack.c.bf16 %v1573, %v1567
  %v1616 = vpack.c.bf16 %v1574, %v1568
  %v1617 = vpack.c.bf16 %v1581, %v1575
  %v1618 = vpack.c.bf16 %v1582, %v1576
  %v1619 = vpack.c.bf16 %v1583, %v1577
  %v1620 = vpack.c.bf16 %v1584, %v1578
  %v1621 = vpack.c.bf16 %v1585, %v1579
  %v1622 = vpack.c.bf16 %v1586, %v1580
  %v1623 = vpack.c.bf16 %v1593, %v1587
  %v1624 = vpack.c.bf16 %v1594, %v1588
  %v1625 = vpack.c.bf16 %v1595, %v1589
  %v1626 = vpack.c.bf16 %v1596, %v1590
  %v1627 = vpack.c.bf16 %v1597, %v1591
  %v1628 = vpack.c.bf16 %v1598, %v1592
  %v1629 = vpack.c.bf16 %v1605, %v1599
  %v1630 = vpack.c.bf16 %v1606, %v1600
  %v1631 = vpack.c.bf16 %v1607, %v1601
  %v1632 = vpack.c.bf16 %v1608, %v1602
  %v1633 = vpack.c.bf16 %v1609, %v1603
  %v1634 = vpack.c.bf16 %v1610, %v1604
  %v1635 = vld [vmem:[%s10] sm:$0xf]
  %v1636 = vld [vmem:[%s10 + $0x4] sm:$0xf]
  %v1637 = vld [vmem:[%s10 + $0x8] sm:$0xf]
  %v1638 = vld [vmem:[%s10 + $0xc] sm:$0xf]
  %v1639 = vld [vmem:[%s10 + $0x10] sm:$0xf]
  %v1640 = vld [vmem:[%s10 + $0x14] sm:$0xf]
  %v1641 = vld [vmem:[%s10 + $0x18] sm:$0xf]
  %v1642 = vld [vmem:[%s10 + $0x1c] sm:$0xf]
  %v1643 = vld [vmem:[%s11] sm:$0xff]
  %v1644 = vld [vmem:[%s11 + $0x8] sm:$0xff]
  %v1645 = vld [vmem:[%s11 + $0x10] sm:$0xff]
  %v1646 = vld [vmem:[%s11 + $0x18] sm:$0xff]
  %v1647 = vld [vmem:[%s11 + $0x20] sm:$0xff]
  %v1648 = vld [vmem:[%s11 + $0x28] sm:$0xff]
  %v1649 = vld [vmem:[%s11 + $0x30] sm:$0xff]
  %v1650 = vld [vmem:[%s11 + $0x38] sm:$0xff]
  %1652 = vset.pattern.permute.xlu0 0
  %1653 = vperm.xlu0 %1652, %v1643
  %v1654 = vpop.permute.xlu0 %1653
  %1657 = vset.pattern.permute.xlu0 0
  %1658 = vperm.xlu0 %1657, %v1644
  %v1659 = vpop.permute.xlu0 %1658
  %1662 = vset.pattern.permute.xlu0 0
  %1663 = vperm.xlu0 %1662, %v1645
  %v1664 = vpop.permute.xlu0 %1663
  %1667 = vset.pattern.permute.xlu0 0
  %1668 = vperm.xlu0 %1667, %v1646
  %v1669 = vpop.permute.xlu0 %1668
  %1672 = vset.pattern.permute.xlu0 0
  %1673 = vperm.xlu0 %1672, %v1647
  %v1674 = vpop.permute.xlu0 %1673
  %1677 = vset.pattern.permute.xlu0 0
  %1678 = vperm.xlu0 %1677, %v1648
  %v1679 = vpop.permute.xlu0 %1678
  %1682 = vset.pattern.permute.xlu0 0
  %1683 = vperm.xlu0 %1682, %v1649
  %v1684 = vpop.permute.xlu0 %1683
  %1687 = vset.pattern.permute.xlu0 0
  %1688 = vperm.xlu0 %1687, %v1650
  %v1689 = vpop.permute.xlu0 %1688
  %v1699 = vunpack.c.l.b16 %v1635
  %v1700 = vunpack.c.l.b16 %v1636
  %v1701 = vunpack.c.l.b16 %v1637
  %v1702 = vunpack.c.l.b16 %v1638
  %v1703 = vunpack.c.l.b16 %v1639
  %v1704 = vunpack.c.l.b16 %v1640
  %v1705 = vunpack.c.l.b16 %v1641
  %v1706 = vunpack.c.l.b16 %v1642
  %v1707 = vpack.c.b16 %v1700, %v1699
  %v1708 = vpack.c.b16 %v1702, %v1701
  %v1709 = vpack.c.b16 %v1704, %v1703
  %v1710 = vpack.c.b16 %v1706, %v1705
  %vm1711 = vcmask 523264
  %v1713 = vsel %vm1711, %v1707, 0
  %v1716 = vsel %vm1711, %v1708, 0
  %v1719 = vsel %vm1711, %v1709, 0
  %v1722 = vsel %vm1711, %v1710, 0
  %1724 = vmatpush.bf16.msra.mxu0 0
  %1725 = vmatpush.bf16.msra.mxu0 0
  %1726 = vmatpush.bf16.msra.mxu0 0
  %1727 = vmatpush.bf16.msra.mxu0 0
  %1728 = vmatpush.bf16.msra.mxu0 %v1629
  %1729 = vmatpush.bf16.msra.mxu0 %v1623
  %1730 = vmatpush.bf16.msra.mxu0 %v1617
  %1731 = vmatpush.bf16.msra.mxu0 %v1611
  %1732 = vmatmul.bf16.gmra.mxu0 %v1713
  %v1733 = vpop.f32.mrf.mxu0
  %v1734 = vadd.f32 %v1654, %v1733
  %v1735 = vpop.f32.mrf.mxu0
  %v1736 = vadd.f32 %v1659, %v1735
  %1737 = vmatmul.bf16.gmra.mxu0 %v1716
  %v1738 = vpop.f32.mrf.mxu0
  %v1739 = vadd.f32 %v1664, %v1738
  %v1740 = vpop.f32.mrf.mxu0
  %v1741 = vadd.f32 %v1669, %v1740
  %1742 = vmatmul.bf16.gmra.mxu0 %v1719
  %v1743 = vpop.f32.mrf.mxu0
  %v1744 = vadd.f32 %v1674, %v1743
  %v1745 = vpop.f32.mrf.mxu0
  %v1746 = vadd.f32 %v1679, %v1745
  %1747 = vmatmul.bf16.gmra.mxu0 %v1722
  %v1748 = vpop.f32.mrf.mxu0
  %v1749 = vadd.f32 %v1684, %v1748
  %v1750 = vpop.f32.mrf.mxu0
  %v1751 = vadd.f32 %v1689, %v1750
  %1752 = vdwg.mxu0
  %1753 = vmatpush.bf16.msra.mxu0 0
  %1754 = vmatpush.bf16.msra.mxu0 0
  %1755 = vmatpush.bf16.msra.mxu0 0
  %1756 = vmatpush.bf16.msra.mxu0 0
  %1757 = vmatpush.bf16.msra.mxu0 %v1630
  %1758 = vmatpush.bf16.msra.mxu0 %v1624
  %1759 = vmatpush.bf16.msra.mxu0 %v1618
  %1760 = vmatpush.bf16.msra.mxu0 %v1612
  %1761 = vmatmul.bf16.gmra.mxu0 %v1713
  %v1762 = vpop.f32.mrf.mxu0
  %v1763 = vadd.f32 %v1654, %v1762
  %v1764 = vpop.f32.mrf.mxu0
  %v1765 = vadd.f32 %v1659, %v1764
  %1766 = vmatmul.bf16.gmra.mxu0 %v1716
  %v1767 = vpop.f32.mrf.mxu0
  %v1768 = vadd.f32 %v1664, %v1767
  %v1769 = vpop.f32.mrf.mxu0
  %v1770 = vadd.f32 %v1669, %v1769
  %1771 = vmatmul.bf16.gmra.mxu0 %v1719
  %v1772 = vpop.f32.mrf.mxu0
  %v1773 = vadd.f32 %v1674, %v1772
  %v1774 = vpop.f32.mrf.mxu0
  %v1775 = vadd.f32 %v1679, %v1774
  %1776 = vmatmul.bf16.gmra.mxu0 %v1722
  %v1777 = vpop.f32.mrf.mxu0
  %v1778 = vadd.f32 %v1684, %v1777
  %v1779 = vpop.f32.mrf.mxu0
  %v1780 = vadd.f32 %v1689, %v1779
  %1781 = vdwg.mxu0
  %1782 = vmatpush.bf16.msra.mxu0 0
  %1783 = vmatpush.bf16.msra.mxu0 0
  %1784 = vmatpush.bf16.msra.mxu0 0
  %1785 = vmatpush.bf16.msra.mxu0 0
  %1786 = vmatpush.bf16.msra.mxu0 %v1631
  %1787 = vmatpush.bf16.msra.mxu0 %v1625
  %1788 = vmatpush.bf16.msra.mxu0 %v1619
  %1789 = vmatpush.bf16.msra.mxu0 %v1613
  %1790 = vmatmul.bf16.gmra.mxu0 %v1713
  %v1791 = vpop.f32.mrf.mxu0
  %v1792 = vadd.f32 %v1654, %v1791
  %v1793 = vpop.f32.mrf.mxu0
  %v1794 = vadd.f32 %v1659, %v1793
  %1795 = vmatmul.bf16.gmra.mxu0 %v1716
  %v1796 = vpop.f32.mrf.mxu0
  %v1797 = vadd.f32 %v1664, %v1796
  %v1798 = vpop.f32.mrf.mxu0
  %v1799 = vadd.f32 %v1669, %v1798
  %1800 = vmatmul.bf16.gmra.mxu0 %v1719
  %v1801 = vpop.f32.mrf.mxu0
  %v1802 = vadd.f32 %v1674, %v1801
  %v1803 = vpop.f32.mrf.mxu0
  %v1804 = vadd.f32 %v1679, %v1803
  %1805 = vmatmul.bf16.gmra.mxu0 %v1722
  %v1806 = vpop.f32.mrf.mxu0
  %v1807 = vadd.f32 %v1684, %v1806
  %v1808 = vpop.f32.mrf.mxu0
  %v1809 = vadd.f32 %v1689, %v1808
  %1810 = vdwg.mxu0
  %1811 = vmatpush.bf16.msra.mxu0 0
  %1812 = vmatpush.bf16.msra.mxu0 0
  %1813 = vmatpush.bf16.msra.mxu0 0
  %1814 = vmatpush.bf16.msra.mxu0 0
  %1815 = vmatpush.bf16.msra.mxu0 %v1632
  %1816 = vmatpush.bf16.msra.mxu0 %v1626
  %1817 = vmatpush.bf16.msra.mxu0 %v1620
  %1818 = vmatpush.bf16.msra.mxu0 %v1614
  %1819 = vmatmul.bf16.gmra.mxu0 %v1713
  %v1820 = vpop.f32.mrf.mxu0
  %v1821 = vadd.f32 %v1654, %v1820
  %v1822 = vpop.f32.mrf.mxu0
  %v1823 = vadd.f32 %v1659, %v1822
  %1824 = vmatmul.bf16.gmra.mxu0 %v1716
  %v1825 = vpop.f32.mrf.mxu0
  %v1826 = vadd.f32 %v1664, %v1825
  %v1827 = vpop.f32.mrf.mxu0
  %v1828 = vadd.f32 %v1669, %v1827
  %1829 = vmatmul.bf16.gmra.mxu0 %v1719
  %v1830 = vpop.f32.mrf.mxu0
  %v1831 = vadd.f32 %v1674, %v1830
  %v1832 = vpop.f32.mrf.mxu0
  %v1833 = vadd.f32 %v1679, %v1832
  %1834 = vmatmul.bf16.gmra.mxu0 %v1722
  %v1835 = vpop.f32.mrf.mxu0
  %v1836 = vadd.f32 %v1684, %v1835
  %v1837 = vpop.f32.mrf.mxu0
  %v1838 = vadd.f32 %v1689, %v1837
  %1839 = vdwg.mxu0
  %1840 = vmatpush.bf16.msra.mxu0 0
  %1841 = vmatpush.bf16.msra.mxu0 0
  %1842 = vmatpush.bf16.msra.mxu0 0
  %1843 = vmatpush.bf16.msra.mxu0 0
  %1844 = vmatpush.bf16.msra.mxu0 %v1633
  %1845 = vmatpush.bf16.msra.mxu0 %v1627
  %1846 = vmatpush.bf16.msra.mxu0 %v1621
  %1847 = vmatpush.bf16.msra.mxu0 %v1615
  %1848 = vmatmul.bf16.gmra.mxu0 %v1713
  %v1849 = vpop.f32.mrf.mxu0
  %v1850 = vadd.f32 %v1654, %v1849
  %v1851 = vpop.f32.mrf.mxu0
  %v1852 = vadd.f32 %v1659, %v1851
  %1853 = vmatmul.bf16.gmra.mxu0 %v1716
  %v1854 = vpop.f32.mrf.mxu0
  %v1855 = vadd.f32 %v1664, %v1854
  %v1856 = vpop.f32.mrf.mxu0
  %v1857 = vadd.f32 %v1669, %v1856
  %1858 = vmatmul.bf16.gmra.mxu0 %v1719
  %v1859 = vpop.f32.mrf.mxu0
  %v1860 = vadd.f32 %v1674, %v1859
  %v1861 = vpop.f32.mrf.mxu0
  %v1862 = vadd.f32 %v1679, %v1861
  %1863 = vmatmul.bf16.gmra.mxu0 %v1722
  %v1864 = vpop.f32.mrf.mxu0
  %v1865 = vadd.f32 %v1684, %v1864
  %v1866 = vpop.f32.mrf.mxu0
  %v1867 = vadd.f32 %v1689, %v1866
  %1868 = vdwg.mxu0
  %1869 = vmatpush.bf16.msra.mxu0 0
  %1870 = vmatpush.bf16.msra.mxu0 0
  %1871 = vmatpush.bf16.msra.mxu0 0
  %1872 = vmatpush.bf16.msra.mxu0 0
  %1873 = vmatpush.bf16.msra.mxu0 %v1634
  %1874 = vmatpush.bf16.msra.mxu0 %v1628
  %1875 = vmatpush.bf16.msra.mxu0 %v1622
  %1876 = vmatpush.bf16.msra.mxu0 %v1616
  %1877 = vmatmul.bf16.gmra.mxu0 %v1713
  %v1878 = vpop.f32.mrf.mxu0
  %v1879 = vadd.f32 %v1654, %v1878
  %v1880 = vpop.f32.mrf.mxu0
  %v1881 = vadd.f32 %v1659, %v1880
  %1882 = vmatmul.bf16.gmra.mxu0 %v1716
  %v1883 = vpop.f32.mrf.mxu0
  %v1884 = vadd.f32 %v1664, %v1883
  %v1885 = vpop.f32.mrf.mxu0
  %v1886 = vadd.f32 %v1669, %v1885
  %1887 = vmatmul.bf16.gmra.mxu0 %v1719
  %v1888 = vpop.f32.mrf.mxu0
  %v1889 = vadd.f32 %v1674, %v1888
  %v1890 = vpop.f32.mrf.mxu0
  %v1891 = vadd.f32 %v1679, %v1890
  %1892 = vmatmul.bf16.gmra.mxu0 %v1722
  %v1893 = vpop.f32.mrf.mxu0
  %v1894 = vadd.f32 %v1684, %v1893
  %v1895 = vpop.f32.mrf.mxu0
  %v1896 = vadd.f32 %v1689, %v1895
  %1897 = vdwg.mxu0
  %vm1898 = vcmp.gt.f32.partialorder %v1734, 0.0
  %vm1899 = vcmp.gt.f32.partialorder %v1763, 0.0
  %vm1900 = vcmp.gt.f32.partialorder %v1792, 0.0
  %vm1901 = vcmp.gt.f32.partialorder %v1821, 0.0
  %vm1902 = vcmp.gt.f32.partialorder %v1850, 0.0
  %vm1903 = vcmp.gt.f32.partialorder %v1879, 0.0
  %vm1904 = vcmp.gt.f32.partialorder %v1736, 0.0
  %vm1905 = vcmp.gt.f32.partialorder %v1765, 0.0
  %vm1906 = vcmp.gt.f32.partialorder %v1794, 0.0
  %vm1907 = vcmp.gt.f32.partialorder %v1823, 0.0
  %vm1908 = vcmp.gt.f32.partialorder %v1852, 0.0
  %vm1909 = vcmp.gt.f32.partialorder %v1881, 0.0
  %vm1910 = vcmp.gt.f32.partialorder %v1739, 0.0
  %vm1911 = vcmp.gt.f32.partialorder %v1768, 0.0
  %vm1912 = vcmp.gt.f32.partialorder %v1797, 0.0
  %vm1913 = vcmp.gt.f32.partialorder %v1826, 0.0
  %vm1914 = vcmp.gt.f32.partialorder %v1855, 0.0
  %vm1915 = vcmp.gt.f32.partialorder %v1884, 0.0
  %vm1916 = vcmp.gt.f32.partialorder %v1741, 0.0
  %vm1917 = vcmp.gt.f32.partialorder %v1770, 0.0
  %vm1918 = vcmp.gt.f32.partialorder %v1799, 0.0
  %vm1919 = vcmp.gt.f32.partialorder %v1828, 0.0
  %vm1920 = vcmp.gt.f32.partialorder %v1857, 0.0
  %vm1921 = vcmp.gt.f32.partialorder %v1886, 0.0
  %vm1922 = vcmp.gt.f32.partialorder %v1744, 0.0
  %vm1923 = vcmp.gt.f32.partialorder %v1773, 0.0
  %vm1924 = vcmp.gt.f32.partialorder %v1802, 0.0
  %vm1925 = vcmp.gt.f32.partialorder %v1831, 0.0
  %vm1926 = vcmp.gt.f32.partialorder %v1860, 0.0
  %vm1927 = vcmp.gt.f32.partialorder %v1889, 0.0
  %vm1928 = vcmp.gt.f32.partialorder %v1746, 0.0
  %vm1929 = vcmp.gt.f32.partialorder %v1775, 0.0
  %vm1930 = vcmp.gt.f32.partialorder %v1804, 0.0
  %vm1931 = vcmp.gt.f32.partialorder %v1833, 0.0
  %vm1932 = vcmp.gt.f32.partialorder %v1862, 0.0
  %vm1933 = vcmp.gt.f32.partialorder %v1891, 0.0
  %vm1934 = vcmp.gt.f32.partialorder %v1749, 0.0
  %vm1935 = vcmp.gt.f32.partialorder %v1778, 0.0
  %vm1936 = vcmp.gt.f32.partialorder %v1807, 0.0
  %vm1937 = vcmp.gt.f32.partialorder %v1836, 0.0
  %vm1938 = vcmp.gt.f32.partialorder %v1865, 0.0
  %vm1939 = vcmp.gt.f32.partialorder %v1894, 0.0
  %vm1940 = vcmp.gt.f32.partialorder %v1751, 0.0
  %vm1941 = vcmp.gt.f32.partialorder %v1780, 0.0
  %vm1942 = vcmp.gt.f32.partialorder %v1809, 0.0
  %vm1943 = vcmp.gt.f32.partialorder %v1838, 0.0
  %vm1944 = vcmp.gt.f32.partialorder %v1867, 0.0
  %vm1945 = vcmp.gt.f32.partialorder %v1896, 0.0
  %v1946 = vmul.f32 %v1734, 0.2
  %v1947 = vmul.f32 %v1763, 0.2
  %v1948 = vmul.f32 %v1792, 0.2
  %v1949 = vmul.f32 %v1821, 0.2
  %v1950 = vmul.f32 %v1850, 0.2
  %v1951 = vmul.f32 %v1879, 0.2
  %v1952 = vmul.f32 %v1736, 0.2
  %v1953 = vmul.f32 %v1765, 0.2
  %v1954 = vmul.f32 %v1794, 0.2
  %v1955 = vmul.f32 %v1823, 0.2
  %v1956 = vmul.f32 %v1852, 0.2
  %v1957 = vmul.f32 %v1881, 0.2
  %v1958 = vmul.f32 %v1739, 0.2
  %v1959 = vmul.f32 %v1768, 0.2
  %v1960 = vmul.f32 %v1797, 0.2
  %v1961 = vmul.f32 %v1826, 0.2
  %v1962 = vmul.f32 %v1855, 0.2
  %v1963 = vmul.f32 %v1884, 0.2
  %v1964 = vmul.f32 %v1741, 0.2
  %v1965 = vmul.f32 %v1770, 0.2
  %v1966 = vmul.f32 %v1799, 0.2
  %v1967 = vmul.f32 %v1828, 0.2
  %v1968 = vmul.f32 %v1857, 0.2
  %v1969 = vmul.f32 %v1886, 0.2
  %v1970 = vmul.f32 %v1744, 0.2
  %v1971 = vmul.f32 %v1773, 0.2
  %v1972 = vmul.f32 %v1802, 0.2
  %v1973 = vmul.f32 %v1831, 0.2
  %v1974 = vmul.f32 %v1860, 0.2
  %v1975 = vmul.f32 %v1889, 0.2
  %v1976 = vmul.f32 %v1746, 0.2
  %v1977 = vmul.f32 %v1775, 0.2
  %v1978 = vmul.f32 %v1804, 0.2
  %v1979 = vmul.f32 %v1833, 0.2
  %v1980 = vmul.f32 %v1862, 0.2
  %v1981 = vmul.f32 %v1891, 0.2
  %v1982 = vmul.f32 %v1749, 0.2
  %v1983 = vmul.f32 %v1778, 0.2
  %v1984 = vmul.f32 %v1807, 0.2
  %v1985 = vmul.f32 %v1836, 0.2
  %v1986 = vmul.f32 %v1865, 0.2
  %v1987 = vmul.f32 %v1894, 0.2
  %v1988 = vmul.f32 %v1751, 0.2
  %v1989 = vmul.f32 %v1780, 0.2
  %v1990 = vmul.f32 %v1809, 0.2
  %v1991 = vmul.f32 %v1838, 0.2
  %v1992 = vmul.f32 %v1867, 0.2
  %v1993 = vmul.f32 %v1896, 0.2
  %v1994 = vsel %vm1898, %v1734, %v1946
  %v1995 = vsel %vm1899, %v1763, %v1947
  %v1996 = vsel %vm1900, %v1792, %v1948
  %v1997 = vsel %vm1901, %v1821, %v1949
  %v1998 = vsel %vm1902, %v1850, %v1950
  %v1999 = vsel %vm1903, %v1879, %v1951
  %v2000 = vsel %vm1904, %v1736, %v1952
  %v2001 = vsel %vm1905, %v1765, %v1953
  %v2002 = vsel %vm1906, %v1794, %v1954
  %v2003 = vsel %vm1907, %v1823, %v1955
  %v2004 = vsel %vm1908, %v1852, %v1956
  %v2005 = vsel %vm1909, %v1881, %v1957
  %v2006 = vsel %vm1910, %v1739, %v1958
  %v2007 = vsel %vm1911, %v1768, %v1959
  %v2008 = vsel %vm1912, %v1797, %v1960
  %v2009 = vsel %vm1913, %v1826, %v1961
  %v2010 = vsel %vm1914, %v1855, %v1962
  %v2011 = vsel %vm1915, %v1884, %v1963
  %v2012 = vsel %vm1916, %v1741, %v1964
  %v2013 = vsel %vm1917, %v1770, %v1965
  %v2014 = vsel %vm1918, %v1799, %v1966
  %v2015 = vsel %vm1919, %v1828, %v1967
  %v2016 = vsel %vm1920, %v1857, %v1968
  %v2017 = vsel %vm1921, %v1886, %v1969
  %v2018 = vsel %vm1922, %v1744, %v1970
  %v2019 = vsel %vm1923, %v1773, %v1971
  %v2020 = vsel %vm1924, %v1802, %v1972
  %v2021 = vsel %vm1925, %v1831, %v1973
  %v2022 = vsel %vm1926, %v1860, %v1974
  %v2023 = vsel %vm1927, %v1889, %v1975
  %v2024 = vsel %vm1928, %v1746, %v1976
  %v2025 = vsel %vm1929, %v1775, %v1977
  %v2026 = vsel %vm1930, %v1804, %v1978
  %v2027 = vsel %vm1931, %v1833, %v1979
  %v2028 = vsel %vm1932, %v1862, %v1980
  %v2029 = vsel %vm1933, %v1891, %v1981
  %v2030 = vsel %vm1934, %v1749, %v1982
  %v2031 = vsel %vm1935, %v1778, %v1983
  %v2032 = vsel %vm1936, %v1807, %v1984
  %v2033 = vsel %vm1937, %v1836, %v1985
  %v2034 = vsel %vm1938, %v1865, %v1986
  %v2035 = vsel %vm1939, %v1894, %v1987
  %v2036 = vsel %vm1940, %v1751, %v1988
  %v2037 = vsel %vm1941, %v1780, %v1989
  %v2038 = vsel %vm1942, %v1809, %v1990
  %v2039 = vsel %vm1943, %v1838, %v1991
  %v2040 = vsel %vm1944, %v1867, %v1992
  %v2041 = vsel %vm1945, %v1896, %v1993
  %v2042 = vpack.c.bf16 %v2000, %v1994
  %v2043 = vpack.c.bf16 %v2001, %v1995
  %v2044 = vpack.c.bf16 %v2002, %v1996
  %v2045 = vpack.c.bf16 %v2003, %v1997
  %v2046 = vpack.c.bf16 %v2004, %v1998
  %v2047 = vpack.c.bf16 %v2005, %v1999
  %v2048 = vpack.c.bf16 %v2012, %v2006
  %v2049 = vpack.c.bf16 %v2013, %v2007
  %v2050 = vpack.c.bf16 %v2014, %v2008
  %v2051 = vpack.c.bf16 %v2015, %v2009
  %v2052 = vpack.c.bf16 %v2016, %v2010
  %v2053 = vpack.c.bf16 %v2017, %v2011
  %v2054 = vpack.c.bf16 %v2024, %v2018
  %v2055 = vpack.c.bf16 %v2025, %v2019
  %v2056 = vpack.c.bf16 %v2026, %v2020
  %v2057 = vpack.c.bf16 %v2027, %v2021
  %v2058 = vpack.c.bf16 %v2028, %v2022
  %v2059 = vpack.c.bf16 %v2029, %v2023
  %v2060 = vpack.c.bf16 %v2036, %v2030
  %v2061 = vpack.c.bf16 %v2037, %v2031
  %v2062 = vpack.c.bf16 %v2038, %v2032
  %v2063 = vpack.c.bf16 %v2039, %v2033
  %v2064 = vpack.c.bf16 %v2040, %v2034
  %v2065 = vpack.c.bf16 %v2041, %v2035
  %v2066 = vld [vmem:[%s12] sm:$0xf]
  %v2067 = vld [vmem:[%s12 + $0x4] sm:$0xf]
  %v2068 = vld [vmem:[%s12 + $0x8] sm:$0xf]
  %v2069 = vld [vmem:[%s12 + $0xc] sm:$0xf]
  %v2070 = vld [vmem:[%s12 + $0x10] sm:$0xf]
  %v2071 = vld [vmem:[%s12 + $0x14] sm:$0xf]
  %v2072 = vld [vmem:[%s12 + $0x18] sm:$0xf]
  %v2073 = vld [vmem:[%s12 + $0x1c] sm:$0xf]
  %v2074 = vld [vmem:[%s12 + $0x20] sm:$0xf]
  %v2075 = vld [vmem:[%s12 + $0x24] sm:$0xf]
  %v2076 = vld [vmem:[%s12 + $0x28] sm:$0xf]
  %v2077 = vld [vmem:[%s12 + $0x2c] sm:$0xf]
  %v2078 = vld [vmem:[%s12 + $0x30] sm:$0xf]
  %v2079 = vld [vmem:[%s12 + $0x34] sm:$0xf]
  %v2080 = vld [vmem:[%s13] sm:$0xff]
  %v2081 = vld [vmem:[%s13 + $0x8] sm:$0xff]
  %v2082 = vld [vmem:[%s13 + $0x10] sm:$0xff]
  %v2083 = vld [vmem:[%s13 + $0x18] sm:$0xff]
  %v2084 = vld [vmem:[%s13 + $0x20] sm:$0xff]
  %v2085 = vld [vmem:[%s13 + $0x28] sm:$0xff]
  %v2086 = vld [vmem:[%s13 + $0x30] sm:$0xff]
  %v2087 = vld [vmem:[%s13 + $0x38] sm:$0xff]
  %v2088 = vld [vmem:[%s13 + $0x40] sm:$0xff]
  %v2089 = vld [vmem:[%s13 + $0x48] sm:$0xff]
  %v2090 = vld [vmem:[%s13 + $0x50] sm:$0xff]
  %v2091 = vld [vmem:[%s13 + $0x58] sm:$0xff]
  %v2092 = vld [vmem:[%s13 + $0x60] sm:$0xff]
  %v2093 = vld [vmem:[%s13 + $0x68] sm:$0xff]
  %2095 = vset.pattern.permute.xlu0 0
  %2096 = vperm.xlu0 %2095, %v2080
  %v2097 = vpop.permute.xlu0 %2096
  %2100 = vset.pattern.permute.xlu0 0
  %2101 = vperm.xlu0 %2100, %v2081
  %v2102 = vpop.permute.xlu0 %2101
  %2105 = vset.pattern.permute.xlu0 0
  %2106 = vperm.xlu0 %2105, %v2082
  %v2107 = vpop.permute.xlu0 %2106
  %2110 = vset.pattern.permute.xlu0 0
  %2111 = vperm.xlu0 %2110, %v2083
  %v2112 = vpop.permute.xlu0 %2111
  %2115 = vset.pattern.permute.xlu0 0
  %2116 = vperm.xlu0 %2115, %v2084
  %v2117 = vpop.permute.xlu0 %2116
  %2120 = vset.pattern.permute.xlu0 0
  %2121 = vperm.xlu0 %2120, %v2085
  %v2122 = vpop.permute.xlu0 %2121
  %2125 = vset.pattern.permute.xlu0 0
  %2126 = vperm.xlu0 %2125, %v2086
  %v2127 = vpop.permute.xlu0 %2126
  %2130 = vset.pattern.permute.xlu0 0
  %2131 = vperm.xlu0 %2130, %v2087
  %v2132 = vpop.permute.xlu0 %2131
  %2135 = vset.pattern.permute.xlu0 0
  %2136 = vperm.xlu0 %2135, %v2088
  %v2137 = vpop.permute.xlu0 %2136
  %2140 = vset.pattern.permute.xlu0 0
  %2141 = vperm.xlu0 %2140, %v2089
  %v2142 = vpop.permute.xlu0 %2141
  %2145 = vset.pattern.permute.xlu0 0
  %2146 = vperm.xlu0 %2145, %v2090
  %v2147 = vpop.permute.xlu0 %2146
  %2150 = vset.pattern.permute.xlu0 0
  %2151 = vperm.xlu0 %2150, %v2091
  %v2152 = vpop.permute.xlu0 %2151
  %2155 = vset.pattern.permute.xlu0 0
  %2156 = vperm.xlu0 %2155, %v2092
  %v2157 = vpop.permute.xlu0 %2156
  %2160 = vset.pattern.permute.xlu0 0
  %2161 = vperm.xlu0 %2160, %v2093
  %v2162 = vpop.permute.xlu0 %2161
  %v2178 = vunpack.c.l.b16 %v2066
  %v2179 = vunpack.c.l.b16 %v2067
  %v2180 = vunpack.c.l.b16 %v2068
  %v2181 = vunpack.c.l.b16 %v2069
  %v2182 = vunpack.c.l.b16 %v2070
  %v2183 = vunpack.c.l.b16 %v2071
  %v2184 = vunpack.c.l.b16 %v2072
  %v2185 = vunpack.c.l.b16 %v2073
  %v2186 = vunpack.c.l.b16 %v2074
  %v2187 = vunpack.c.l.b16 %v2075
  %v2188 = vunpack.c.l.b16 %v2076
  %v2189 = vunpack.c.l.b16 %v2077
  %v2190 = vunpack.c.l.b16 %v2078
  %v2191 = vunpack.c.l.b16 %v2079
  %v2192 = vpack.c.b16 %v2179, %v2178
  %v2193 = vpack.c.b16 %v2181, %v2180
  %v2194 = vpack.c.b16 %v2183, %v2182
  %v2195 = vpack.c.b16 %v2185, %v2184
  %v2196 = vpack.c.b16 %v2187, %v2186
  %v2197 = vpack.c.b16 %v2189, %v2188
  %v2198 = vpack.c.b16 %v2191, %v2190
  %v2200 = vsel %vm1711, %v2192, 0
  %v2203 = vsel %vm1711, %v2193, 0
  %v2206 = vsel %vm1711, %v2194, 0
  %v2209 = vsel %vm1711, %v2195, 0
  %v2212 = vsel %vm1711, %v2196, 0
  %v2215 = vsel %vm1711, %v2197, 0
  %v2218 = vsel %vm1711, %v2198, 0
  %2220 = vmatpush.bf16.msra.mxu0 0
  %2221 = vmatpush.bf16.msra.mxu0 0
  %2222 = vmatpush.bf16.msra.mxu0 0
  %2223 = vmatpush.bf16.msra.mxu0 0
  %2224 = vmatpush.bf16.msra.mxu0 %v2060
  %2225 = vmatpush.bf16.msra.mxu0 %v2054
  %2226 = vmatpush.bf16.msra.mxu0 %v2048
  %2227 = vmatpush.bf16.msra.mxu0 %v2042
  %2228 = vmatmul.bf16.gmra.mxu0 %v2200
  %v2229 = vpop.f32.mrf.mxu0
  %v2230 = vadd.f32 %v2097, %v2229
  %v2231 = vpop.f32.mrf.mxu0
  %v2232 = vadd.f32 %v2102, %v2231
  %2233 = vmatmul.bf16.gmra.mxu0 %v2203
  %v2234 = vpop.f32.mrf.mxu0
  %v2235 = vadd.f32 %v2107, %v2234
  %v2236 = vpop.f32.mrf.mxu0
  %v2237 = vadd.f32 %v2112, %v2236
  %2238 = vmatmul.bf16.gmra.mxu0 %v2206
  %v2239 = vpop.f32.mrf.mxu0
  %v2240 = vadd.f32 %v2117, %v2239
  %v2241 = vpop.f32.mrf.mxu0
  %v2242 = vadd.f32 %v2122, %v2241
  %2243 = vmatmul.bf16.gmra.mxu0 %v2209
  %v2244 = vpop.f32.mrf.mxu0
  %v2245 = vadd.f32 %v2127, %v2244
  %v2246 = vpop.f32.mrf.mxu0
  %v2247 = vadd.f32 %v2132, %v2246
  %2248 = vmatmul.bf16.gmra.mxu0 %v2212
  %v2249 = vpop.f32.mrf.mxu0
  %v2250 = vadd.f32 %v2137, %v2249
  %v2251 = vpop.f32.mrf.mxu0
  %v2252 = vadd.f32 %v2142, %v2251
  %2253 = vmatmul.bf16.gmra.mxu0 %v2215
  %v2254 = vpop.f32.mrf.mxu0
  %v2255 = vadd.f32 %v2147, %v2254
  %v2256 = vpop.f32.mrf.mxu0
  %v2257 = vadd.f32 %v2152, %v2256
  %2258 = vmatmul.bf16.gmra.mxu0 %v2218
  %v2259 = vpop.f32.mrf.mxu0
  %v2260 = vadd.f32 %v2157, %v2259
  %v2261 = vpop.f32.mrf.mxu0
  %v2262 = vadd.f32 %v2162, %v2261
  %2263 = vdwg.mxu0
  %2264 = vmatpush.bf16.msra.mxu0 0
  %2265 = vmatpush.bf16.msra.mxu0 0
  %2266 = vmatpush.bf16.msra.mxu0 0
  %2267 = vmatpush.bf16.msra.mxu0 0
  %2268 = vmatpush.bf16.msra.mxu0 %v2061
  %2269 = vmatpush.bf16.msra.mxu0 %v2055
  %2270 = vmatpush.bf16.msra.mxu0 %v2049
  %2271 = vmatpush.bf16.msra.mxu0 %v2043
  %2272 = vmatmul.bf16.gmra.mxu0 %v2200
  %v2273 = vpop.f32.mrf.mxu0
  %v2274 = vadd.f32 %v2097, %v2273
  %v2275 = vpop.f32.mrf.mxu0
  %v2276 = vadd.f32 %v2102, %v2275
  %2277 = vmatmul.bf16.gmra.mxu0 %v2203
  %v2278 = vpop.f32.mrf.mxu0
  %v2279 = vadd.f32 %v2107, %v2278
  %v2280 = vpop.f32.mrf.mxu0
  %v2281 = vadd.f32 %v2112, %v2280
  %2282 = vmatmul.bf16.gmra.mxu0 %v2206
  %v2283 = vpop.f32.mrf.mxu0
  %v2284 = vadd.f32 %v2117, %v2283
  %v2285 = vpop.f32.mrf.mxu0
  %v2286 = vadd.f32 %v2122, %v2285
  %2287 = vmatmul.bf16.gmra.mxu0 %v2209
  %v2288 = vpop.f32.mrf.mxu0
  %v2289 = vadd.f32 %v2127, %v2288
  %v2290 = vpop.f32.mrf.mxu0
  %v2291 = vadd.f32 %v2132, %v2290
  %2292 = vmatmul.bf16.gmra.mxu0 %v2212
  %v2293 = vpop.f32.mrf.mxu0
  %v2294 = vadd.f32 %v2137, %v2293
  %v2295 = vpop.f32.mrf.mxu0
  %v2296 = vadd.f32 %v2142, %v2295
  %2297 = vmatmul.bf16.gmra.mxu0 %v2215
  %v2298 = vpop.f32.mrf.mxu0
  %v2299 = vadd.f32 %v2147, %v2298
  %v2300 = vpop.f32.mrf.mxu0
  %v2301 = vadd.f32 %v2152, %v2300
  %2302 = vmatmul.bf16.gmra.mxu0 %v2218
  %v2303 = vpop.f32.mrf.mxu0
  %v2304 = vadd.f32 %v2157, %v2303
  %v2305 = vpop.f32.mrf.mxu0
  %v2306 = vadd.f32 %v2162, %v2305
  %2307 = vdwg.mxu0
  %2308 = vmatpush.bf16.msra.mxu0 0
  %2309 = vmatpush.bf16.msra.mxu0 0
  %2310 = vmatpush.bf16.msra.mxu0 0
  %2311 = vmatpush.bf16.msra.mxu0 0
  %2312 = vmatpush.bf16.msra.mxu0 %v2062
  %2313 = vmatpush.bf16.msra.mxu0 %v2056
  %2314 = vmatpush.bf16.msra.mxu0 %v2050
  %2315 = vmatpush.bf16.msra.mxu0 %v2044
  %2316 = vmatmul.bf16.gmra.mxu0 %v2200
  %v2317 = vpop.f32.mrf.mxu0
  %v2318 = vadd.f32 %v2097, %v2317
  %v2319 = vpop.f32.mrf.mxu0
  %v2320 = vadd.f32 %v2102, %v2319
  %2321 = vmatmul.bf16.gmra.mxu0 %v2203
  %v2322 = vpop.f32.mrf.mxu0
  %v2323 = vadd.f32 %v2107, %v2322
  %v2324 = vpop.f32.mrf.mxu0
  %v2325 = vadd.f32 %v2112, %v2324
  %2326 = vmatmul.bf16.gmra.mxu0 %v2206
  %v2327 = vpop.f32.mrf.mxu0
  %v2328 = vadd.f32 %v2117, %v2327
  %v2329 = vpop.f32.mrf.mxu0
  %v2330 = vadd.f32 %v2122, %v2329
  %2331 = vmatmul.bf16.gmra.mxu0 %v2209
  %v2332 = vpop.f32.mrf.mxu0
  %v2333 = vadd.f32 %v2127, %v2332
  %v2334 = vpop.f32.mrf.mxu0
  %v2335 = vadd.f32 %v2132, %v2334
  %2336 = vmatmul.bf16.gmra.mxu0 %v2212
  %v2337 = vpop.f32.mrf.mxu0
  %v2338 = vadd.f32 %v2137, %v2337
  %v2339 = vpop.f32.mrf.mxu0
  %v2340 = vadd.f32 %v2142, %v2339
  %2341 = vmatmul.bf16.gmra.mxu0 %v2215
  %v2342 = vpop.f32.mrf.mxu0
  %v2343 = vadd.f32 %v2147, %v2342
  %v2344 = vpop.f32.mrf.mxu0
  %v2345 = vadd.f32 %v2152, %v2344
  %2346 = vmatmul.bf16.gmra.mxu0 %v2218
  %v2347 = vpop.f32.mrf.mxu0
  %v2348 = vadd.f32 %v2157, %v2347
  %v2349 = vpop.f32.mrf.mxu0
  %v2350 = vadd.f32 %v2162, %v2349
  %2351 = vdwg.mxu0
  %2352 = vmatpush.bf16.msra.mxu0 0
  %2353 = vmatpush.bf16.msra.mxu0 0
  %2354 = vmatpush.bf16.msra.mxu0 0
  %2355 = vmatpush.bf16.msra.mxu0 0
  %2356 = vmatpush.bf16.msra.mxu0 %v2063
  %2357 = vmatpush.bf16.msra.mxu0 %v2057
  %2358 = vmatpush.bf16.msra.mxu0 %v2051
  %2359 = vmatpush.bf16.msra.mxu0 %v2045
  %2360 = vmatmul.bf16.gmra.mxu0 %v2200
  %v2361 = vpop.f32.mrf.mxu0
  %v2362 = vadd.f32 %v2097, %v2361
  %v2363 = vpop.f32.mrf.mxu0
  %v2364 = vadd.f32 %v2102, %v2363
  %2365 = vmatmul.bf16.gmra.mxu0 %v2203
  %v2366 = vpop.f32.mrf.mxu0
  %v2367 = vadd.f32 %v2107, %v2366
  %v2368 = vpop.f32.mrf.mxu0
  %v2369 = vadd.f32 %v2112, %v2368
  %2370 = vmatmul.bf16.gmra.mxu0 %v2206
  %v2371 = vpop.f32.mrf.mxu0
  %v2372 = vadd.f32 %v2117, %v2371
  %v2373 = vpop.f32.mrf.mxu0
  %v2374 = vadd.f32 %v2122, %v2373
  %2375 = vmatmul.bf16.gmra.mxu0 %v2209
  %v2376 = vpop.f32.mrf.mxu0
  %v2377 = vadd.f32 %v2127, %v2376
  %v2378 = vpop.f32.mrf.mxu0
  %v2379 = vadd.f32 %v2132, %v2378
  %2380 = vmatmul.bf16.gmra.mxu0 %v2212
  %v2381 = vpop.f32.mrf.mxu0
  %v2382 = vadd.f32 %v2137, %v2381
  %v2383 = vpop.f32.mrf.mxu0
  %v2384 = vadd.f32 %v2142, %v2383
  %2385 = vmatmul.bf16.gmra.mxu0 %v2215
  %v2386 = vpop.f32.mrf.mxu0
  %v2387 = vadd.f32 %v2147, %v2386
  %v2388 = vpop.f32.mrf.mxu0
  %v2389 = vadd.f32 %v2152, %v2388
  %2390 = vmatmul.bf16.gmra.mxu0 %v2218
  %v2391 = vpop.f32.mrf.mxu0
  %v2392 = vadd.f32 %v2157, %v2391
  %v2393 = vpop.f32.mrf.mxu0
  %v2394 = vadd.f32 %v2162, %v2393
  %2395 = vdwg.mxu0
  %2396 = vmatpush.bf16.msra.mxu0 0
  %2397 = vmatpush.bf16.msra.mxu0 0
  %2398 = vmatpush.bf16.msra.mxu0 0
  %2399 = vmatpush.bf16.msra.mxu0 0
  %2400 = vmatpush.bf16.msra.mxu0 %v2064
  %2401 = vmatpush.bf16.msra.mxu0 %v2058
  %2402 = vmatpush.bf16.msra.mxu0 %v2052
  %2403 = vmatpush.bf16.msra.mxu0 %v2046
  %2404 = vmatmul.bf16.gmra.mxu0 %v2200
  %v2405 = vpop.f32.mrf.mxu0
  %v2406 = vadd.f32 %v2097, %v2405
  %v2407 = vpop.f32.mrf.mxu0
  %v2408 = vadd.f32 %v2102, %v2407
  %2409 = vmatmul.bf16.gmra.mxu0 %v2203
  %v2410 = vpop.f32.mrf.mxu0
  %v2411 = vadd.f32 %v2107, %v2410
  %v2412 = vpop.f32.mrf.mxu0
  %v2413 = vadd.f32 %v2112, %v2412
  %2414 = vmatmul.bf16.gmra.mxu0 %v2206
  %v2415 = vpop.f32.mrf.mxu0
  %v2416 = vadd.f32 %v2117, %v2415
  %v2417 = vpop.f32.mrf.mxu0
  %v2418 = vadd.f32 %v2122, %v2417
  %2419 = vmatmul.bf16.gmra.mxu0 %v2209
  %v2420 = vpop.f32.mrf.mxu0
  %v2421 = vadd.f32 %v2127, %v2420
  %v2422 = vpop.f32.mrf.mxu0
  %v2423 = vadd.f32 %v2132, %v2422
  %2424 = vmatmul.bf16.gmra.mxu0 %v2212
  %v2425 = vpop.f32.mrf.mxu0
  %v2426 = vadd.f32 %v2137, %v2425
  %v2427 = vpop.f32.mrf.mxu0
  %v2428 = vadd.f32 %v2142, %v2427
  %2429 = vmatmul.bf16.gmra.mxu0 %v2215
  %v2430 = vpop.f32.mrf.mxu0
  %v2431 = vadd.f32 %v2147, %v2430
  %v2432 = vpop.f32.mrf.mxu0
  %v2433 = vadd.f32 %v2152, %v2432
  %2434 = vmatmul.bf16.gmra.mxu0 %v2218
  %v2435 = vpop.f32.mrf.mxu0
  %v2436 = vadd.f32 %v2157, %v2435
  %v2437 = vpop.f32.mrf.mxu0
  %v2438 = vadd.f32 %v2162, %v2437
  %2439 = vdwg.mxu0
  %2440 = vmatpush.bf16.msra.mxu0 0
  %2441 = vmatpush.bf16.msra.mxu0 0
  %2442 = vmatpush.bf16.msra.mxu0 0
  %2443 = vmatpush.bf16.msra.mxu0 0
  %2444 = vmatpush.bf16.msra.mxu0 %v2065
  %2445 = vmatpush.bf16.msra.mxu0 %v2059
  %2446 = vmatpush.bf16.msra.mxu0 %v2053
  %2447 = vmatpush.bf16.msra.mxu0 %v2047
  %2448 = vmatmul.bf16.gmra.mxu0 %v2200
  %v2449 = vpop.f32.mrf.mxu0
  %v2450 = vadd.f32 %v2097, %v2449
  %v2451 = vpop.f32.mrf.mxu0
  %v2452 = vadd.f32 %v2102, %v2451
  %2453 = vmatmul.bf16.gmra.mxu0 %v2203
  %v2454 = vpop.f32.mrf.mxu0
  %v2455 = vadd.f32 %v2107, %v2454
  %v2456 = vpop.f32.mrf.mxu0
  %v2457 = vadd.f32 %v2112, %v2456
  %2458 = vmatmul.bf16.gmra.mxu0 %v2206
  %v2459 = vpop.f32.mrf.mxu0
  %v2460 = vadd.f32 %v2117, %v2459
  %v2461 = vpop.f32.mrf.mxu0
  %v2462 = vadd.f32 %v2122, %v2461
  %2463 = vmatmul.bf16.gmra.mxu0 %v2209
  %v2464 = vpop.f32.mrf.mxu0
  %v2465 = vadd.f32 %v2127, %v2464
  %v2466 = vpop.f32.mrf.mxu0
  %v2467 = vadd.f32 %v2132, %v2466
  %2468 = vmatmul.bf16.gmra.mxu0 %v2212
  %v2469 = vpop.f32.mrf.mxu0
  %v2470 = vadd.f32 %v2137, %v2469
  %v2471 = vpop.f32.mrf.mxu0
  %v2472 = vadd.f32 %v2142, %v2471
  %2473 = vmatmul.bf16.gmra.mxu0 %v2215
  %v2474 = vpop.f32.mrf.mxu0
  %v2475 = vadd.f32 %v2147, %v2474
  %v2476 = vpop.f32.mrf.mxu0
  %v2477 = vadd.f32 %v2152, %v2476
  %2478 = vmatmul.bf16.gmra.mxu0 %v2218
  %v2479 = vpop.f32.mrf.mxu0
  %v2480 = vadd.f32 %v2157, %v2479
  %v2481 = vpop.f32.mrf.mxu0
  %v2482 = vadd.f32 %v2162, %v2481
  %2483 = vdwg.mxu0
  %v2484 = vmax.f32 %v2230, 0.0
  %v2485 = vmax.f32 %v2274, 0.0
  %v2486 = vmax.f32 %v2318, 0.0
  %v2487 = vmax.f32 %v2362, 0.0
  %v2488 = vmax.f32 %v2406, 0.0
  %v2489 = vmax.f32 %v2450, 0.0
  %v2490 = vmax.f32 %v2232, 0.0
  %v2491 = vmax.f32 %v2276, 0.0
  %v2492 = vmax.f32 %v2320, 0.0
  %v2493 = vmax.f32 %v2364, 0.0
  %v2494 = vmax.f32 %v2408, 0.0
  %v2495 = vmax.f32 %v2452, 0.0
  %v2496 = vmax.f32 %v2235, 0.0
  %v2497 = vmax.f32 %v2279, 0.0
  %v2498 = vmax.f32 %v2323, 0.0
  %v2499 = vmax.f32 %v2367, 0.0
  %v2500 = vmax.f32 %v2411, 0.0
  %v2501 = vmax.f32 %v2455, 0.0
  %v2502 = vmax.f32 %v2237, 0.0
  %v2503 = vmax.f32 %v2281, 0.0
  %v2504 = vmax.f32 %v2325, 0.0
  %v2505 = vmax.f32 %v2369, 0.0
  %v2506 = vmax.f32 %v2413, 0.0
  %v2507 = vmax.f32 %v2457, 0.0
  %v2508 = vmax.f32 %v2240, 0.0
  %v2509 = vmax.f32 %v2284, 0.0
  %v2510 = vmax.f32 %v2328, 0.0
  %v2511 = vmax.f32 %v2372, 0.0
  %v2512 = vmax.f32 %v2416, 0.0
  %v2513 = vmax.f32 %v2460, 0.0
  %v2514 = vmax.f32 %v2242, 0.0
  %v2515 = vmax.f32 %v2286, 0.0
  %v2516 = vmax.f32 %v2330, 0.0
  %v2517 = vmax.f32 %v2374, 0.0
  %v2518 = vmax.f32 %v2418, 0.0
  %v2519 = vmax.f32 %v2462, 0.0
  %v2520 = vpack.c.bf16 %v2490, %v2484
  %v2521 = vpack.c.bf16 %v2491, %v2485
  %v2522 = vpack.c.bf16 %v2492, %v2486
  %v2523 = vpack.c.bf16 %v2493, %v2487
  %v2524 = vpack.c.bf16 %v2494, %v2488
  %v2525 = vpack.c.bf16 %v2495, %v2489
  %v2526 = vpack.c.bf16 %v2502, %v2496
  %v2527 = vpack.c.bf16 %v2503, %v2497
  %v2528 = vpack.c.bf16 %v2504, %v2498
  %v2529 = vpack.c.bf16 %v2505, %v2499
  %v2530 = vpack.c.bf16 %v2506, %v2500
  %v2531 = vpack.c.bf16 %v2507, %v2501
  %v2532 = vpack.c.bf16 %v2514, %v2508
  %v2533 = vpack.c.bf16 %v2515, %v2509
  %v2534 = vpack.c.bf16 %v2516, %v2510
  %v2535 = vpack.c.bf16 %v2517, %v2511
  %v2536 = vpack.c.bf16 %v2518, %v2512
  %v2537 = vpack.c.bf16 %v2519, %v2513
  %v2538 = vld [vmem:[%s14] sm:$0xf]
  %v2539 = vld [vmem:[%s14 + $0x4] sm:$0xf]
  %v2540 = vld [vmem:[%s14 + $0x8] sm:$0xf]
  %v2541 = vld [vmem:[%s14 + $0xc] sm:$0xf]
  %v2542 = vld [vmem:[%s15] sm:$0xff]
  %v2543 = vld [vmem:[%s15 + $0x8] sm:$0xff]
  %v2544 = vld [vmem:[%s15 + $0x10] sm:$0xff]
  %v2545 = vld [vmem:[%s15 + $0x18] sm:$0xff]
  %2547 = vset.pattern.permute.xlu0 0
  %2548 = vperm.xlu0 %2547, %v2542
  %v2549 = vpop.permute.xlu0 %2548
  %2552 = vset.pattern.permute.xlu0 0
  %2553 = vperm.xlu0 %2552, %v2543
  %v2554 = vpop.permute.xlu0 %2553
  %2557 = vset.pattern.permute.xlu0 0
  %2558 = vperm.xlu0 %2557, %v2544
  %v2559 = vpop.permute.xlu0 %2558
  %2562 = vset.pattern.permute.xlu0 0
  %2563 = vperm.xlu0 %2562, %v2545
  %v2564 = vpop.permute.xlu0 %2563
  %v2570 = vunpack.c.l.b16 %v2538
  %v2571 = vunpack.c.l.b16 %v2539
  %v2572 = vunpack.c.l.b16 %v2540
  %v2573 = vunpack.c.l.b16 %v2541
  %v2574 = vpack.c.b16 %v2571, %v2570
  %v2575 = vpack.c.b16 %v2573, %v2572
  %vm2576 = vcmask 392192
  %v2578 = vsel %vm2576, %v2574, 0
  %v2581 = vsel %vm2576, %v2575, 0
  %2583 = vmatpush.bf16.msra.mxu0 0
  %2584 = vmatpush.bf16.msra.mxu0 0
  %2585 = vmatpush.bf16.msra.mxu0 0
  %2586 = vmatpush.bf16.msra.mxu0 0
  %2587 = vmatpush.bf16.msra.mxu0 0
  %2588 = vmatpush.bf16.msra.mxu0 %v2532
  %2589 = vmatpush.bf16.msra.mxu0 %v2526
  %2590 = vmatpush.bf16.msra.mxu0 %v2520
  %2591 = vmatmul.bf16.gmra.mxu0 %v2578
  %v2592 = vpop.f32.mrf.mxu0
  %v2593 = vadd.f32 %v2549, %v2592
  %v2594 = vpop.f32.mrf.mxu0
  %v2595 = vadd.f32 %v2554, %v2594
  %2596 = vmatmul.bf16.gmra.mxu0 %v2581
  %v2597 = vpop.f32.mrf.mxu0
  %v2598 = vadd.f32 %v2559, %v2597
  %v2599 = vpop.f32.mrf.mxu0
  %v2600 = vadd.f32 %v2564, %v2599
  %2601 = vdwg.mxu0
  %2602 = vmatpush.bf16.msra.mxu0 0
  %2603 = vmatpush.bf16.msra.mxu0 0
  %2604 = vmatpush.bf16.msra.mxu0 0
  %2605 = vmatpush.bf16.msra.mxu0 0
  %2606 = vmatpush.bf16.msra.mxu0 0
  %2607 = vmatpush.bf16.msra.mxu0 %v2533
  %2608 = vmatpush.bf16.msra.mxu0 %v2527
  %2609 = vmatpush.bf16.msra.mxu0 %v2521
  %2610 = vmatmul.bf16.gmra.mxu0 %v2578
  %v2611 = vpop.f32.mrf.mxu0
  %v2612 = vadd.f32 %v2549, %v2611
  %v2613 = vpop.f32.mrf.mxu0
  %v2614 = vadd.f32 %v2554, %v2613
  %2615 = vmatmul.bf16.gmra.mxu0 %v2581
  %v2616 = vpop.f32.mrf.mxu0
  %v2617 = vadd.f32 %v2559, %v2616
  %v2618 = vpop.f32.mrf.mxu0
  %v2619 = vadd.f32 %v2564, %v2618
  %2620 = vdwg.mxu0
  %2621 = vmatpush.bf16.msra.mxu0 0
  %2622 = vmatpush.bf16.msra.mxu0 0
  %2623 = vmatpush.bf16.msra.mxu0 0
  %2624 = vmatpush.bf16.msra.mxu0 0
  %2625 = vmatpush.bf16.msra.mxu0 0
  %2626 = vmatpush.bf16.msra.mxu0 %v2534
  %2627 = vmatpush.bf16.msra.mxu0 %v2528
  %2628 = vmatpush.bf16.msra.mxu0 %v2522
  %2629 = vmatmul.bf16.gmra.mxu0 %v2578
  %v2630 = vpop.f32.mrf.mxu0
  %v2631 = vadd.f32 %v2549, %v2630
  %v2632 = vpop.f32.mrf.mxu0
  %v2633 = vadd.f32 %v2554, %v2632
  %2634 = vmatmul.bf16.gmra.mxu0 %v2581
  %v2635 = vpop.f32.mrf.mxu0
  %v2636 = vadd.f32 %v2559, %v2635
  %v2637 = vpop.f32.mrf.mxu0
  %v2638 = vadd.f32 %v2564, %v2637
  %2639 = vdwg.mxu0
  %2640 = vmatpush.bf16.msra.mxu0 0
  %2641 = vmatpush.bf16.msra.mxu0 0
  %2642 = vmatpush.bf16.msra.mxu0 0
  %2643 = vmatpush.bf16.msra.mxu0 0
  %2644 = vmatpush.bf16.msra.mxu0 0
  %2645 = vmatpush.bf16.msra.mxu0 %v2535
  %2646 = vmatpush.bf16.msra.mxu0 %v2529
  %2647 = vmatpush.bf16.msra.mxu0 %v2523
  %2648 = vmatmul.bf16.gmra.mxu0 %v2578
  %v2649 = vpop.f32.mrf.mxu0
  %v2650 = vadd.f32 %v2549, %v2649
  %v2651 = vpop.f32.mrf.mxu0
  %v2652 = vadd.f32 %v2554, %v2651
  %2653 = vmatmul.bf16.gmra.mxu0 %v2581
  %v2654 = vpop.f32.mrf.mxu0
  %v2655 = vadd.f32 %v2559, %v2654
  %v2656 = vpop.f32.mrf.mxu0
  %v2657 = vadd.f32 %v2564, %v2656
  %2658 = vdwg.mxu0
  %2659 = vmatpush.bf16.msra.mxu0 0
  %2660 = vmatpush.bf16.msra.mxu0 0
  %2661 = vmatpush.bf16.msra.mxu0 0
  %2662 = vmatpush.bf16.msra.mxu0 0
  %2663 = vmatpush.bf16.msra.mxu0 0
  %2664 = vmatpush.bf16.msra.mxu0 %v2536
  %2665 = vmatpush.bf16.msra.mxu0 %v2530
  %2666 = vmatpush.bf16.msra.mxu0 %v2524
  %2667 = vmatmul.bf16.gmra.mxu0 %v2578
  %v2668 = vpop.f32.mrf.mxu0
  %v2669 = vadd.f32 %v2549, %v2668
  %v2670 = vpop.f32.mrf.mxu0
  %v2671 = vadd.f32 %v2554, %v2670
  %2672 = vmatmul.bf16.gmra.mxu0 %v2581
  %v2673 = vpop.f32.mrf.mxu0
  %v2674 = vadd.f32 %v2559, %v2673
  %v2675 = vpop.f32.mrf.mxu0
  %v2676 = vadd.f32 %v2564, %v2675
  %2677 = vdwg.mxu0
  %2678 = vmatpush.bf16.msra.mxu0 0
  %2679 = vmatpush.bf16.msra.mxu0 0
  %2680 = vmatpush.bf16.msra.mxu0 0
  %2681 = vmatpush.bf16.msra.mxu0 0
  %2682 = vmatpush.bf16.msra.mxu0 0
  %2683 = vmatpush.bf16.msra.mxu0 %v2537
  %2684 = vmatpush.bf16.msra.mxu0 %v2531
  %2685 = vmatpush.bf16.msra.mxu0 %v2525
  %2686 = vmatmul.bf16.gmra.mxu0 %v2578
  %v2687 = vpop.f32.mrf.mxu0
  %v2688 = vadd.f32 %v2549, %v2687
  %v2689 = vpop.f32.mrf.mxu0
  %v2690 = vadd.f32 %v2554, %v2689
  %2691 = vmatmul.bf16.gmra.mxu0 %v2581
  %v2692 = vpop.f32.mrf.mxu0
  %v2693 = vadd.f32 %v2559, %v2692
  %v2694 = vpop.f32.mrf.mxu0
  %v2695 = vadd.f32 %v2564, %v2694
  %2696 = vdwg.mxu0
  %v2697 = vpack.c.bf16 %v2612, %v2593
  %v2698 = vpack.c.bf16 %v2650, %v2631
  %v2699 = vpack.c.bf16 %v2688, %v2669
  %v2700 = vpack.c.bf16 %v2614, %v2595
  %v2701 = vpack.c.bf16 %v2652, %v2633
  %v2702 = vpack.c.bf16 %v2690, %v2671
  %v2703 = vpack.c.bf16 %v2617, %v2598
  %v2704 = vpack.c.bf16 %v2655, %v2636
  %v2705 = vpack.c.bf16 %v2693, %v2674
  %v2706 = vpack.c.bf16 %v2619, %v2600
  %v2707 = vpack.c.bf16 %v2657, %v2638
  %v2708 = vpack.c.bf16 %v2695, %v2676
  %2709 = vst [vmem:[#allocation2 + $0x180] sm:$0xff] %v2697
  %2710 = vst [vmem:[#allocation2 + $0x188] sm:$0xff] %v2698
  %2711 = vst [vmem:[#allocation2 + $0x190] sm:$0xff] %v2699
  %2712 = vst [vmem:[#allocation2 + $0x198] sm:$0xff] %v2700
  %2713 = vst [vmem:[#allocation2 + $0x1a0] sm:$0xff] %v2701
  %2714 = vst [vmem:[#allocation2 + $0x1a8] sm:$0xff] %v2702
  %2715 = vst [vmem:[#allocation2 + $0x1b0] sm:$0xff] %v2703
  %2716 = vst [vmem:[#allocation2 + $0x1b8] sm:$0xff] %v2704
  %2717 = vst [vmem:[#allocation2 + $0x1c0] sm:$0xff] %v2705
  %2718 = vst [vmem:[#allocation2 + $0x1c8] sm:$0xff] %v2706
  %2719 = vst [vmem:[#allocation2 + $0x1d0] sm:$0xff] %v2707
  %2720 = vst [vmem:[#allocation2 + $0x1d8] sm:$0xff] %v2708
  %v2721 = vpack.c.bf16 %v2289, %v2245
  %v2722 = vpack.c.bf16 %v2377, %v2333
  %v2723 = vpack.c.bf16 %v2465, %v2421
  %v2724 = vpack.c.bf16 %v2291, %v2247
  %v2725 = vpack.c.bf16 %v2379, %v2335
  %v2726 = vpack.c.bf16 %v2467, %v2423
  %2727 = vst [vmem:[#allocation3] sm:$0xff] %v2721
  %2728 = vst [vmem:[#allocation3 + $0x8] sm:$0xff] %v2722
  %2729 = vst [vmem:[#allocation3 + $0x10] sm:$0xff] %v2723
  %2730 = vst [vmem:[#allocation3 + $0x18] sm:$0xff] %v2724
  %2731 = vst [vmem:[#allocation3 + $0x20] sm:$0xff] %v2725
  %2732 = vst [vmem:[#allocation3 + $0x28] sm:$0xff] %v2726
  %v2733 = vpack.c.bf16 %v2294, %v2250
  %v2734 = vpack.c.bf16 %v2382, %v2338
  %v2735 = vpack.c.bf16 %v2470, %v2426
  %v2736 = vpack.c.bf16 %v2296, %v2252
  %v2737 = vpack.c.bf16 %v2384, %v2340
  %v2738 = vpack.c.bf16 %v2472, %v2428
  %2739 = vst [vmem:[#allocation3 + $0x30] sm:$0xff] %v2733
  %2740 = vst [vmem:[#allocation3 + $0x38] sm:$0xff] %v2734
  %2741 = vst [vmem:[#allocation3 + $0x40] sm:$0xff] %v2735
  %2742 = vst [vmem:[#allocation3 + $0x48] sm:$0xff] %v2736
  %2743 = vst [vmem:[#allocation3 + $0x50] sm:$0xff] %v2737
  %2744 = vst [vmem:[#allocation3 + $0x58] sm:$0xff] %v2738
  %v2745 = vpack.c.bf16 %v2299, %v2255
  %v2746 = vpack.c.bf16 %v2387, %v2343
  %v2747 = vpack.c.bf16 %v2475, %v2431
  %v2748 = vpack.c.bf16 %v2301, %v2257
  %v2749 = vpack.c.bf16 %v2389, %v2345
  %v2750 = vpack.c.bf16 %v2477, %v2433
  %v2751 = vpack.c.bf16 %v2304, %v2260
  %v2752 = vpack.c.bf16 %v2392, %v2348
  %v2753 = vpack.c.bf16 %v2480, %v2436
  %v2754 = vpack.c.bf16 %v2306, %v2262
  %v2755 = vpack.c.bf16 %v2394, %v2350
  %v2756 = vpack.c.bf16 %v2482, %v2438
  %2757 = vst [vmem:[#allocation3 + $0x60] sm:$0xff] %v2745
  %2758 = vst [vmem:[#allocation3 + $0x68] sm:$0xff] %v2746
  %2759 = vst [vmem:[#allocation3 + $0x70] sm:$0xff] %v2747
  %2760 = vst [vmem:[#allocation3 + $0x78] sm:$0xff] %v2748
  %2761 = vst [vmem:[#allocation3 + $0x80] sm:$0xff] %v2749
  %2762 = vst [vmem:[#allocation3 + $0x88] sm:$0xff] %v2750
  %2763 = vst [vmem:[#allocation3 + $0x90] sm:$0xff] %v2751
  %2764 = vst [vmem:[#allocation3 + $0x98] sm:$0xff] %v2752
  %2765 = vst [vmem:[#allocation3 + $0xa0] sm:$0xff] %v2753
  %2766 = vst [vmem:[#allocation3 + $0xa8] sm:$0xff] %v2754
  %2767 = vst [vmem:[#allocation3 + $0xb0] sm:$0xff] %v2755
  %2768 = vst [vmem:[#allocation3 + $0xb8] sm:$0xff] %v2756
  %v2769 = vld [vmem:[#allocation3] sm:$0xf]
  %v2770 = vld [vmem:[#allocation3 + $0x18] sm:$0xf]
  %v2771 = vld [vmem:[#allocation3 + $0x30] sm:$0xf]
  %v2772 = vld [vmem:[#allocation3 + $0x48] sm:$0xf]
  %v2773 = vld [vmem:[#allocation3 + $0x60] sm:$0xf]
  %v2774 = vld [vmem:[#allocation3 + $0x78] sm:$0xf]
  %v2775 = vld [vmem:[#allocation3 + $0x90] sm:$0xf]
  %v2776 = vld [vmem:[#allocation3 + $0xa8] sm:$0xf]
  %v2779 = vunpack.c.l.b16 %v2769
  %v2780 = vunpack.c.l.b16 %v2770
  %v2781 = vpack.c.b16 %v2780, %v2779
  %2783 = vxpose.xlu0.c.b16.start [1/8] %v2781, 128
  %2784 = vxpose.xlu0.c.b16.cont [2/8] 0, 128
  %2785 = vxpose.xlu0.c.b16.cont [3/8] 0, 128
  %2786 = vxpose.xlu0.c.b16.cont [4/8] 0, 128
  %2787 = vxpose.xlu0.c.b16.cont [5/8] 0, 128
  %2788 = vxpose.xlu0.c.b16.cont [6/8] 0, 128
  %2789 = vxpose.xlu0.c.b16.cont [7/8] 0, 128
  %2790 = vxpose.xlu0.c.b16.end [8/8] 0, 128
  %v2791 = vpop.trf.xlu0
  %v2792 = vpop.trf.xlu0
  %v2793 = vpop.trf.xlu0
  %v2794 = vpop.trf.xlu0
  %v2795 = vpop.trf.xlu0
  %v2796 = vpop.trf.xlu0
  %v2797 = vpop.trf.xlu0
  %v2798 = vpop.trf.xlu0
  %v2801 = vunpack.c.l.b16 %v2771
  %v2802 = vunpack.c.l.b16 %v2772
  %v2803 = vpack.c.b16 %v2802, %v2801
  %v2806 = vsel %vm142, %v2791, 0
  %v2809 = vsel %vm142, %v2792, 0
  %v2812 = vsel %vm142, %v2793, 0
  %v2815 = vsel %vm142, %v2794, 0
  %v2818 = vsel %vm142, %v2795, 0
  %v2821 = vsel %vm142, %v2796, 0
  %v2824 = vsel %vm142, %v2797, 0
  %v2827 = vsel %vm142, %v2798, 0
  %2829 = vmatpush.bf16.msra.mxu0 0
  %2830 = vmatpush.bf16.msra.mxu0 0
  %2831 = vmatpush.bf16.msra.mxu0 0
  %2832 = vmatpush.bf16.msra.mxu0 0
  %2833 = vmatpush.bf16.msra.mxu0 0
  %2834 = vmatpush.bf16.msra.mxu0 0
  %2835 = vmatpush.bf16.msra.mxu0 0
  %2836 = vmatpush.bf16.msra.mxu0 %v2803
  %2837 = vmatmul.bf16.gmra.mxu0 %v2806
  %v2838 = vpop.f32.mrf.mxu0
  %v2839 = vadd.f32 0.0, %v2838
  %v2840 = vpop.f32.mrf.mxu0
  %v2841 = vadd.f32 0.0, %v2840
  %2842 = vmatmul.bf16.gmra.mxu0 %v2809
  %v2843 = vpop.f32.mrf.mxu0
  %v2844 = vadd.f32 0.0, %v2843
  %v2845 = vpop.f32.mrf.mxu0
  %v2846 = vadd.f32 0.0, %v2845
  %2847 = vmatmul.bf16.gmra.mxu0 %v2812
  %v2848 = vpop.f32.mrf.mxu0
  %v2849 = vadd.f32 0.0, %v2848
  %v2850 = vpop.f32.mrf.mxu0
  %v2851 = vadd.f32 0.0, %v2850
  %2852 = vmatmul.bf16.gmra.mxu0 %v2815
  %v2853 = vpop.f32.mrf.mxu0
  %v2854 = vadd.f32 0.0, %v2853
  %v2855 = vpop.f32.mrf.mxu0
  %v2856 = vadd.f32 0.0, %v2855
  %2857 = vmatmul.bf16.gmra.mxu0 %v2818
  %v2858 = vpop.f32.mrf.mxu0
  %v2859 = vadd.f32 0.0, %v2858
  %v2860 = vpop.f32.mrf.mxu0
  %v2861 = vadd.f32 0.0, %v2860
  %2862 = vmatmul.bf16.gmra.mxu0 %v2821
  %v2863 = vpop.f32.mrf.mxu0
  %v2864 = vadd.f32 0.0, %v2863
  %v2865 = vpop.f32.mrf.mxu0
  %v2866 = vadd.f32 0.0, %v2865
  %2867 = vmatmul.bf16.gmra.mxu0 %v2824
  %v2868 = vpop.f32.mrf.mxu0
  %v2869 = vadd.f32 0.0, %v2868
  %v2870 = vpop.f32.mrf.mxu0
  %v2871 = vadd.f32 0.0, %v2870
  %2872 = vmatmul.bf16.gmra.mxu0 %v2827
  %v2873 = vpop.f32.mrf.mxu0
  %v2874 = vadd.f32 0.0, %v2873
  %v2875 = vpop.f32.mrf.mxu0
  %v2876 = vadd.f32 0.0, %v2875
  %2877 = vdwg.mxu0
  %v2878 = vmul.f32 %v2839, 0.25
  %v2879 = vmul.f32 %v2841, 0.25
  %v2880 = vmul.f32 %v2844, 0.25
  %v2881 = vmul.f32 %v2846, 0.25
  %v2882 = vmul.f32 %v2849, 0.25
  %v2883 = vmul.f32 %v2851, 0.25
  %v2884 = vmul.f32 %v2854, 0.25
  %v2885 = vmul.f32 %v2856, 0.25
  %v2886 = vmul.f32 %v2859, 0.25
  %v2887 = vmul.f32 %v2861, 0.25
  %v2888 = vmul.f32 %v2864, 0.25
  %v2889 = vmul.f32 %v2866, 0.25
  %v2890 = vmul.f32 %v2869, 0.25
  %v2891 = vmul.f32 %v2871, 0.25
  %v2892 = vmul.f32 %v2874, 0.25
  %v2893 = vmul.f32 %v2876, 0.25
  %2894 = vmax.xlane.f32.xlu0 %v2878
  %v2895 = vpop.xlane.xlu0 %2894
  %2896 = vmax.xlane.f32.xlu0 %v2879
  %v2897 = vpop.xlane.xlu0 %2896
  %2898 = vmax.xlane.f32.xlu0 %v2880
  %v2899 = vpop.xlane.xlu0 %2898
  %2900 = vmax.xlane.f32.xlu0 %v2881
  %v2901 = vpop.xlane.xlu0 %2900
  %2902 = vmax.xlane.f32.xlu0 %v2882
  %v2903 = vpop.xlane.xlu0 %2902
  %2904 = vmax.xlane.f32.xlu0 %v2883
  %v2905 = vpop.xlane.xlu0 %2904
  %2906 = vmax.xlane.f32.xlu0 %v2884
  %v2907 = vpop.xlane.xlu0 %2906
  %2908 = vmax.xlane.f32.xlu0 %v2885
  %v2909 = vpop.xlane.xlu0 %2908
  %2910 = vmax.xlane.f32.xlu0 %v2886
  %v2911 = vpop.xlane.xlu0 %2910
  %2912 = vmax.xlane.f32.xlu0 %v2887
  %v2913 = vpop.xlane.xlu0 %2912
  %2914 = vmax.xlane.f32.xlu0 %v2888
  %v2915 = vpop.xlane.xlu0 %2914
  %2916 = vmax.xlane.f32.xlu0 %v2889
  %v2917 = vpop.xlane.xlu0 %2916
  %2918 = vmax.xlane.f32.xlu0 %v2890
  %v2919 = vpop.xlane.xlu0 %2918
  %2920 = vmax.xlane.f32.xlu0 %v2891
  %v2921 = vpop.xlane.xlu0 %2920
  %2922 = vmax.xlane.f32.xlu0 %v2892
  %v2923 = vpop.xlane.xlu0 %2922
  %2924 = vmax.xlane.f32.xlu0 %v2893
  %v2925 = vpop.xlane.xlu0 %2924
  %v2926 = vsub.f32 %v2878, %v2895
  %v2927 = vsub.f32 %v2879, %v2897
  %v2928 = vsub.f32 %v2880, %v2899
  %v2929 = vsub.f32 %v2881, %v2901
  %v2930 = vsub.f32 %v2882, %v2903
  %v2931 = vsub.f32 %v2883, %v2905
  %v2932 = vsub.f32 %v2884, %v2907
  %v2933 = vsub.f32 %v2885, %v2909
  %v2934 = vsub.f32 %v2886, %v2911
  %v2935 = vsub.f32 %v2887, %v2913
  %v2936 = vsub.f32 %v2888, %v2915
  %v2937 = vsub.f32 %v2889, %v2917
  %v2938 = vsub.f32 %v2890, %v2919
  %v2939 = vsub.f32 %v2891, %v2921
  %v2940 = vsub.f32 %v2892, %v2923
  %v2941 = vsub.f32 %v2893, %v2925
  %v2942 = vmul.f32 %v2926, 1.442695
  %v2943 = vpow.pop %v2942
  %v2944 = vmul.f32 %v2927, 1.442695
  %v2945 = vpow.pop %v2944
  %v2946 = vmul.f32 %v2928, 1.442695
  %v2947 = vpow.pop %v2946
  %v2948 = vmul.f32 %v2929, 1.442695
  %v2949 = vpow.pop %v2948
  %v2950 = vmul.f32 %v2930, 1.442695
  %v2951 = vpow.pop %v2950
  %v2952 = vmul.f32 %v2931, 1.442695
  %v2953 = vpow.pop %v2952
  %v2954 = vmul.f32 %v2932, 1.442695
  %v2955 = vpow.pop %v2954
  %v2956 = vmul.f32 %v2933, 1.442695
  %v2957 = vpow.pop %v2956
  %v2958 = vmul.f32 %v2934, 1.442695
  %v2959 = vpow.pop %v2958
  %v2960 = vmul.f32 %v2935, 1.442695
  %v2961 = vpow.pop %v2960
  %v2962 = vmul.f32 %v2936, 1.442695
  %v2963 = vpow.pop %v2962
  %v2964 = vmul.f32 %v2937, 1.442695
  %v2965 = vpow.pop %v2964
  %v2966 = vmul.f32 %v2938, 1.442695
  %v2967 = vpow.pop %v2966
  %v2968 = vmul.f32 %v2939, 1.442695
  %v2969 = vpow.pop %v2968
  %v2970 = vmul.f32 %v2940, 1.442695
  %v2971 = vpow.pop %v2970
  %v2972 = vmul.f32 %v2941, 1.442695
  %v2973 = vpow.pop %v2972
  %2974 = vadd.xlane.f32.xlu0 %v2943
  %v2975 = vpop.xlane.xlu0 %2974
  %2976 = vadd.xlane.f32.xlu0 %v2945
  %v2977 = vpop.xlane.xlu0 %2976
  %2978 = vadd.xlane.f32.xlu0 %v2947
  %v2979 = vpop.xlane.xlu0 %2978
  %2980 = vadd.xlane.f32.xlu0 %v2949
  %v2981 = vpop.xlane.xlu0 %2980
  %2982 = vadd.xlane.f32.xlu0 %v2951
  %v2983 = vpop.xlane.xlu0 %2982
  %2984 = vadd.xlane.f32.xlu0 %v2953
  %v2985 = vpop.xlane.xlu0 %2984
  %2986 = vadd.xlane.f32.xlu0 %v2955
  %v2987 = vpop.xlane.xlu0 %2986
  %2988 = vadd.xlane.f32.xlu0 %v2957
  %v2989 = vpop.xlane.xlu0 %2988
  %2990 = vadd.xlane.f32.xlu0 %v2959
  %v2991 = vpop.xlane.xlu0 %2990
  %2992 = vadd.xlane.f32.xlu0 %v2961
  %v2993 = vpop.xlane.xlu0 %2992
  %2994 = vadd.xlane.f32.xlu0 %v2963
  %v2995 = vpop.xlane.xlu0 %2994
  %2996 = vadd.xlane.f32.xlu0 %v2965
  %v2997 = vpop.xlane.xlu0 %2996
  %2998 = vadd.xlane.f32.xlu0 %v2967
  %v2999 = vpop.xlane.xlu0 %2998
  %3000 = vadd.xlane.f32.xlu0 %v2969
  %v3001 = vpop.xlane.xlu0 %3000
  %3002 = vadd.xlane.f32.xlu0 %v2971
  %v3003 = vpop.xlane.xlu0 %3002
  %3004 = vadd.xlane.f32.xlu0 %v2973
  %v3005 = vpop.xlane.xlu0 %3004
  %v3006 = vrcp.pop %v2975
  %v3007 = vrcp.pop %v2977
  %v3008 = vrcp.pop %v2979
  %v3009 = vrcp.pop %v2981
  %v3010 = vrcp.pop %v2983
  %v3011 = vrcp.pop %v2985
  %v3012 = vrcp.pop %v2987
  %v3013 = vrcp.pop %v2989
  %v3014 = vrcp.pop %v2991
  %v3015 = vrcp.pop %v2993
  %v3016 = vrcp.pop %v2995
  %v3017 = vrcp.pop %v2997
  %v3018 = vrcp.pop %v2999
  %v3019 = vrcp.pop %v3001
  %v3020 = vrcp.pop %v3003
  %v3021 = vrcp.pop %v3005
  %v3022 = vmul.f32 %v2943, %v3006
  %v3023 = vmul.f32 %v2945, %v3007
  %v3024 = vmul.f32 %v2947, %v3008
  %v3025 = vmul.f32 %v2949, %v3009
  %v3026 = vmul.f32 %v2951, %v3010
  %v3027 = vmul.f32 %v2953, %v3011
  %v3028 = vmul.f32 %v2955, %v3012
  %v3029 = vmul.f32 %v2957, %v3013
  %v3030 = vmul.f32 %v2959, %v3014
  %v3031 = vmul.f32 %v2961, %v3015
  %v3032 = vmul.f32 %v2963, %v3016
  %v3033 = vmul.f32 %v2965, %v3017
  %v3034 = vmul.f32 %v2967, %v3018
  %v3035 = vmul.f32 %v2969, %v3019
  %v3036 = vmul.f32 %v2971, %v3020
  %v3037 = vmul.f32 %v2973, %v3021
  %v3038 = vpack.c.bf16 %v3023, %v3022
  %v3039 = vpack.c.bf16 %v3025, %v3024
  %v3040 = vpack.c.bf16 %v3027, %v3026
  %v3041 = vpack.c.bf16 %v3029, %v3028
  %v3042 = vpack.c.bf16 %v3031, %v3030
  %v3043 = vpack.c.bf16 %v3033, %v3032
  %v3044 = vpack.c.bf16 %v3035, %v3034
  %v3045 = vpack.c.bf16 %v3037, %v3036
  %v3050 = vunpack.c.l.b16 %v2773
  %v3051 = vunpack.c.l.b16 %v2774
  %v3052 = vunpack.c.l.b16 %v2775
  %v3053 = vunpack.c.l.b16 %v2776
  %v3054 = vpack.c.b16 %v3051, %v3050
  %v3055 = vpack.c.b16 %v3053, %v3052
  %3058 = vmatpush.bf16.xpose.msra.mxu0 %v3045
  %3059 = vmatpush.bf16.xpose.msra.mxu0 %v3044
  %3060 = vmatpush.bf16.xpose.msra.mxu0 %v3043
  %3061 = vmatpush.bf16.xpose.msra.mxu0 %v3042
  %3062 = vmatpush.bf16.xpose.msra.mxu0 %v3041
  %3063 = vmatpush.bf16.xpose.msra.mxu0 %v3040
  %3064 = vmatpush.bf16.xpose.msra.mxu0 %v3039
  %3065 = vmatpush.bf16.xpose.msra.mxu0 %v3038
  %3066 = vmatmul.bf16.gmra.mxu0 %v3054
  %v3067 = vpop.f32.mrf.mxu0
  %v3068 = vadd.f32 0.0, %v3067
  %v3069 = vpop.f32.mrf.mxu0
  %v3070 = vadd.f32 0.0, %v3069
  %3071 = vmatmul.bf16.gmra.mxu0 %v3055
  %v3072 = vpop.f32.mrf.mxu0
  %v3073 = vadd.f32 0.0, %v3072
  %v3074 = vpop.f32.mrf.mxu0
  %v3075 = vadd.f32 0.0, %v3074
  %3076 = vdwg.mxu0
  %v3077 = vpack.c.bf16 %v3068, %v3068
  %v3078 = vpack.c.bf16 %v3070, %v3070
  %v3079 = vpack.c.bf16 %v3073, %v3073
  %v3080 = vpack.c.bf16 %v3075, %v3075
  %3081 = vst [vmem:[#allocation2 + $0x120] sm:$0xf] %v3077
  %3082 = vst [vmem:[#allocation2 + $0x138] sm:$0xf] %v3078
  %3083 = vst [vmem:[#allocation2 + $0x150] sm:$0xf] %v3079
  %3084 = vst [vmem:[#allocation2 + $0x168] sm:$0xf] %v3080
  %v3085 = vld [vmem:[#allocation3 + $0x4] sm:$0xf]
  %v3086 = vld [vmem:[#allocation3 + $0x1c] sm:$0xf]
  %v3087 = vld [vmem:[#allocation3 + $0x34] sm:$0xf]
  %v3088 = vld [vmem:[#allocation3 + $0x4c] sm:$0xf]
  %v3089 = vld [vmem:[#allocation3 + $0x64] sm:$0xf]
  %v3090 = vld [vmem:[#allocation3 + $0x7c] sm:$0xf]
  %v3091 = vld [vmem:[#allocation3 + $0x94] sm:$0xf]
  %v3092 = vld [vmem:[#allocation3 + $0xac] sm:$0xf]
  %v3095 = vunpack.c.l.b16 %v3085
  %v3096 = vunpack.c.l.b16 %v3086
  %v3097 = vpack.c.b16 %v3096, %v3095
  %3099 = vxpose.xlu0.c.b16.start [1/8] %v3097, 128
  %3100 = vxpose.xlu0.c.b16.cont [2/8] 0, 128
  %3101 = vxpose.xlu0.c.b16.cont [3/8] 0, 128
  %3102 = vxpose.xlu0.c.b16.cont [4/8] 0, 128
  %3103 = vxpose.xlu0.c.b16.cont [5/8] 0, 128
  %3104 = vxpose.xlu0.c.b16.cont [6/8] 0, 128
  %3105 = vxpose.xlu0.c.b16.cont [7/8] 0, 128
  %3106 = vxpose.xlu0.c.b16.end [8/8] 0, 128
  %v3107 = vpop.trf.xlu0
  %v3108 = vpop.trf.xlu0
  %v3109 = vpop.trf.xlu0
  %v3110 = vpop.trf.xlu0
  %v3111 = vpop.trf.xlu0
  %v3112 = vpop.trf.xlu0
  %v3113 = vpop.trf.xlu0
  %v3114 = vpop.trf.xlu0
  %v3117 = vunpack.c.l.b16 %v3087
  %v3118 = vunpack.c.l.b16 %v3088
  %v3119 = vpack.c.b16 %v3118, %v3117
  %v3122 = vsel %vm142, %v3107, 0
  %v3125 = vsel %vm142, %v3108, 0
  %v3128 = vsel %vm142, %v3109, 0
  %v3131 = vsel %vm142, %v3110, 0
  %v3134 = vsel %vm142, %v3111, 0
  %v3137 = vsel %vm142, %v3112, 0
  %v3140 = vsel %vm142, %v3113, 0
  %v3143 = vsel %vm142, %v3114, 0
  %3145 = vmatpush.bf16.msra.mxu0 0
  %3146 = vmatpush.bf16.msra.mxu0 0
  %3147 = vmatpush.bf16.msra.mxu0 0
  %3148 = vmatpush.bf16.msra.mxu0 0
  %3149 = vmatpush.bf16.msra.mxu0 0
  %3150 = vmatpush.bf16.msra.mxu0 0
  %3151 = vmatpush.bf16.msra.mxu0 0
  %3152 = vmatpush.bf16.msra.mxu0 %v3119
  %3153 = vmatmul.bf16.gmra.mxu0 %v3122
  %v3154 = vpop.f32.mrf.mxu0
  %v3155 = vadd.f32 0.0, %v3154
  %v3156 = vpop.f32.mrf.mxu0
  %v3157 = vadd.f32 0.0, %v3156
  %3158 = vmatmul.bf16.gmra.mxu0 %v3125
  %v3159 = vpop.f32.mrf.mxu0
  %v3160 = vadd.f32 0.0, %v3159
  %v3161 = vpop.f32.mrf.mxu0
  %v3162 = vadd.f32 0.0, %v3161
  %3163 = vmatmul.bf16.gmra.mxu0 %v3128
  %v3164 = vpop.f32.mrf.mxu0
  %v3165 = vadd.f32 0.0, %v3164
  %v3166 = vpop.f32.mrf.mxu0
  %v3167 = vadd.f32 0.0, %v3166
  %3168 = vmatmul.bf16.gmra.mxu0 %v3131
  %v3169 = vpop.f32.mrf.mxu0
  %v3170 = vadd.f32 0.0, %v3169
  %v3171 = vpop.f32.mrf.mxu0
  %v3172 = vadd.f32 0.0, %v3171
  %3173 = vmatmul.bf16.gmra.mxu0 %v3134
  %v3174 = vpop.f32.mrf.mxu0
  %v3175 = vadd.f32 0.0, %v3174
  %v3176 = vpop.f32.mrf.mxu0
  %v3177 = vadd.f32 0.0, %v3176
  %3178 = vmatmul.bf16.gmra.mxu0 %v3137
  %v3179 = vpop.f32.mrf.mxu0
  %v3180 = vadd.f32 0.0, %v3179
  %v3181 = vpop.f32.mrf.mxu0
  %v3182 = vadd.f32 0.0, %v3181
  %3183 = vmatmul.bf16.gmra.mxu0 %v3140
  %v3184 = vpop.f32.mrf.mxu0
  %v3185 = vadd.f32 0.0, %v3184
  %v3186 = vpop.f32.mrf.mxu0
  %v3187 = vadd.f32 0.0, %v3186
  %3188 = vmatmul.bf16.gmra.mxu0 %v3143
  %v3189 = vpop.f32.mrf.mxu0
  %v3190 = vadd.f32 0.0, %v3189
  %v3191 = vpop.f32.mrf.mxu0
  %v3192 = vadd.f32 0.0, %v3191
  %3193 = vdwg.mxu0
  %v3194 = vmul.f32 %v3155, 0.25
  %v3195 = vmul.f32 %v3157, 0.25
  %v3196 = vmul.f32 %v3160, 0.25
  %v3197 = vmul.f32 %v3162, 0.25
  %v3198 = vmul.f32 %v3165, 0.25
  %v3199 = vmul.f32 %v3167, 0.25
  %v3200 = vmul.f32 %v3170, 0.25
  %v3201 = vmul.f32 %v3172, 0.25
  %v3202 = vmul.f32 %v3175, 0.25
  %v3203 = vmul.f32 %v3177, 0.25
  %v3204 = vmul.f32 %v3180, 0.25
  %v3205 = vmul.f32 %v3182, 0.25
  %v3206 = vmul.f32 %v3185, 0.25
  %v3207 = vmul.f32 %v3187, 0.25
  %v3208 = vmul.f32 %v3190, 0.25
  %v3209 = vmul.f32 %v3192, 0.25
  %3210 = vmax.xlane.f32.xlu0 %v3194
  %v3211 = vpop.xlane.xlu0 %3210
  %3212 = vmax.xlane.f32.xlu0 %v3195
  %v3213 = vpop.xlane.xlu0 %3212
  %3214 = vmax.xlane.f32.xlu0 %v3196
  %v3215 = vpop.xlane.xlu0 %3214
  %3216 = vmax.xlane.f32.xlu0 %v3197
  %v3217 = vpop.xlane.xlu0 %3216
  %3218 = vmax.xlane.f32.xlu0 %v3198
  %v3219 = vpop.xlane.xlu0 %3218
  %3220 = vmax.xlane.f32.xlu0 %v3199
  %v3221 = vpop.xlane.xlu0 %3220
  %3222 = vmax.xlane.f32.xlu0 %v3200
  %v3223 = vpop.xlane.xlu0 %3222
  %3224 = vmax.xlane.f32.xlu0 %v3201
  %v3225 = vpop.xlane.xlu0 %3224
  %3226 = vmax.xlane.f32.xlu0 %v3202
  %v3227 = vpop.xlane.xlu0 %3226
  %3228 = vmax.xlane.f32.xlu0 %v3203
  %v3229 = vpop.xlane.xlu0 %3228
  %3230 = vmax.xlane.f32.xlu0 %v3204
  %v3231 = vpop.xlane.xlu0 %3230
  %3232 = vmax.xlane.f32.xlu0 %v3205
  %v3233 = vpop.xlane.xlu0 %3232
  %3234 = vmax.xlane.f32.xlu0 %v3206
  %v3235 = vpop.xlane.xlu0 %3234
  %3236 = vmax.xlane.f32.xlu0 %v3207
  %v3237 = vpop.xlane.xlu0 %3236
  %3238 = vmax.xlane.f32.xlu0 %v3208
  %v3239 = vpop.xlane.xlu0 %3238
  %3240 = vmax.xlane.f32.xlu0 %v3209
  %v3241 = vpop.xlane.xlu0 %3240
  %v3242 = vsub.f32 %v3194, %v3211
  %v3243 = vsub.f32 %v3195, %v3213
  %v3244 = vsub.f32 %v3196, %v3215
  %v3245 = vsub.f32 %v3197, %v3217
  %v3246 = vsub.f32 %v3198, %v3219
  %v3247 = vsub.f32 %v3199, %v3221
  %v3248 = vsub.f32 %v3200, %v3223
  %v3249 = vsub.f32 %v3201, %v3225
  %v3250 = vsub.f32 %v3202, %v3227
  %v3251 = vsub.f32 %v3203, %v3229
  %v3252 = vsub.f32 %v3204, %v3231
  %v3253 = vsub.f32 %v3205, %v3233
  %v3254 = vsub.f32 %v3206, %v3235
  %v3255 = vsub.f32 %v3207, %v3237
  %v3256 = vsub.f32 %v3208, %v3239
  %v3257 = vsub.f32 %v3209, %v3241
  %v3258 = vmul.f32 %v3242, 1.442695
  %v3259 = vpow.pop %v3258
  %v3260 = vmul.f32 %v3243, 1.442695
  %v3261 = vpow.pop %v3260
  %v3262 = vmul.f32 %v3244, 1.442695
  %v3263 = vpow.pop %v3262
  %v3264 = vmul.f32 %v3245, 1.442695
  %v3265 = vpow.pop %v3264
  %v3266 = vmul.f32 %v3246, 1.442695
  %v3267 = vpow.pop %v3266
  %v3268 = vmul.f32 %v3247, 1.442695
  %v3269 = vpow.pop %v3268
  %v3270 = vmul.f32 %v3248, 1.442695
  %v3271 = vpow.pop %v3270
  %v3272 = vmul.f32 %v3249, 1.442695
  %v3273 = vpow.pop %v3272
  %v3274 = vmul.f32 %v3250, 1.442695
  %v3275 = vpow.pop %v3274
  %v3276 = vmul.f32 %v3251, 1.442695
  %v3277 = vpow.pop %v3276
  %v3278 = vmul.f32 %v3252, 1.442695
  %v3279 = vpow.pop %v3278
  %v3280 = vmul.f32 %v3253, 1.442695
  %v3281 = vpow.pop %v3280
  %v3282 = vmul.f32 %v3254, 1.442695
  %v3283 = vpow.pop %v3282
  %v3284 = vmul.f32 %v3255, 1.442695
  %v3285 = vpow.pop %v3284
  %v3286 = vmul.f32 %v3256, 1.442695
  %v3287 = vpow.pop %v3286
  %v3288 = vmul.f32 %v3257, 1.442695
  %v3289 = vpow.pop %v3288
  %3290 = vadd.xlane.f32.xlu0 %v3259
  %v3291 = vpop.xlane.xlu0 %3290
  %3292 = vadd.xlane.f32.xlu0 %v3261
  %v3293 = vpop.xlane.xlu0 %3292
  %3294 = vadd.xlane.f32.xlu0 %v3263
  %v3295 = vpop.xlane.xlu0 %3294
  %3296 = vadd.xlane.f32.xlu0 %v3265
  %v3297 = vpop.xlane.xlu0 %3296
  %3298 = vadd.xlane.f32.xlu0 %v3267
  %v3299 = vpop.xlane.xlu0 %3298
  %3300 = vadd.xlane.f32.xlu0 %v3269
  %v3301 = vpop.xlane.xlu0 %3300
  %3302 = vadd.xlane.f32.xlu0 %v3271
  %v3303 = vpop.xlane.xlu0 %3302
  %3304 = vadd.xlane.f32.xlu0 %v3273
  %v3305 = vpop.xlane.xlu0 %3304
  %3306 = vadd.xlane.f32.xlu0 %v3275
  %v3307 = vpop.xlane.xlu0 %3306
  %3308 = vadd.xlane.f32.xlu0 %v3277
  %v3309 = vpop.xlane.xlu0 %3308
  %3310 = vadd.xlane.f32.xlu0 %v3279
  %v3311 = vpop.xlane.xlu0 %3310
  %3312 = vadd.xlane.f32.xlu0 %v3281
  %v3313 = vpop.xlane.xlu0 %3312
  %3314 = vadd.xlane.f32.xlu0 %v3283
  %v3315 = vpop.xlane.xlu0 %3314
  %3316 = vadd.xlane.f32.xlu0 %v3285
  %v3317 = vpop.xlane.xlu0 %3316
  %3318 = vadd.xlane.f32.xlu0 %v3287
  %v3319 = vpop.xlane.xlu0 %3318
  %3320 = vadd.xlane.f32.xlu0 %v3289
  %v3321 = vpop.xlane.xlu0 %3320
  %v3322 = vrcp.pop %v3291
  %v3323 = vrcp.pop %v3293
  %v3324 = vrcp.pop %v3295
  %v3325 = vrcp.pop %v3297
  %v3326 = vrcp.pop %v3299
  %v3327 = vrcp.pop %v3301
  %v3328 = vrcp.pop %v3303
  %v3329 = vrcp.pop %v3305
  %v3330 = vrcp.pop %v3307
  %v3331 = vrcp.pop %v3309
  %v3332 = vrcp.pop %v3311
  %v3333 = vrcp.pop %v3313
  %v3334 = vrcp.pop %v3315
  %v3335 = vrcp.pop %v3317
  %v3336 = vrcp.pop %v3319
  %v3337 = vrcp.pop %v3321
  %v3338 = vmul.f32 %v3259, %v3322
  %v3339 = vmul.f32 %v3261, %v3323
  %v3340 = vmul.f32 %v3263, %v3324
  %v3341 = vmul.f32 %v3265, %v3325
  %v3342 = vmul.f32 %v3267, %v3326
  %v3343 = vmul.f32 %v3269, %v3327
  %v3344 = vmul.f32 %v3271, %v3328
  %v3345 = vmul.f32 %v3273, %v3329
  %v3346 = vmul.f32 %v3275, %v3330
  %v3347 = vmul.f32 %v3277, %v3331
  %v3348 = vmul.f32 %v3279, %v3332
  %v3349 = vmul.f32 %v3281, %v3333
  %v3350 = vmul.f32 %v3283, %v3334
  %v3351 = vmul.f32 %v3285, %v3335
  %v3352 = vmul.f32 %v3287, %v3336
  %v3353 = vmul.f32 %v3289, %v3337
  %v3354 = vpack.c.bf16 %v3339, %v3338
  %v3355 = vpack.c.bf16 %v3341, %v3340
  %v3356 = vpack.c.bf16 %v3343, %v3342
  %v3357 = vpack.c.bf16 %v3345, %v3344
  %v3358 = vpack.c.bf16 %v3347, %v3346
  %v3359 = vpack.c.bf16 %v3349, %v3348
  %v3360 = vpack.c.bf16 %v3351, %v3350
  %v3361 = vpack.c.bf16 %v3353, %v3352
  %v3366 = vunpack.c.l.b16 %v3089
  %v3367 = vunpack.c.l.b16 %v3090
  %v3368 = vunpack.c.l.b16 %v3091
  %v3369 = vunpack.c.l.b16 %v3092
  %v3370 = vpack.c.b16 %v3367, %v3366
  %v3371 = vpack.c.b16 %v3369, %v3368
  %3374 = vmatpush.bf16.xpose.msra.mxu0 %v3361
  %3375 = vmatpush.bf16.xpose.msra.mxu0 %v3360
  %3376 = vmatpush.bf16.xpose.msra.mxu0 %v3359
  %3377 = vmatpush.bf16.xpose.msra.mxu0 %v3358
  %3378 = vmatpush.bf16.xpose.msra.mxu0 %v3357
  %3379 = vmatpush.bf16.xpose.msra.mxu0 %v3356
  %3380 = vmatpush.bf16.xpose.msra.mxu0 %v3355
  %3381 = vmatpush.bf16.xpose.msra.mxu0 %v3354
  %3382 = vmatmul.bf16.gmra.mxu0 %v3370
  %v3383 = vpop.f32.mrf.mxu0
  %v3384 = vadd.f32 0.0, %v3383
  %v3385 = vpop.f32.mrf.mxu0
  %v3386 = vadd.f32 0.0, %v3385
  %3387 = vmatmul.bf16.gmra.mxu0 %v3371
  %v3388 = vpop.f32.mrf.mxu0
  %v3389 = vadd.f32 0.0, %v3388
  %v3390 = vpop.f32.mrf.mxu0
  %v3391 = vadd.f32 0.0, %v3390
  %3392 = vdwg.mxu0
  %v3393 = vpack.c.bf16 %v3384, %v3384
  %v3394 = vpack.c.bf16 %v3386, %v3386
  %v3395 = vpack.c.bf16 %v3389, %v3389
  %v3396 = vpack.c.bf16 %v3391, %v3391
  %3397 = vst [vmem:[#allocation2 + $0x124] sm:$0xf] %v3393
  %3398 = vst [vmem:[#allocation2 + $0x13c] sm:$0xf] %v3394
  %3399 = vst [vmem:[#allocation2 + $0x154] sm:$0xf] %v3395
  %3400 = vst [vmem:[#allocation2 + $0x16c] sm:$0xf] %v3396
  %v3401 = vld [vmem:[#allocation3 + $0x8] sm:$0xf]
  %v3402 = vld [vmem:[#allocation3 + $0x20] sm:$0xf]
  %v3403 = vld [vmem:[#allocation3 + $0x38] sm:$0xf]
  %v3404 = vld [vmem:[#allocation3 + $0x50] sm:$0xf]
  %v3405 = vld [vmem:[#allocation3 + $0x68] sm:$0xf]
  %v3406 = vld [vmem:[#allocation3 + $0x80] sm:$0xf]
  %v3407 = vld [vmem:[#allocation3 + $0x98] sm:$0xf]
  %v3408 = vld [vmem:[#allocation3 + $0xb0] sm:$0xf]
  %v3411 = vunpack.c.l.b16 %v3401
  %v3412 = vunpack.c.l.b16 %v3402
  %v3413 = vpack.c.b16 %v3412, %v3411
  %3415 = vxpose.xlu0.c.b16.start [1/8] %v3413, 128
  %3416 = vxpose.xlu0.c.b16.cont [2/8] 0, 128
  %3417 = vxpose.xlu0.c.b16.cont [3/8] 0, 128
  %3418 = vxpose.xlu0.c.b16.cont [4/8] 0, 128
  %3419 = vxpose.xlu0.c.b16.cont [5/8] 0, 128
  %3420 = vxpose.xlu0.c.b16.cont [6/8] 0, 128
  %3421 = vxpose.xlu0.c.b16.cont [7/8] 0, 128
  %3422 = vxpose.xlu0.c.b16.end [8/8] 0, 128
  %v3423 = vpop.trf.xlu0
  %v3424 = vpop.trf.xlu0
  %v3425 = vpop.trf.xlu0
  %v3426 = vpop.trf.xlu0
  %v3427 = vpop.trf.xlu0
  %v3428 = vpop.trf.xlu0
  %v3429 = vpop.trf.xlu0
  %v3430 = vpop.trf.xlu0
  %v3433 = vunpack.c.l.b16 %v3403
  %v3434 = vunpack.c.l.b16 %v3404
  %v3435 = vpack.c.b16 %v3434, %v3433
  %v3438 = vsel %vm142, %v3423, 0
  %v3441 = vsel %vm142, %v3424, 0
  %v3444 = vsel %vm142, %v3425, 0
  %v3447 = vsel %vm142, %v3426, 0
  %v3450 = vsel %vm142, %v3427, 0
  %v3453 = vsel %vm142, %v3428, 0
  %v3456 = vsel %vm142, %v3429, 0
  %v3459 = vsel %vm142, %v3430, 0
  %3461 = vmatpush.bf16.msra.mxu0 0
  %3462 = vmatpush.bf16.msra.mxu0 0
  %3463 = vmatpush.bf16.msra.mxu0 0
  %3464 = vmatpush.bf16.msra.mxu0 0
  %3465 = vmatpush.bf16.msra.mxu0 0
  %3466 = vmatpush.bf16.msra.mxu0 0
  %3467 = vmatpush.bf16.msra.mxu0 0
  %3468 = vmatpush.bf16.msra.mxu0 %v3435
  %3469 = vmatmul.bf16.gmra.mxu0 %v3438
  %v3470 = vpop.f32.mrf.mxu0
  %v3471 = vadd.f32 0.0, %v3470
  %v3472 = vpop.f32.mrf.mxu0
  %v3473 = vadd.f32 0.0, %v3472
  %3474 = vmatmul.bf16.gmra.mxu0 %v3441
  %v3475 = vpop.f32.mrf.mxu0
  %v3476 = vadd.f32 0.0, %v3475
  %v3477 = vpop.f32.mrf.mxu0
  %v3478 = vadd.f32 0.0, %v3477
  %3479 = vmatmul.bf16.gmra.mxu0 %v3444
  %v3480 = vpop.f32.mrf.mxu0
  %v3481 = vadd.f32 0.0, %v3480
  %v3482 = vpop.f32.mrf.mxu0
  %v3483 = vadd.f32 0.0, %v3482
  %3484 = vmatmul.bf16.gmra.mxu0 %v3447
  %v3485 = vpop.f32.mrf.mxu0
  %v3486 = vadd.f32 0.0, %v3485
  %v3487 = vpop.f32.mrf.mxu0
  %v3488 = vadd.f32 0.0, %v3487
  %3489 = vmatmul.bf16.gmra.mxu0 %v3450
  %v3490 = vpop.f32.mrf.mxu0
  %v3491 = vadd.f32 0.0, %v3490
  %v3492 = vpop.f32.mrf.mxu0
  %v3493 = vadd.f32 0.0, %v3492
  %3494 = vmatmul.bf16.gmra.mxu0 %v3453
  %v3495 = vpop.f32.mrf.mxu0
  %v3496 = vadd.f32 0.0, %v3495
  %v3497 = vpop.f32.mrf.mxu0
  %v3498 = vadd.f32 0.0, %v3497
  %3499 = vmatmul.bf16.gmra.mxu0 %v3456
  %v3500 = vpop.f32.mrf.mxu0
  %v3501 = vadd.f32 0.0, %v3500
  %v3502 = vpop.f32.mrf.mxu0
  %v3503 = vadd.f32 0.0, %v3502
  %3504 = vmatmul.bf16.gmra.mxu0 %v3459
  %v3505 = vpop.f32.mrf.mxu0
  %v3506 = vadd.f32 0.0, %v3505
  %v3507 = vpop.f32.mrf.mxu0
  %v3508 = vadd.f32 0.0, %v3507
  %3509 = vdwg.mxu0
  %v3510 = vmul.f32 %v3471, 0.25
  %v3511 = vmul.f32 %v3473, 0.25
  %v3512 = vmul.f32 %v3476, 0.25
  %v3513 = vmul.f32 %v3478, 0.25
  %v3514 = vmul.f32 %v3481, 0.25
  %v3515 = vmul.f32 %v3483, 0.25
  %v3516 = vmul.f32 %v3486, 0.25
  %v3517 = vmul.f32 %v3488, 0.25
  %v3518 = vmul.f32 %v3491, 0.25
  %v3519 = vmul.f32 %v3493, 0.25
  %v3520 = vmul.f32 %v3496, 0.25
  %v3521 = vmul.f32 %v3498, 0.25
  %v3522 = vmul.f32 %v3501, 0.25
  %v3523 = vmul.f32 %v3503, 0.25
  %v3524 = vmul.f32 %v3506, 0.25
  %v3525 = vmul.f32 %v3508, 0.25
  %3526 = vmax.xlane.f32.xlu0 %v3510
  %v3527 = vpop.xlane.xlu0 %3526
  %3528 = vmax.xlane.f32.xlu0 %v3511
  %v3529 = vpop.xlane.xlu0 %3528
  %3530 = vmax.xlane.f32.xlu0 %v3512
  %v3531 = vpop.xlane.xlu0 %3530
  %3532 = vmax.xlane.f32.xlu0 %v3513
  %v3533 = vpop.xlane.xlu0 %3532
  %3534 = vmax.xlane.f32.xlu0 %v3514
  %v3535 = vpop.xlane.xlu0 %3534
  %3536 = vmax.xlane.f32.xlu0 %v3515
  %v3537 = vpop.xlane.xlu0 %3536
  %3538 = vmax.xlane.f32.xlu0 %v3516
  %v3539 = vpop.xlane.xlu0 %3538
  %3540 = vmax.xlane.f32.xlu0 %v3517
  %v3541 = vpop.xlane.xlu0 %3540
  %3542 = vmax.xlane.f32.xlu0 %v3518
  %v3543 = vpop.xlane.xlu0 %3542
  %3544 = vmax.xlane.f32.xlu0 %v3519
  %v3545 = vpop.xlane.xlu0 %3544
  %3546 = vmax.xlane.f32.xlu0 %v3520
  %v3547 = vpop.xlane.xlu0 %3546
  %3548 = vmax.xlane.f32.xlu0 %v3521
  %v3549 = vpop.xlane.xlu0 %3548
  %3550 = vmax.xlane.f32.xlu0 %v3522
  %v3551 = vpop.xlane.xlu0 %3550
  %3552 = vmax.xlane.f32.xlu0 %v3523
  %v3553 = vpop.xlane.xlu0 %3552
  %3554 = vmax.xlane.f32.xlu0 %v3524
  %v3555 = vpop.xlane.xlu0 %3554
  %3556 = vmax.xlane.f32.xlu0 %v3525
  %v3557 = vpop.xlane.xlu0 %3556
  %v3558 = vsub.f32 %v3510, %v3527
  %v3559 = vsub.f32 %v3511, %v3529
  %v3560 = vsub.f32 %v3512, %v3531
  %v3561 = vsub.f32 %v3513, %v3533
  %v3562 = vsub.f32 %v3514, %v3535
  %v3563 = vsub.f32 %v3515, %v3537
  %v3564 = vsub.f32 %v3516, %v3539
  %v3565 = vsub.f32 %v3517, %v3541
  %v3566 = vsub.f32 %v3518, %v3543
  %v3567 = vsub.f32 %v3519, %v3545
  %v3568 = vsub.f32 %v3520, %v3547
  %v3569 = vsub.f32 %v3521, %v3549
  %v3570 = vsub.f32 %v3522, %v3551
  %v3571 = vsub.f32 %v3523, %v3553
  %v3572 = vsub.f32 %v3524, %v3555
  %v3573 = vsub.f32 %v3525, %v3557
  %v3574 = vmul.f32 %v3558, 1.442695
  %v3575 = vpow.pop %v3574
  %v3576 = vmul.f32 %v3559, 1.442695
  %v3577 = vpow.pop %v3576
  %v3578 = vmul.f32 %v3560, 1.442695
  %v3579 = vpow.pop %v3578
  %v3580 = vmul.f32 %v3561, 1.442695
  %v3581 = vpow.pop %v3580
  %v3582 = vmul.f32 %v3562, 1.442695
  %v3583 = vpow.pop %v3582
  %v3584 = vmul.f32 %v3563, 1.442695
  %v3585 = vpow.pop %v3584
  %v3586 = vmul.f32 %v3564, 1.442695
  %v3587 = vpow.pop %v3586
  %v3588 = vmul.f32 %v3565, 1.442695
  %v3589 = vpow.pop %v3588
  %v3590 = vmul.f32 %v3566, 1.442695
  %v3591 = vpow.pop %v3590
  %v3592 = vmul.f32 %v3567, 1.442695
  %v3593 = vpow.pop %v3592
  %v3594 = vmul.f32 %v3568, 1.442695
  %v3595 = vpow.pop %v3594
  %v3596 = vmul.f32 %v3569, 1.442695
  %v3597 = vpow.pop %v3596
  %v3598 = vmul.f32 %v3570, 1.442695
  %v3599 = vpow.pop %v3598
  %v3600 = vmul.f32 %v3571, 1.442695
  %v3601 = vpow.pop %v3600
  %v3602 = vmul.f32 %v3572, 1.442695
  %v3603 = vpow.pop %v3602
  %v3604 = vmul.f32 %v3573, 1.442695
  %v3605 = vpow.pop %v3604
  %3606 = vadd.xlane.f32.xlu0 %v3575
  %v3607 = vpop.xlane.xlu0 %3606
  %3608 = vadd.xlane.f32.xlu0 %v3577
  %v3609 = vpop.xlane.xlu0 %3608
  %3610 = vadd.xlane.f32.xlu0 %v3579
  %v3611 = vpop.xlane.xlu0 %3610
  %3612 = vadd.xlane.f32.xlu0 %v3581
  %v3613 = vpop.xlane.xlu0 %3612
  %3614 = vadd.xlane.f32.xlu0 %v3583
  %v3615 = vpop.xlane.xlu0 %3614
  %3616 = vadd.xlane.f32.xlu0 %v3585
  %v3617 = vpop.xlane.xlu0 %3616
  %3618 = vadd.xlane.f32.xlu0 %v3587
  %v3619 = vpop.xlane.xlu0 %3618
  %3620 = vadd.xlane.f32.xlu0 %v3589
  %v3621 = vpop.xlane.xlu0 %3620
  %3622 = vadd.xlane.f32.xlu0 %v3591
  %v3623 = vpop.xlane.xlu0 %3622
  %3624 = vadd.xlane.f32.xlu0 %v3593
  %v3625 = vpop.xlane.xlu0 %3624
  %3626 = vadd.xlane.f32.xlu0 %v3595
  %v3627 = vpop.xlane.xlu0 %3626
  %3628 = vadd.xlane.f32.xlu0 %v3597
  %v3629 = vpop.xlane.xlu0 %3628
  %3630 = vadd.xlane.f32.xlu0 %v3599
  %v3631 = vpop.xlane.xlu0 %3630
  %3632 = vadd.xlane.f32.xlu0 %v3601
  %v3633 = vpop.xlane.xlu0 %3632
  %3634 = vadd.xlane.f32.xlu0 %v3603
  %v3635 = vpop.xlane.xlu0 %3634
  %3636 = vadd.xlane.f32.xlu0 %v3605
  %v3637 = vpop.xlane.xlu0 %3636
  %v3638 = vrcp.pop %v3607
  %v3639 = vrcp.pop %v3609
  %v3640 = vrcp.pop %v3611
  %v3641 = vrcp.pop %v3613
  %v3642 = vrcp.pop %v3615
  %v3643 = vrcp.pop %v3617
  %v3644 = vrcp.pop %v3619
  %v3645 = vrcp.pop %v3621
  %v3646 = vrcp.pop %v3623
  %v3647 = vrcp.pop %v3625
  %v3648 = vrcp.pop %v3627
  %v3649 = vrcp.pop %v3629
  %v3650 = vrcp.pop %v3631
  %v3651 = vrcp.pop %v3633
  %v3652 = vrcp.pop %v3635
  %v3653 = vrcp.pop %v3637
  %v3654 = vmul.f32 %v3575, %v3638
  %v3655 = vmul.f32 %v3577, %v3639
  %v3656 = vmul.f32 %v3579, %v3640
  %v3657 = vmul.f32 %v3581, %v3641
  %v3658 = vmul.f32 %v3583, %v3642
  %v3659 = vmul.f32 %v3585, %v3643
  %v3660 = vmul.f32 %v3587, %v3644
  %v3661 = vmul.f32 %v3589, %v3645
  %v3662 = vmul.f32 %v3591, %v3646
  %v3663 = vmul.f32 %v3593, %v3647
  %v3664 = vmul.f32 %v3595, %v3648
  %v3665 = vmul.f32 %v3597, %v3649
  %v3666 = vmul.f32 %v3599, %v3650
  %v3667 = vmul.f32 %v3601, %v3651
  %v3668 = vmul.f32 %v3603, %v3652
  %v3669 = vmul.f32 %v3605, %v3653
  %v3670 = vpack.c.bf16 %v3655, %v3654
  %v3671 = vpack.c.bf16 %v3657, %v3656
  %v3672 = vpack.c.bf16 %v3659, %v3658
  %v3673 = vpack.c.bf16 %v3661, %v3660
  %v3674 = vpack.c.bf16 %v3663, %v3662
  %v3675 = vpack.c.bf16 %v3665, %v3664
  %v3676 = vpack.c.bf16 %v3667, %v3666
  %v3677 = vpack.c.bf16 %v3669, %v3668
  %v3682 = vunpack.c.l.b16 %v3405
  %v3683 = vunpack.c.l.b16 %v3406
  %v3684 = vunpack.c.l.b16 %v3407
  %v3685 = vunpack.c.l.b16 %v3408
  %v3686 = vpack.c.b16 %v3683, %v3682
  %v3687 = vpack.c.b16 %v3685, %v3684
  %3690 = vmatpush.bf16.xpose.msra.mxu0 %v3677
  %3691 = vmatpush.bf16.xpose.msra.mxu0 %v3676
  %3692 = vmatpush.bf16.xpose.msra.mxu0 %v3675
  %3693 = vmatpush.bf16.xpose.msra.mxu0 %v3674
  %3694 = vmatpush.bf16.xpose.msra.mxu0 %v3673
  %3695 = vmatpush.bf16.xpose.msra.mxu0 %v3672
  %3696 = vmatpush.bf16.xpose.msra.mxu0 %v3671
  %3697 = vmatpush.bf16.xpose.msra.mxu0 %v3670
  %3698 = vmatmul.bf16.gmra.mxu0 %v3686
  %v3699 = vpop.f32.mrf.mxu0
  %v3700 = vadd.f32 0.0, %v3699
  %v3701 = vpop.f32.mrf.mxu0
  %v3702 = vadd.f32 0.0, %v3701
  %3703 = vmatmul.bf16.gmra.mxu0 %v3687
  %v3704 = vpop.f32.mrf.mxu0
  %v3705 = vadd.f32 0.0, %v3704
  %v3706 = vpop.f32.mrf.mxu0
  %v3707 = vadd.f32 0.0, %v3706
  %3708 = vdwg.mxu0
  %v3709 = vpack.c.bf16 %v3700, %v3700
  %v3710 = vpack.c.bf16 %v3702, %v3702
  %v3711 = vpack.c.bf16 %v3705, %v3705
  %v3712 = vpack.c.bf16 %v3707, %v3707
  %3713 = vst [vmem:[#allocation2 + $0x128] sm:$0xf] %v3709
  %3714 = vst [vmem:[#allocation2 + $0x140] sm:$0xf] %v3710
  %3715 = vst [vmem:[#allocation2 + $0x158] sm:$0xf] %v3711
  %3716 = vst [vmem:[#allocation2 + $0x170] sm:$0xf] %v3712
  %v3717 = vld [vmem:[#allocation3 + $0xc] sm:$0xf]
  %v3718 = vld [vmem:[#allocation3 + $0x24] sm:$0xf]
  %v3719 = vld [vmem:[#allocation3 + $0x3c] sm:$0xf]
  %v3720 = vld [vmem:[#allocation3 + $0x54] sm:$0xf]
  %v3721 = vld [vmem:[#allocation3 + $0x6c] sm:$0xf]
  %v3722 = vld [vmem:[#allocation3 + $0x84] sm:$0xf]
  %v3723 = vld [vmem:[#allocation3 + $0x9c] sm:$0xf]
  %v3724 = vld [vmem:[#allocation3 + $0xb4] sm:$0xf]
  %v3727 = vunpack.c.l.b16 %v3717
  %v3728 = vunpack.c.l.b16 %v3718
  %v3729 = vpack.c.b16 %v3728, %v3727
  %3731 = vxpose.xlu0.c.b16.start [1/8] %v3729, 128
  %3732 = vxpose.xlu0.c.b16.cont [2/8] 0, 128
  %3733 = vxpose.xlu0.c.b16.cont [3/8] 0, 128
  %3734 = vxpose.xlu0.c.b16.cont [4/8] 0, 128
  %3735 = vxpose.xlu0.c.b16.cont [5/8] 0, 128
  %3736 = vxpose.xlu0.c.b16.cont [6/8] 0, 128
  %3737 = vxpose.xlu0.c.b16.cont [7/8] 0, 128
  %3738 = vxpose.xlu0.c.b16.end [8/8] 0, 128
  %v3739 = vpop.trf.xlu0
  %v3740 = vpop.trf.xlu0
  %v3741 = vpop.trf.xlu0
  %v3742 = vpop.trf.xlu0
  %v3743 = vpop.trf.xlu0
  %v3744 = vpop.trf.xlu0
  %v3745 = vpop.trf.xlu0
  %v3746 = vpop.trf.xlu0
  %v3749 = vunpack.c.l.b16 %v3719
  %v3750 = vunpack.c.l.b16 %v3720
  %v3751 = vpack.c.b16 %v3750, %v3749
  %v3754 = vsel %vm142, %v3739, 0
  %v3757 = vsel %vm142, %v3740, 0
  %v3760 = vsel %vm142, %v3741, 0
  %v3763 = vsel %vm142, %v3742, 0
  %v3766 = vsel %vm142, %v3743, 0
  %v3769 = vsel %vm142, %v3744, 0
  %v3772 = vsel %vm142, %v3745, 0
  %v3775 = vsel %vm142, %v3746, 0
  %3777 = vmatpush.bf16.msra.mxu0 0
  %3778 = vmatpush.bf16.msra.mxu0 0
  %3779 = vmatpush.bf16.msra.mxu0 0
  %3780 = vmatpush.bf16.msra.mxu0 0
  %3781 = vmatpush.bf16.msra.mxu0 0
  %3782 = vmatpush.bf16.msra.mxu0 0
  %3783 = vmatpush.bf16.msra.mxu0 0
  %3784 = vmatpush.bf16.msra.mxu0 %v3751
  %3785 = vmatmul.bf16.gmra.mxu0 %v3754
  %v3786 = vpop.f32.mrf.mxu0
  %v3787 = vadd.f32 0.0, %v3786
  %v3788 = vpop.f32.mrf.mxu0
  %v3789 = vadd.f32 0.0, %v3788
  %3790 = vmatmul.bf16.gmra.mxu0 %v3757
  %v3791 = vpop.f32.mrf.mxu0
  %v3792 = vadd.f32 0.0, %v3791
  %v3793 = vpop.f32.mrf.mxu0
  %v3794 = vadd.f32 0.0, %v3793
  %3795 = vmatmul.bf16.gmra.mxu0 %v3760
  %v3796 = vpop.f32.mrf.mxu0
  %v3797 = vadd.f32 0.0, %v3796
  %v3798 = vpop.f32.mrf.mxu0
  %v3799 = vadd.f32 0.0, %v3798
  %3800 = vmatmul.bf16.gmra.mxu0 %v3763
  %v3801 = vpop.f32.mrf.mxu0
  %v3802 = vadd.f32 0.0, %v3801
  %v3803 = vpop.f32.mrf.mxu0
  %v3804 = vadd.f32 0.0, %v3803
  %3805 = vmatmul.bf16.gmra.mxu0 %v3766
  %v3806 = vpop.f32.mrf.mxu0
  %v3807 = vadd.f32 0.0, %v3806
  %v3808 = vpop.f32.mrf.mxu0
  %v3809 = vadd.f32 0.0, %v3808
  %3810 = vmatmul.bf16.gmra.mxu0 %v3769
  %v3811 = vpop.f32.mrf.mxu0
  %v3812 = vadd.f32 0.0, %v3811
  %v3813 = vpop.f32.mrf.mxu0
  %v3814 = vadd.f32 0.0, %v3813
  %3815 = vmatmul.bf16.gmra.mxu0 %v3772
  %v3816 = vpop.f32.mrf.mxu0
  %v3817 = vadd.f32 0.0, %v3816
  %v3818 = vpop.f32.mrf.mxu0
  %v3819 = vadd.f32 0.0, %v3818
  %3820 = vmatmul.bf16.gmra.mxu0 %v3775
  %v3821 = vpop.f32.mrf.mxu0
  %v3822 = vadd.f32 0.0, %v3821
  %v3823 = vpop.f32.mrf.mxu0
  %v3824 = vadd.f32 0.0, %v3823
  %3825 = vdwg.mxu0
  %v3826 = vmul.f32 %v3787, 0.25
  %v3827 = vmul.f32 %v3789, 0.25
  %v3828 = vmul.f32 %v3792, 0.25
  %v3829 = vmul.f32 %v3794, 0.25
  %v3830 = vmul.f32 %v3797, 0.25
  %v3831 = vmul.f32 %v3799, 0.25
  %v3832 = vmul.f32 %v3802, 0.25
  %v3833 = vmul.f32 %v3804, 0.25
  %v3834 = vmul.f32 %v3807, 0.25
  %v3835 = vmul.f32 %v3809, 0.25
  %v3836 = vmul.f32 %v3812, 0.25
  %v3837 = vmul.f32 %v3814, 0.25
  %v3838 = vmul.f32 %v3817, 0.25
  %v3839 = vmul.f32 %v3819, 0.25
  %v3840 = vmul.f32 %v3822, 0.25
  %v3841 = vmul.f32 %v3824, 0.25
  %3842 = vmax.xlane.f32.xlu0 %v3826
  %v3843 = vpop.xlane.xlu0 %3842
  %3844 = vmax.xlane.f32.xlu0 %v3827
  %v3845 = vpop.xlane.xlu0 %3844
  %3846 = vmax.xlane.f32.xlu0 %v3828
  %v3847 = vpop.xlane.xlu0 %3846
  %3848 = vmax.xlane.f32.xlu0 %v3829
  %v3849 = vpop.xlane.xlu0 %3848
  %3850 = vmax.xlane.f32.xlu0 %v3830
  %v3851 = vpop.xlane.xlu0 %3850
  %3852 = vmax.xlane.f32.xlu0 %v3831
  %v3853 = vpop.xlane.xlu0 %3852
  %3854 = vmax.xlane.f32.xlu0 %v3832
  %v3855 = vpop.xlane.xlu0 %3854
  %3856 = vmax.xlane.f32.xlu0 %v3833
  %v3857 = vpop.xlane.xlu0 %3856
  %3858 = vmax.xlane.f32.xlu0 %v3834
  %v3859 = vpop.xlane.xlu0 %3858
  %3860 = vmax.xlane.f32.xlu0 %v3835
  %v3861 = vpop.xlane.xlu0 %3860
  %3862 = vmax.xlane.f32.xlu0 %v3836
  %v3863 = vpop.xlane.xlu0 %3862
  %3864 = vmax.xlane.f32.xlu0 %v3837
  %v3865 = vpop.xlane.xlu0 %3864
  %3866 = vmax.xlane.f32.xlu0 %v3838
  %v3867 = vpop.xlane.xlu0 %3866
  %3868 = vmax.xlane.f32.xlu0 %v3839
  %v3869 = vpop.xlane.xlu0 %3868
  %3870 = vmax.xlane.f32.xlu0 %v3840
  %v3871 = vpop.xlane.xlu0 %3870
  %3872 = vmax.xlane.f32.xlu0 %v3841
  %v3873 = vpop.xlane.xlu0 %3872
  %v3874 = vsub.f32 %v3826, %v3843
  %v3875 = vsub.f32 %v3827, %v3845
  %v3876 = vsub.f32 %v3828, %v3847
  %v3877 = vsub.f32 %v3829, %v3849
  %v3878 = vsub.f32 %v3830, %v3851
  %v3879 = vsub.f32 %v3831, %v3853
  %v3880 = vsub.f32 %v3832, %v3855
  %v3881 = vsub.f32 %v3833, %v3857
  %v3882 = vsub.f32 %v3834, %v3859
  %v3883 = vsub.f32 %v3835, %v3861
  %v3884 = vsub.f32 %v3836, %v3863
  %v3885 = vsub.f32 %v3837, %v3865
  %v3886 = vsub.f32 %v3838, %v3867
  %v3887 = vsub.f32 %v3839, %v3869
  %v3888 = vsub.f32 %v3840, %v3871
  %v3889 = vsub.f32 %v3841, %v3873
  %v3890 = vmul.f32 %v3874, 1.442695
  %v3891 = vpow.pop %v3890
  %v3892 = vmul.f32 %v3875, 1.442695
  %v3893 = vpow.pop %v3892
  %v3894 = vmul.f32 %v3876, 1.442695
  %v3895 = vpow.pop %v3894
  %v3896 = vmul.f32 %v3877, 1.442695
  %v3897 = vpow.pop %v3896
  %v3898 = vmul.f32 %v3878, 1.442695
  %v3899 = vpow.pop %v3898
  %v3900 = vmul.f32 %v3879, 1.442695
  %v3901 = vpow.pop %v3900
  %v3902 = vmul.f32 %v3880, 1.442695
  %v3903 = vpow.pop %v3902
  %v3904 = vmul.f32 %v3881, 1.442695
  %v3905 = vpow.pop %v3904
  %v3906 = vmul.f32 %v3882, 1.442695
  %v3907 = vpow.pop %v3906
  %v3908 = vmul.f32 %v3883, 1.442695
  %v3909 = vpow.pop %v3908
  %v3910 = vmul.f32 %v3884, 1.442695
  %v3911 = vpow.pop %v3910
  %v3912 = vmul.f32 %v3885, 1.442695
  %v3913 = vpow.pop %v3912
  %v3914 = vmul.f32 %v3886, 1.442695
  %v3915 = vpow.pop %v3914
  %v3916 = vmul.f32 %v3887, 1.442695
  %v3917 = vpow.pop %v3916
  %v3918 = vmul.f32 %v3888, 1.442695
  %v3919 = vpow.pop %v3918
  %v3920 = vmul.f32 %v3889, 1.442695
  %v3921 = vpow.pop %v3920
  %3922 = vadd.xlane.f32.xlu0 %v3891
  %v3923 = vpop.xlane.xlu0 %3922
  %3924 = vadd.xlane.f32.xlu0 %v3893
  %v3925 = vpop.xlane.xlu0 %3924
  %3926 = vadd.xlane.f32.xlu0 %v3895
  %v3927 = vpop.xlane.xlu0 %3926
  %3928 = vadd.xlane.f32.xlu0 %v3897
  %v3929 = vpop.xlane.xlu0 %3928
  %3930 = vadd.xlane.f32.xlu0 %v3899
  %v3931 = vpop.xlane.xlu0 %3930
  %3932 = vadd.xlane.f32.xlu0 %v3901
  %v3933 = vpop.xlane.xlu0 %3932
  %3934 = vadd.xlane.f32.xlu0 %v3903
  %v3935 = vpop.xlane.xlu0 %3934
  %3936 = vadd.xlane.f32.xlu0 %v3905
  %v3937 = vpop.xlane.xlu0 %3936
  %3938 = vadd.xlane.f32.xlu0 %v3907
  %v3939 = vpop.xlane.xlu0 %3938
  %3940 = vadd.xlane.f32.xlu0 %v3909
  %v3941 = vpop.xlane.xlu0 %3940
  %3942 = vadd.xlane.f32.xlu0 %v3911
  %v3943 = vpop.xlane.xlu0 %3942
  %3944 = vadd.xlane.f32.xlu0 %v3913
  %v3945 = vpop.xlane.xlu0 %3944
  %3946 = vadd.xlane.f32.xlu0 %v3915
  %v3947 = vpop.xlane.xlu0 %3946
  %3948 = vadd.xlane.f32.xlu0 %v3917
  %v3949 = vpop.xlane.xlu0 %3948
  %3950 = vadd.xlane.f32.xlu0 %v3919
  %v3951 = vpop.xlane.xlu0 %3950
  %3952 = vadd.xlane.f32.xlu0 %v3921
  %v3953 = vpop.xlane.xlu0 %3952
  %v3954 = vrcp.pop %v3923
  %v3955 = vrcp.pop %v3925
  %v3956 = vrcp.pop %v3927
  %v3957 = vrcp.pop %v3929
  %v3958 = vrcp.pop %v3931
  %v3959 = vrcp.pop %v3933
  %v3960 = vrcp.pop %v3935
  %v3961 = vrcp.pop %v3937
  %v3962 = vrcp.pop %v3939
  %v3963 = vrcp.pop %v3941
  %v3964 = vrcp.pop %v3943
  %v3965 = vrcp.pop %v3945
  %v3966 = vrcp.pop %v3947
  %v3967 = vrcp.pop %v3949
  %v3968 = vrcp.pop %v3951
  %v3969 = vrcp.pop %v3953
  %v3970 = vmul.f32 %v3891, %v3954
  %v3971 = vmul.f32 %v3893, %v3955
  %v3972 = vmul.f32 %v3895, %v3956
  %v3973 = vmul.f32 %v3897, %v3957
  %v3974 = vmul.f32 %v3899, %v3958
  %v3975 = vmul.f32 %v3901, %v3959
  %v3976 = vmul.f32 %v3903, %v3960
  %v3977 = vmul.f32 %v3905, %v3961
  %v3978 = vmul.f32 %v3907, %v3962
  %v3979 = vmul.f32 %v3909, %v3963
  %v3980 = vmul.f32 %v3911, %v3964
  %v3981 = vmul.f32 %v3913, %v3965
  %v3982 = vmul.f32 %v3915, %v3966
  %v3983 = vmul.f32 %v3917, %v3967
  %v3984 = vmul.f32 %v3919, %v3968
  %v3985 = vmul.f32 %v3921, %v3969
  %v3986 = vpack.c.bf16 %v3971, %v3970
  %v3987 = vpack.c.bf16 %v3973, %v3972
  %v3988 = vpack.c.bf16 %v3975, %v3974
  %v3989 = vpack.c.bf16 %v3977, %v3976
  %v3990 = vpack.c.bf16 %v3979, %v3978
  %v3991 = vpack.c.bf16 %v3981, %v3980
  %v3992 = vpack.c.bf16 %v3983, %v3982
  %v3993 = vpack.c.bf16 %v3985, %v3984
  %v3998 = vunpack.c.l.b16 %v3721
  %v3999 = vunpack.c.l.b16 %v3722
  %v4000 = vunpack.c.l.b16 %v3723
  %v4001 = vunpack.c.l.b16 %v3724
  %v4002 = vpack.c.b16 %v3999, %v3998
  %v4003 = vpack.c.b16 %v4001, %v4000
  %4006 = vmatpush.bf16.xpose.msra.mxu0 %v3993
  %4007 = vmatpush.bf16.xpose.msra.mxu0 %v3992
  %4008 = vmatpush.bf16.xpose.msra.mxu0 %v3991
  %4009 = vmatpush.bf16.xpose.msra.mxu0 %v3990
  %4010 = vmatpush.bf16.xpose.msra.mxu0 %v3989
  %4011 = vmatpush.bf16.xpose.msra.mxu0 %v3988
  %4012 = vmatpush.bf16.xpose.msra.mxu0 %v3987
  %4013 = vmatpush.bf16.xpose.msra.mxu0 %v3986
  %4014 = vmatmul.bf16.gmra.mxu0 %v4002
  %v4015 = vpop.f32.mrf.mxu0
  %v4016 = vadd.f32 0.0, %v4015
  %v4017 = vpop.f32.mrf.mxu0
  %v4018 = vadd.f32 0.0, %v4017
  %4019 = vmatmul.bf16.gmra.mxu0 %v4003
  %v4020 = vpop.f32.mrf.mxu0
  %v4021 = vadd.f32 0.0, %v4020
  %v4022 = vpop.f32.mrf.mxu0
  %v4023 = vadd.f32 0.0, %v4022
  %4024 = vdwg.mxu0
  %v4025 = vpack.c.bf16 %v4016, %v4016
  %v4026 = vpack.c.bf16 %v4018, %v4018
  %v4027 = vpack.c.bf16 %v4021, %v4021
  %v4028 = vpack.c.bf16 %v4023, %v4023
  %4029 = vst [vmem:[#allocation2 + $0x12c] sm:$0xf] %v4025
  %4030 = vst [vmem:[#allocation2 + $0x144] sm:$0xf] %v4026
  %4031 = vst [vmem:[#allocation2 + $0x15c] sm:$0xf] %v4027
  %4032 = vst [vmem:[#allocation2 + $0x174] sm:$0xf] %v4028
  %v4033 = vld [vmem:[#allocation3 + $0x10] sm:$0xf]
  %v4034 = vld [vmem:[#allocation3 + $0x28] sm:$0xf]
  %v4035 = vld [vmem:[#allocation3 + $0x40] sm:$0xf]
  %v4036 = vld [vmem:[#allocation3 + $0x58] sm:$0xf]
  %v4037 = vld [vmem:[#allocation3 + $0x70] sm:$0xf]
  %v4038 = vld [vmem:[#allocation3 + $0x88] sm:$0xf]
  %v4039 = vld [vmem:[#allocation3 + $0xa0] sm:$0xf]
  %v4040 = vld [vmem:[#allocation3 + $0xb8] sm:$0xf]
  %v4043 = vunpack.c.l.b16 %v4033
  %v4044 = vunpack.c.l.b16 %v4034
  %v4045 = vpack.c.b16 %v4044, %v4043
  %4047 = vxpose.xlu0.c.b16.start [1/8] %v4045, 128
  %4048 = vxpose.xlu0.c.b16.cont [2/8] 0, 128
  %4049 = vxpose.xlu0.c.b16.cont [3/8] 0, 128
  %4050 = vxpose.xlu0.c.b16.cont [4/8] 0, 128
  %4051 = vxpose.xlu0.c.b16.cont [5/8] 0, 128
  %4052 = vxpose.xlu0.c.b16.cont [6/8] 0, 128
  %4053 = vxpose.xlu0.c.b16.cont [7/8] 0, 128
  %4054 = vxpose.xlu0.c.b16.end [8/8] 0, 128
  %v4055 = vpop.trf.xlu0
  %v4056 = vpop.trf.xlu0
  %v4057 = vpop.trf.xlu0
  %v4058 = vpop.trf.xlu0
  %v4059 = vpop.trf.xlu0
  %v4060 = vpop.trf.xlu0
  %v4061 = vpop.trf.xlu0
  %v4062 = vpop.trf.xlu0
  %v4065 = vunpack.c.l.b16 %v4035
  %v4066 = vunpack.c.l.b16 %v4036
  %v4067 = vpack.c.b16 %v4066, %v4065
  %v4070 = vsel %vm142, %v4055, 0
  %v4073 = vsel %vm142, %v4056, 0
  %v4076 = vsel %vm142, %v4057, 0
  %v4079 = vsel %vm142, %v4058, 0
  %v4082 = vsel %vm142, %v4059, 0
  %v4085 = vsel %vm142, %v4060, 0
  %v4088 = vsel %vm142, %v4061, 0
  %v4091 = vsel %vm142, %v4062, 0
  %4093 = vmatpush.bf16.msra.mxu0 0
  %4094 = vmatpush.bf16.msra.mxu0 0
  %4095 = vmatpush.bf16.msra.mxu0 0
  %4096 = vmatpush.bf16.msra.mxu0 0
  %4097 = vmatpush.bf16.msra.mxu0 0
  %4098 = vmatpush.bf16.msra.mxu0 0
  %4099 = vmatpush.bf16.msra.mxu0 0
  %4100 = vmatpush.bf16.msra.mxu0 %v4067
  %4101 = vmatmul.bf16.gmra.mxu0 %v4070
  %v4102 = vpop.f32.mrf.mxu0
  %v4103 = vadd.f32 0.0, %v4102
  %v4104 = vpop.f32.mrf.mxu0
  %v4105 = vadd.f32 0.0, %v4104
  %4106 = vmatmul.bf16.gmra.mxu0 %v4073
  %v4107 = vpop.f32.mrf.mxu0
  %v4108 = vadd.f32 0.0, %v4107
  %v4109 = vpop.f32.mrf.mxu0
  %v4110 = vadd.f32 0.0, %v4109
  %4111 = vmatmul.bf16.gmra.mxu0 %v4076
  %v4112 = vpop.f32.mrf.mxu0
  %v4113 = vadd.f32 0.0, %v4112
  %v4114 = vpop.f32.mrf.mxu0
  %v4115 = vadd.f32 0.0, %v4114
  %4116 = vmatmul.bf16.gmra.mxu0 %v4079
  %v4117 = vpop.f32.mrf.mxu0
  %v4118 = vadd.f32 0.0, %v4117
  %v4119 = vpop.f32.mrf.mxu0
  %v4120 = vadd.f32 0.0, %v4119
  %4121 = vmatmul.bf16.gmra.mxu0 %v4082
  %v4122 = vpop.f32.mrf.mxu0
  %v4123 = vadd.f32 0.0, %v4122
  %v4124 = vpop.f32.mrf.mxu0
  %v4125 = vadd.f32 0.0, %v4124
  %4126 = vmatmul.bf16.gmra.mxu0 %v4085
  %v4127 = vpop.f32.mrf.mxu0
  %v4128 = vadd.f32 0.0, %v4127
  %v4129 = vpop.f32.mrf.mxu0
  %v4130 = vadd.f32 0.0, %v4129
  %4131 = vmatmul.bf16.gmra.mxu0 %v4088
  %v4132 = vpop.f32.mrf.mxu0
  %v4133 = vadd.f32 0.0, %v4132
  %v4134 = vpop.f32.mrf.mxu0
  %v4135 = vadd.f32 0.0, %v4134
  %4136 = vmatmul.bf16.gmra.mxu0 %v4091
  %v4137 = vpop.f32.mrf.mxu0
  %v4138 = vadd.f32 0.0, %v4137
  %v4139 = vpop.f32.mrf.mxu0
  %v4140 = vadd.f32 0.0, %v4139
  %4141 = vdwg.mxu0
  %v4142 = vmul.f32 %v4103, 0.25
  %v4143 = vmul.f32 %v4105, 0.25
  %v4144 = vmul.f32 %v4108, 0.25
  %v4145 = vmul.f32 %v4110, 0.25
  %v4146 = vmul.f32 %v4113, 0.25
  %v4147 = vmul.f32 %v4115, 0.25
  %v4148 = vmul.f32 %v4118, 0.25
  %v4149 = vmul.f32 %v4120, 0.25
  %v4150 = vmul.f32 %v4123, 0.25
  %v4151 = vmul.f32 %v4125, 0.25
  %v4152 = vmul.f32 %v4128, 0.25
  %v4153 = vmul.f32 %v4130, 0.25
  %v4154 = vmul.f32 %v4133, 0.25
  %v4155 = vmul.f32 %v4135, 0.25
  %v4156 = vmul.f32 %v4138, 0.25
  %v4157 = vmul.f32 %v4140, 0.25
  %4158 = vmax.xlane.f32.xlu0 %v4142
  %v4159 = vpop.xlane.xlu0 %4158
  %4160 = vmax.xlane.f32.xlu0 %v4143
  %v4161 = vpop.xlane.xlu0 %4160
  %4162 = vmax.xlane.f32.xlu0 %v4144
  %v4163 = vpop.xlane.xlu0 %4162
  %4164 = vmax.xlane.f32.xlu0 %v4145
  %v4165 = vpop.xlane.xlu0 %4164
  %4166 = vmax.xlane.f32.xlu0 %v4146
  %v4167 = vpop.xlane.xlu0 %4166
  %4168 = vmax.xlane.f32.xlu0 %v4147
  %v4169 = vpop.xlane.xlu0 %4168
  %4170 = vmax.xlane.f32.xlu0 %v4148
  %v4171 = vpop.xlane.xlu0 %4170
  %4172 = vmax.xlane.f32.xlu0 %v4149
  %v4173 = vpop.xlane.xlu0 %4172
  %4174 = vmax.xlane.f32.xlu0 %v4150
  %v4175 = vpop.xlane.xlu0 %4174
  %4176 = vmax.xlane.f32.xlu0 %v4151
  %v4177 = vpop.xlane.xlu0 %4176
  %4178 = vmax.xlane.f32.xlu0 %v4152
  %v4179 = vpop.xlane.xlu0 %4178
  %4180 = vmax.xlane.f32.xlu0 %v4153
  %v4181 = vpop.xlane.xlu0 %4180
  %4182 = vmax.xlane.f32.xlu0 %v4154
  %v4183 = vpop.xlane.xlu0 %4182
  %4184 = vmax.xlane.f32.xlu0 %v4155
  %v4185 = vpop.xlane.xlu0 %4184
  %4186 = vmax.xlane.f32.xlu0 %v4156
  %v4187 = vpop.xlane.xlu0 %4186
  %4188 = vmax.xlane.f32.xlu0 %v4157
  %v4189 = vpop.xlane.xlu0 %4188
  %v4190 = vsub.f32 %v4142, %v4159
  %v4191 = vsub.f32 %v4143, %v4161
  %v4192 = vsub.f32 %v4144, %v4163
  %v4193 = vsub.f32 %v4145, %v4165
  %v4194 = vsub.f32 %v4146, %v4167
  %v4195 = vsub.f32 %v4147, %v4169
  %v4196 = vsub.f32 %v4148, %v4171
  %v4197 = vsub.f32 %v4149, %v4173
  %v4198 = vsub.f32 %v4150, %v4175
  %v4199 = vsub.f32 %v4151, %v4177
  %v4200 = vsub.f32 %v4152, %v4179
  %v4201 = vsub.f32 %v4153, %v4181
  %v4202 = vsub.f32 %v4154, %v4183
  %v4203 = vsub.f32 %v4155, %v4185
  %v4204 = vsub.f32 %v4156, %v4187
  %v4205 = vsub.f32 %v4157, %v4189
  %v4206 = vmul.f32 %v4190, 1.442695
  %v4207 = vpow.pop %v4206
  %v4208 = vmul.f32 %v4191, 1.442695
  %v4209 = vpow.pop %v4208
  %v4210 = vmul.f32 %v4192, 1.442695
  %v4211 = vpow.pop %v4210
  %v4212 = vmul.f32 %v4193, 1.442695
  %v4213 = vpow.pop %v4212
  %v4214 = vmul.f32 %v4194, 1.442695
  %v4215 = vpow.pop %v4214
  %v4216 = vmul.f32 %v4195, 1.442695
  %v4217 = vpow.pop %v4216
  %v4218 = vmul.f32 %v4196, 1.442695
  %v4219 = vpow.pop %v4218
  %v4220 = vmul.f32 %v4197, 1.442695
  %v4221 = vpow.pop %v4220
  %v4222 = vmul.f32 %v4198, 1.442695
  %v4223 = vpow.pop %v4222
  %v4224 = vmul.f32 %v4199, 1.442695
  %v4225 = vpow.pop %v4224
  %v4226 = vmul.f32 %v4200, 1.442695
  %v4227 = vpow.pop %v4226
  %v4228 = vmul.f32 %v4201, 1.442695
  %v4229 = vpow.pop %v4228
  %v4230 = vmul.f32 %v4202, 1.442695
  %v4231 = vpow.pop %v4230
  %v4232 = vmul.f32 %v4203, 1.442695
  %v4233 = vpow.pop %v4232
  %v4234 = vmul.f32 %v4204, 1.442695
  %v4235 = vpow.pop %v4234
  %v4236 = vmul.f32 %v4205, 1.442695
  %v4237 = vpow.pop %v4236
  %4238 = vadd.xlane.f32.xlu0 %v4207
  %v4239 = vpop.xlane.xlu0 %4238
  %4240 = vadd.xlane.f32.xlu0 %v4209
  %v4241 = vpop.xlane.xlu0 %4240
  %4242 = vadd.xlane.f32.xlu0 %v4211
  %v4243 = vpop.xlane.xlu0 %4242
  %4244 = vadd.xlane.f32.xlu0 %v4213
  %v4245 = vpop.xlane.xlu0 %4244
  %4246 = vadd.xlane.f32.xlu0 %v4215
  %v4247 = vpop.xlane.xlu0 %4246
  %4248 = vadd.xlane.f32.xlu0 %v4217
  %v4249 = vpop.xlane.xlu0 %4248
  %4250 = vadd.xlane.f32.xlu0 %v4219
  %v4251 = vpop.xlane.xlu0 %4250
  %4252 = vadd.xlane.f32.xlu0 %v4221
  %v4253 = vpop.xlane.xlu0 %4252
  %4254 = vadd.xlane.f32.xlu0 %v4223
  %v4255 = vpop.xlane.xlu0 %4254
  %4256 = vadd.xlane.f32.xlu0 %v4225
  %v4257 = vpop.xlane.xlu0 %4256
  %4258 = vadd.xlane.f32.xlu0 %v4227
  %v4259 = vpop.xlane.xlu0 %4258
  %4260 = vadd.xlane.f32.xlu0 %v4229
  %v4261 = vpop.xlane.xlu0 %4260
  %4262 = vadd.xlane.f32.xlu0 %v4231
  %v4263 = vpop.xlane.xlu0 %4262
  %4264 = vadd.xlane.f32.xlu0 %v4233
  %v4265 = vpop.xlane.xlu0 %4264
  %4266 = vadd.xlane.f32.xlu0 %v4235
  %v4267 = vpop.xlane.xlu0 %4266
  %4268 = vadd.xlane.f32.xlu0 %v4237
  %v4269 = vpop.xlane.xlu0 %4268
  %v4270 = vrcp.pop %v4239
  %v4271 = vrcp.pop %v4241
  %v4272 = vrcp.pop %v4243
  %v4273 = vrcp.pop %v4245
  %v4274 = vrcp.pop %v4247
  %v4275 = vrcp.pop %v4249
  %v4276 = vrcp.pop %v4251
  %v4277 = vrcp.pop %v4253
  %v4278 = vrcp.pop %v4255
  %v4279 = vrcp.pop %v4257
  %v4280 = vrcp.pop %v4259
  %v4281 = vrcp.pop %v4261
  %v4282 = vrcp.pop %v4263
  %v4283 = vrcp.pop %v4265
  %v4284 = vrcp.pop %v4267
  %v4285 = vrcp.pop %v4269
  %v4286 = vmul.f32 %v4207, %v4270
  %v4287 = vmul.f32 %v4209, %v4271
  %v4288 = vmul.f32 %v4211, %v4272
  %v4289 = vmul.f32 %v4213, %v4273
  %v4290 = vmul.f32 %v4215, %v4274
  %v4291 = vmul.f32 %v4217, %v4275
  %v4292 = vmul.f32 %v4219, %v4276
  %v4293 = vmul.f32 %v4221, %v4277
  %v4294 = vmul.f32 %v4223, %v4278
  %v4295 = vmul.f32 %v4225, %v4279
  %v4296 = vmul.f32 %v4227, %v4280
  %v4297 = vmul.f32 %v4229, %v4281
  %v4298 = vmul.f32 %v4231, %v4282
  %v4299 = vmul.f32 %v4233, %v4283
  %v4300 = vmul.f32 %v4235, %v4284
  %v4301 = vmul.f32 %v4237, %v4285
  %v4302 = vpack.c.bf16 %v4287, %v4286
  %v4303 = vpack.c.bf16 %v4289, %v4288
  %v4304 = vpack.c.bf16 %v4291, %v4290
  %v4305 = vpack.c.bf16 %v4293, %v4292
  %v4306 = vpack.c.bf16 %v4295, %v4294
  %v4307 = vpack.c.bf16 %v4297, %v4296
  %v4308 = vpack.c.bf16 %v4299, %v4298
  %v4309 = vpack.c.bf16 %v4301, %v4300
  %v4314 = vunpack.c.l.b16 %v4037
  %v4315 = vunpack.c.l.b16 %v4038
  %v4316 = vunpack.c.l.b16 %v4039
  %v4317 = vunpack.c.l.b16 %v4040
  %v4318 = vpack.c.b16 %v4315, %v4314
  %v4319 = vpack.c.b16 %v4317, %v4316
  %4322 = vmatpush.bf16.xpose.msra.mxu0 %v4309
  %4323 = vmatpush.bf16.xpose.msra.mxu0 %v4308
  %4324 = vmatpush.bf16.xpose.msra.mxu0 %v4307
  %4325 = vmatpush.bf16.xpose.msra.mxu0 %v4306
  %4326 = vmatpush.bf16.xpose.msra.mxu0 %v4305
  %4327 = vmatpush.bf16.xpose.msra.mxu0 %v4304
  %4328 = vmatpush.bf16.xpose.msra.mxu0 %v4303
  %4329 = vmatpush.bf16.xpose.msra.mxu0 %v4302
  %4330 = vmatmul.bf16.gmra.mxu0 %v4318
  %v4331 = vpop.f32.mrf.mxu0
  %v4332 = vadd.f32 0.0, %v4331
  %v4333 = vpop.f32.mrf.mxu0
  %v4334 = vadd.f32 0.0, %v4333
  %4335 = vmatmul.bf16.gmra.mxu0 %v4319
  %v4336 = vpop.f32.mrf.mxu0
  %v4337 = vadd.f32 0.0, %v4336
  %v4338 = vpop.f32.mrf.mxu0
  %v4339 = vadd.f32 0.0, %v4338
  %4340 = vdwg.mxu0
  %v4341 = vpack.c.bf16 %v4332, %v4332
  %v4342 = vpack.c.bf16 %v4334, %v4334
  %v4343 = vpack.c.bf16 %v4337, %v4337
  %v4344 = vpack.c.bf16 %v4339, %v4339
  %4345 = vst [vmem:[#allocation2 + $0x130] sm:$0xf] %v4341
  %4346 = vst [vmem:[#allocation2 + $0x148] sm:$0xf] %v4342
  %4347 = vst [vmem:[#allocation2 + $0x160] sm:$0xf] %v4343
  %4348 = vst [vmem:[#allocation2 + $0x178] sm:$0xf] %v4344
  %v4349 = vld [vmem:[#allocation3 + $0x14] sm:$0xf]
  %v4350 = vld [vmem:[#allocation3 + $0x2c] sm:$0xf]
  %v4351 = vld [vmem:[#allocation3 + $0x44] sm:$0xf]
  %v4352 = vld [vmem:[#allocation3 + $0x5c] sm:$0xf]
  %v4353 = vld [vmem:[#allocation3 + $0x74] sm:$0xf]
  %v4354 = vld [vmem:[#allocation3 + $0x8c] sm:$0xf]
  %v4355 = vld [vmem:[#allocation3 + $0xa4] sm:$0xf]
  %v4356 = vld [vmem:[#allocation3 + $0xbc] sm:$0xf]
  %v4359 = vunpack.c.l.b16 %v4349
  %v4360 = vunpack.c.l.b16 %v4350
  %v4361 = vpack.c.b16 %v4360, %v4359
  %4363 = vxpose.xlu0.c.b16.start [1/8] %v4361, 128
  %4364 = vxpose.xlu0.c.b16.cont [2/8] 0, 128
  %4365 = vxpose.xlu0.c.b16.cont [3/8] 0, 128
  %4366 = vxpose.xlu0.c.b16.cont [4/8] 0, 128
  %4367 = vxpose.xlu0.c.b16.cont [5/8] 0, 128
  %4368 = vxpose.xlu0.c.b16.cont [6/8] 0, 128
  %4369 = vxpose.xlu0.c.b16.cont [7/8] 0, 128
  %4370 = vxpose.xlu0.c.b16.end [8/8] 0, 128
  %v4371 = vpop.trf.xlu0
  %v4372 = vpop.trf.xlu0
  %v4373 = vpop.trf.xlu0
  %v4374 = vpop.trf.xlu0
  %v4375 = vpop.trf.xlu0
  %v4376 = vpop.trf.xlu0
  %v4377 = vpop.trf.xlu0
  %v4378 = vpop.trf.xlu0
  %v4381 = vunpack.c.l.b16 %v4351
  %v4382 = vunpack.c.l.b16 %v4352
  %v4383 = vpack.c.b16 %v4382, %v4381
  %v4386 = vsel %vm142, %v4371, 0
  %v4389 = vsel %vm142, %v4372, 0
  %v4392 = vsel %vm142, %v4373, 0
  %v4395 = vsel %vm142, %v4374, 0
  %v4398 = vsel %vm142, %v4375, 0
  %v4401 = vsel %vm142, %v4376, 0
  %v4404 = vsel %vm142, %v4377, 0
  %v4407 = vsel %vm142, %v4378, 0
  %4409 = vmatpush.bf16.msra.mxu0 0
  %4410 = vmatpush.bf16.msra.mxu0 0
  %4411 = vmatpush.bf16.msra.mxu0 0
  %4412 = vmatpush.bf16.msra.mxu0 0
  %4413 = vmatpush.bf16.msra.mxu0 0
  %4414 = vmatpush.bf16.msra.mxu0 0
  %4415 = vmatpush.bf16.msra.mxu0 0
  %4416 = vmatpush.bf16.msra.mxu0 %v4383
  %4417 = vmatmul.bf16.gmra.mxu0 %v4386
  %v4418 = vpop.f32.mrf.mxu0
  %v4419 = vadd.f32 0.0, %v4418
  %v4420 = vpop.f32.mrf.mxu0
  %v4421 = vadd.f32 0.0, %v4420
  %4422 = vmatmul.bf16.gmra.mxu0 %v4389
  %v4423 = vpop.f32.mrf.mxu0
  %v4424 = vadd.f32 0.0, %v4423
  %v4425 = vpop.f32.mrf.mxu0
  %v4426 = vadd.f32 0.0, %v4425
  %4427 = vmatmul.bf16.gmra.mxu0 %v4392
  %v4428 = vpop.f32.mrf.mxu0
  %v4429 = vadd.f32 0.0, %v4428
  %v4430 = vpop.f32.mrf.mxu0
  %v4431 = vadd.f32 0.0, %v4430
  %4432 = vmatmul.bf16.gmra.mxu0 %v4395
  %v4433 = vpop.f32.mrf.mxu0
  %v4434 = vadd.f32 0.0, %v4433
  %v4435 = vpop.f32.mrf.mxu0
  %v4436 = vadd.f32 0.0, %v4435
  %4437 = vmatmul.bf16.gmra.mxu0 %v4398
  %v4438 = vpop.f32.mrf.mxu0
  %v4439 = vadd.f32 0.0, %v4438
  %v4440 = vpop.f32.mrf.mxu0
  %v4441 = vadd.f32 0.0, %v4440
  %4442 = vmatmul.bf16.gmra.mxu0 %v4401
  %v4443 = vpop.f32.mrf.mxu0
  %v4444 = vadd.f32 0.0, %v4443
  %v4445 = vpop.f32.mrf.mxu0
  %v4446 = vadd.f32 0.0, %v4445
  %4447 = vmatmul.bf16.gmra.mxu0 %v4404
  %v4448 = vpop.f32.mrf.mxu0
  %v4449 = vadd.f32 0.0, %v4448
  %v4450 = vpop.f32.mrf.mxu0
  %v4451 = vadd.f32 0.0, %v4450
  %4452 = vmatmul.bf16.gmra.mxu0 %v4407
  %v4453 = vpop.f32.mrf.mxu0
  %v4454 = vadd.f32 0.0, %v4453
  %v4455 = vpop.f32.mrf.mxu0
  %v4456 = vadd.f32 0.0, %v4455
  %4457 = vdwg.mxu0
  %v4458 = vmul.f32 %v4419, 0.25
  %v4459 = vmul.f32 %v4421, 0.25
  %v4460 = vmul.f32 %v4424, 0.25
  %v4461 = vmul.f32 %v4426, 0.25
  %v4462 = vmul.f32 %v4429, 0.25
  %v4463 = vmul.f32 %v4431, 0.25
  %v4464 = vmul.f32 %v4434, 0.25
  %v4465 = vmul.f32 %v4436, 0.25
  %v4466 = vmul.f32 %v4439, 0.25
  %v4467 = vmul.f32 %v4441, 0.25
  %v4468 = vmul.f32 %v4444, 0.25
  %v4469 = vmul.f32 %v4446, 0.25
  %v4470 = vmul.f32 %v4449, 0.25
  %v4471 = vmul.f32 %v4451, 0.25
  %v4472 = vmul.f32 %v4454, 0.25
  %v4473 = vmul.f32 %v4456, 0.25
  %4474 = vmax.xlane.f32.xlu0 %v4458
  %v4475 = vpop.xlane.xlu0 %4474
  %4476 = vmax.xlane.f32.xlu0 %v4459
  %v4477 = vpop.xlane.xlu0 %4476
  %4478 = vmax.xlane.f32.xlu0 %v4460
  %v4479 = vpop.xlane.xlu0 %4478
  %4480 = vmax.xlane.f32.xlu0 %v4461
  %v4481 = vpop.xlane.xlu0 %4480
  %4482 = vmax.xlane.f32.xlu0 %v4462
  %v4483 = vpop.xlane.xlu0 %4482
  %4484 = vmax.xlane.f32.xlu0 %v4463
  %v4485 = vpop.xlane.xlu0 %4484
  %4486 = vmax.xlane.f32.xlu0 %v4464
  %v4487 = vpop.xlane.xlu0 %4486
  %4488 = vmax.xlane.f32.xlu0 %v4465
  %v4489 = vpop.xlane.xlu0 %4488
  %4490 = vmax.xlane.f32.xlu0 %v4466
  %v4491 = vpop.xlane.xlu0 %4490
  %4492 = vmax.xlane.f32.xlu0 %v4467
  %v4493 = vpop.xlane.xlu0 %4492
  %4494 = vmax.xlane.f32.xlu0 %v4468
  %v4495 = vpop.xlane.xlu0 %4494
  %4496 = vmax.xlane.f32.xlu0 %v4469
  %v4497 = vpop.xlane.xlu0 %4496
  %4498 = vmax.xlane.f32.xlu0 %v4470
  %v4499 = vpop.xlane.xlu0 %4498
  %4500 = vmax.xlane.f32.xlu0 %v4471
  %v4501 = vpop.xlane.xlu0 %4500
  %4502 = vmax.xlane.f32.xlu0 %v4472
  %v4503 = vpop.xlane.xlu0 %4502
  %4504 = vmax.xlane.f32.xlu0 %v4473
  %v4505 = vpop.xlane.xlu0 %4504
  %v4506 = vsub.f32 %v4458, %v4475
  %v4507 = vsub.f32 %v4459, %v4477
  %v4508 = vsub.f32 %v4460, %v4479
  %v4509 = vsub.f32 %v4461, %v4481
  %v4510 = vsub.f32 %v4462, %v4483
  %v4511 = vsub.f32 %v4463, %v4485
  %v4512 = vsub.f32 %v4464, %v4487
  %v4513 = vsub.f32 %v4465, %v4489
  %v4514 = vsub.f32 %v4466, %v4491
  %v4515 = vsub.f32 %v4467, %v4493
  %v4516 = vsub.f32 %v4468, %v4495
  %v4517 = vsub.f32 %v4469, %v4497
  %v4518 = vsub.f32 %v4470, %v4499
  %v4519 = vsub.f32 %v4471, %v4501
  %v4520 = vsub.f32 %v4472, %v4503
  %v4521 = vsub.f32 %v4473, %v4505
  %v4522 = vmul.f32 %v4506, 1.442695
  %v4523 = vpow.pop %v4522
  %v4524 = vmul.f32 %v4507, 1.442695
  %v4525 = vpow.pop %v4524
  %v4526 = vmul.f32 %v4508, 1.442695
  %v4527 = vpow.pop %v4526
  %v4528 = vmul.f32 %v4509, 1.442695
  %v4529 = vpow.pop %v4528
  %v4530 = vmul.f32 %v4510, 1.442695
  %v4531 = vpow.pop %v4530
  %v4532 = vmul.f32 %v4511, 1.442695
  %v4533 = vpow.pop %v4532
  %v4534 = vmul.f32 %v4512, 1.442695
  %v4535 = vpow.pop %v4534
  %v4536 = vmul.f32 %v4513, 1.442695
  %v4537 = vpow.pop %v4536
  %v4538 = vmul.f32 %v4514, 1.442695
  %v4539 = vpow.pop %v4538
  %v4540 = vmul.f32 %v4515, 1.442695
  %v4541 = vpow.pop %v4540
  %v4542 = vmul.f32 %v4516, 1.442695
  %v4543 = vpow.pop %v4542
  %v4544 = vmul.f32 %v4517, 1.442695
  %v4545 = vpow.pop %v4544
  %v4546 = vmul.f32 %v4518, 1.442695
  %v4547 = vpow.pop %v4546
  %v4548 = vmul.f32 %v4519, 1.442695
  %v4549 = vpow.pop %v4548
  %v4550 = vmul.f32 %v4520, 1.442695
  %v4551 = vpow.pop %v4550
  %v4552 = vmul.f32 %v4521, 1.442695
  %v4553 = vpow.pop %v4552
  %4554 = vadd.xlane.f32.xlu0 %v4523
  %v4555 = vpop.xlane.xlu0 %4554
  %4556 = vadd.xlane.f32.xlu0 %v4525
  %v4557 = vpop.xlane.xlu0 %4556
  %4558 = vadd.xlane.f32.xlu0 %v4527
  %v4559 = vpop.xlane.xlu0 %4558
  %4560 = vadd.xlane.f32.xlu0 %v4529
  %v4561 = vpop.xlane.xlu0 %4560
  %4562 = vadd.xlane.f32.xlu0 %v4531
  %v4563 = vpop.xlane.xlu0 %4562
  %4564 = vadd.xlane.f32.xlu0 %v4533
  %v4565 = vpop.xlane.xlu0 %4564
  %4566 = vadd.xlane.f32.xlu0 %v4535
  %v4567 = vpop.xlane.xlu0 %4566
  %4568 = vadd.xlane.f32.xlu0 %v4537
  %v4569 = vpop.xlane.xlu0 %4568
  %4570 = vadd.xlane.f32.xlu0 %v4539
  %v4571 = vpop.xlane.xlu0 %4570
  %4572 = vadd.xlane.f32.xlu0 %v4541
  %v4573 = vpop.xlane.xlu0 %4572
  %4574 = vadd.xlane.f32.xlu0 %v4543
  %v4575 = vpop.xlane.xlu0 %4574
  %4576 = vadd.xlane.f32.xlu0 %v4545
  %v4577 = vpop.xlane.xlu0 %4576
  %4578 = vadd.xlane.f32.xlu0 %v4547
  %v4579 = vpop.xlane.xlu0 %4578
  %4580 = vadd.xlane.f32.xlu0 %v4549
  %v4581 = vpop.xlane.xlu0 %4580
  %4582 = vadd.xlane.f32.xlu0 %v4551
  %v4583 = vpop.xlane.xlu0 %4582
  %4584 = vadd.xlane.f32.xlu0 %v4553
  %v4585 = vpop.xlane.xlu0 %4584
  %v4586 = vrcp.pop %v4555
  %v4587 = vrcp.pop %v4557
  %v4588 = vrcp.pop %v4559
  %v4589 = vrcp.pop %v4561
  %v4590 = vrcp.pop %v4563
  %v4591 = vrcp.pop %v4565
  %v4592 = vrcp.pop %v4567
  %v4593 = vrcp.pop %v4569
  %v4594 = vrcp.pop %v4571
  %v4595 = vrcp.pop %v4573
  %v4596 = vrcp.pop %v4575
  %v4597 = vrcp.pop %v4577
  %v4598 = vrcp.pop %v4579
  %v4599 = vrcp.pop %v4581
  %v4600 = vrcp.pop %v4583
  %v4601 = vrcp.pop %v4585
  %v4602 = vmul.f32 %v4523, %v4586
  %v4603 = vmul.f32 %v4525, %v4587
  %v4604 = vmul.f32 %v4527, %v4588
  %v4605 = vmul.f32 %v4529, %v4589
  %v4606 = vmul.f32 %v4531, %v4590
  %v4607 = vmul.f32 %v4533, %v4591
  %v4608 = vmul.f32 %v4535, %v4592
  %v4609 = vmul.f32 %v4537, %v4593
  %v4610 = vmul.f32 %v4539, %v4594
  %v4611 = vmul.f32 %v4541, %v4595
  %v4612 = vmul.f32 %v4543, %v4596
  %v4613 = vmul.f32 %v4545, %v4597
  %v4614 = vmul.f32 %v4547, %v4598
  %v4615 = vmul.f32 %v4549, %v4599
  %v4616 = vmul.f32 %v4551, %v4600
  %v4617 = vmul.f32 %v4553, %v4601
  %v4618 = vpack.c.bf16 %v4603, %v4602
  %v4619 = vpack.c.bf16 %v4605, %v4604
  %v4620 = vpack.c.bf16 %v4607, %v4606
  %v4621 = vpack.c.bf16 %v4609, %v4608
  %v4622 = vpack.c.bf16 %v4611, %v4610
  %v4623 = vpack.c.bf16 %v4613, %v4612
  %v4624 = vpack.c.bf16 %v4615, %v4614
  %v4625 = vpack.c.bf16 %v4617, %v4616
  %v4630 = vunpack.c.l.b16 %v4353
  %v4631 = vunpack.c.l.b16 %v4354
  %v4632 = vunpack.c.l.b16 %v4355
  %v4633 = vunpack.c.l.b16 %v4356
  %v4634 = vpack.c.b16 %v4631, %v4630
  %v4635 = vpack.c.b16 %v4633, %v4632
  %4638 = vmatpush.bf16.xpose.msra.mxu0 %v4625
  %4639 = vmatpush.bf16.xpose.msra.mxu0 %v4624
  %4640 = vmatpush.bf16.xpose.msra.mxu0 %v4623
  %4641 = vmatpush.bf16.xpose.msra.mxu0 %v4622
  %4642 = vmatpush.bf16.xpose.msra.mxu0 %v4621
  %4643 = vmatpush.bf16.xpose.msra.mxu0 %v4620
  %4644 = vmatpush.bf16.xpose.msra.mxu0 %v4619
  %4645 = vmatpush.bf16.xpose.msra.mxu0 %v4618
  %4646 = vmatmul.bf16.gmra.mxu0 %v4634
  %v4647 = vpop.f32.mrf.mxu0
  %v4648 = vadd.f32 0.0, %v4647
  %v4649 = vpop.f32.mrf.mxu0
  %v4650 = vadd.f32 0.0, %v4649
  %4651 = vmatmul.bf16.gmra.mxu0 %v4635
  %v4652 = vpop.f32.mrf.mxu0
  %v4653 = vadd.f32 0.0, %v4652
  %v4654 = vpop.f32.mrf.mxu0
  %v4655 = vadd.f32 0.0, %v4654
  %4656 = vdwg.mxu0
  %v4657 = vpack.c.bf16 %v4648, %v4648
  %v4658 = vpack.c.bf16 %v4650, %v4650
  %v4659 = vpack.c.bf16 %v4653, %v4653
  %v4660 = vpack.c.bf16 %v4655, %v4655
  %4661 = vst [vmem:[#allocation2 + $0x134] sm:$0xf] %v4657
  %4662 = vst [vmem:[#allocation2 + $0x14c] sm:$0xf] %v4658
  %4663 = vst [vmem:[#allocation2 + $0x164] sm:$0xf] %v4659
  %4664 = vst [vmem:[#allocation2 + $0x17c] sm:$0xf] %v4660
  %v4665 = vld [vmem:[#allocation2] sm:$0xff]
  %v4666 = vld [vmem:[#allocation2 + $0x8] sm:$0xff]
  %v4667 = vld [vmem:[#allocation2 + $0x18] sm:$0xff]
  %v4668 = vld [vmem:[#allocation2 + $0x20] sm:$0xff]
  %v4669 = vld [vmem:[#allocation2 + $0x30] sm:$0xff]
  %v4670 = vld [vmem:[#allocation2 + $0x38] sm:$0xff]
  %v4671 = vld [vmem:[#allocation2 + $0x48] sm:$0xff]
  %v4672 = vld [vmem:[#allocation2 + $0x50] sm:$0xff]
  %v4673 = vld [vmem:[#allocation2 + $0x60] sm:$0xff]
  %v4674 = vld [vmem:[#allocation2 + $0x68] sm:$0xff]
  %v4675 = vld [vmem:[#allocation2 + $0x78] sm:$0xff]
  %v4676 = vld [vmem:[#allocation2 + $0x80] sm:$0xff]
  %v4677 = vld [vmem:[#allocation2 + $0x90] sm:$0xff]
  %v4678 = vld [vmem:[#allocation2 + $0x98] sm:$0xff]
  %v4679 = vld [vmem:[#allocation2 + $0xa8] sm:$0xff]
  %v4680 = vld [vmem:[#allocation2 + $0xb0] sm:$0xff]
  %v4681 = vld [vmem:[#allocation2 + $0xc0] sm:$0xff]
  %v4682 = vld [vmem:[#allocation2 + $0xc8] sm:$0xff]
  %v4683 = vld [vmem:[#allocation2 + $0xd8] sm:$0xff]
  %v4684 = vld [vmem:[#allocation2 + $0xe0] sm:$0xff]
  %v4685 = vld [vmem:[#allocation2 + $0xf0] sm:$0xff]
  %v4686 = vld [vmem:[#allocation2 + $0xf8] sm:$0xff]
  %v4687 = vld [vmem:[#allocation2 + $0x108] sm:$0xff]
  %v4688 = vld [vmem:[#allocation2 + $0x110] sm:$0xff]
  %v4689 = vld [vmem:[#allocation2 + $0x120] sm:$0xff]
  %v4690 = vld [vmem:[#allocation2 + $0x128] sm:$0xff]
  %v4691 = vld [vmem:[#allocation2 + $0x138] sm:$0xff]
  %v4692 = vld [vmem:[#allocation2 + $0x140] sm:$0xff]
  %v4693 = vld [vmem:[#allocation2 + $0x150] sm:$0xff]
  %v4694 = vld [vmem:[#allocation2 + $0x158] sm:$0xff]
  %v4695 = vld [vmem:[#allocation2 + $0x168] sm:$0xff]
  %v4696 = vld [vmem:[#allocation2 + $0x170] sm:$0xff]
  %v4697 = vld [vmem:[#allocation2 + $0x180] sm:$0xff]
  %v4698 = vld [vmem:[#allocation2 + $0x188] sm:$0xff]
  %v4699 = vld [vmem:[#allocation2 + $0x198] sm:$0xff]
  %v4700 = vld [vmem:[#allocation2 + $0x1a0] sm:$0xff]
  %v4701 = vld [vmem:[#allocation2 + $0x1b0] sm:$0xff]
  %v4702 = vld [vmem:[#allocation2 + $0x1b8] sm:$0xff]
  %v4703 = vld [vmem:[#allocation2 + $0x1c8] sm:$0xff]
  %v4704 = vld [vmem:[#allocation2 + $0x1d0] sm:$0xff]
  %v4705 = vld [vmem:[%s1] sm:$0xf]
  %v4706 = vld [vmem:[%s1 + $0x4] sm:$0xf]
  %v4707 = vld [vmem:[%s1 + $0x8] sm:$0xf]
  %v4708 = vld [vmem:[%s1 + $0xc] sm:$0xf]
  %v4709 = vld [vmem:[%s1 + $0x10] sm:$0xf]
  %v4710 = vld [vmem:[%s1 + $0x14] sm:$0xf]
  %v4711 = vld [vmem:[%s1 + $0x18] sm:$0xf]
  %v4712 = vld [vmem:[%s1 + $0x1c] sm:$0xf]
  %v4713 = vld [vmem:[%s1 + $0x20] sm:$0xf]
  %v4714 = vld [vmem:[%s1 + $0x24] sm:$0xf]
  %v4715 = vld [vmem:[%s1 + $0x28] sm:$0xf]
  %v4716 = vld [vmem:[%s1 + $0x2c] sm:$0xf]
  %v4717 = vld [vmem:[%s1 + $0x30] sm:$0xf]
  %v4718 = vld [vmem:[%s1 + $0x34] sm:$0xf]
  %v4719 = vld [vmem:[%s1 + $0x38] sm:$0xf]
  %v4720 = vld [vmem:[%s1 + $0x3c] sm:$0xf]
  %v4721 = vld [vmem:[%s1 + $0x40] sm:$0xf]
  %v4722 = vld [vmem:[%s1 + $0x44] sm:$0xf]
  %v4723 = vld [vmem:[%s1 + $0x48] sm:$0xf]
  %v4724 = vld [vmem:[%s1 + $0x4c] sm:$0xf]
  %v4725 = vld [vmem:[%s1 + $0x50] sm:$0xf]
  %v4726 = vld [vmem:[%s1 + $0x54] sm:$0xf]
  %v4727 = vld [vmem:[%s1 + $0x58] sm:$0xf]
  %v4728 = vld [vmem:[%s1 + $0x5c] sm:$0xf]
  %v4729 = vld [vmem:[%s1 + $0x60] sm:$0xf]
  %v4730 = vld [vmem:[%s1 + $0x64] sm:$0xf]
  %v4731 = vld [vmem:[%s1 + $0x68] sm:$0xf]
  %v4732 = vld [vmem:[%s1 + $0x6c] sm:$0xf]
  %v4733 = vld [vmem:[%s1 + $0x70] sm:$0xf]
  %v4734 = vld [vmem:[%s1 + $0x74] sm:$0xf]
  %v4735 = vld [vmem:[%s1 + $0x78] sm:$0xf]
  %v4736 = vld [vmem:[%s1 + $0x7c] sm:$0xf]
  %v4737 = vld [vmem:[%s1 + $0x80] sm:$0xf]
  %v4738 = vld [vmem:[%s1 + $0x84] sm:$0xf]
  %v4739 = vld [vmem:[%s1 + $0x88] sm:$0xf]
  %v4740 = vld [vmem:[%s1 + $0x8c] sm:$0xf]
  %v4741 = vld [vmem:[%s1 + $0x90] sm:$0xf]
  %v4742 = vld [vmem:[%s1 + $0x94] sm:$0xf]
  %v4743 = vld [vmem:[%s1 + $0x98] sm:$0xf]
  %v4744 = vld [vmem:[%s1 + $0x9c] sm:$0xf]
  %v4745 = vld [vmem:[%s1 + $0xa0] sm:$0xf]
  %v4746 = vld [vmem:[%s1 + $0xa4] sm:$0xf]
  %v4747 = vld [vmem:[%s1 + $0xa8] sm:$0xf]
  %v4748 = vld [vmem:[%s1 + $0xac] sm:$0xf]
  %v4749 = vld [vmem:[%s1 + $0xb0] sm:$0xf]
  %v4750 = vld [vmem:[%s1 + $0xb4] sm:$0xf]
  %v4751 = vld [vmem:[%s1 + $0xb8] sm:$0xf]
  %v4752 = vld [vmem:[%s1 + $0xbc] sm:$0xf]
  %v4753 = vld [vmem:[%s1 + $0xc0] sm:$0xf]
  %v4754 = vld [vmem:[%s1 + $0xc4] sm:$0xf]
  %v4755 = vld [vmem:[%s1 + $0xc8] sm:$0xf]
  %v4756 = vld [vmem:[%s1 + $0xcc] sm:$0xf]
  %v4757 = vld [vmem:[%s1 + $0xd0] sm:$0xf]
  %v4758 = vld [vmem:[%s1 + $0xd4] sm:$0xf]
  %v4759 = vld [vmem:[%s1 + $0xd8] sm:$0xf]
  %v4760 = vld [vmem:[%s1 + $0xdc] sm:$0xf]
  %v4761 = vld [vmem:[%s1 + $0xe0] sm:$0xf]
  %v4762 = vld [vmem:[%s1 + $0xe4] sm:$0xf]
  %v4763 = vld [vmem:[%s1 + $0xe8] sm:$0xf]
  %v4764 = vld [vmem:[%s1 + $0xec] sm:$0xf]
  %v4765 = vld [vmem:[%s1 + $0xf0] sm:$0xf]
  %v4766 = vld [vmem:[%s1 + $0xf4] sm:$0xf]
  %v4767 = vld [vmem:[%s1 + $0xf8] sm:$0xf]
  %v4768 = vld [vmem:[%s1 + $0xfc] sm:$0xf]
  %v4833 = vunpack.c.l.b16 %v4705
  %v4834 = vunpack.c.l.b16 %v4706
  %v4835 = vunpack.c.l.b16 %v4707
  %v4836 = vunpack.c.l.b16 %v4708
  %v4837 = vunpack.c.l.b16 %v4709
  %v4838 = vunpack.c.l.b16 %v4710
  %v4839 = vunpack.c.l.b16 %v4711
  %v4840 = vunpack.c.l.b16 %v4712
  %v4841 = vunpack.c.l.b16 %v4713
  %v4842 = vunpack.c.l.b16 %v4714
  %v4843 = vunpack.c.l.b16 %v4715
  %v4844 = vunpack.c.l.b16 %v4716
  %v4845 = vunpack.c.l.b16 %v4717
  %v4846 = vunpack.c.l.b16 %v4718
  %v4847 = vunpack.c.l.b16 %v4719
  %v4848 = vunpack.c.l.b16 %v4720
  %v4849 = vunpack.c.l.b16 %v4721
  %v4850 = vunpack.c.l.b16 %v4722
  %v4851 = vunpack.c.l.b16 %v4723
  %v4852 = vunpack.c.l.b16 %v4724
  %v4853 = vunpack.c.l.b16 %v4725
  %v4854 = vunpack.c.l.b16 %v4726
  %v4855 = vunpack.c.l.b16 %v4727
  %v4856 = vunpack.c.l.b16 %v4728
  %v4857 = vunpack.c.l.b16 %v4729
  %v4858 = vunpack.c.l.b16 %v4730
  %v4859 = vunpack.c.l.b16 %v4731
  %v4860 = vunpack.c.l.b16 %v4732
  %v4861 = vunpack.c.l.b16 %v4733
  %v4862 = vunpack.c.l.b16 %v4734
  %v4863 = vunpack.c.l.b16 %v4735
  %v4864 = vunpack.c.l.b16 %v4736
  %v4865 = vunpack.c.l.b16 %v4737
  %v4866 = vunpack.c.l.b16 %v4738
  %v4867 = vunpack.c.l.b16 %v4739
  %v4868 = vunpack.c.l.b16 %v4740
  %v4869 = vunpack.c.l.b16 %v4741
  %v4870 = vunpack.c.l.b16 %v4742
  %v4871 = vunpack.c.l.b16 %v4743
  %v4872 = vunpack.c.l.b16 %v4744
  %v4873 = vunpack.c.l.b16 %v4745
  %v4874 = vunpack.c.l.b16 %v4746
  %v4875 = vunpack.c.l.b16 %v4747
  %v4876 = vunpack.c.l.b16 %v4748
  %v4877 = vunpack.c.l.b16 %v4749
  %v4878 = vunpack.c.l.b16 %v4750
  %v4879 = vunpack.c.l.b16 %v4751
  %v4880 = vunpack.c.l.b16 %v4752
  %v4881 = vunpack.c.l.b16 %v4753
  %v4882 = vunpack.c.l.b16 %v4754
  %v4883 = vunpack.c.l.b16 %v4755
  %v4884 = vunpack.c.l.b16 %v4756
  %v4885 = vunpack.c.l.b16 %v4757
  %v4886 = vunpack.c.l.b16 %v4758
  %v4887 = vunpack.c.l.b16 %v4759
  %v4888 = vunpack.c.l.b16 %v4760
  %v4889 = vunpack.c.l.b16 %v4761
  %v4890 = vunpack.c.l.b16 %v4762
  %v4891 = vunpack.c.l.b16 %v4763
  %v4892 = vunpack.c.l.b16 %v4764
  %v4893 = vunpack.c.l.b16 %v4765
  %v4894 = vunpack.c.l.b16 %v4766
  %v4895 = vunpack.c.l.b16 %v4767
  %v4896 = vunpack.c.l.b16 %v4768
  %v4897 = vpack.c.b16 %v4834, %v4833
  %v4898 = vpack.c.b16 %v4836, %v4835
  %v4899 = vpack.c.b16 %v4838, %v4837
  %v4900 = vpack.c.b16 %v4840, %v4839
  %v4901 = vpack.c.b16 %v4842, %v4841
  %v4902 = vpack.c.b16 %v4844, %v4843
  %v4903 = vpack.c.b16 %v4846, %v4845
  %v4904 = vpack.c.b16 %v4848, %v4847
  %v4905 = vpack.c.b16 %v4850, %v4849
  %v4906 = vpack.c.b16 %v4852, %v4851
  %v4907 = vpack.c.b16 %v4854, %v4853
  %v4908 = vpack.c.b16 %v4856, %v4855
  %v4909 = vpack.c.b16 %v4858, %v4857
  %v4910 = vpack.c.b16 %v4860, %v4859
  %v4911 = vpack.c.b16 %v4862, %v4861
  %v4912 = vpack.c.b16 %v4864, %v4863
  %v4913 = vpack.c.b16 %v4866, %v4865
  %v4914 = vpack.c.b16 %v4868, %v4867
  %v4915 = vpack.c.b16 %v4870, %v4869
  %v4916 = vpack.c.b16 %v4872, %v4871
  %v4917 = vpack.c.b16 %v4874, %v4873
  %v4918 = vpack.c.b16 %v4876, %v4875
  %v4919 = vpack.c.b16 %v4878, %v4877
  %v4920 = vpack.c.b16 %v4880, %v4879
  %v4921 = vpack.c.b16 %v4882, %v4881
  %v4922 = vpack.c.b16 %v4884, %v4883
  %v4923 = vpack.c.b16 %v4886, %v4885
  %v4924 = vpack.c.b16 %v4888, %v4887
  %v4925 = vpack.c.b16 %v4890, %v4889
  %v4926 = vpack.c.b16 %v4892, %v4891
  %v4927 = vpack.c.b16 %v4894, %v4893
  %v4928 = vpack.c.b16 %v4896, %v4895
  %4961 = vxpose.xlu0.c.b16.start [1/8] %v4897, 128
  %4962 = vxpose.xlu0.c.b16.cont [2/8] %v4898, 128
  %4963 = vxpose.xlu0.c.b16.cont [3/8] %v4899, 128
  %4964 = vxpose.xlu0.c.b16.cont [4/8] %v4900, 128
  %4965 = vxpose.xlu0.c.b16.cont [5/8] %v4901, 128
  %4966 = vxpose.xlu0.c.b16.cont [6/8] %v4902, 128
  %4967 = vxpose.xlu0.c.b16.cont [7/8] %v4903, 128
  %4968 = vxpose.xlu0.c.b16.end [8/8] %v4904, 128
  %v4969 = vpop.trf.xlu0
  %v4970 = vpop.trf.xlu0
  %v4971 = vpop.trf.xlu0
  %v4972 = vpop.trf.xlu0
  %v4973 = vpop.trf.xlu0
  %v4974 = vpop.trf.xlu0
  %v4975 = vpop.trf.xlu0
  %v4976 = vpop.trf.xlu0
  %4977 = vxpose.xlu0.c.b16.start [1/8] %v4905, 128
  %4978 = vxpose.xlu0.c.b16.cont [2/8] %v4906, 128
  %4979 = vxpose.xlu0.c.b16.cont [3/8] %v4907, 128
  %4980 = vxpose.xlu0.c.b16.cont [4/8] %v4908, 128
  %4981 = vxpose.xlu0.c.b16.cont [5/8] %v4909, 128
  %4982 = vxpose.xlu0.c.b16.cont [6/8] %v4910, 128
  %4983 = vxpose.xlu0.c.b16.cont [7/8] %v4911, 128
  %4984 = vxpose.xlu0.c.b16.end [8/8] %v4912, 128
  %v4985 = vpop.trf.xlu0
  %v4986 = vpop.trf.xlu0
  %v4987 = vpop.trf.xlu0
  %v4988 = vpop.trf.xlu0
  %v4989 = vpop.trf.xlu0
  %v4990 = vpop.trf.xlu0
  %v4991 = vpop.trf.xlu0
  %v4992 = vpop.trf.xlu0
  %4993 = vxpose.xlu0.c.b16.start [1/8] %v4913, 128
  %4994 = vxpose.xlu0.c.b16.cont [2/8] %v4914, 128
  %4995 = vxpose.xlu0.c.b16.cont [3/8] %v4915, 128
  %4996 = vxpose.xlu0.c.b16.cont [4/8] %v4916, 128
  %4997 = vxpose.xlu0.c.b16.cont [5/8] %v4917, 128
  %4998 = vxpose.xlu0.c.b16.cont [6/8] %v4918, 128
  %4999 = vxpose.xlu0.c.b16.cont [7/8] %v4919, 128
  %5000 = vxpose.xlu0.c.b16.end [8/8] %v4920, 128
  %v5001 = vpop.trf.xlu0
  %v5002 = vpop.trf.xlu0
  %v5003 = vpop.trf.xlu0
  %v5004 = vpop.trf.xlu0
  %v5005 = vpop.trf.xlu0
  %v5006 = vpop.trf.xlu0
  %v5007 = vpop.trf.xlu0
  %v5008 = vpop.trf.xlu0
  %5009 = vxpose.xlu0.c.b16.start [1/8] %v4921, 128
  %5010 = vxpose.xlu0.c.b16.cont [2/8] %v4922, 128
  %5011 = vxpose.xlu0.c.b16.cont [3/8] %v4923, 128
  %5012 = vxpose.xlu0.c.b16.cont [4/8] %v4924, 128
  %5013 = vxpose.xlu0.c.b16.cont [5/8] %v4925, 128
  %5014 = vxpose.xlu0.c.b16.cont [6/8] %v4926, 128
  %5015 = vxpose.xlu0.c.b16.cont [7/8] %v4927, 128
  %5016 = vxpose.xlu0.c.b16.end [8/8] %v4928, 128
  %v5017 = vpop.trf.xlu0
  %v5018 = vpop.trf.xlu0
  %v5019 = vpop.trf.xlu0
  %v5020 = vpop.trf.xlu0
  %v5021 = vpop.trf.xlu0
  %v5022 = vpop.trf.xlu0
  %v5023 = vpop.trf.xlu0
  %v5024 = vpop.trf.xlu0
  %v5065 = vunpack.c.l.b16 %v4665
  %v5066 = vunpack.c.h.b16 %v4665
  %v5067 = vunpack.c.l.b16 %v4666
  %v5068 = vunpack.c.h.b16 %v4666
  %v5069 = vunpack.c.l.b16 %v4667
  %v5070 = vunpack.c.h.b16 %v4667
  %v5071 = vunpack.c.l.b16 %v4668
  %v5072 = vunpack.c.h.b16 %v4668
  %v5073 = vunpack.c.l.b16 %v4669
  %v5074 = vunpack.c.h.b16 %v4669
  %v5075 = vunpack.c.l.b16 %v4670
  %v5076 = vunpack.c.h.b16 %v4670
  %v5077 = vunpack.c.l.b16 %v4671
  %v5078 = vunpack.c.h.b16 %v4671
  %v5079 = vunpack.c.l.b16 %v4672
  %v5080 = vunpack.c.h.b16 %v4672
  %v5081 = vunpack.c.l.b16 %v4673
  %v5082 = vunpack.c.h.b16 %v4673
  %v5083 = vunpack.c.l.b16 %v4674
  %v5084 = vunpack.c.h.b16 %v4674
  %v5085 = vunpack.c.l.b16 %v4675
  %v5086 = vunpack.c.h.b16 %v4675
  %v5087 = vunpack.c.l.b16 %v4676
  %v5088 = vunpack.c.h.b16 %v4676
  %v5089 = vunpack.c.l.b16 %v4677
  %v5090 = vunpack.c.h.b16 %v4677
  %v5091 = vunpack.c.l.b16 %v4678
  %v5092 = vunpack.c.h.b16 %v4678
  %v5093 = vunpack.c.l.b16 %v4679
  %v5094 = vunpack.c.h.b16 %v4679
  %v5095 = vunpack.c.l.b16 %v4680
  %v5096 = vunpack.c.h.b16 %v4680
  %v5097 = vunpack.c.l.b16 %v4681
  %v5098 = vunpack.c.h.b16 %v4681
  %v5099 = vunpack.c.l.b16 %v4682
  %v5100 = vunpack.c.h.b16 %v4682
  %v5101 = vunpack.c.l.b16 %v4683
  %v5102 = vunpack.c.h.b16 %v4683
  %v5103 = vunpack.c.l.b16 %v4684
  %v5104 = vunpack.c.h.b16 %v4684
  %v5105 = vunpack.c.l.b16 %v4685
  %v5106 = vunpack.c.h.b16 %v4685
  %v5107 = vunpack.c.l.b16 %v4686
  %v5108 = vunpack.c.h.b16 %v4686
  %v5109 = vunpack.c.l.b16 %v4687
  %v5110 = vunpack.c.h.b16 %v4687
  %v5111 = vunpack.c.l.b16 %v4688
  %v5112 = vunpack.c.h.b16 %v4688
  %v5113 = vunpack.c.l.b16 %v4689
  %v5114 = vunpack.c.h.b16 %v4689
  %v5115 = vunpack.c.l.b16 %v4690
  %v5116 = vunpack.c.h.b16 %v4690
  %v5117 = vunpack.c.l.b16 %v4691
  %v5118 = vunpack.c.h.b16 %v4691
  %v5119 = vunpack.c.l.b16 %v4692
  %v5120 = vunpack.c.h.b16 %v4692
  %v5121 = vunpack.c.l.b16 %v4693
  %v5122 = vunpack.c.h.b16 %v4693
  %v5123 = vunpack.c.l.b16 %v4694
  %v5124 = vunpack.c.h.b16 %v4694
  %v5125 = vunpack.c.l.b16 %v4695
  %v5126 = vunpack.c.h.b16 %v4695
  %v5127 = vunpack.c.l.b16 %v4696
  %v5128 = vunpack.c.h.b16 %v4696
  %v5129 = vunpack.c.l.b16 %v4697
  %v5130 = vunpack.c.h.b16 %v4697
  %v5131 = vunpack.c.l.b16 %v4698
  %v5132 = vunpack.c.h.b16 %v4698
  %v5133 = vunpack.c.l.b16 %v4699
  %v5134 = vunpack.c.h.b16 %v4699
  %v5135 = vunpack.c.l.b16 %v4700
  %v5136 = vunpack.c.h.b16 %v4700
  %v5137 = vunpack.c.l.b16 %v4701
  %v5138 = vunpack.c.h.b16 %v4701
  %v5139 = vunpack.c.l.b16 %v4702
  %v5140 = vunpack.c.h.b16 %v4702
  %v5141 = vunpack.c.l.b16 %v4703
  %v5142 = vunpack.c.h.b16 %v4703
  %v5143 = vunpack.c.l.b16 %v4704
  %v5144 = vunpack.c.h.b16 %v4704
  %v5145 = vpack.c.b16 %v5069, %v5065
  %v5146 = vpack.c.b16 %v5070, %v5066
  %v5147 = vpack.c.b16 %v5071, %v5067
  %v5148 = vpack.c.b16 %v5072, %v5068
  %v5149 = vpack.c.b16 %v5077, %v5073
  %v5150 = vpack.c.b16 %v5078, %v5074
  %v5151 = vpack.c.b16 %v5079, %v5075
  %v5152 = vpack.c.b16 %v5080, %v5076
  %v5153 = vpack.c.b16 %v5085, %v5081
  %v5154 = vpack.c.b16 %v5086, %v5082
  %v5155 = vpack.c.b16 %v5087, %v5083
  %v5156 = vpack.c.b16 %v5088, %v5084
  %v5157 = vpack.c.b16 %v5093, %v5089
  %v5158 = vpack.c.b16 %v5094, %v5090
  %v5159 = vpack.c.b16 %v5095, %v5091
  %v5160 = vpack.c.b16 %v5096, %v5092
  %v5161 = vpack.c.b16 %v5101, %v5097
  %v5162 = vpack.c.b16 %v5102, %v5098
  %v5163 = vpack.c.b16 %v5103, %v5099
  %v5164 = vpack.c.b16 %v5104, %v5100
  %v5165 = vpack.c.b16 %v5109, %v5105
  %v5166 = vpack.c.b16 %v5110, %v5106
  %v5167 = vpack.c.b16 %v5111, %v5107
  %v5168 = vpack.c.b16 %v5112, %v5108
  %v5169 = vpack.c.b16 %v5117, %v5113
  %v5170 = vpack.c.b16 %v5118, %v5114
  %v5171 = vpack.c.b16 %v5119, %v5115
  %v5172 = vpack.c.b16 %v5120, %v5116
  %v5173 = vpack.c.b16 %v5125, %v5121
  %v5174 = vpack.c.b16 %v5126, %v5122
  %v5175 = vpack.c.b16 %v5127, %v5123
  %v5176 = vpack.c.b16 %v5128, %v5124
  %v5177 = vpack.c.b16 %v5133, %v5129
  %v5178 = vpack.c.b16 %v5134, %v5130
  %v5179 = vpack.c.b16 %v5135, %v5131
  %v5180 = vpack.c.b16 %v5136, %v5132
  %v5181 = vpack.c.b16 %v5141, %v5137
  %v5182 = vpack.c.b16 %v5142, %v5138
  %v5183 = vpack.c.b16 %v5143, %v5139
  %v5184 = vpack.c.b16 %v5144, %v5140
  %5225 = vmatpush.bf16.xpose.msra.mxu0 %v5173
  %5226 = vmatpush.bf16.xpose.msra.mxu0 %v5169
  %5227 = vmatpush.bf16.xpose.msra.mxu0 %v5165
  %5228 = vmatpush.bf16.xpose.msra.mxu0 %v5161
  %5229 = vmatpush.bf16.xpose.msra.mxu0 %v5157
  %5230 = vmatpush.bf16.xpose.msra.mxu0 %v5153
  %5231 = vmatpush.bf16.xpose.msra.mxu0 %v5149
  %5232 = vmatpush.bf16.xpose.msra.mxu0 %v5145
  %5233 = vmatmul.bf16.gmra.mxu0 %v4969
  %v5234 = vpop.f32.mrf.mxu0
  %v5235 = vadd.f32 0.0, %v5234
  %v5236 = vpop.f32.mrf.mxu0
  %5237 = vdwg.mxu0
  %5238 = vmatpush.bf16.xpose.msra.mxu0 %v5174
  %5239 = vmatpush.bf16.xpose.msra.mxu0 %v5170
  %5240 = vmatpush.bf16.xpose.msra.mxu0 %v5166
  %5241 = vmatpush.bf16.xpose.msra.mxu0 %v5162
  %5242 = vmatpush.bf16.xpose.msra.mxu0 %v5158
  %5243 = vmatpush.bf16.xpose.msra.mxu0 %v5154
  %5244 = vmatpush.bf16.xpose.msra.mxu0 %v5150
  %5245 = vmatpush.bf16.xpose.msra.mxu0 %v5146
  %5246 = vmatmul.bf16.gmra.mxu0 %v4985
  %v5247 = vpop.f32.mrf.mxu0
  %v5248 = vadd.f32 %v5235, %v5247
  %v5249 = vpop.f32.mrf.mxu0
  %5250 = vdwg.mxu0
  %5251 = vmatpush.bf16.xpose.msra.mxu0 %v5175
  %5252 = vmatpush.bf16.xpose.msra.mxu0 %v5171
  %5253 = vmatpush.bf16.xpose.msra.mxu0 %v5167
  %5254 = vmatpush.bf16.xpose.msra.mxu0 %v5163
  %5255 = vmatpush.bf16.xpose.msra.mxu0 %v5159
  %5256 = vmatpush.bf16.xpose.msra.mxu0 %v5155
  %5257 = vmatpush.bf16.xpose.msra.mxu0 %v5151
  %5258 = vmatpush.bf16.xpose.msra.mxu0 %v5147
  %5259 = vmatmul.bf16.gmra.mxu0 %v5001
  %v5260 = vpop.f32.mrf.mxu0
  %v5261 = vadd.f32 %v5248, %v5260
  %v5262 = vpop.f32.mrf.mxu0
  %5263 = vdwg.mxu0
  %5264 = vmatpush.bf16.xpose.msra.mxu0 %v5176
  %5265 = vmatpush.bf16.xpose.msra.mxu0 %v5172
  %5266 = vmatpush.bf16.xpose.msra.mxu0 %v5168
  %5267 = vmatpush.bf16.xpose.msra.mxu0 %v5164
  %5268 = vmatpush.bf16.xpose.msra.mxu0 %v5160
  %5269 = vmatpush.bf16.xpose.msra.mxu0 %v5156
  %5270 = vmatpush.bf16.xpose.msra.mxu0 %v5152
  %5271 = vmatpush.bf16.xpose.msra.mxu0 %v5148
  %5272 = vmatmul.bf16.gmra.mxu0 %v5017
  %v5273 = vpop.f32.mrf.mxu0
  %v5274 = vadd.f32 %v5261, %v5273
  %v5275 = vpop.f32.mrf.mxu0
  %5276 = vdwg.mxu0
  %5277 = vmatpush.bf16.xpose.msra.mxu0 0
  %5278 = vmatpush.bf16.xpose.msra.mxu0 0
  %5279 = vmatpush.bf16.xpose.msra.mxu0 0
  %5280 = vmatpush.bf16.xpose.msra.mxu0 0
  %5281 = vmatpush.bf16.xpose.msra.mxu0 0
  %5282 = vmatpush.bf16.xpose.msra.mxu0 0
  %5283 = vmatpush.bf16.xpose.msra.mxu0 %v5181
  %5284 = vmatpush.bf16.xpose.msra.mxu0 %v5177
  %5285 = vmatmul.bf16.gmra.mxu0 %v4969
  %v5286 = vpop.f32.mrf.mxu0
  %v5287 = vadd.f32 0.0, %v5286
  %v5288 = vpop.f32.mrf.mxu0
  %5289 = vdwg.mxu0
  %5290 = vmatpush.bf16.xpose.msra.mxu0 0
  %5291 = vmatpush.bf16.xpose.msra.mxu0 0
  %5292 = vmatpush.bf16.xpose.msra.mxu0 0
  %5293 = vmatpush.bf16.xpose.msra.mxu0 0
  %5294 = vmatpush.bf16.xpose.msra.mxu0 0
  %5295 = vmatpush.bf16.xpose.msra.mxu0 0
  %5296 = vmatpush.bf16.xpose.msra.mxu0 %v5182
  %5297 = vmatpush.bf16.xpose.msra.mxu0 %v5178
  %5298 = vmatmul.bf16.gmra.mxu0 %v4985
  %v5299 = vpop.f32.mrf.mxu0
  %v5300 = vadd.f32 %v5287, %v5299
  %v5301 = vpop.f32.mrf.mxu0
  %5302 = vdwg.mxu0
  %5303 = vmatpush.bf16.xpose.msra.mxu0 0
  %5304 = vmatpush.bf16.xpose.msra.mxu0 0
  %5305 = vmatpush.bf16.xpose.msra.mxu0 0
  %5306 = vmatpush.bf16.xpose.msra.mxu0 0
  %5307 = vmatpush.bf16.xpose.msra.mxu0 0
  %5308 = vmatpush.bf16.xpose.msra.mxu0 0
  %5309 = vmatpush.bf16.xpose.msra.mxu0 %v5183
  %5310 = vmatpush.bf16.xpose.msra.mxu0 %v5179
  %5311 = vmatmul.bf16.gmra.mxu0 %v5001
  %v5312 = vpop.f32.mrf.mxu0
  %v5313 = vadd.f32 %v5300, %v5312
  %v5314 = vpop.f32.mrf.mxu0
  %5315 = vdwg.mxu0
  %5316 = vmatpush.bf16.xpose.msra.mxu0 0
  %5317 = vmatpush.bf16.xpose.msra.mxu0 0
  %5318 = vmatpush.bf16.xpose.msra.mxu0 0
  %5319 = vmatpush.bf16.xpose.msra.mxu0 0
  %5320 = vmatpush.bf16.xpose.msra.mxu0 0
  %5321 = vmatpush.bf16.xpose.msra.mxu0 0
  %5322 = vmatpush.bf16.xpose.msra.mxu0 %v5184
  %5323 = vmatpush.bf16.xpose.msra.mxu0 %v5180
  %5324 = vmatmul.bf16.gmra.mxu0 %v5017
  %v5325 = vpop.f32.mrf.mxu0
  %v5326 = vadd.f32 %v5313, %v5325
  %v5327 = vpop.f32.mrf.mxu0
  %5328 = vdwg.mxu0
  %v5329 = vld [vmem:[#allocation2] sm:$0xf]
  %v5330 = vld [vmem:[#allocation2 + $0x18] sm:$0xf]
  %v5331 = vld [vmem:[#allocation2 + $0x30] sm:$0xf]
  %v5332 = vld [vmem:[#allocation2 + $0x48] sm:$0xf]
  %v5333 = vld [vmem:[#allocation2 + $0x60] sm:$0xf]
  %v5334 = vld [vmem:[#allocation2 + $0x78] sm:$0xf]
  %v5335 = vld [vmem:[#allocation2 + $0x90] sm:$0xf]
  %v5336 = vld [vmem:[#allocation2 + $0xa8] sm:$0xf]
  %v5337 = vld [vmem:[#allocation2 + $0xc0] sm:$0xf]
  %v5338 = vld [vmem:[#allocation2 + $0xd8] sm:$0xf]
  %v5339 = vld [vmem:[#allocation2 + $0xf0] sm:$0xf]
  %v5340 = vld [vmem:[#allocation2 + $0x108] sm:$0xf]
  %v5341 = vld [vmem:[#allocation2 + $0x120] sm:$0xf]
  %v5342 = vld [vmem:[#allocation2 + $0x138] sm:$0xf]
  %v5343 = vld [vmem:[#allocation2 + $0x150] sm:$0xf]
  %v5344 = vld [vmem:[#allocation2 + $0x168] sm:$0xf]
  %v5345 = vld [vmem:[#allocation2 + $0x180] sm:$0xf]
  %v5346 = vld [vmem:[#allocation2 + $0x198] sm:$0xf]
  %v5347 = vld [vmem:[#allocation2 + $0x1b0] sm:$0xf]
  %v5348 = vld [vmem:[#allocation2 + $0x1c8] sm:$0xf]
  %v5349 = vunpack.c.l.bf16 %v5329
  %v5350 = vunpack.c.l.bf16 %v5330
  %v5351 = vunpack.c.l.bf16 %v5331
  %v5352 = vunpack.c.l.bf16 %v5332
  %v5353 = vunpack.c.l.bf16 %v5333
  %v5354 = vunpack.c.l.bf16 %v5334
  %v5355 = vunpack.c.l.bf16 %v5335
  %v5356 = vunpack.c.l.bf16 %v5336
  %v5357 = vunpack.c.l.bf16 %v5337
  %v5358 = vunpack.c.l.bf16 %v5338
  %v5359 = vunpack.c.l.bf16 %v5339
  %v5360 = vunpack.c.l.bf16 %v5340
  %v5361 = vunpack.c.l.bf16 %v5341
  %v5362 = vunpack.c.l.bf16 %v5342
  %v5363 = vunpack.c.l.bf16 %v5343
  %v5364 = vunpack.c.l.bf16 %v5344
  %v5365 = vunpack.c.l.bf16 %v5345
  %v5366 = vunpack.c.l.bf16 %v5346
  %v5367 = vunpack.c.l.bf16 %v5347
  %v5368 = vunpack.c.l.bf16 %v5348
  %v5369 = vld [vmem:[#allocation2 + $0x4] sm:$0xf]
  %v5370 = vld [vmem:[#allocation2 + $0x1c] sm:$0xf]
  %v5371 = vld [vmem:[#allocation2 + $0x34] sm:$0xf]
  %v5372 = vld [vmem:[#allocation2 + $0x4c] sm:$0xf]
  %v5373 = vld [vmem:[#allocation2 + $0x64] sm:$0xf]
  %v5374 = vld [vmem:[#allocation2 + $0x7c] sm:$0xf]
  %v5375 = vld [vmem:[#allocation2 + $0x94] sm:$0xf]
  %v5376 = vld [vmem:[#allocation2 + $0xac] sm:$0xf]
  %v5377 = vld [vmem:[#allocation2 + $0xc4] sm:$0xf]
  %v5378 = vld [vmem:[#allocation2 + $0xdc] sm:$0xf]
  %v5379 = vld [vmem:[#allocation2 + $0xf4] sm:$0xf]
  %v5380 = vld [vmem:[#allocation2 + $0x10c] sm:$0xf]
  %v5381 = vld [vmem:[#allocation2 + $0x124] sm:$0xf]
  %v5382 = vld [vmem:[#allocation2 + $0x13c] sm:$0xf]
  %v5383 = vld [vmem:[#allocation2 + $0x154] sm:$0xf]
  %v5384 = vld [vmem:[#allocation2 + $0x16c] sm:$0xf]
  %v5385 = vld [vmem:[#allocation2 + $0x184] sm:$0xf]
  %v5386 = vld [vmem:[#allocation2 + $0x19c] sm:$0xf]
  %v5387 = vld [vmem:[#allocation2 + $0x1b4] sm:$0xf]
  %v5388 = vld [vmem:[#allocation2 + $0x1cc] sm:$0xf]
  %v5389 = vunpack.c.l.bf16 %v5369
  %v5390 = vunpack.c.l.bf16 %v5370
  %v5391 = vunpack.c.l.bf16 %v5371
  %v5392 = vunpack.c.l.bf16 %v5372
  %v5393 = vunpack.c.l.bf16 %v5373
  %v5394 = vunpack.c.l.bf16 %v5374
  %v5395 = vunpack.c.l.bf16 %v5375
  %v5396 = vunpack.c.l.bf16 %v5376
  %v5397 = vunpack.c.l.bf16 %v5377
  %v5398 = vunpack.c.l.bf16 %v5378
  %v5399 = vunpack.c.l.bf16 %v5379
  %v5400 = vunpack.c.l.bf16 %v5380
  %v5401 = vunpack.c.l.bf16 %v5381
  %v5402 = vunpack.c.l.bf16 %v5382
  %v5403 = vunpack.c.l.bf16 %v5383
  %v5404 = vunpack.c.l.bf16 %v5384
  %v5405 = vunpack.c.l.bf16 %v5385
  %v5406 = vunpack.c.l.bf16 %v5386
  %v5407 = vunpack.c.l.bf16 %v5387
  %v5408 = vunpack.c.l.bf16 %v5388
  %v5409 = vadd.f32 %v5349, %v5389
  %v5410 = vadd.f32 %v5350, %v5390
  %v5411 = vadd.f32 %v5351, %v5391
  %v5412 = vadd.f32 %v5352, %v5392
  %v5413 = vadd.f32 %v5353, %v5393
  %v5414 = vadd.f32 %v5354, %v5394
  %v5415 = vadd.f32 %v5355, %v5395
  %v5416 = vadd.f32 %v5356, %v5396
  %v5417 = vadd.f32 %v5357, %v5397
  %v5418 = vadd.f32 %v5358, %v5398
  %v5419 = vadd.f32 %v5359, %v5399
  %v5420 = vadd.f32 %v5360, %v5400
  %v5421 = vadd.f32 %v5361, %v5401
  %v5422 = vadd.f32 %v5362, %v5402
  %v5423 = vadd.f32 %v5363, %v5403
  %v5424 = vadd.f32 %v5364, %v5404
  %v5425 = vadd.f32 %v5365, %v5405
  %v5426 = vadd.f32 %v5366, %v5406
  %v5427 = vadd.f32 %v5367, %v5407
  %v5428 = vadd.f32 %v5368, %v5408
  %v5429 = vld [vmem:[#allocation2 + $0x8] sm:$0xf]
  %v5430 = vld [vmem:[#allocation2 + $0x20] sm:$0xf]
  %v5431 = vld [vmem:[#allocation2 + $0x38] sm:$0xf]
  %v5432 = vld [vmem:[#allocation2 + $0x50] sm:$0xf]
  %v5433 = vld [vmem:[#allocation2 + $0x68] sm:$0xf]
  %v5434 = vld [vmem:[#allocation2 + $0x80] sm:$0xf]
  %v5435 = vld [vmem:[#allocation2 + $0x98] sm:$0xf]
  %v5436 = vld [vmem:[#allocation2 + $0xb0] sm:$0xf]
  %v5437 = vld [vmem:[#allocation2 + $0xc8] sm:$0xf]
  %v5438 = vld [vmem:[#allocation2 + $0xe0] sm:$0xf]
  %v5439 = vld [vmem:[#allocation2 + $0xf8] sm:$0xf]
  %v5440 = vld [vmem:[#allocation2 + $0x110] sm:$0xf]
  %v5441 = vld [vmem:[#allocation2 + $0x128] sm:$0xf]
  %v5442 = vld [vmem:[#allocation2 + $0x140] sm:$0xf]
  %v5443 = vld [vmem:[#allocation2 + $0x158] sm:$0xf]
  %v5444 = vld [vmem:[#allocation2 + $0x170] sm:$0xf]
  %v5445 = vld [vmem:[#allocation2 + $0x188] sm:$0xf]
  %v5446 = vld [vmem:[#allocation2 + $0x1a0] sm:$0xf]
  %v5447 = vld [vmem:[#allocation2 + $0x1b8] sm:$0xf]
  %v5448 = vld [vmem:[#allocation2 + $0x1d0] sm:$0xf]
  %v5449 = vunpack.c.l.bf16 %v5429
  %v5450 = vunpack.c.l.bf16 %v5430
  %v5451 = vunpack.c.l.bf16 %v5431
  %v5452 = vunpack.c.l.bf16 %v5432
  %v5453 = vunpack.c.l.bf16 %v5433
  %v5454 = vunpack.c.l.bf16 %v5434
  %v5455 = vunpack.c.l.bf16 %v5435
  %v5456 = vunpack.c.l.bf16 %v5436
  %v5457 = vunpack.c.l.bf16 %v5437
  %v5458 = vunpack.c.l.bf16 %v5438
  %v5459 = vunpack.c.l.bf16 %v5439
  %v5460 = vunpack.c.l.bf16 %v5440
  %v5461 = vunpack.c.l.bf16 %v5441
  %v5462 = vunpack.c.l.bf16 %v5442
  %v5463 = vunpack.c.l.bf16 %v5443
  %v5464 = vunpack.c.l.bf16 %v5444
  %v5465 = vunpack.c.l.bf16 %v5445
  %v5466 = vunpack.c.l.bf16 %v5446
  %v5467 = vunpack.c.l.bf16 %v5447
  %v5468 = vunpack.c.l.bf16 %v5448
  %v5469 = vadd.f32 %v5409, %v5449
  %v5470 = vadd.f32 %v5410, %v5450
  %v5471 = vadd.f32 %v5411, %v5451
  %v5472 = vadd.f32 %v5412, %v5452
  %v5473 = vadd.f32 %v5413, %v5453
  %v5474 = vadd.f32 %v5414, %v5454
  %v5475 = vadd.f32 %v5415, %v5455
  %v5476 = vadd.f32 %v5416, %v5456
  %v5477 = vadd.f32 %v5417, %v5457
  %v5478 = vadd.f32 %v5418, %v5458
  %v5479 = vadd.f32 %v5419, %v5459
  %v5480 = vadd.f32 %v5420, %v5460
  %v5481 = vadd.f32 %v5421, %v5461
  %v5482 = vadd.f32 %v5422, %v5462
  %v5483 = vadd.f32 %v5423, %v5463
  %v5484 = vadd.f32 %v5424, %v5464
  %v5485 = vadd.f32 %v5425, %v5465
  %v5486 = vadd.f32 %v5426, %v5466
  %v5487 = vadd.f32 %v5427, %v5467
  %v5488 = vadd.f32 %v5428, %v5468
  %v5489 = vld [vmem:[#allocation2 + $0xc] sm:$0xf]
  %v5490 = vld [vmem:[#allocation2 + $0x24] sm:$0xf]
  %v5491 = vld [vmem:[#allocation2 + $0x3c] sm:$0xf]
  %v5492 = vld [vmem:[#allocation2 + $0x54] sm:$0xf]
  %v5493 = vld [vmem:[#allocation2 + $0x6c] sm:$0xf]
  %v5494 = vld [vmem:[#allocation2 + $0x84] sm:$0xf]
  %v5495 = vld [vmem:[#allocation2 + $0x9c] sm:$0xf]
  %v5496 = vld [vmem:[#allocation2 + $0xb4] sm:$0xf]
  %v5497 = vld [vmem:[#allocation2 + $0xcc] sm:$0xf]
  %v5498 = vld [vmem:[#allocation2 + $0xe4] sm:$0xf]
  %v5499 = vld [vmem:[#allocation2 + $0xfc] sm:$0xf]
  %v5500 = vld [vmem:[#allocation2 + $0x114] sm:$0xf]
  %v5501 = vld [vmem:[#allocation2 + $0x12c] sm:$0xf]
  %v5502 = vld [vmem:[#allocation2 + $0x144] sm:$0xf]
  %v5503 = vld [vmem:[#allocation2 + $0x15c] sm:$0xf]
  %v5504 = vld [vmem:[#allocation2 + $0x174] sm:$0xf]
  %v5505 = vld [vmem:[#allocation2 + $0x18c] sm:$0xf]
  %v5506 = vld [vmem:[#allocation2 + $0x1a4] sm:$0xf]
  %v5507 = vld [vmem:[#allocation2 + $0x1bc] sm:$0xf]
  %v5508 = vld [vmem:[#allocation2 + $0x1d4] sm:$0xf]
  %v5509 = vunpack.c.l.bf16 %v5489
  %v5510 = vunpack.c.l.bf16 %v5490
  %v5511 = vunpack.c.l.bf16 %v5491
  %v5512 = vunpack.c.l.bf16 %v5492
  %v5513 = vunpack.c.l.bf16 %v5493
  %v5514 = vunpack.c.l.bf16 %v5494
  %v5515 = vunpack.c.l.bf16 %v5495
  %v5516 = vunpack.c.l.bf16 %v5496
  %v5517 = vunpack.c.l.bf16 %v5497
  %v5518 = vunpack.c.l.bf16 %v5498
  %v5519 = vunpack.c.l.bf16 %v5499
  %v5520 = vunpack.c.l.bf16 %v5500
  %v5521 = vunpack.c.l.bf16 %v5501
  %v5522 = vunpack.c.l.bf16 %v5502
  %v5523 = vunpack.c.l.bf16 %v5503
  %v5524 = vunpack.c.l.bf16 %v5504
  %v5525 = vunpack.c.l.bf16 %v5505
  %v5526 = vunpack.c.l.bf16 %v5506
  %v5527 = vunpack.c.l.bf16 %v5507
  %v5528 = vunpack.c.l.bf16 %v5508
  %v5529 = vadd.f32 %v5469, %v5509
  %v5530 = vadd.f32 %v5470, %v5510
  %v5531 = vadd.f32 %v5471, %v5511
  %v5532 = vadd.f32 %v5472, %v5512
  %v5533 = vadd.f32 %v5473, %v5513
  %v5534 = vadd.f32 %v5474, %v5514
  %v5535 = vadd.f32 %v5475, %v5515
  %v5536 = vadd.f32 %v5476, %v5516
  %v5537 = vadd.f32 %v5477, %v5517
  %v5538 = vadd.f32 %v5478, %v5518
  %v5539 = vadd.f32 %v5479, %v5519
  %v5540 = vadd.f32 %v5480, %v5520
  %v5541 = vadd.f32 %v5481, %v5521
  %v5542 = vadd.f32 %v5482, %v5522
  %v5543 = vadd.f32 %v5483, %v5523
  %v5544 = vadd.f32 %v5484, %v5524
  %v5545 = vadd.f32 %v5485, %v5525
  %v5546 = vadd.f32 %v5486, %v5526
  %v5547 = vadd.f32 %v5487, %v5527
  %v5548 = vadd.f32 %v5488, %v5528
  %v5549 = vmul.f32 %v5529, 0.25
  %v5550 = vmul.f32 %v5530, 0.25
  %v5551 = vmul.f32 %v5531, 0.25
  %v5552 = vmul.f32 %v5532, 0.25
  %v5553 = vmul.f32 %v5533, 0.25
  %v5554 = vmul.f32 %v5534, 0.25
  %v5555 = vmul.f32 %v5535, 0.25
  %v5556 = vmul.f32 %v5536, 0.25
  %v5557 = vmul.f32 %v5537, 0.25
  %v5558 = vmul.f32 %v5538, 0.25
  %v5559 = vmul.f32 %v5539, 0.25
  %v5560 = vmul.f32 %v5540, 0.25
  %v5561 = vmul.f32 %v5541, 0.25
  %v5562 = vmul.f32 %v5542, 0.25
  %v5563 = vmul.f32 %v5543, 0.25
  %v5564 = vmul.f32 %v5544, 0.25
  %v5565 = vmul.f32 %v5545, 0.25
  %v5566 = vmul.f32 %v5546, 0.25
  %v5567 = vmul.f32 %v5547, 0.25
  %v5568 = vmul.f32 %v5548, 0.25
  %v5569 = vpack.c.bf16 %v5550, %v5549
  %v5570 = vpack.c.bf16 %v5552, %v5551
  %v5571 = vpack.c.bf16 %v5554, %v5553
  %v5572 = vpack.c.bf16 %v5556, %v5555
  %v5573 = vpack.c.bf16 %v5558, %v5557
  %v5574 = vpack.c.bf16 %v5560, %v5559
  %v5575 = vpack.c.bf16 %v5562, %v5561
  %v5576 = vpack.c.bf16 %v5564, %v5563
  %v5577 = vpack.c.bf16 %v5566, %v5565
  %v5578 = vpack.c.bf16 %v5568, %v5567
  %v5579 = vld [vmem:[%s16] sm:$0xf]
  %v5580 = vld [vmem:[%s16 + $0x4] sm:$0xf]
  %v5581 = vld [vmem:[%s16 + $0x8] sm:$0xf]
  %v5582 = vld [vmem:[%s16 + $0xc] sm:$0xf]
  %v5583 = vld [vmem:[%s16 + $0x10] sm:$0xf]
  %v5584 = vld [vmem:[%s16 + $0x14] sm:$0xf]
  %v5585 = vld [vmem:[%s16 + $0x18] sm:$0xf]
  %v5586 = vld [vmem:[%s16 + $0x1c] sm:$0xf]
  %v5587 = vld [vmem:[%s16 + $0x20] sm:$0xf]
  %v5588 = vld [vmem:[%s16 + $0x24] sm:$0xf]
  %v5589 = vld [vmem:[%s16 + $0x28] sm:$0xf]
  %v5590 = vld [vmem:[%s16 + $0x2c] sm:$0xf]
  %v5591 = vld [vmem:[%s16 + $0x30] sm:$0xf]
  %v5592 = vld [vmem:[%s16 + $0x34] sm:$0xf]
  %v5593 = vld [vmem:[%s16 + $0x38] sm:$0xf]
  %v5594 = vld [vmem:[%s16 + $0x3c] sm:$0xf]
  %v5595 = vld [vmem:[%s16 + $0x40] sm:$0xf]
  %v5596 = vld [vmem:[%s16 + $0x44] sm:$0xf]
  %v5597 = vld [vmem:[%s16 + $0x48] sm:$0xf]
  %v5598 = vld [vmem:[%s16 + $0x4c] sm:$0xf]
  %v5599 = vld [vmem:[%s17] sm:$0xff]
  %v5600 = vld [vmem:[%s17 + $0x8] sm:$0xff]
  %v5601 = vld [vmem:[%s17 + $0x10] sm:$0xff]
  %v5602 = vld [vmem:[%s17 + $0x18] sm:$0xff]
  %v5603 = vld [vmem:[%s17 + $0x20] sm:$0xff]
  %v5604 = vld [vmem:[%s17 + $0x28] sm:$0xff]
  %v5605 = vld [vmem:[%s17 + $0x30] sm:$0xff]
  %v5606 = vld [vmem:[%s17 + $0x38] sm:$0xff]
  %v5607 = vld [vmem:[%s18] sm:$0xff]
  %v5608 = vld [vmem:[%s18 + $0x8] sm:$0xff]
  %v5609 = vld [vmem:[%s18 + $0x10] sm:$0xff]
  %v5610 = vld [vmem:[%s18 + $0x18] sm:$0xff]
  %v5611 = vld [vmem:[%s18 + $0x20] sm:$0xff]
  %v5612 = vld [vmem:[%s18 + $0x28] sm:$0xff]
  %v5613 = vld [vmem:[%s18 + $0x30] sm:$0xff]
  %v5614 = vld [vmem:[%s18 + $0x38] sm:$0xff]
  %v5615 = vld [vmem:[%s19] sm:$0xff]
  %v5616 = vld [vmem:[%s19 + $0x8] sm:$0xff]
  %v5617 = vld [vmem:[%s19 + $0x10] sm:$0xff]
  %v5618 = vld [vmem:[%s19 + $0x18] sm:$0xff]
  %v5619 = vld [vmem:[%s19 + $0x20] sm:$0xff]
  %v5620 = vld [vmem:[%s19 + $0x28] sm:$0xff]
  %v5621 = vld [vmem:[%s19 + $0x30] sm:$0xff]
  %v5622 = vld [vmem:[%s19 + $0x38] sm:$0xff]
  %v5631 = vunpack.c.l.b16 %v5607
  %v5632 = vunpack.c.h.b16 %v5607
  %v5633 = vunpack.c.l.b16 %v5608
  %v5634 = vunpack.c.h.b16 %v5608
  %v5635 = vunpack.c.l.b16 %v5609
  %v5636 = vunpack.c.h.b16 %v5609
  %v5637 = vunpack.c.l.b16 %v5610
  %v5638 = vunpack.c.h.b16 %v5610
  %v5639 = vunpack.c.l.b16 %v5611
  %v5640 = vunpack.c.h.b16 %v5611
  %v5641 = vunpack.c.l.b16 %v5612
  %v5642 = vunpack.c.h.b16 %v5612
  %v5643 = vunpack.c.l.b16 %v5613
  %v5644 = vunpack.c.h.b16 %v5613
  %v5645 = vunpack.c.l.b16 %v5614
  %v5646 = vunpack.c.h.b16 %v5614
  %v5647 = vpack.c.b16 %v5633, %v5631
  %v5648 = vpack.c.b16 %v5634, %v5632
  %v5649 = vpack.c.b16 %v5637, %v5635
  %v5650 = vpack.c.b16 %v5638, %v5636
  %v5651 = vpack.c.b16 %v5641, %v5639
  %v5652 = vpack.c.b16 %v5642, %v5640
  %v5653 = vpack.c.b16 %v5645, %v5643
  %v5654 = vpack.c.b16 %v5646, %v5644
  %v5660 = vsel %vm457, %v5648, 0
  %v5663 = vsel %vm457, %v5650, 0
  %v5666 = vsel %vm457, %v5652, 0
  %v5669 = vsel %vm457, %v5654, 0
  %5671 = vmatpush.bf16.msra.mxu0 %v5576
  %5672 = vmatpush.bf16.msra.mxu0 %v5575
  %5673 = vmatpush.bf16.msra.mxu0 %v5574
  %5674 = vmatpush.bf16.msra.mxu0 %v5573
  %5675 = vmatpush.bf16.msra.mxu0 %v5572
  %5676 = vmatpush.bf16.msra.mxu0 %v5571
  %5677 = vmatpush.bf16.msra.mxu0 %v5570
  %5678 = vmatpush.bf16.msra.mxu0 %v5569
  %5679 = vmatmul.bf16.gmra.mxu0 %v5647
  %v5680 = vpop.f32.mrf.mxu0
  %v5681 = vadd.f32 0.0, %v5680
  %v5682 = vpop.f32.mrf.mxu0
  %v5683 = vadd.f32 0.0, %v5682
  %5684 = vmatmul.bf16.gmra.mxu0 %v5649
  %v5685 = vpop.f32.mrf.mxu0
  %v5686 = vadd.f32 0.0, %v5685
  %v5687 = vpop.f32.mrf.mxu0
  %v5688 = vadd.f32 0.0, %v5687
  %5689 = vmatmul.bf16.gmra.mxu0 %v5651
  %v5690 = vpop.f32.mrf.mxu0
  %v5691 = vadd.f32 0.0, %v5690
  %v5692 = vpop.f32.mrf.mxu0
  %v5693 = vadd.f32 0.0, %v5692
  %5694 = vmatmul.bf16.gmra.mxu0 %v5653
  %v5695 = vpop.f32.mrf.mxu0
  %v5696 = vadd.f32 0.0, %v5695
  %v5697 = vpop.f32.mrf.mxu0
  %v5698 = vadd.f32 0.0, %v5697
  %5699 = vdwg.mxu0
  %5700 = vmatpush.bf16.msra.mxu0 0
  %5701 = vmatpush.bf16.msra.mxu0 0
  %5702 = vmatpush.bf16.msra.mxu0 0
  %5703 = vmatpush.bf16.msra.mxu0 0
  %5704 = vmatpush.bf16.msra.mxu0 0
  %5705 = vmatpush.bf16.msra.mxu0 0
  %5706 = vmatpush.bf16.msra.mxu0 %v5578
  %5707 = vmatpush.bf16.msra.mxu0 %v5577
  %5708 = vmatmul.bf16.gmra.mxu0 %v5660
  %v5709 = vpop.f32.mrf.mxu0
  %v5710 = vadd.f32 %v5681, %v5709
  %v5711 = vpop.f32.mrf.mxu0
  %v5712 = vadd.f32 %v5683, %v5711
  %5713 = vmatmul.bf16.gmra.mxu0 %v5663
  %v5714 = vpop.f32.mrf.mxu0
  %v5715 = vadd.f32 %v5686, %v5714
  %v5716 = vpop.f32.mrf.mxu0
  %v5717 = vadd.f32 %v5688, %v5716
  %5718 = vmatmul.bf16.gmra.mxu0 %v5666
  %v5719 = vpop.f32.mrf.mxu0
  %v5720 = vadd.f32 %v5691, %v5719
  %v5721 = vpop.f32.mrf.mxu0
  %v5722 = vadd.f32 %v5693, %v5721
  %5723 = vmatmul.bf16.gmra.mxu0 %v5669
  %v5724 = vpop.f32.mrf.mxu0
  %v5725 = vadd.f32 %v5696, %v5724
  %v5726 = vpop.f32.mrf.mxu0
  %v5727 = vadd.f32 %v5698, %v5726
  %5728 = vdwg.mxu0
  %v5729 = vpack.c.bf16 %v5712, %v5710
  %v5730 = vpack.c.bf16 %v5717, %v5715
  %v5731 = vpack.c.bf16 %v5722, %v5720
  %v5732 = vpack.c.bf16 %v5727, %v5725
  %v5733 = vld [vmem:[#allocation2 + $0x10] sm:$0xf]
  %v5734 = vld [vmem:[#allocation2 + $0x28] sm:$0xf]
  %v5735 = vld [vmem:[#allocation2 + $0x40] sm:$0xf]
  %v5736 = vld [vmem:[#allocation2 + $0x58] sm:$0xf]
  %v5737 = vld [vmem:[#allocation2 + $0x70] sm:$0xf]
  %v5738 = vld [vmem:[#allocation2 + $0x88] sm:$0xf]
  %v5739 = vld [vmem:[#allocation2 + $0xa0] sm:$0xf]
  %v5740 = vld [vmem:[#allocation2 + $0xb8] sm:$0xf]
  %v5741 = vld [vmem:[#allocation2 + $0xd0] sm:$0xf]
  %v5742 = vld [vmem:[#allocation2 + $0xe8] sm:$0xf]
  %v5743 = vld [vmem:[#allocation2 + $0x100] sm:$0xf]
  %v5744 = vld [vmem:[#allocation2 + $0x118] sm:$0xf]
  %v5745 = vld [vmem:[#allocation2 + $0x130] sm:$0xf]
  %v5746 = vld [vmem:[#allocation2 + $0x148] sm:$0xf]
  %v5747 = vld [vmem:[#allocation2 + $0x160] sm:$0xf]
  %v5748 = vld [vmem:[#allocation2 + $0x178] sm:$0xf]
  %v5749 = vld [vmem:[#allocation2 + $0x190] sm:$0xf]
  %v5750 = vld [vmem:[#allocation2 + $0x1a8] sm:$0xf]
  %v5751 = vld [vmem:[#allocation2 + $0x1c0] sm:$0xf]
  %v5752 = vld [vmem:[#allocation2 + $0x1d8] sm:$0xf]
  %v5761 = vunpack.c.l.b16 %v5599
  %v5762 = vunpack.c.h.b16 %v5599
  %v5763 = vunpack.c.l.b16 %v5600
  %v5764 = vunpack.c.h.b16 %v5600
  %v5765 = vunpack.c.l.b16 %v5601
  %v5766 = vunpack.c.h.b16 %v5601
  %v5767 = vunpack.c.l.b16 %v5602
  %v5768 = vunpack.c.h.b16 %v5602
  %v5769 = vunpack.c.l.b16 %v5603
  %v5770 = vunpack.c.h.b16 %v5603
  %v5771 = vunpack.c.l.b16 %v5604
  %v5772 = vunpack.c.h.b16 %v5604
  %v5773 = vunpack.c.l.b16 %v5605
  %v5774 = vunpack.c.h.b16 %v5605
  %v5775 = vunpack.c.l.b16 %v5606
  %v5776 = vunpack.c.h.b16 %v5606
  %v5777 = vpack.c.b16 %v5763, %v5761
  %v5778 = vpack.c.b16 %v5764, %v5762
  %v5779 = vpack.c.b16 %v5767, %v5765
  %v5780 = vpack.c.b16 %v5768, %v5766
  %v5781 = vpack.c.b16 %v5771, %v5769
  %v5782 = vpack.c.b16 %v5772, %v5770
  %v5783 = vpack.c.b16 %v5775, %v5773
  %v5784 = vpack.c.b16 %v5776, %v5774
  %v5809 = vunpack.c.l.b16 %v5733
  %v5810 = vunpack.c.l.b16 %v5734
  %v5811 = vunpack.c.l.b16 %v5735
  %v5812 = vunpack.c.l.b16 %v5736
  %v5813 = vunpack.c.l.b16 %v5737
  %v5814 = vunpack.c.l.b16 %v5738
  %v5815 = vunpack.c.l.b16 %v5739
  %v5816 = vunpack.c.l.b16 %v5740
  %v5817 = vunpack.c.l.b16 %v5741
  %v5818 = vunpack.c.l.b16 %v5742
  %v5819 = vunpack.c.l.b16 %v5743
  %v5820 = vunpack.c.l.b16 %v5744
  %v5821 = vunpack.c.l.b16 %v5745
  %v5822 = vunpack.c.l.b16 %v5746
  %v5823 = vunpack.c.l.b16 %v5747
  %v5824 = vunpack.c.l.b16 %v5748
  %v5825 = vunpack.c.l.b16 %v5749
  %v5826 = vunpack.c.l.b16 %v5750
  %v5827 = vunpack.c.l.b16 %v5751
  %v5828 = vunpack.c.l.b16 %v5752
  %v5829 = vpack.c.b16 %v5810, %v5809
  %v5830 = vpack.c.b16 %v5812, %v5811
  %v5831 = vpack.c.b16 %v5814, %v5813
  %v5832 = vpack.c.b16 %v5816, %v5815
  %v5833 = vpack.c.b16 %v5818, %v5817
  %v5834 = vpack.c.b16 %v5820, %v5819
  %v5835 = vpack.c.b16 %v5822, %v5821
  %v5836 = vpack.c.b16 %v5824, %v5823
  %v5837 = vpack.c.b16 %v5826, %v5825
  %v5838 = vpack.c.b16 %v5828, %v5827
  %v5850 = vsel %vm457, %v5778, 0
  %v5853 = vsel %vm457, %v5780, 0
  %v5856 = vsel %vm457, %v5782, 0
  %v5859 = vsel %vm457, %v5784, 0
  %5861 = vmatpush.bf16.msra.mxu0 %v5836
  %5862 = vmatpush.bf16.msra.mxu0 %v5835
  %5863 = vmatpush.bf16.msra.mxu0 %v5834
  %5864 = vmatpush.bf16.msra.mxu0 %v5833
  %5865 = vmatpush.bf16.msra.mxu0 %v5832
  %5866 = vmatpush.bf16.msra.mxu0 %v5831
  %5867 = vmatpush.bf16.msra.mxu0 %v5830
  %5868 = vmatpush.bf16.msra.mxu0 %v5829
  %5869 = vmatmul.bf16.gmra.mxu0 %v5777
  %v5870 = vpop.f32.mrf.mxu0
  %v5871 = vadd.f32 0.0, %v5870
  %v5872 = vpop.f32.mrf.mxu0
  %v5873 = vadd.f32 0.0, %v5872
  %5874 = vmatmul.bf16.gmra.mxu0 %v5779
  %v5875 = vpop.f32.mrf.mxu0
  %v5876 = vadd.f32 0.0, %v5875
  %v5877 = vpop.f32.mrf.mxu0
  %v5878 = vadd.f32 0.0, %v5877
  %5879 = vmatmul.bf16.gmra.mxu0 %v5781
  %v5880 = vpop.f32.mrf.mxu0
  %v5881 = vadd.f32 0.0, %v5880
  %v5882 = vpop.f32.mrf.mxu0
  %v5883 = vadd.f32 0.0, %v5882
  %5884 = vmatmul.bf16.gmra.mxu0 %v5783
  %v5885 = vpop.f32.mrf.mxu0
  %v5886 = vadd.f32 0.0, %v5885
  %v5887 = vpop.f32.mrf.mxu0
  %v5888 = vadd.f32 0.0, %v5887
  %5889 = vdwg.mxu0
  %5890 = vmatpush.bf16.msra.mxu0 0
  %5891 = vmatpush.bf16.msra.mxu0 0
  %5892 = vmatpush.bf16.msra.mxu0 0
  %5893 = vmatpush.bf16.msra.mxu0 0
  %5894 = vmatpush.bf16.msra.mxu0 0
  %5895 = vmatpush.bf16.msra.mxu0 0
  %5896 = vmatpush.bf16.msra.mxu0 %v5838
  %5897 = vmatpush.bf16.msra.mxu0 %v5837
  %5898 = vmatmul.bf16.gmra.mxu0 %v5850
  %v5899 = vpop.f32.mrf.mxu0
  %v5900 = vadd.f32 %v5871, %v5899
  %v5901 = vpop.f32.mrf.mxu0
  %v5902 = vadd.f32 %v5873, %v5901
  %5903 = vmatmul.bf16.gmra.mxu0 %v5853
  %v5904 = vpop.f32.mrf.mxu0
  %v5905 = vadd.f32 %v5876, %v5904
  %v5906 = vpop.f32.mrf.mxu0
  %v5907 = vadd.f32 %v5878, %v5906
  %5908 = vmatmul.bf16.gmra.mxu0 %v5856
  %v5909 = vpop.f32.mrf.mxu0
  %v5910 = vadd.f32 %v5881, %v5909
  %v5911 = vpop.f32.mrf.mxu0
  %v5912 = vadd.f32 %v5883, %v5911
  %5913 = vmatmul.bf16.gmra.mxu0 %v5859
  %v5914 = vpop.f32.mrf.mxu0
  %v5915 = vadd.f32 %v5886, %v5914
  %v5916 = vpop.f32.mrf.mxu0
  %v5917 = vadd.f32 %v5888, %v5916
  %5918 = vdwg.mxu0
  %v5919 = vpack.c.bf16 %v5902, %v5900
  %v5920 = vpack.c.bf16 %v5907, %v5905
  %v5921 = vpack.c.bf16 %v5912, %v5910
  %v5922 = vpack.c.bf16 %v5917, %v5915
  %v5923 = vpack.c.bf16 %v5274, %v5274
  %v5924 = vpack.c.bf16 %v5326, %v5326
  %v5945 = vunpack.c.l.b16 %v5579
  %v5946 = vunpack.c.l.b16 %v5580
  %v5947 = vunpack.c.l.b16 %v5581
  %v5948 = vunpack.c.l.b16 %v5582
  %v5949 = vunpack.c.l.b16 %v5583
  %v5950 = vunpack.c.l.b16 %v5584
  %v5951 = vunpack.c.l.b16 %v5585
  %v5952 = vunpack.c.l.b16 %v5586
  %v5953 = vunpack.c.l.b16 %v5587
  %v5954 = vunpack.c.l.b16 %v5588
  %v5955 = vunpack.c.l.b16 %v5589
  %v5956 = vunpack.c.l.b16 %v5590
  %v5957 = vunpack.c.l.b16 %v5591
  %v5958 = vunpack.c.l.b16 %v5592
  %v5959 = vunpack.c.l.b16 %v5593
  %v5960 = vunpack.c.l.b16 %v5594
  %v5961 = vunpack.c.l.b16 %v5595
  %v5962 = vunpack.c.l.b16 %v5596
  %v5963 = vunpack.c.l.b16 %v5597
  %v5964 = vunpack.c.l.b16 %v5598
  %v5965 = vpack.c.b16 %v5946, %v5945
  %v5966 = vpack.c.b16 %v5948, %v5947
  %v5967 = vpack.c.b16 %v5950, %v5949
  %v5968 = vpack.c.b16 %v5952, %v5951
  %v5969 = vpack.c.b16 %v5954, %v5953
  %v5970 = vpack.c.b16 %v5956, %v5955
  %v5971 = vpack.c.b16 %v5958, %v5957
  %v5972 = vpack.c.b16 %v5960, %v5959
  %v5973 = vpack.c.b16 %v5962, %v5961
  %v5974 = vpack.c.b16 %v5964, %v5963
  %v5986 = vsel %vm457, %v5924, 0
  %5988 = vmatpush.bf16.msra.mxu0 %v5972
  %5989 = vmatpush.bf16.msra.mxu0 %v5971
  %5990 = vmatpush.bf16.msra.mxu0 %v5970
  %5991 = vmatpush.bf16.msra.mxu0 %v5969
  %5992 = vmatpush.bf16.msra.mxu0 %v5968
  %5993 = vmatpush.bf16.msra.mxu0 %v5967
  %5994 = vmatpush.bf16.msra.mxu0 %v5966
  %5995 = vmatpush.bf16.msra.mxu0 %v5965
  %5996 = vmatmul.bf16.gmra.mxu0 %v5923
  %v5997 = vpop.f32.mrf.mxu0
  %v5998 = vadd.f32 0.0, %v5997
  %v5999 = vpop.f32.mrf.mxu0
  %6000 = vdwg.mxu0
  %6001 = vmatpush.bf16.msra.mxu0 0
  %6002 = vmatpush.bf16.msra.mxu0 0
  %6003 = vmatpush.bf16.msra.mxu0 0
  %6004 = vmatpush.bf16.msra.mxu0 0
  %6005 = vmatpush.bf16.msra.mxu0 0
  %6006 = vmatpush.bf16.msra.mxu0 0
  %6007 = vmatpush.bf16.msra.mxu0 %v5974
  %6008 = vmatpush.bf16.msra.mxu0 %v5973
  %6009 = vmatmul.bf16.gmra.mxu0 %v5986
  %v6010 = vpop.f32.mrf.mxu0
  %v6011 = vadd.f32 %v5998, %v6010
  %v6012 = vpop.f32.mrf.mxu0
  %6013 = vdwg.mxu0
  %v6014 = vpack.c.bf16 %v6011, %v6011
  %v6016 = vsel %vm1711, %v6014, 0
  %6018 = vmatpush.bf16.msra.mxu0 0
  %6019 = vmatpush.bf16.msra.mxu0 0
  %6020 = vmatpush.bf16.msra.mxu0 0
  %6021 = vmatpush.bf16.msra.mxu0 0
  %6022 = vmatpush.bf16.msra.mxu0 %v5922
  %6023 = vmatpush.bf16.msra.mxu0 %v5921
  %6024 = vmatpush.bf16.msra.mxu0 %v5920
  %6025 = vmatpush.bf16.msra.mxu0 %v5919
  %6026 = vmatmul.bf16.gmra.mxu0 %v6016
  %v6027 = vpop.f32.mrf.mxu0
  %v6028 = vadd.f32 0.0, %v6027
  %v6029 = vpop.f32.mrf.mxu0
  %6030 = vdwg.mxu0
  %v6031 = vmul.f32 %v6028, 0.125
  %vm6032 = vcmask 1042432
  %v6033 = vsel %vm6032, %v6031, -inf
  %6034 = vmax.xlane.f32.xlu0 %v6033
  %v6035 = vpop.xlane.xlu0 %6034
  %v6036 = vsub.f32 %v6031, %v6035
  %v6037 = vmul.f32 %v6036, 1.442695
  %v6038 = vpow.pop %v6037
  %v6039 = vsel %vm6032, %v6038, 0.0
  %6040 = vadd.xlane.f32.xlu0 %v6039
  %v6041 = vpop.xlane.xlu0 %6040
  %v6042 = vrcp.pop %v6041
  %v6043 = vmul.f32 %v6038, %v6042
  %v6044 = vpack.c.bf16 %v6043, %v6043
  %6045 = vmatpush.bf16.xpose.msra.mxu0 0
  %6046 = vmatpush.bf16.xpose.msra.mxu0 0
  %6047 = vmatpush.bf16.xpose.msra.mxu0 0
  %6048 = vmatpush.bf16.xpose.msra.mxu0 0
  %6049 = vmatpush.bf16.xpose.msra.mxu0 %v5732
  %6050 = vmatpush.bf16.xpose.msra.mxu0 %v5731
  %6051 = vmatpush.bf16.xpose.msra.mxu0 %v5730
  %6052 = vmatpush.bf16.xpose.msra.mxu0 %v5729
  %6053 = vmatmul.bf16.gmra.mxu0 %v6044
  %v6054 = vpop.f32.mrf.mxu0
  %v6055 = vadd.f32 0.0, %v6054
  %v6056 = vpop.f32.mrf.mxu0
  %6057 = vdwg.mxu0
  %v6058 = vpack.c.bf16 %v6055, %v6055
  %v6067 = vunpack.c.l.b16 %v5615
  %v6068 = vunpack.c.h.b16 %v5615
  %v6069 = vunpack.c.l.b16 %v5616
  %v6070 = vunpack.c.h.b16 %v5616
  %v6071 = vunpack.c.l.b16 %v5617
  %v6072 = vunpack.c.h.b16 %v5617
  %v6073 = vunpack.c.l.b16 %v5618
  %v6074 = vunpack.c.h.b16 %v5618
  %v6075 = vunpack.c.l.b16 %v5619
  %v6076 = vunpack.c.h.b16 %v5619
  %v6077 = vunpack.c.l.b16 %v5620
  %v6078 = vunpack.c.h.b16 %v5620
  %v6079 = vunpack.c.l.b16 %v5621
  %v6080 = vunpack.c.h.b16 %v5621
  %v6081 = vunpack.c.l.b16 %v5622
  %v6082 = vunpack.c.h.b16 %v5622
  %v6083 = vpack.c.b16 %v6069, %v6067
  %v6084 = vpack.c.b16 %v6070, %v6068
  %v6085 = vpack.c.b16 %v6073, %v6071
  %v6086 = vpack.c.b16 %v6074, %v6072
  %v6087 = vpack.c.b16 %v6077, %v6075
  %v6088 = vpack.c.b16 %v6078, %v6076
  %v6089 = vpack.c.b16 %v6081, %v6079
  %v6090 = vpack.c.b16 %v6082, %v6080
  %v6100 = vsel %vm1711, %v6058, 0
  %6102 = vmatpush.bf16.msra.mxu0 0
  %6103 = vmatpush.bf16.msra.mxu0 0
  %6104 = vmatpush.bf16.msra.mxu0 0
  %6105 = vmatpush.bf16.msra.mxu0 0
  %6106 = vmatpush.bf16.msra.mxu0 %v6089
  %6107 = vmatpush.bf16.msra.mxu0 %v6087
  %6108 = vmatpush.bf16.msra.mxu0 %v6085
  %6109 = vmatpush.bf16.msra.mxu0 %v6083
  %6110 = vmatmul.bf16.gmra.mxu0 %v6100
  %v6111 = vpop.f32.mrf.mxu0
  %v6112 = vadd.f32 0.0, %v6111
  %v6113 = vpop.f32.mrf.mxu0
  %6114 = vdwg.mxu0
  %6115 = vmatpush.bf16.msra.mxu0 0
  %6116 = vmatpush.bf16.msra.mxu0 0
  %6117 = vmatpush.bf16.msra.mxu0 0
  %6118 = vmatpush.bf16.msra.mxu0 0
  %6119 = vmatpush.bf16.msra.mxu0 %v6090
  %6120 = vmatpush.bf16.msra.mxu0 %v6088
  %6121 = vmatpush.bf16.msra.mxu0 %v6086
  %6122 = vmatpush.bf16.msra.mxu0 %v6084
  %6123 = vmatmul.bf16.gmra.mxu0 %v6100
  %v6124 = vpop.f32.mrf.mxu0
  %v6125 = vadd.f32 0.0, %v6124
  %v6126 = vpop.f32.mrf.mxu0
  %6127 = vdwg.mxu0
  %v6128 = vadd.f32 %v5274, %v6112
  %v6129 = vadd.f32 %v5326, %v6125
  %v6130 = vpack.c.bf16 %v6128, %v6128
  %v6131 = vpack.c.bf16 %v6129, %v6129
  %v6133 = vsel %vm457, %v6131, 0
  %6135 = vmatpush.bf16.msra.mxu0 %v5972
  %6136 = vmatpush.bf16.msra.mxu0 %v5971
  %6137 = vmatpush.bf16.msra.mxu0 %v5970
  %6138 = vmatpush.bf16.msra.mxu0 %v5969
  %6139 = vmatpush.bf16.msra.mxu0 %v5968
  %6140 = vmatpush.bf16.msra.mxu0 %v5967
  %6141 = vmatpush.bf16.msra.mxu0 %v5966
  %6142 = vmatpush.bf16.msra.mxu0 %v5965
  %6143 = vmatmul.bf16.gmra.mxu0 %v6130
  %v6144 = vpop.f32.mrf.mxu0
  %v6145 = vadd.f32 0.0, %v6144
  %v6146 = vpop.f32.mrf.mxu0
  %6147 = vdwg.mxu0
  %6148 = vmatpush.bf16.msra.mxu0 0
  %6149 = vmatpush.bf16.msra.mxu0 0
  %6150 = vmatpush.bf16.msra.mxu0 0
  %6151 = vmatpush.bf16.msra.mxu0 0
  %6152 = vmatpush.bf16.msra.mxu0 0
  %6153 = vmatpush.bf16.msra.mxu0 0
  %6154 = vmatpush.bf16.msra.mxu0 %v5974
  %6155 = vmatpush.bf16.msra.mxu0 %v5973
  %6156 = vmatmul.bf16.gmra.mxu0 %v6133
  %v6157 = vpop.f32.mrf.mxu0
  %v6158 = vadd.f32 %v6145, %v6157
  %v6159 = vpop.f32.mrf.mxu0
  %6160 = vdwg.mxu0
  %v6161 = vpack.c.bf16 %v6158, %v6158
  %v6163 = vsel %vm1711, %v6161, 0
  %6165 = vmatpush.bf16.msra.mxu0 0
  %6166 = vmatpush.bf16.msra.mxu0 0
  %6167 = vmatpush.bf16.msra.mxu0 0
  %6168 = vmatpush.bf16.msra.mxu0 0
  %6169 = vmatpush.bf16.msra.mxu0 %v5922
  %6170 = vmatpush.bf16.msra.mxu0 %v5921
  %6171 = vmatpush.bf16.msra.mxu0 %v5920
  %6172 = vmatpush.bf16.msra.mxu0 %v5919
  %6173 = vmatmul.bf16.gmra.mxu0 %v6163
  %v6174 = vpop.f32.mrf.mxu0
  %v6175 = vadd.f32 0.0, %v6174
  %v6176 = vpop.f32.mrf.mxu0
  %6177 = vdwg.mxu0
  %v6178 = vmul.f32 %v6175, 0.125
  %v6179 = vsel %vm6032, %v6178, -inf
  %6180 = vmax.xlane.f32.xlu0 %v6179
  %v6181 = vpop.xlane.xlu0 %6180
  %v6182 = vsub.f32 %v6178, %v6181
  %v6183 = vmul.f32 %v6182, 1.442695
  %v6184 = vpow.pop %v6183
  %v6185 = vsel %vm6032, %v6184, 0.0
  %6186 = vadd.xlane.f32.xlu0 %v6185
  %v6187 = vpop.xlane.xlu0 %6186
  %v6188 = vrcp.pop %v6187
  %v6189 = vmul.f32 %v6184, %v6188
  %v6190 = vpack.c.bf16 %v6189, %v6189
  %6191 = vmatpush.bf16.xpose.msra.mxu0 0
  %6192 = vmatpush.bf16.xpose.msra.mxu0 0
  %6193 = vmatpush.bf16.xpose.msra.mxu0 0
  %6194 = vmatpush.bf16.xpose.msra.mxu0 0
  %6195 = vmatpush.bf16.xpose.msra.mxu0 %v5732
  %6196 = vmatpush.bf16.xpose.msra.mxu0 %v5731
  %6197 = vmatpush.bf16.xpose.msra.mxu0 %v5730
  %6198 = vmatpush.bf16.xpose.msra.mxu0 %v5729
  %6199 = vmatmul.bf16.gmra.mxu0 %v6190
  %v6200 = vpop.f32.mrf.mxu0
  %v6201 = vadd.f32 0.0, %v6200
  %v6202 = vpop.f32.mrf.mxu0
  %6203 = vdwg.mxu0
  %v6204 = vpack.c.bf16 %v6201, %v6201
  %v6206 = vsel %vm1711, %v6204, 0
  %6208 = vmatpush.bf16.msra.mxu0 0
  %6209 = vmatpush.bf16.msra.mxu0 0
  %6210 = vmatpush.bf16.msra.mxu0 0
  %6211 = vmatpush.bf16.msra.mxu0 0
  %6212 = vmatpush.bf16.msra.mxu0 %v6089
  %6213 = vmatpush.bf16.msra.mxu0 %v6087
  %6214 = vmatpush.bf16.msra.mxu0 %v6085
  %6215 = vmatpush.bf16.msra.mxu0 %v6083
  %6216 = vmatmul.bf16.gmra.mxu0 %v6206
  %v6217 = vpop.f32.mrf.mxu0
  %v6218 = vadd.f32 0.0, %v6217
  %v6219 = vpop.f32.mrf.mxu0
  %6220 = vdwg.mxu0
  %6221 = vmatpush.bf16.msra.mxu0 0
  %6222 = vmatpush.bf16.msra.mxu0 0
  %6223 = vmatpush.bf16.msra.mxu0 0
  %6224 = vmatpush.bf16.msra.mxu0 0
  %6225 = vmatpush.bf16.msra.mxu0 %v6090
  %6226 = vmatpush.bf16.msra.mxu0 %v6088
  %6227 = vmatpush.bf16.msra.mxu0 %v6086
  %6228 = vmatpush.bf16.msra.mxu0 %v6084
  %6229 = vmatmul.bf16.gmra.mxu0 %v6206
  %v6230 = vpop.f32.mrf.mxu0
  %v6231 = vadd.f32 0.0, %v6230
  %v6232 = vpop.f32.mrf.mxu0
  %6233 = vdwg.mxu0
  %v6234 = vadd.f32 %v6128, %v6218
  %v6235 = vadd.f32 %v6129, %v6231
  %v6236 = vadd.f32 %v5274, %v6128
  %v6237 = vadd.f32 %v5326, %v6129
  %v6238 = vadd.f32 %v6236, %v6234
  %v6239 = vadd.f32 %v6237, %v6235
  %v6240 = vmul.f32 %v6238, 0.33333334
  %v6241 = vmul.f32 %v6239, 0.33333334
  %v6242 = vunpack.c.l.bf16 %v5733
  %v6243 = vunpack.c.l.bf16 %v5734
  %v6244 = vunpack.c.l.bf16 %v5735
  %v6245 = vunpack.c.l.bf16 %v5736
  %v6246 = vunpack.c.l.bf16 %v5737
  %v6247 = vunpack.c.l.bf16 %v5738
  %v6248 = vunpack.c.l.bf16 %v5739
  %v6249 = vunpack.c.l.bf16 %v5740
  %v6250 = vunpack.c.l.bf16 %v5741
  %v6251 = vunpack.c.l.bf16 %v5742
  %v6252 = vunpack.c.l.bf16 %v5743
  %v6253 = vunpack.c.l.bf16 %v5744
  %v6254 = vunpack.c.l.bf16 %v5745
  %v6255 = vunpack.c.l.bf16 %v5746
  %v6256 = vunpack.c.l.bf16 %v5747
  %v6257 = vunpack.c.l.bf16 %v5748
  %v6258 = vunpack.c.l.bf16 %v5749
  %v6259 = vunpack.c.l.bf16 %v5750
  %v6260 = vunpack.c.l.bf16 %v5751
  %v6261 = vunpack.c.l.bf16 %v5752
  %v6262 = vpack.c.bf16 %v6240, %v6240
  %v6263 = vpack.c.bf16 %v6241, %v6241
  %v6265 = vsel %vm457, %v6263, 0
  %6267 = vmatpush.bf16.msra.mxu0 %v5836
  %6268 = vmatpush.bf16.msra.mxu0 %v5835
  %6269 = vmatpush.bf16.msra.mxu0 %v5834
  %6270 = vmatpush.bf16.msra.mxu0 %v5833
  %6271 = vmatpush.bf16.msra.mxu0 %v5832
  %6272 = vmatpush.bf16.msra.mxu0 %v5831
  %6273 = vmatpush.bf16.msra.mxu0 %v5830
  %6274 = vmatpush.bf16.msra.mxu0 %v5829
  %6275 = vmatmul.bf16.gmra.mxu0 %v6262
  %v6276 = vpop.f32.mrf.mxu0
  %v6277 = vadd.f32 0.0, %v6276
  %v6278 = vpop.f32.mrf.mxu0
  %6279 = vdwg.mxu0
  %6280 = vmatpush.bf16.msra.mxu0 0
  %6281 = vmatpush.bf16.msra.mxu0 0
  %6282 = vmatpush.bf16.msra.mxu0 0
  %6283 = vmatpush.bf16.msra.mxu0 0
  %6284 = vmatpush.bf16.msra.mxu0 0
  %6285 = vmatpush.bf16.msra.mxu0 0
  %6286 = vmatpush.bf16.msra.mxu0 %v5838
  %6287 = vmatpush.bf16.msra.mxu0 %v5837
  %6288 = vmatmul.bf16.gmra.mxu0 %v6265
  %v6289 = vpop.f32.mrf.mxu0
  %v6290 = vadd.f32 %v6277, %v6289
  %v6291 = vpop.f32.mrf.mxu0
  %6292 = vdwg.mxu0
  %v6293 = vmul.f32 %v6242, %v6242
  %v6294 = vmul.f32 %v6243, %v6243
  %v6295 = vmul.f32 %v6244, %v6244
  %v6296 = vmul.f32 %v6245, %v6245
  %v6297 = vmul.f32 %v6246, %v6246
  %v6298 = vmul.f32 %v6247, %v6247
  %v6299 = vmul.f32 %v6248, %v6248
  %v6300 = vmul.f32 %v6249, %v6249
  %v6301 = vmul.f32 %v6250, %v6250
  %v6302 = vmul.f32 %v6251, %v6251
  %v6303 = vmul.f32 %v6252, %v6252
  %v6304 = vmul.f32 %v6253, %v6253
  %v6305 = vmul.f32 %v6254, %v6254
  %v6306 = vmul.f32 %v6255, %v6255
  %v6307 = vmul.f32 %v6256, %v6256
  %v6308 = vmul.f32 %v6257, %v6257
  %v6309 = vmul.f32 %v6258, %v6258
  %v6310 = vmul.f32 %v6259, %v6259
  %v6311 = vmul.f32 %v6260, %v6260
  %v6312 = vmul.f32 %v6261, %v6261
  %v6313 = vadd.f32 %v6293, %v6294
  %v6314 = vadd.f32 %v6313, %v6295
  %v6315 = vadd.f32 %v6314, %v6296
  %v6316 = vadd.f32 %v6315, %v6297
  %v6317 = vadd.f32 %v6316, %v6298
  %v6318 = vadd.f32 %v6317, %v6299
  %v6319 = vadd.f32 %v6318, %v6300
  %v6320 = vadd.f32 %v6319, %v6301
  %v6321 = vadd.f32 %v6320, %v6302
  %v6322 = vadd.f32 %v6321, %v6303
  %v6323 = vadd.f32 %v6322, %v6304
  %v6324 = vadd.f32 %v6323, %v6305
  %v6325 = vadd.f32 %v6324, %v6306
  %v6326 = vadd.f32 %v6325, %v6307
  %v6327 = vadd.f32 %v6326, %v6308
  %v6328 = vadd.f32 %v6327, %v6309
  %v6329 = vadd.f32 %v6328, %v6310
  %v6330 = vadd.f32 %v6329, %v6311
  %v6331 = vadd.f32 %v6330, %v6312
  %v6332 = vrot.slane %v6331, 4
  %v6333 = vadd.f32 %v6331, %v6332
  %v6334 = vrot.slane %v6333, 2
  %v6335 = vadd.f32 %v6333, %v6334
  %v6336 = vrot.slane %v6335, 1
  %v6337 = vadd.f32 %v6335, %v6336
  %v6338 = vrsqrt.pop %v6337
  %v6339 = vmul.f32 %v6338, %v6337
  %v6340 = vmul.f32 %v6339, %v6338
  %v6341 = vmul.f32 0.5, %v6340
  %v6342 = vsub.f32 1.5, %v6341
  %v6343 = vmul.f32 %v6338, %v6342
  %v6344 = vmul.f32 %v6337, %v6343
  %vm6345 = vcmp.eq.f32.partialorder %v6337, inf
  %v6346 = vsel %vm6345, %v6337, %v6344
  %vm6347 = vcmp.eq.f32.partialorder %v6337, 0.0
  %v6348 = vand.u32 %v6337, 2147483648
  %v6349 = vsel %vm6347, %v6348, %v6346
  %v6350 = vmul.f32 %v6240, %v6240
  %v6351 = vmul.f32 %v6241, %v6241
  %v6352 = vsel %vm6032, %v6350, 0.0
  %vm6353 = vcmask 256000
  %v6354 = vsel %vm6353, %v6351, 0.0
  %v6355 = vadd.f32 %v6352, %v6354
  %6356 = vadd.xlane.f32.xlu0 %v6355
  %v6357 = vpop.xlane.xlu0 %6356
  %v6358 = vrsqrt.pop %v6357
  %v6359 = vmul.f32 %v6358, %v6357
  %v6360 = vmul.f32 %v6359, %v6358
  %v6361 = vmul.f32 0.5, %v6360
  %v6362 = vsub.f32 1.5, %v6361
  %v6363 = vmul.f32 %v6358, %v6362
  %v6364 = vmul.f32 %v6357, %v6363
  %vm6365 = vcmp.eq.f32.partialorder %v6357, inf
  %v6366 = vsel %vm6365, %v6357, %v6364
  %vm6367 = vcmp.eq.f32.partialorder %v6357, 0.0
  %v6368 = vand.u32 %v6357, 2147483648
  %v6369 = vsel %vm6367, %v6368, %v6366
  %v6370 = vmax.f32 %v6369, 1e-08
  %v6371 = vmax.f32 %v6349, 1e-08
  %v6372 = vmul.f32 %v6370, %v6371
  %v6373 = vmul.f32 %v6290, 10.0
  %v6374 = vrcp.pop %v6372
  %v6375 = vmul.f32 %v6373, %v6374
  %6376 = vst [vmem:[%s20] sm:$0x7] %v6375
  %v6379 = vrot.slane %v6129, 4
  %vm6380 = vcmask 1043456
  %v6381 = vsel %vm6380, %v6128, %v6379
  %vm6383 = vcmask 260100
  %vm6384 = vmor %vm6383, %vm6032
  %6385 = vst.msk [vmem:[%s21] sm:$0x77] %vm6384, %v6381
  %v6386 = vld [vmem:[#allocation2 + $0x14] sm:$0xf]
  %v6387 = vld [vmem:[#allocation2 + $0x2c] sm:$0xf]
  %v6388 = vld [vmem:[#allocation2 + $0x44] sm:$0xf]
  %v6389 = vld [vmem:[#allocation2 + $0x5c] sm:$0xf]
  %v6390 = vld [vmem:[#allocation2 + $0x74] sm:$0xf]
  %v6391 = vld [vmem:[#allocation2 + $0x8c] sm:$0xf]
  %v6392 = vld [vmem:[#allocation2 + $0xa4] sm:$0xf]
  %v6393 = vld [vmem:[#allocation2 + $0xbc] sm:$0xf]
  %v6394 = vld [vmem:[#allocation2 + $0xd4] sm:$0xf]
  %v6395 = vld [vmem:[#allocation2 + $0xec] sm:$0xf]
  %v6396 = vld [vmem:[#allocation2 + $0x104] sm:$0xf]
  %v6397 = vld [vmem:[#allocation2 + $0x11c] sm:$0xf]
  %v6398 = vld [vmem:[#allocation2 + $0x134] sm:$0xf]
  %v6399 = vld [vmem:[#allocation2 + $0x14c] sm:$0xf]
  %v6400 = vld [vmem:[#allocation2 + $0x164] sm:$0xf]
  %v6401 = vld [vmem:[#allocation2 + $0x17c] sm:$0xf]
  %v6402 = vld [vmem:[#allocation2 + $0x194] sm:$0xf]
  %v6403 = vld [vmem:[#allocation2 + $0x1ac] sm:$0xf]
  %v6404 = vld [vmem:[#allocation2 + $0x1c4] sm:$0xf]
  %v6405 = vld [vmem:[#allocation2 + $0x1dc] sm:$0xf]
  %v6426 = vunpack.c.l.b16 %v6386
  %v6427 = vunpack.c.l.b16 %v6387
  %v6428 = vunpack.c.l.b16 %v6388
  %v6429 = vunpack.c.l.b16 %v6389
  %v6430 = vunpack.c.l.b16 %v6390
  %v6431 = vunpack.c.l.b16 %v6391
  %v6432 = vunpack.c.l.b16 %v6392
  %v6433 = vunpack.c.l.b16 %v6393
  %v6434 = vunpack.c.l.b16 %v6394
  %v6435 = vunpack.c.l.b16 %v6395
  %v6436 = vunpack.c.l.b16 %v6396
  %v6437 = vunpack.c.l.b16 %v6397
  %v6438 = vunpack.c.l.b16 %v6398
  %v6439 = vunpack.c.l.b16 %v6399
  %v6440 = vunpack.c.l.b16 %v6400
  %v6441 = vunpack.c.l.b16 %v6401
  %v6442 = vunpack.c.l.b16 %v6402
  %v6443 = vunpack.c.l.b16 %v6403
  %v6444 = vunpack.c.l.b16 %v6404
  %v6445 = vunpack.c.l.b16 %v6405
  %v6446 = vpack.c.b16 %v6427, %v6426
  %v6447 = vpack.c.b16 %v6429, %v6428
  %v6448 = vpack.c.b16 %v6431, %v6430
  %v6449 = vpack.c.b16 %v6433, %v6432
  %v6450 = vpack.c.b16 %v6435, %v6434
  %v6451 = vpack.c.b16 %v6437, %v6436
  %v6452 = vpack.c.b16 %v6439, %v6438
  %v6453 = vpack.c.b16 %v6441, %v6440
  %v6454 = vpack.c.b16 %v6443, %v6442
  %v6455 = vpack.c.b16 %v6445, %v6444
  %6466 = vmatpush.bf16.msra.mxu0 %v6453
  %6467 = vmatpush.bf16.msra.mxu0 %v6452
  %6468 = vmatpush.bf16.msra.mxu0 %v6451
  %6469 = vmatpush.bf16.msra.mxu0 %v6450
  %6470 = vmatpush.bf16.msra.mxu0 %v6449
  %6471 = vmatpush.bf16.msra.mxu0 %v6448
  %6472 = vmatpush.bf16.msra.mxu0 %v6447
  %6473 = vmatpush.bf16.msra.mxu0 %v6446
  %6474 = vmatmul.bf16.gmra.mxu0 %v5777
  %v6475 = vpop.f32.mrf.mxu0
  %v6476 = vadd.f32 0.0, %v6475
  %v6477 = vpop.f32.mrf.mxu0
  %v6478 = vadd.f32 0.0, %v6477
  %6479 = vmatmul.bf16.gmra.mxu0 %v5779
  %v6480 = vpop.f32.mrf.mxu0
  %v6481 = vadd.f32 0.0, %v6480
  %v6482 = vpop.f32.mrf.mxu0
  %v6483 = vadd.f32 0.0, %v6482
  %6484 = vmatmul.bf16.gmra.mxu0 %v5781
  %v6485 = vpop.f32.mrf.mxu0
  %v6486 = vadd.f32 0.0, %v6485
  %v6487 = vpop.f32.mrf.mxu0
  %v6488 = vadd.f32 0.0, %v6487
  %6489 = vmatmul.bf16.gmra.mxu0 %v5783
  %v6490 = vpop.f32.mrf.mxu0
  %v6491 = vadd.f32 0.0, %v6490
  %v6492 = vpop.f32.mrf.mxu0
  %v6493 = vadd.f32 0.0, %v6492
  %6494 = vdwg.mxu0
  %6495 = vmatpush.bf16.msra.mxu0 0
  %6496 = vmatpush.bf16.msra.mxu0 0
  %6497 = vmatpush.bf16.msra.mxu0 0
  %6498 = vmatpush.bf16.msra.mxu0 0
  %6499 = vmatpush.bf16.msra.mxu0 0
  %6500 = vmatpush.bf16.msra.mxu0 0
  %6501 = vmatpush.bf16.msra.mxu0 %v6455
  %6502 = vmatpush.bf16.msra.mxu0 %v6454
  %6503 = vmatmul.bf16.gmra.mxu0 %v5850
  %v6504 = vpop.f32.mrf.mxu0
  %v6505 = vadd.f32 %v6476, %v6504
  %v6506 = vpop.f32.mrf.mxu0
  %v6507 = vadd.f32 %v6478, %v6506
  %6508 = vmatmul.bf16.gmra.mxu0 %v5853
  %v6509 = vpop.f32.mrf.mxu0
  %v6510 = vadd.f32 %v6481, %v6509
  %v6511 = vpop.f32.mrf.mxu0
  %v6512 = vadd.f32 %v6483, %v6511
  %6513 = vmatmul.bf16.gmra.mxu0 %v5856
  %v6514 = vpop.f32.mrf.mxu0
  %v6515 = vadd.f32 %v6486, %v6514
  %v6516 = vpop.f32.mrf.mxu0
  %v6517 = vadd.f32 %v6488, %v6516
  %6518 = vmatmul.bf16.gmra.mxu0 %v5859
  %v6519 = vpop.f32.mrf.mxu0
  %v6520 = vadd.f32 %v6491, %v6519
  %v6521 = vpop.f32.mrf.mxu0
  %v6522 = vadd.f32 %v6493, %v6521
  %6523 = vdwg.mxu0
  %v6524 = vpack.c.bf16 %v6507, %v6505
  %v6525 = vpack.c.bf16 %v6512, %v6510
  %v6526 = vpack.c.bf16 %v6517, %v6515
  %v6527 = vpack.c.bf16 %v6522, %v6520
  %6528 = vmatpush.bf16.msra.mxu0 0
  %6529 = vmatpush.bf16.msra.mxu0 0
  %6530 = vmatpush.bf16.msra.mxu0 0
  %6531 = vmatpush.bf16.msra.mxu0 0
  %6532 = vmatpush.bf16.msra.mxu0 %v6527
  %6533 = vmatpush.bf16.msra.mxu0 %v6526
  %6534 = vmatpush.bf16.msra.mxu0 %v6525
  %6535 = vmatpush.bf16.msra.mxu0 %v6524
  %6536 = vmatmul.bf16.gmra.mxu0 %v6016
  %v6537 = vpop.f32.mrf.mxu0
  %v6538 = vadd.f32 0.0, %v6537
  %v6539 = vpop.f32.mrf.mxu0
  %6540 = vdwg.mxu0
  %v6541 = vmul.f32 %v6538, 0.125
  %v6542 = vsel %vm6032, %v6541, -inf
  %6543 = vmax.xlane.f32.xlu0 %v6542
  %v6544 = vpop.xlane.xlu0 %6543
  %v6545 = vsub.f32 %v6541, %v6544
  %v6546 = vmul.f32 %v6545, 1.442695
  %v6547 = vpow.pop %v6546
  %v6548 = vsel %vm6032, %v6547, 0.0
  %6549 = vadd.xlane.f32.xlu0 %v6548
  %v6550 = vpop.xlane.xlu0 %6549
  %v6551 = vrcp.pop %v6550
  %v6552 = vmul.f32 %v6547, %v6551
  %v6553 = vpack.c.bf16 %v6552, %v6552
  %6554 = vmatpush.bf16.xpose.msra.mxu0 0
  %6555 = vmatpush.bf16.xpose.msra.mxu0 0
  %6556 = vmatpush.bf16.xpose.msra.mxu0 0
  %6557 = vmatpush.bf16.xpose.msra.mxu0 0
  %6558 = vmatpush.bf16.xpose.msra.mxu0 %v5732
  %6559 = vmatpush.bf16.xpose.msra.mxu0 %v5731
  %6560 = vmatpush.bf16.xpose.msra.mxu0 %v5730
  %6561 = vmatpush.bf16.xpose.msra.mxu0 %v5729
  %6562 = vmatmul.bf16.gmra.mxu0 %v6553
  %v6563 = vpop.f32.mrf.mxu0
  %v6564 = vadd.f32 0.0, %v6563
  %v6565 = vpop.f32.mrf.mxu0
  %6566 = vdwg.mxu0
  %v6567 = vpack.c.bf16 %v6564, %v6564
  %v6569 = vsel %vm1711, %v6567, 0
  %6571 = vmatpush.bf16.msra.mxu0 0
  %6572 = vmatpush.bf16.msra.mxu0 0
  %6573 = vmatpush.bf16.msra.mxu0 0
  %6574 = vmatpush.bf16.msra.mxu0 0
  %6575 = vmatpush.bf16.msra.mxu0 %v6089
  %6576 = vmatpush.bf16.msra.mxu0 %v6087
  %6577 = vmatpush.bf16.msra.mxu0 %v6085
  %6578 = vmatpush.bf16.msra.mxu0 %v6083
  %6579 = vmatmul.bf16.gmra.mxu0 %v6569
  %v6580 = vpop.f32.mrf.mxu0
  %v6581 = vadd.f32 0.0, %v6580
  %v6582 = vpop.f32.mrf.mxu0
  %6583 = vdwg.mxu0
  %6584 = vmatpush.bf16.msra.mxu0 0
  %6585 = vmatpush.bf16.msra.mxu0 0
  %6586 = vmatpush.bf16.msra.mxu0 0
  %6587 = vmatpush.bf16.msra.mxu0 0
  %6588 = vmatpush.bf16.msra.mxu0 %v6090
  %6589 = vmatpush.bf16.msra.mxu0 %v6088
  %6590 = vmatpush.bf16.msra.mxu0 %v6086
  %6591 = vmatpush.bf16.msra.mxu0 %v6084
  %6592 = vmatmul.bf16.gmra.mxu0 %v6569
  %v6593 = vpop.f32.mrf.mxu0
  %v6594 = vadd.f32 0.0, %v6593
  %v6595 = vpop.f32.mrf.mxu0
  %6596 = vdwg.mxu0
  %v6597 = vadd.f32 %v5274, %v6581
  %v6598 = vadd.f32 %v5326, %v6594
  %v6599 = vpack.c.bf16 %v6597, %v6597
  %v6600 = vpack.c.bf16 %v6598, %v6598
  %v6602 = vsel %vm457, %v6600, 0
  %6604 = vmatpush.bf16.msra.mxu0 %v5972
  %6605 = vmatpush.bf16.msra.mxu0 %v5971
  %6606 = vmatpush.bf16.msra.mxu0 %v5970
  %6607 = vmatpush.bf16.msra.mxu0 %v5969
  %6608 = vmatpush.bf16.msra.mxu0 %v5968
  %6609 = vmatpush.bf16.msra.mxu0 %v5967
  %6610 = vmatpush.bf16.msra.mxu0 %v5966
  %6611 = vmatpush.bf16.msra.mxu0 %v5965
  %6612 = vmatmul.bf16.gmra.mxu0 %v6599
  %v6613 = vpop.f32.mrf.mxu0
  %v6614 = vadd.f32 0.0, %v6613
  %v6615 = vpop.f32.mrf.mxu0
  %6616 = vdwg.mxu0
  %6617 = vmatpush.bf16.msra.mxu0 0
  %6618 = vmatpush.bf16.msra.mxu0 0
  %6619 = vmatpush.bf16.msra.mxu0 0
  %6620 = vmatpush.bf16.msra.mxu0 0
  %6621 = vmatpush.bf16.msra.mxu0 0
  %6622 = vmatpush.bf16.msra.mxu0 0
  %6623 = vmatpush.bf16.msra.mxu0 %v5974
  %6624 = vmatpush.bf16.msra.mxu0 %v5973
  %6625 = vmatmul.bf16.gmra.mxu0 %v6602
  %v6626 = vpop.f32.mrf.mxu0
  %v6627 = vadd.f32 %v6614, %v6626
  %v6628 = vpop.f32.mrf.mxu0
  %6629 = vdwg.mxu0
  %v6630 = vpack.c.bf16 %v6627, %v6627
  %v6632 = vsel %vm1711, %v6630, 0
  %6634 = vmatpush.bf16.msra.mxu0 0
  %6635 = vmatpush.bf16.msra.mxu0 0
  %6636 = vmatpush.bf16.msra.mxu0 0
  %6637 = vmatpush.bf16.msra.mxu0 0
  %6638 = vmatpush.bf16.msra.mxu0 %v6527
  %6639 = vmatpush.bf16.msra.mxu0 %v6526
  %6640 = vmatpush.bf16.msra.mxu0 %v6525
  %6641 = vmatpush.bf16.msra.mxu0 %v6524
  %6642 = vmatmul.bf16.gmra.mxu0 %v6632
  %v6643 = vpop.f32.mrf.mxu0
  %v6644 = vadd.f32 0.0, %v6643
  %v6645 = vpop.f32.mrf.mxu0
  %6646 = vdwg.mxu0
  %v6647 = vmul.f32 %v6644, 0.125
  %v6648 = vsel %vm6032, %v6647, -inf
  %6649 = vmax.xlane.f32.xlu0 %v6648
  %v6650 = vpop.xlane.xlu0 %6649
  %v6651 = vsub.f32 %v6647, %v6650
  %v6652 = vmul.f32 %v6651, 1.442695
  %v6653 = vpow.pop %v6652
  %v6654 = vsel %vm6032, %v6653, 0.0
  %6655 = vadd.xlane.f32.xlu0 %v6654
  %v6656 = vpop.xlane.xlu0 %6655
  %v6657 = vrcp.pop %v6656
  %v6658 = vmul.f32 %v6653, %v6657
  %v6659 = vpack.c.bf16 %v6658, %v6658
  %6660 = vmatpush.bf16.xpose.msra.mxu0 0
  %6661 = vmatpush.bf16.xpose.msra.mxu0 0
  %6662 = vmatpush.bf16.xpose.msra.mxu0 0
  %6663 = vmatpush.bf16.xpose.msra.mxu0 0
  %6664 = vmatpush.bf16.xpose.msra.mxu0 %v5732
  %6665 = vmatpush.bf16.xpose.msra.mxu0 %v5731
  %6666 = vmatpush.bf16.xpose.msra.mxu0 %v5730
  %6667 = vmatpush.bf16.xpose.msra.mxu0 %v5729
  %6668 = vmatmul.bf16.gmra.mxu0 %v6659
  %v6669 = vpop.f32.mrf.mxu0
  %v6670 = vadd.f32 0.0, %v6669
  %v6671 = vpop.f32.mrf.mxu0
  %6672 = vdwg.mxu0
  %v6673 = vpack.c.bf16 %v6670, %v6670
  %v6675 = vsel %vm1711, %v6673, 0
  %6677 = vmatpush.bf16.msra.mxu0 0
  %6678 = vmatpush.bf16.msra.mxu0 0
  %6679 = vmatpush.bf16.msra.mxu0 0
  %6680 = vmatpush.bf16.msra.mxu0 0
  %6681 = vmatpush.bf16.msra.mxu0 %v6089
  %6682 = vmatpush.bf16.msra.mxu0 %v6087
  %6683 = vmatpush.bf16.msra.mxu0 %v6085
  %6684 = vmatpush.bf16.msra.mxu0 %v6083
  %6685 = vmatmul.bf16.gmra.mxu0 %v6675
  %v6686 = vpop.f32.mrf.mxu0
  %v6687 = vadd.f32 0.0, %v6686
  %v6688 = vpop.f32.mrf.mxu0
  %6689 = vdwg.mxu0
  %6690 = vmatpush.bf16.msra.mxu0 0
  %6691 = vmatpush.bf16.msra.mxu0 0
  %6692 = vmatpush.bf16.msra.mxu0 0
  %6693 = vmatpush.bf16.msra.mxu0 0
  %6694 = vmatpush.bf16.msra.mxu0 %v6090
  %6695 = vmatpush.bf16.msra.mxu0 %v6088
  %6696 = vmatpush.bf16.msra.mxu0 %v6086
  %6697 = vmatpush.bf16.msra.mxu0 %v6084
  %6698 = vmatmul.bf16.gmra.mxu0 %v6675
  %v6699 = vpop.f32.mrf.mxu0
  %v6700 = vadd.f32 0.0, %v6699
  %v6701 = vpop.f32.mrf.mxu0
  %6702 = vdwg.mxu0
  %v6703 = vadd.f32 %v6597, %v6687
  %v6704 = vadd.f32 %v6598, %v6700
  %v6705 = vadd.f32 %v5274, %v6597
  %v6706 = vadd.f32 %v5326, %v6598
  %v6707 = vadd.f32 %v6705, %v6703
  %v6708 = vadd.f32 %v6706, %v6704
  %v6709 = vmul.f32 %v6707, 0.33333334
  %v6710 = vmul.f32 %v6708, 0.33333334
  %v6711 = vunpack.c.l.bf16 %v6386
  %v6712 = vunpack.c.l.bf16 %v6387
  %v6713 = vunpack.c.l.bf16 %v6388
  %v6714 = vunpack.c.l.bf16 %v6389
  %v6715 = vunpack.c.l.bf16 %v6390
  %v6716 = vunpack.c.l.bf16 %v6391
  %v6717 = vunpack.c.l.bf16 %v6392
  %v6718 = vunpack.c.l.bf16 %v6393
  %v6719 = vunpack.c.l.bf16 %v6394
  %v6720 = vunpack.c.l.bf16 %v6395
  %v6721 = vunpack.c.l.bf16 %v6396
  %v6722 = vunpack.c.l.bf16 %v6397
  %v6723 = vunpack.c.l.bf16 %v6398
  %v6724 = vunpack.c.l.bf16 %v6399
  %v6725 = vunpack.c.l.bf16 %v6400
  %v6726 = vunpack.c.l.bf16 %v6401
  %v6727 = vunpack.c.l.bf16 %v6402
  %v6728 = vunpack.c.l.bf16 %v6403
  %v6729 = vunpack.c.l.bf16 %v6404
  %v6730 = vunpack.c.l.bf16 %v6405
  %v6731 = vpack.c.bf16 %v6709, %v6709
  %v6732 = vpack.c.bf16 %v6710, %v6710
  %v6734 = vsel %vm457, %v6732, 0
  %6736 = vmatpush.bf16.msra.mxu0 %v6453
  %6737 = vmatpush.bf16.msra.mxu0 %v6452
  %6738 = vmatpush.bf16.msra.mxu0 %v6451
  %6739 = vmatpush.bf16.msra.mxu0 %v6450
  %6740 = vmatpush.bf16.msra.mxu0 %v6449
  %6741 = vmatpush.bf16.msra.mxu0 %v6448
  %6742 = vmatpush.bf16.msra.mxu0 %v6447
  %6743 = vmatpush.bf16.msra.mxu0 %v6446
  %6744 = vmatmul.bf16.gmra.mxu0 %v6731
  %v6745 = vpop.f32.mrf.mxu0
  %v6746 = vadd.f32 0.0, %v6745
  %v6747 = vpop.f32.mrf.mxu0
  %6748 = vdwg.mxu0
  %6749 = vmatpush.bf16.msra.mxu0 0
  %6750 = vmatpush.bf16.msra.mxu0 0
  %6751 = vmatpush.bf16.msra.mxu0 0
  %6752 = vmatpush.bf16.msra.mxu0 0
  %6753 = vmatpush.bf16.msra.mxu0 0
  %6754 = vmatpush.bf16.msra.mxu0 0
  %6755 = vmatpush.bf16.msra.mxu0 %v6455
  %6756 = vmatpush.bf16.msra.mxu0 %v6454
  %6757 = vmatmul.bf16.gmra.mxu0 %v6734
  %v6758 = vpop.f32.mrf.mxu0
  %v6759 = vadd.f32 %v6746, %v6758
  %v6760 = vpop.f32.mrf.mxu0
  %6761 = vdwg.mxu0
  %v6762 = vmul.f32 %v6711, %v6711
  %v6763 = vmul.f32 %v6712, %v6712
  %v6764 = vmul.f32 %v6713, %v6713
  %v6765 = vmul.f32 %v6714, %v6714
  %v6766 = vmul.f32 %v6715, %v6715
  %v6767 = vmul.f32 %v6716, %v6716
  %v6768 = vmul.f32 %v6717, %v6717
  %v6769 = vmul.f32 %v6718, %v6718
  %v6770 = vmul.f32 %v6719, %v6719
  %v6771 = vmul.f32 %v6720, %v6720
  %v6772 = vmul.f32 %v6721, %v6721
  %v6773 = vmul.f32 %v6722, %v6722
  %v6774 = vmul.f32 %v6723, %v6723
  %v6775 = vmul.f32 %v6724, %v6724
  %v6776 = vmul.f32 %v6725, %v6725
  %v6777 = vmul.f32 %v6726, %v6726
  %v6778 = vmul.f32 %v6727, %v6727
  %v6779 = vmul.f32 %v6728, %v6728
  %v6780 = vmul.f32 %v6729, %v6729
  %v6781 = vmul.f32 %v6730, %v6730
  %v6782 = vadd.f32 %v6762, %v6763
  %v6783 = vadd.f32 %v6782, %v6764
  %v6784 = vadd.f32 %v6783, %v6765
  %v6785 = vadd.f32 %v6784, %v6766
  %v6786 = vadd.f32 %v6785, %v6767
  %v6787 = vadd.f32 %v6786, %v6768
  %v6788 = vadd.f32 %v6787, %v6769
  %v6789 = vadd.f32 %v6788, %v6770
  %v6790 = vadd.f32 %v6789, %v6771
  %v6791 = vadd.f32 %v6790, %v6772
  %v6792 = vadd.f32 %v6791, %v6773
  %v6793 = vadd.f32 %v6792, %v6774
  %v6794 = vadd.f32 %v6793, %v6775
  %v6795 = vadd.f32 %v6794, %v6776
  %v6796 = vadd.f32 %v6795, %v6777
  %v6797 = vadd.f32 %v6796, %v6778
  %v6798 = vadd.f32 %v6797, %v6779
  %v6799 = vadd.f32 %v6798, %v6780
  %v6800 = vadd.f32 %v6799, %v6781
  %v6801 = vrot.slane %v6800, 4
  %v6802 = vadd.f32 %v6800, %v6801
  %v6803 = vrot.slane %v6802, 2
  %v6804 = vadd.f32 %v6802, %v6803
  %v6805 = vrot.slane %v6804, 1
  %v6806 = vadd.f32 %v6804, %v6805
  %v6807 = vrsqrt.pop %v6806
  %v6808 = vmul.f32 %v6807, %v6806
  %v6809 = vmul.f32 %v6808, %v6807
  %v6810 = vmul.f32 0.5, %v6809
  %v6811 = vsub.f32 1.5, %v6810
  %v6812 = vmul.f32 %v6807, %v6811
  %v6813 = vmul.f32 %v6806, %v6812
  %vm6814 = vcmp.eq.f32.partialorder %v6806, inf
  %v6815 = vsel %vm6814, %v6806, %v6813
  %vm6816 = vcmp.eq.f32.partialorder %v6806, 0.0
  %v6817 = vand.u32 %v6806, 2147483648
  %v6818 = vsel %vm6816, %v6817, %v6815
  %v6819 = vmul.f32 %v6709, %v6709
  %v6820 = vmul.f32 %v6710, %v6710
  %v6821 = vsel %vm6032, %v6819, 0.0
  %v6822 = vsel %vm6353, %v6820, 0.0
  %v6823 = vadd.f32 %v6821, %v6822
  %6824 = vadd.xlane.f32.xlu0 %v6823
  %v6825 = vpop.xlane.xlu0 %6824
  %v6826 = vrsqrt.pop %v6825
  %v6827 = vmul.f32 %v6826, %v6825
  %v6828 = vmul.f32 %v6827, %v6826
  %v6829 = vmul.f32 0.5, %v6828
  %v6830 = vsub.f32 1.5, %v6829
  %v6831 = vmul.f32 %v6826, %v6830
  %v6832 = vmul.f32 %v6825, %v6831
  %vm6833 = vcmp.eq.f32.partialorder %v6825, inf
  %v6834 = vsel %vm6833, %v6825, %v6832
  %vm6835 = vcmp.eq.f32.partialorder %v6825, 0.0
  %v6836 = vand.u32 %v6825, 2147483648
  %v6837 = vsel %vm6835, %v6836, %v6834
  %v6838 = vmax.f32 %v6837, 1e-08
  %v6839 = vmax.f32 %v6818, 1e-08
  %v6840 = vmul.f32 %v6838, %v6839
  %v6841 = vmul.f32 %v6759, 10.0
  %v6842 = vrcp.pop %v6840
  %v6843 = vmul.f32 %v6841, %v6842
  %s6844 = scalar_lea.vmem %s20, 4
  %6845 = vst [vmem:[%s6844] sm:$0x7] %v6843
  %v6848 = vrot.slane %v6598, 4
  %v6849 = vsel %vm6380, %v6597, %v6848
  %s6851 = scalar_lea.vmem %s21, 8
  %6852 = vst.msk [vmem:[%s6851] sm:$0x77] %vm6384, %v6849
  // Predicated region
  $region82: #{tpu_custom_call.1} parent=0 // pred_check
    _
  $region83: #{tpu_custom_call.1} parent=0 // pred_check_branch
    %6854 = sbr.rel (0) target = $region85
  $region84: #{tpu_custom_call.1} parent=0 // pred_region
    _
  $region85: #{tpu_custom_call.1} parent=0 // pred_fallthru
    _
  // Predicated region
  $region86: #{tpu_custom_call.1} parent=0 // pred_check
    _
  $region87: #{tpu_custom_call.1} parent=0 // pred_check_branch
    %6856 = sbr.rel (0) target = $region89
  $region88: #{tpu_custom_call.1} parent=0 // pred_region
    _
  $region89: #{tpu_custom_call.1} parent=0 // pred_fallthru
    _
  // Predicated region
  $region90: #{tpu_custom_call.1} parent=0 // pred_check
    _
  $region91: #{tpu_custom_call.1} parent=0 // pred_check_branch
    %6858 = sbr.rel (0) target = $region93
  $region92: #{tpu_custom_call.1} parent=0 // pred_region
    _
  $region93: #{tpu_custom_call.1} parent=0 // pred_fallthru
    _
  // Predicated region
  $region94: #{tpu_custom_call.1} parent=0 // pred_check
    _
  $region95: #{tpu_custom_call.1} parent=0 // pred_check_branch
    %6860 = sbr.rel (0) target = $region97
  $region96: #{tpu_custom_call.1} parent=0 // pred_region
    _
  $region97: #{tpu_custom_call.1} parent=0 // pred_fallthru
    _

</llo_original>
